<compile_context>
chip_gen: v7x
topology: tpu7x:2x2x1
jax: 0.10.0
libtpu: 0.0.40
codegen_flags: <defaults>
</compile_context>

<pallas_src>
import functools

import jax
import jax.numpy as jnp
from jax import lax
from jax.experimental import pallas as pl
from jax.experimental.pallas import tpu as pltpu


def _round_up(x, m):
    return ((x + m - 1) // m) * m


def _pick_tile(total, candidates):
    for c in candidates:
        if total % c == 0:
            return c
    return total


# --------------------------------------------------------------------------------- #
# Kernel A:  relu(bn2( relu(bn1(x)) @ W1 ))   (1x1 conv with fused BN/ReLU pro/epilogue)
# --------------------------------------------------------------------------------- #
def _bn_relu_mm_bn_relu_kernel(x_ref, s1_ref, t1_ref, w_ref, s2_ref, t2_ref,
                               o_ref, acc_ref):
    k = pl.program_id(2)

    @pl.when(k == 0)
    def _():
        acc_ref[...] = jnp.zeros_like(acc_ref)

    # BN1 + ReLU prologue on the x tile (VPU work, hidden under the MXU).
    h = jnp.maximum(x_ref[...].astype(jnp.float32) * s1_ref[...] + t1_ref[...], 0.0)
    # bf16 MXU matmul, float32 accumulation in VMEM scratch.
    acc_ref[...] += jnp.dot(h.astype(jnp.bfloat16), w_ref[...],
                            preferred_element_type=jnp.float32)

    @pl.when(k == pl.num_programs(2) - 1)
    def _():
        y = jnp.maximum(acc_ref[...] * s2_ref[...] + t2_ref[...], 0.0)   # BN2 + ReLU
        o_ref[...] = y.astype(o_ref.dtype)


def fused_bn_relu_conv1x1_bn_relu(x2d, w, scale1, shift1, scale2, shift2):
    """y = relu(bn2( relu(bn1(x)) @ w )).  x2d:(M,K) bf16, w:(K,N) bf16.

    Returns (M, Np) bf16 with Np = round_up(N, 128); the padded columns are exact zeros
    (they double as the zero channel padding required by the following 5x5 conv, and keep
    the store lane-dense).
    """
    M, K = x2d.shape
    N = w.shape[1]

    # Contraction dim: only pad/tile K when it is actually large.  For small or
    # non-128-multiple K we use the full-extent block (MXU pads internally) and avoid
    # materializing a zero-padded copy of the whole activation in HBM.
    if K % 128 == 0:
        Kp = K
    elif K <= 1024:
        Kp = K
    else:
        Kp = _round_up(K, 128)
    tk = _pick_tile(Kp, (512, 256, 128)) if Kp % 128 == 0 else Kp

    Np = _round_up(N, 128)
    tn = _pick_tile(Np, (256, 128))

    tm = min(256, _round_up(M, 8))
    # v7x has 2 TensorCores: ensure the parallel part of the grid has >= 2 steps.
    if (_round_up(M, tm) // tm) * (Np // tn) < 2 and M > 8:
        tm = _round_up(max(8, (M + 1) // 2), 8)
    Mp = _round_up(M, tm)

    xp = jnp.pad(x2d, ((0, Mp - M), (0, Kp - K))) if (Mp > M or Kp > K) else x2d
    wp = jnp.pad(w, ((0, Kp - K), (0, Np - N)))
    s1 = jnp.pad(scale1.astype(jnp.float32), (0, Kp - K)).reshape(1, Kp)
    t1 = jnp.pad(shift1.astype(jnp.float32), (0, Kp - K)).reshape(1, Kp)
    s2 = jnp.pad(scale2.astype(jnp.float32), (0, Np - N)).reshape(1, Np)
    t2 = jnp.pad(shift2.astype(jnp.float32), (0, Np - N)).reshape(1, Np)

    cost = pl.CostEstimate(
        flops=2 * Mp * Kp * Np + 4 * Mp * (Kp + Np),
        transcendentals=0,
        bytes_accessed=(xp.size + wp.size + Mp * Np) * 2 + (Kp + Np) * 4 * 4,
    )

    out = pl.pallas_call(
        _bn_relu_mm_bn_relu_kernel,
        out_shape=jax.ShapeDtypeStruct((Mp, Np), jnp.bfloat16),
        grid=(Mp // tm, Np // tn, Kp // tk),
        in_specs=[
            pl.BlockSpec((tm, tk), lambda i, j, k: (i, k)),
            pl.BlockSpec((1, tk), lambda i, j, k: (0, k)),
            pl.BlockSpec((1, tk), lambda i, j, k: (0, k)),
            pl.BlockSpec((tk, tn), lambda i, j, k: (k, j)),
            pl.BlockSpec((1, tn), lambda i, j, k: (0, j)),
            pl.BlockSpec((1, tn), lambda i, j, k: (0, j)),
        ],
        out_specs=pl.BlockSpec((tm, tn), lambda i, j, k: (i, j)),
        scratch_shapes=[pltpu.VMEM((tm, tn), jnp.float32)],
        compiler_params=pltpu.CompilerParams(
            dimension_semantics=("parallel", "parallel", "arbitrary"),
            vmem_limit_bytes=32 * 1024 * 1024),
        cost_estimate=cost,
    )(xp, s1, t1, wp, s2, t2)
    return out[:M, :]


# --------------------------------------------------------------------------------- #
# Kernel B:  5x5 conv (padding=2, no bias) + fused channel-concat with the block input x.
#            25 taps accumulated on-chip (no im2col matrix in HBM), output = [x | conv].
# --------------------------------------------------------------------------------- #
def _conv5x5_concat_kernel(x_ref, h_ref, w_ref, o_ref, *, H, W):
    kh, kw, cinp, cout = w_ref.shape
    hp = h_ref[...]                                       # (H+kh-1, W+kw-1, Cp) bf16
    acc = jnp.zeros((H * W, cout), jnp.float32)
    for di in range(kh):                                  # static unrolled tap loop
        for dj in range(kw):
            win = hp[di:di + H, dj:dj + W, :].reshape(H * W, cinp)
            acc = acc + jnp.dot(win, w_ref[di, dj],
                                preferred_element_type=jnp.float32)
    out = acc.reshape(H, W, cout)
    o_ref[...] = jnp.concatenate([x_ref[...].astype(jnp.float32), out],
                                 axis=-1).astype(o_ref.dtype)


def conv5x5_concat(x_nhwc, h_pad, w):
    """5x5 'SAME' conv on an already spatially zero-padded NHWC activation, concatenated
    with the original input x along channels (torch.cat([x, out], 1) in NHWC).

    x_nhwc: (B, H, W, Cin)      f32
    h_pad:  (B, H+4, W+4, Cp)   bf16 (channels zero-padded to a lane multiple)
    w:      (5, 5, Cp, Cout)    bf16
    Returns (B, H, W, Cin + Cout) float32.
    """
    # TODO(synk): for very large H*W or channel counts, add an output-row grid axis with
    # halo loads to bound the per-step VMEM footprint.
    B, H, W, cin = x_nhwc.shape
    _, Hp, Wp, Cp = h_pad.shape
    KH, KW, _, cout = w.shape
    assert Hp - KH + 1 == H and Wp - KW + 1 == W

    cost = pl.CostEstimate(
        flops=2 * B * H * W * KH * KW * Cp * cout,
        transcendentals=0,
        bytes_accessed=(h_pad.size + w.size) * 2 + x_nhwc.size * 4
                       + B * H * W * (cin + cout) * 4,
    )

    return pl.pallas_call(
        functools.partial(_conv5x5_concat_kernel, H=H, W=W),
        out_shape=jax.ShapeDtypeStruct((B, H, W, cin + cout), jnp.float32),
        grid=(B,),
        in_specs=[
            pl.BlockSpec((None, H, W, cin), lambda b: (b, 0, 0, 0)),
            pl.BlockSpec((None, Hp, Wp, Cp), lambda b: (b, 0, 0, 0)),
            pl.BlockSpec((KH, KW, Cp, cout), lambda b: (0, 0, 0, 0)),
        ],
        out_specs=pl.BlockSpec((None, H, W, cin + cout), lambda b: (b, 0, 0, 0)),
        compiler_params=pltpu.CompilerParams(
            dimension_semantics=("parallel",),
            vmem_limit_bytes=32 * 1024 * 1024),
        cost_estimate=cost,
    )(x_nhwc, h_pad, w)


# --------------------------------------------------------------------------------- #
# BottleneckBlock1 forward (eval mode; dropRate=0.0 default -> dropout is the identity)
# --------------------------------------------------------------------------------- #
@jax.jit
def bottleneck_block1_forward(params, x_nchw):
    # TODO(synk): F.dropout for dropRate>0 (training mode) not implemented; the module
    # default dropRate=0.0 makes it the identity, which is what is computed here.
    x = jnp.transpose(x_nchw, (0, 2, 3, 1)).astype(jnp.float32)   # NCHW -> NHWC
    B, H, W, cin = x.shape

    g1, b1, m1, v1 = params["bn1"]
    s1 = g1 * lax.rsqrt(v1 + 1e-5)
    t1 = b1 - m1 * s1
    g2, b2, m2, v2 = params["bn2"]
    s2 = g2 * lax.rsqrt(v2 + 1e-5)
    t2 = b2 - m2 * s2

    w1 = params["conv1"]                                  # (inter, cin, 1, 1) torch OIHW
    inter = w1.shape[0]
    w1mat = jnp.transpose(w1[:, :, 0, 0], (1, 0)).astype(jnp.bfloat16)   # (cin, inter)

    # Kernel A: BN1+ReLU -> 1x1 conv -> BN2+ReLU, single bf16 HBM round trip.
    x2d = x.reshape(B * H * W, cin).astype(jnp.bfloat16)
    h2d = fused_bn_relu_conv1x1_bn_relu(x2d, w1mat, s1, t1, s2, t2)
    interp = h2d.shape[1]                                 # inter padded to lanes (zeros)
    h = h2d.reshape(B, H, W, interp)

    # Kernel B: 5x5 conv, padding=2 (zero pad applied AFTER BN2+ReLU, matching PyTorch),
    # with the final channel-concat against x fused into the kernel epilogue.
    w2 = params["conv2"]                                  # (out_planes, inter, 5, 5)
    w2t = jnp.transpose(w2, (2, 3, 1, 0))                 # (5, 5, inter, out)
    w2t = jnp.pad(w2t, ((0, 0), (0, 0), (0, interp - inter),
                        (0, 0))).astype(jnp.bfloat16)
    h_pad = jnp.pad(h, ((0, 0), (2, 2), (2, 2), (0, 0)))

    y_nhwc = conv5x5_concat(x, h_pad, w2t)                # (B, H, W, cin + out) f32
    return jnp.transpose(y_nhwc, (0, 3, 1, 2))            # NHWC -> NCHW


# --------------------------------------------------------------------------------- #
# Pure-JAX float32 reference (for numerical validation of the bf16 MXU path)
# --------------------------------------------------------------------------------- #
def reference_forward(params, x_nchw):
    x = jnp.transpose(x_nchw, (0, 2, 3, 1)).astype(jnp.float32)
    g1, b1, m1, v1 = params["bn1"]
    h = jnp.maximum((x - m1) * (g1 * lax.rsqrt(v1 + 1e-5)) + b1, 0.0)
    w1 = jnp.transpose(params["conv1"], (2, 3, 1, 0))
    h = lax.conv_general_dilated(h, w1, (1, 1), "VALID",
                                 dimension_numbers=("NHWC", "HWIO", "NHWC"))
    g2, b2, m2, v2 = params["bn2"]
    h = jnp.maximum((h - m2) * (g2 * lax.rsqrt(v2 + 1e-5)) + b2, 0.0)
    w2 = jnp.transpose(params["conv2"], (2, 3, 1, 0))
    out = lax.conv_general_dilated(h, w2, (1, 1), "SAME",
                                   dimension_numbers=("NHWC", "HWIO", "NHWC"))
    y = jnp.concatenate([x, out], axis=-1)
    return jnp.transpose(y, (0, 3, 1, 2))


# --------------------------------------------------------------------------------- #
# Deterministic parameter initialization (eval-mode BatchNorm statistics)
# --------------------------------------------------------------------------------- #
def init_bn(key, c):
    k1, k2, k3, k4 = jax.random.split(key, 4)
    gamma = 1.0 + 0.1 * jax.random.normal(k1, (c,), jnp.float32)
    beta = 0.1 * jax.random.normal(k2, (c,), jnp.float32)
    mean = 0.1 * jax.random.normal(k3, (c,), jnp.float32)
    var = 1.0 + 0.1 * jnp.abs(jax.random.normal(k4, (c,), jnp.float32))
    return gamma, beta, mean, var


def init_bottleneck_block1(key, in_planes, out_planes):
    inter = out_planes * 4
    k1, k2, k3, k4 = jax.random.split(key, 4)
    return {
        "bn1": init_bn(k1, in_planes),
        "conv1": jax.random.normal(k2, (inter, in_planes, 1, 1), jnp.float32)
                 * (2.0 / in_planes) ** 0.5,
        "bn2": init_bn(k3, inter),
        "conv2": jax.random.normal(k4, (out_planes, inter, 5, 5), jnp.float32)
                 * (2.0 / (inter * 25)) ** 0.5,
    }


# --------------------------------------------------------------------------------- #
if __name__ == "__main__":
    key = jax.random.PRNGKey(0)
    kx, kp = jax.random.split(key)
    B, in_planes, H, W = 2, 16, 16, 16
    out_planes = 8                                        # inter_planes = 32
    x = jax.random.normal(kx, (B, in_planes, H, W), jnp.float32)
    params = init_bottleneck_block1(kp, in_planes, out_planes)

    y = bottleneck_block1_forward(params, x)
    y = jax.block_until_ready(y)

    assert y.shape == (B, in_planes + out_planes, H, W), y.shape
    assert bool(jnp.all(jnp.isfinite(y)))

    # bf16 MXU inputs / f32 accumulation: validate against the pure-f32 reference.
    y_ref = reference_forward(params, x)
    err = jnp.max(jnp.abs(y - y_ref) / jnp.maximum(jnp.abs(y_ref), 1.0))
    assert float(err) < 0.15, f"numerical mismatch vs f32 reference: {float(err)}"

    print("KERNEL_OK")
</pallas_src>

<mosaic_0001>
module attributes {stable_mosaic.version = 11 : i64} {
  func.func @_bn_relu_mm_bn_relu_kernel(%arg0: i32, %arg1: i32, %arg2: i32, %arg3: memref<256x16xbf16, #tpu.memory_space<vmem>>, %arg4: memref<1x16xf32, #tpu.memory_space<vmem>>, %arg5: memref<1x16xf32, #tpu.memory_space<vmem>>, %arg6: memref<16x128xbf16, #tpu.memory_space<vmem>>, %arg7: memref<1x128xf32, #tpu.memory_space<vmem>>, %arg8: memref<1x128xf32, #tpu.memory_space<vmem>>, %arg9: memref<256x128xbf16, #tpu.memory_space<vmem>>, %arg10: memref<256x128xf32, #tpu.memory_space<vmem>>) attributes {dimension_semantics = [#tpu.dimension_semantics<parallel>, #tpu.dimension_semantics<parallel>, #tpu.dimension_semantics<arbitrary>], iteration_bounds = array<i64: 2, 1, 1>, scalar_prefetch = 0 : i64, scratch_operands = 1 : i64, tpu.core_type = #tpu.core_type<tc>, window_params = [{transform_indices = @transform_0, window_bounds = array<i64: 256, 16>}, {transform_indices = @transform_1, window_bounds = array<i64: 1, 16>}, {transform_indices = @transform_2, window_bounds = array<i64: 1, 16>}, {transform_indices = @transform_3, window_bounds = array<i64: 16, 128>}, {transform_indices = @transform_4, window_bounds = array<i64: 1, 128>}, {transform_indices = @transform_5, window_bounds = array<i64: 1, 128>}, {transform_indices = @transform_6, window_bounds = array<i64: 256, 128>}]} {
    %c0_i32 = arith.constant 0 : i32
    %0 = arith.cmpi eq, %arg2, %c0_i32 : i32
    %1 = arith.extui %0 : i1 to i32
    %c0_i32_0 = arith.constant 0 : i32
    %2 = arith.cmpi ne, %1, %c0_i32_0 : i32
    scf.if %2 {
      %cst_15 = arith.constant 0.000000e+00 : f32
      %22 = vector.broadcast %cst_15 : f32 to vector<256x128xf32>
      %c0_16 = arith.constant 0 : index
      %c0_17 = arith.constant 0 : index
      %23 = vector.load %arg10[%c0_16, %c0_17] : memref<256x128xf32, #tpu.memory_space<vmem>>, vector<256x128xf32>
      tpu.vector_store %arg10[%c0_16, %c0_17], %22 {strides = array<i32>} : memref<256x128xf32, #tpu.memory_space<vmem>>, vector<256x128xf32>,
    } else {
    }
    %c0 = arith.constant 0 : index
    %c0_1 = arith.constant 0 : index
    %3 = vector.load %arg3[%c0, %c0_1] : memref<256x16xbf16, #tpu.memory_space<vmem>>, vector<256x16xbf16>
    %4 = arith.extf %3 : vector<256x16xbf16> to vector<256x16xf32>
    %c0_2 = arith.constant 0 : index
    %c0_3 = arith.constant 0 : index
    %5 = vector.load %arg4[%c0_2, %c0_3] : memref<1x16xf32, #tpu.memory_space<vmem>>, vector<1x16xf32>
    %6 = vector.broadcast %5 : vector<1x16xf32> to vector<256x16xf32>
    %7 = arith.mulf %4, %6 : vector<256x16xf32>
    %c0_4 = arith.constant 0 : index
    %c0_5 = arith.constant 0 : index
    %8 = vector.load %arg5[%c0_4, %c0_5] : memref<1x16xf32, #tpu.memory_space<vmem>>, vector<1x16xf32>
    %9 = vector.broadcast %8 : vector<1x16xf32> to vector<256x16xf32>
    %10 = arith.addf %7, %9 : vector<256x16xf32>
    %cst = arith.constant 0.000000e+00 : f32
    %11 = vector.broadcast %cst : f32 to vector<256x16xf32>
    %12 = arith.maximumf %10, %11 : vector<256x16xf32>
    %c0_6 = arith.constant 0 : index
    %c0_7 = arith.constant 0 : index
    %13 = vector.load %arg10[%c0_6, %c0_7] : memref<256x128xf32, #tpu.memory_space<vmem>>, vector<256x128xf32>
    %14 = arith.truncf %12 : vector<256x16xf32> to vector<256x16xbf16>
    %c0_8 = arith.constant 0 : index
    %c0_9 = arith.constant 0 : index
    %15 = vector.load %arg6[%c0_8, %c0_9] : memref<16x128xbf16, #tpu.memory_space<vmem>>, vector<16x128xbf16>
    %cst_10 = arith.constant dense<0.000000e+00> : vector<256x128xf32>
    %16 = tpu.matmul %14, %15, %cst_10 {dimension_numbers = #tpu.dot_dimension_numbers<[1], [0], [0], [1], [0, 0, 1, 1], [], []>} : vector<256x16xbf16>, vector<16x128xbf16>, vector<256x128xf32> -> vector<256x128xf32>
    %17 = arith.addf %13, %16 : vector<256x128xf32>
    %c0_11 = arith.constant 0 : index
    %c0_12 = arith.constant 0 : index
    %18 = vector.load %arg10[%c0_11, %c0_12] : memref<256x128xf32, #tpu.memory_space<vmem>>, vector<256x128xf32>
    tpu.vector_store %arg10[%c0_11, %c0_12], %17 {strides = array<i32>} : memref<256x128xf32, #tpu.memory_space<vmem>>, vector<256x128xf32>,
    %c0_i32_13 = arith.constant 0 : i32
    %19 = arith.cmpi eq, %arg2, %c0_i32_13 : i32
    %20 = arith.extui %19 : i1 to i32
    %c0_i32_14 = arith.constant 0 : i32
    %21 = arith.cmpi ne, %20, %c0_i32_14 : i32
    scf.if %21 {
      %c0_15 = arith.constant 0 : index
      %c0_16 = arith.constant 0 : index
      %22 = vector.load %arg10[%c0_15, %c0_16] : memref<256x128xf32, #tpu.memory_space<vmem>>, vector<256x128xf32>
      %c0_17 = arith.constant 0 : index
      %c0_18 = arith.constant 0 : index
      %23 = vector.load %arg7[%c0_17, %c0_18] : memref<1x128xf32, #tpu.memory_space<vmem>>, vector<1x128xf32>
      %24 = vector.broadcast %23 : vector<1x128xf32> to vector<256x128xf32>
      %25 = arith.mulf %22, %24 : vector<256x128xf32>
      %c0_19 = arith.constant 0 : index
      %c0_20 = arith.constant 0 : index
      %26 = vector.load %arg8[%c0_19, %c0_20] : memref<1x128xf32, #tpu.memory_space<vmem>>, vector<1x128xf32>
      %27 = vector.broadcast %26 : vector<1x128xf32> to vector<256x128xf32>
      %28 = arith.addf %25, %27 : vector<256x128xf32>
      %cst_21 = arith.constant 0.000000e+00 : f32
      %29 = vector.broadcast %cst_21 : f32 to vector<256x128xf32>
      %30 = arith.maximumf %28, %29 : vector<256x128xf32>
      %31 = arith.truncf %30 : vector<256x128xf32> to vector<256x128xbf16>
      %c0_22 = arith.constant 0 : index
      %c0_23 = arith.constant 0 : index
      %32 = vector.load %arg9[%c0_22, %c0_23] : memref<256x128xbf16, #tpu.memory_space<vmem>>, vector<256x128xbf16>
      tpu.vector_store %arg9[%c0_22, %c0_23], %31 {strides = array<i32>} : memref<256x128xbf16, #tpu.memory_space<vmem>>, vector<256x128xbf16>,
    } else {
    }
    return
  }
  func.func @transform_0(%arg0: i32, %arg1: i32, %arg2: i32) -> (i32, i32) {
    %c0_i32 = arith.constant 0 : i32
    return %arg0, %arg2 : i32, i32
  }
  func.func @transform_1(%arg0: i32, %arg1: i32, %arg2: i32) -> (i32, i32) {
    %c0_i32 = arith.constant 0 : i32
    %c0_i32_0 = arith.constant 0 : i32
    return %c0_i32, %arg2 : i32, i32
  }
  func.func @transform_2(%arg0: i32, %arg1: i32, %arg2: i32) -> (i32, i32) {
    %c0_i32 = arith.constant 0 : i32
    %c0_i32_0 = arith.constant 0 : i32
    return %c0_i32, %arg2 : i32, i32
  }
  func.func @transform_3(%arg0: i32, %arg1: i32, %arg2: i32) -> (i32, i32) {
    %c0_i32 = arith.constant 0 : i32
    return %arg2, %arg1 : i32, i32
  }
  func.func @transform_4(%arg0: i32, %arg1: i32, %arg2: i32) -> (i32, i32) {
    %c0_i32 = arith.constant 0 : i32
    %c0_i32_0 = arith.constant 0 : i32
    return %c0_i32, %arg1 : i32, i32
  }
  func.func @transform_5(%arg0: i32, %arg1: i32, %arg2: i32) -> (i32, i32) {
    %c0_i32 = arith.constant 0 : i32
    %c0_i32_0 = arith.constant 0 : i32
    return %c0_i32, %arg1 : i32, i32
  }
  func.func @transform_6(%arg0: i32, %arg1: i32, %arg2: i32) -> (i32, i32) {
    %c0_i32 = arith.constant 0 : i32
    return %arg0, %arg1 : i32, i32
  }
}

module attributes {stable_mosaic.version = 11 : i64} {
  func.func @_conv5x5_concat_kernel(%arg0: i32, %arg1: memref<1x16x16x16xf32, #tpu.memory_space<vmem>>, %arg2: memref<1x20x20x128xbf16, #tpu.memory_space<vmem>>, %arg3: memref<5x5x128x8xbf16, #tpu.memory_space<vmem>>, %arg4: memref<1x16x16x24xf32, #tpu.memory_space<vmem>>) attributes {dimension_semantics = [#tpu.dimension_semantics<parallel>], iteration_bounds = array<i64: 2>, scalar_prefetch = 0 : i64, scratch_operands = 0 : i64, tpu.core_type = #tpu.core_type<tc>, window_params = [{transform_indices = @transform_0, window_bounds = array<i64: 1, 16, 16, 16>}, {transform_indices = @transform_1, window_bounds = array<i64: 1, 20, 20, 128>}, {pipeline_mode = #tpu.pipeline_mode<synchronous>, transform_indices = @transform_2, window_bounds = array<i64: 5, 5, 128, 8>}, {transform_indices = @transform_3, window_bounds = array<i64: 1, 16, 16, 24>}]} {
    %c0 = arith.constant 0 : index
    %c0_0 = arith.constant 0 : index
    %c0_1 = arith.constant 0 : index
    %c0_2 = arith.constant 0 : index
    %0 = vector.load %arg2[%c0, %c0_0, %c0_1, %c0_2] : memref<1x20x20x128xbf16, #tpu.memory_space<vmem>>, vector<1x20x20x128xbf16>
    %1 = vector.shape_cast %0 : vector<1x20x20x128xbf16> to vector<20x20x128xbf16>
    %cst = arith.constant 0.000000e+00 : f32
    %2 = vector.broadcast %cst : f32 to vector<256x8xf32>
    %3 = vector.extract_strided_slice %1 {offsets = [0, 0, 0], sizes = [16, 16, 128], strides = [1, 1, 1]} : vector<20x20x128xbf16> to vector<16x16x128xbf16>
    %4 = vector.shape_cast %3 : vector<16x16x128xbf16> to vector<256x128xbf16>
    %c0_3 = arith.constant 0 : index
    %c0_4 = arith.constant 0 : index
    %c0_5 = arith.constant 0 : index
    %c0_6 = arith.constant 0 : index
    %5 = vector.load %arg3[%c0_3, %c0_4, %c0_5, %c0_6] : memref<5x5x128x8xbf16, #tpu.memory_space<vmem>>, vector<1x1x128x8xbf16>
    %6 = vector.shape_cast %5 : vector<1x1x128x8xbf16> to vector<128x8xbf16>
    %cst_7 = arith.constant dense<0.000000e+00> : vector<256x8xf32>
    %7 = tpu.matmul %4, %6, %cst_7 {dimension_numbers = #tpu.dot_dimension_numbers<[1], [0], [0], [1], [0, 0, 1, 1], [], []>} : vector<256x128xbf16>, vector<128x8xbf16>, vector<256x8xf32> -> vector<256x8xf32>
    %8 = arith.addf %2, %7 : vector<256x8xf32>
    %9 = vector.extract_strided_slice %1 {offsets = [0, 1, 0], sizes = [16, 16, 128], strides = [1, 1, 1]} : vector<20x20x128xbf16> to vector<16x16x128xbf16>
    %10 = vector.shape_cast %9 : vector<16x16x128xbf16> to vector<256x128xbf16>
    %c0_8 = arith.constant 0 : index
    %c1 = arith.constant 1 : index
    %c0_9 = arith.constant 0 : index
    %c0_10 = arith.constant 0 : index
    %11 = vector.load %arg3[%c0_8, %c1, %c0_9, %c0_10] : memref<5x5x128x8xbf16, #tpu.memory_space<vmem>>, vector<1x1x128x8xbf16>
    %12 = vector.shape_cast %11 : vector<1x1x128x8xbf16> to vector<128x8xbf16>
    %cst_11 = arith.constant dense<0.000000e+00> : vector<256x8xf32>
    %13 = tpu.matmul %10, %12, %cst_11 {dimension_numbers = #tpu.dot_dimension_numbers<[1], [0], [0], [1], [0, 0, 1, 1], [], []>} : vector<256x128xbf16>, vector<128x8xbf16>, vector<256x8xf32> -> vector<256x8xf32>
    %14 = arith.addf %8, %13 : vector<256x8xf32>
    %15 = vector.extract_strided_slice %1 {offsets = [0, 2, 0], sizes = [16, 16, 128], strides = [1, 1, 1]} : vector<20x20x128xbf16> to vector<16x16x128xbf16>
    %16 = vector.shape_cast %15 : vector<16x16x128xbf16> to vector<256x128xbf16>
    %c0_12 = arith.constant 0 : index
    %c2 = arith.constant 2 : index
    %c0_13 = arith.constant 0 : index
    %c0_14 = arith.constant 0 : index
    %17 = vector.load %arg3[%c0_12, %c2, %c0_13, %c0_14] : memref<5x5x128x8xbf16, #tpu.memory_space<vmem>>, vector<1x1x128x8xbf16>
    %18 = vector.shape_cast %17 : vector<1x1x128x8xbf16> to vector<128x8xbf16>
    %cst_15 = arith.constant dense<0.000000e+00> : vector<256x8xf32>
    %19 = tpu.matmul %16, %18, %cst_15 {dimension_numbers = #tpu.dot_dimension_numbers<[1], [0], [0], [1], [0, 0, 1, 1], [], []>} : vector<256x128xbf16>, vector<128x8xbf16>, vector<256x8xf32> -> vector<256x8xf32>
    %20 = arith.addf %14, %19 : vector<256x8xf32>
    %21 = vector.extract_strided_slice %1 {offsets = [0, 3, 0], sizes = [16, 16, 128], strides = [1, 1, 1]} : vector<20x20x128xbf16> to vector<16x16x128xbf16>
    %22 = vector.shape_cast %21 : vector<16x16x128xbf16> to vector<256x128xbf16>
    %c0_16 = arith.constant 0 : index
    %c3 = arith.constant 3 : index
    %c0_17 = arith.constant 0 : index
    %c0_18 = arith.constant 0 : index
    %23 = vector.load %arg3[%c0_16, %c3, %c0_17, %c0_18] : memref<5x5x128x8xbf16, #tpu.memory_space<vmem>>, vector<1x1x128x8xbf16>
    %24 = vector.shape_cast %23 : vector<1x1x128x8xbf16> to vector<128x8xbf16>
    %cst_19 = arith.constant dense<0.000000e+00> : vector<256x8xf32>
    %25 = tpu.matmul %22, %24, %cst_19 {dimension_numbers = #tpu.dot_dimension_numbers<[1], [0], [0], [1], [0, 0, 1, 1], [], []>} : vector<256x128xbf16>, vector<128x8xbf16>, vector<256x8xf32> -> vector<256x8xf32>
    %26 = arith.addf %20, %25 : vector<256x8xf32>
    %27 = vector.extract_strided_slice %1 {offsets = [0, 4, 0], sizes = [16, 16, 128], strides = [1, 1, 1]} : vector<20x20x128xbf16> to vector<16x16x128xbf16>
    %28 = vector.shape_cast %27 : vector<16x16x128xbf16> to vector<256x128xbf16>
    %c0_20 = arith.constant 0 : index
    %c4 = arith.constant 4 : index
    %c0_21 = arith.constant 0 : index
    %c0_22 = arith.constant 0 : index
    %29 = vector.load %arg3[%c0_20, %c4, %c0_21, %c0_22] : memref<5x5x128x8xbf16, #tpu.memory_space<vmem>>, vector<1x1x128x8xbf16>
    %30 = vector.shape_cast %29 : vector<1x1x128x8xbf16> to vector<128x8xbf16>
    %cst_23 = arith.constant dense<0.000000e+00> : vector<256x8xf32>
    %31 = tpu.matmul %28, %30, %cst_23 {dimension_numbers = #tpu.dot_dimension_numbers<[1], [0], [0], [1], [0, 0, 1, 1], [], []>} : vector<256x128xbf16>, vector<128x8xbf16>, vector<256x8xf32> -> vector<256x8xf32>
    %32 = arith.addf %26, %31 : vector<256x8xf32>
    %33 = vector.extract_strided_slice %1 {offsets = [1, 0, 0], sizes = [16, 16, 128], strides = [1, 1, 1]} : vector<20x20x128xbf16> to vector<16x16x128xbf16>
    %34 = vector.shape_cast %33 : vector<16x16x128xbf16> to vector<256x128xbf16>
    %c1_24 = arith.constant 1 : index
    %c0_25 = arith.constant 0 : index
    %c0_26 = arith.constant 0 : index
    %c0_27 = arith.constant 0 : index
    %35 = vector.load %arg3[%c1_24, %c0_25, %c0_26, %c0_27] : memref<5x5x128x8xbf16, #tpu.memory_space<vmem>>, vector<1x1x128x8xbf16>
    %36 = vector.shape_cast %35 : vector<1x1x128x8xbf16> to vector<128x8xbf16>
    %cst_28 = arith.constant dense<0.000000e+00> : vector<256x8xf32>
    %37 = tpu.matmul %34, %36, %cst_28 {dimension_numbers = #tpu.dot_dimension_numbers<[1], [0], [0], [1], [0, 0, 1, 1], [], []>} : vector<256x128xbf16>, vector<128x8xbf16>, vector<256x8xf32> -> vector<256x8xf32>
    %38 = arith.addf %32, %37 : vector<256x8xf32>
    %39 = vector.extract_strided_slice %1 {offsets = [1, 1, 0], sizes = [16, 16, 128], strides = [1, 1, 1]} : vector<20x20x128xbf16> to vector<16x16x128xbf16>
    %40 = vector.shape_cast %39 : vector<16x16x128xbf16> to vector<256x128xbf16>
    %c1_29 = arith.constant 1 : index
    %c1_30 = arith.constant 1 : index
    %c0_31 = arith.constant 0 : index
    %c0_32 = arith.constant 0 : index
    %41 = vector.load %arg3[%c1_29, %c1_30, %c0_31, %c0_32] : memref<5x5x128x8xbf16, #tpu.memory_space<vmem>>, vector<1x1x128x8xbf16>
    %42 = vector.shape_cast %41 : vector<1x1x128x8xbf16> to vector<128x8xbf16>
    %cst_33 = arith.constant dense<0.000000e+00> : vector<256x8xf32>
    %43 = tpu.matmul %40, %42, %cst_33 {dimension_numbers = #tpu.dot_dimension_numbers<[1], [0], [0], [1], [0, 0, 1, 1], [], []>} : vector<256x128xbf16>, vector<128x8xbf16>, vector<256x8xf32> -> vector<256x8xf32>
    %44 = arith.addf %38, %43 : vector<256x8xf32>
    %45 = vector.extract_strided_slice %1 {offsets = [1, 2, 0], sizes = [16, 16, 128], strides = [1, 1, 1]} : vector<20x20x128xbf16> to vector<16x16x128xbf16>
    %46 = vector.shape_cast %45 : vector<16x16x128xbf16> to vector<256x128xbf16>
    %c1_34 = arith.constant 1 : index
    %c2_35 = arith.constant 2 : index
    %c0_36 = arith.constant 0 : index
    %c0_37 = arith.constant 0 : index
    %47 = vector.load %arg3[%c1_34, %c2_35, %c0_36, %c0_37] : memref<5x5x128x8xbf16, #tpu.memory_space<vmem>>, vector<1x1x128x8xbf16>
    %48 = vector.shape_cast %47 : vector<1x1x128x8xbf16> to vector<128x8xbf16>
    %cst_38 = arith.constant dense<0.000000e+00> : vector<256x8xf32>
    %49 = tpu.matmul %46, %48, %cst_38 {dimension_numbers = #tpu.dot_dimension_numbers<[1], [0], [0], [1], [0, 0, 1, 1], [], []>} : vector<256x128xbf16>, vector<128x8xbf16>, vector<256x8xf32> -> vector<256x8xf32>
    %50 = arith.addf %44, %49 : vector<256x8xf32>
    %51 = vector.extract_strided_slice %1 {offsets = [1, 3, 0], sizes = [16, 16, 128], strides = [1, 1, 1]} : vector<20x20x128xbf16> to vector<16x16x128xbf16>
    %52 = vector.shape_cast %51 : vector<16x16x128xbf16> to vector<256x128xbf16>
    %c1_39 = arith.constant 1 : index
    %c3_40 = arith.constant 3 : index
    %c0_41 = arith.constant 0 : index
    %c0_42 = arith.constant 0 : index
    %53 = vector.load %arg3[%c1_39, %c3_40, %c0_41, %c0_42] : memref<5x5x128x8xbf16, #tpu.memory_space<vmem>>, vector<1x1x128x8xbf16>
    %54 = vector.shape_cast %53 : vector<1x1x128x8xbf16> to vector<128x8xbf16>
    %cst_43 = arith.constant dense<0.000000e+00> : vector<256x8xf32>
    %55 = tpu.matmul %52, %54, %cst_43 {dimension_numbers = #tpu.dot_dimension_numbers<[1], [0], [0], [1], [0, 0, 1, 1], [], []>} : vector<256x128xbf16>, vector<128x8xbf16>, vector<256x8xf32> -> vector<256x8xf32>
    %56 = arith.addf %50, %55 : vector<256x8xf32>
    %57 = vector.extract_strided_slice %1 {offsets = [1, 4, 0], sizes = [16, 16, 128], strides = [1, 1, 1]} : vector<20x20x128xbf16> to vector<16x16x128xbf16>
    %58 = vector.shape_cast %57 : vector<16x16x128xbf16> to vector<256x128xbf16>
    %c1_44 = arith.constant 1 : index
    %c4_45 = arith.constant 4 : index
    %c0_46 = arith.constant 0 : index
    %c0_47 = arith.constant 0 : index
    %59 = vector.load %arg3[%c1_44, %c4_45, %c0_46, %c0_47] : memref<5x5x128x8xbf16, #tpu.memory_space<vmem>>, vector<1x1x128x8xbf16>
    %60 = vector.shape_cast %59 : vector<1x1x128x8xbf16> to vector<128x8xbf16>
    %cst_48 = arith.constant dense<0.000000e+00> : vector<256x8xf32>
    %61 = tpu.matmul %58, %60, %cst_48 {dimension_numbers = #tpu.dot_dimension_numbers<[1], [0], [0], [1], [0, 0, 1, 1], [], []>} : vector<256x128xbf16>, vector<128x8xbf16>, vector<256x8xf32> -> vector<256x8xf32>
    %62 = arith.addf %56, %61 : vector<256x8xf32>
    %63 = vector.extract_strided_slice %1 {offsets = [2, 0, 0], sizes = [16, 16, 128], strides = [1, 1, 1]} : vector<20x20x128xbf16> to vector<16x16x128xbf16>
    %64 = vector.shape_cast %63 : vector<16x16x128xbf16> to vector<256x128xbf16>
    %c2_49 = arith.constant 2 : index
    %c0_50 = arith.constant 0 : index
    %c0_51 = arith.constant 0 : index
    %c0_52 = arith.constant 0 : index
    %65 = vector.load %arg3[%c2_49, %c0_50, %c0_51, %c0_52] : memref<5x5x128x8xbf16, #tpu.memory_space<vmem>>, vector<1x1x128x8xbf16>
    %66 = vector.shape_cast %65 : vector<1x1x128x8xbf16> to vector<128x8xbf16>
    %cst_53 = arith.constant dense<0.000000e+00> : vector<256x8xf32>
    %67 = tpu.matmul %64, %66, %cst_53 {dimension_numbers = #tpu.dot_dimension_numbers<[1], [0], [0], [1], [0, 0, 1, 1], [], []>} : vector<256x128xbf16>, vector<128x8xbf16>, vector<256x8xf32> -> vector<256x8xf32>
    %68 = arith.addf %62, %67 : vector<256x8xf32>
    %69 = vector.extract_strided_slice %1 {offsets = [2, 1, 0], sizes = [16, 16, 128], strides = [1, 1, 1]} : vector<20x20x128xbf16> to vector<16x16x128xbf16>
    %70 = vector.shape_cast %69 : vector<16x16x128xbf16> to vector<256x128xbf16>
    %c2_54 = arith.constant 2 : index
    %c1_55 = arith.constant 1 : index
    %c0_56 = arith.constant 0 : index
    %c0_57 = arith.constant 0 : index
    %71 = vector.load %arg3[%c2_54, %c1_55, %c0_56, %c0_57] : memref<5x5x128x8xbf16, #tpu.memory_space<vmem>>, vector<1x1x128x8xbf16>
    %72 = vector.shape_cast %71 : vector<1x1x128x8xbf16> to vector<128x8xbf16>
    %cst_58 = arith.constant dense<0.000000e+00> : vector<256x8xf32>
    %73 = tpu.matmul %70, %72, %cst_58 {dimension_numbers = #tpu.dot_dimension_numbers<[1], [0], [0], [1], [0, 0, 1, 1], [], []>} : vector<256x128xbf16>, vector<128x8xbf16>, vector<256x8xf32> -> vector<256x8xf32>
    %74 = arith.addf %68, %73 : vector<256x8xf32>
    %75 = vector.extract_strided_slice %1 {offsets = [2, 2, 0], sizes = [16, 16, 128], strides = [1, 1, 1]} : vector<20x20x128xbf16> to vector<16x16x128xbf16>
    %76 = vector.shape_cast %75 : vector<16x16x128xbf16> to vector<256x128xbf16>
    %c2_59 = arith.constant 2 : index
    %c2_60 = arith.constant 2 : index
    %c0_61 = arith.constant 0 : index
    %c0_62 = arith.constant 0 : index
    %77 = vector.load %arg3[%c2_59, %c2_60, %c0_61, %c0_62] : memref<5x5x128x8xbf16, #tpu.memory_space<vmem>>, vector<1x1x128x8xbf16>
    %78 = vector.shape_cast %77 : vector<1x1x128x8xbf16> to vector<128x8xbf16>
    %cst_63 = arith.constant dense<0.000000e+00> : vector<256x8xf32>
    %79 = tpu.matmul %76, %78, %cst_63 {dimension_numbers = #tpu.dot_dimension_numbers<[1], [0], [0], [1], [0, 0, 1, 1], [], []>} : vector<256x128xbf16>, vector<128x8xbf16>, vector<256x8xf32> -> vector<256x8xf32>
    %80 = arith.addf %74, %79 : vector<256x8xf32>
    %81 = vector.extract_strided_slice %1 {offsets = [2, 3, 0], sizes = [16, 16, 128], strides = [1, 1, 1]} : vector<20x20x128xbf16> to vector<16x16x128xbf16>
    %82 = vector.shape_cast %81 : vector<16x16x128xbf16> to vector<256x128xbf16>
    %c2_64 = arith.constant 2 : index
    %c3_65 = arith.constant 3 : index
    %c0_66 = arith.constant 0 : index
    %c0_67 = arith.constant 0 : index
    %83 = vector.load %arg3[%c2_64, %c3_65, %c0_66, %c0_67] : memref<5x5x128x8xbf16, #tpu.memory_space<vmem>>, vector<1x1x128x8xbf16>
    %84 = vector.shape_cast %83 : vector<1x1x128x8xbf16> to vector<128x8xbf16>
    %cst_68 = arith.constant dense<0.000000e+00> : vector<256x8xf32>
    %85 = tpu.matmul %82, %84, %cst_68 {dimension_numbers = #tpu.dot_dimension_numbers<[1], [0], [0], [1], [0, 0, 1, 1], [], []>} : vector<256x128xbf16>, vector<128x8xbf16>, vector<256x8xf32> -> vector<256x8xf32>
    %86 = arith.addf %80, %85 : vector<256x8xf32>
    %87 = vector.extract_strided_slice %1 {offsets = [2, 4, 0], sizes = [16, 16, 128], strides = [1, 1, 1]} : vector<20x20x128xbf16> to vector<16x16x128xbf16>
    %88 = vector.shape_cast %87 : vector<16x16x128xbf16> to vector<256x128xbf16>
    %c2_69 = arith.constant 2 : index
    %c4_70 = arith.constant 4 : index
    %c0_71 = arith.constant 0 : index
    %c0_72 = arith.constant 0 : index
    %89 = vector.load %arg3[%c2_69, %c4_70, %c0_71, %c0_72] : memref<5x5x128x8xbf16, #tpu.memory_space<vmem>>, vector<1x1x128x8xbf16>
    %90 = vector.shape_cast %89 : vector<1x1x128x8xbf16> to vector<128x8xbf16>
    %cst_73 = arith.constant dense<0.000000e+00> : vector<256x8xf32>
    %91 = tpu.matmul %88, %90, %cst_73 {dimension_numbers = #tpu.dot_dimension_numbers<[1], [0], [0], [1], [0, 0, 1, 1], [], []>} : vector<256x128xbf16>, vector<128x8xbf16>, vector<256x8xf32> -> vector<256x8xf32>
    %92 = arith.addf %86, %91 : vector<256x8xf32>
    %93 = vector.extract_strided_slice %1 {offsets = [3, 0, 0], sizes = [16, 16, 128], strides = [1, 1, 1]} : vector<20x20x128xbf16> to vector<16x16x128xbf16>
    %94 = vector.shape_cast %93 : vector<16x16x128xbf16> to vector<256x128xbf16>
    %c3_74 = arith.constant 3 : index
    %c0_75 = arith.constant 0 : index
    %c0_76 = arith.constant 0 : index
    %c0_77 = arith.constant 0 : index
    %95 = vector.load %arg3[%c3_74, %c0_75, %c0_76, %c0_77] : memref<5x5x128x8xbf16, #tpu.memory_space<vmem>>, vector<1x1x128x8xbf16>
    %96 = vector.shape_cast %95 : vector<1x1x128x8xbf16> to vector<128x8xbf16>
    %cst_78 = arith.constant dense<0.000000e+00> : vector<256x8xf32>
    %97 = tpu.matmul %94, %96, %cst_78 {dimension_numbers = #tpu.dot_dimension_numbers<[1], [0], [0], [1], [0, 0, 1, 1], [], []>} : vector<256x128xbf16>, vector<128x8xbf16>, vector<256x8xf32> -> vector<256x8xf32>
    %98 = arith.addf %92, %97 : vector<256x8xf32>
    %99 = vector.extract_strided_slice %1 {offsets = [3, 1, 0], sizes = [16, 16, 128], strides = [1, 1, 1]} : vector<20x20x128xbf16> to vector<16x16x128xbf16>
    %100 = vector.shape_cast %99 : vector<16x16x128xbf16> to vector<256x128xbf16>
    %c3_79 = arith.constant 3 : index
    %c1_80 = arith.constant 1 : index
    %c0_81 = arith.constant 0 : index
    %c0_82 = arith.constant 0 : index
    %101 = vector.load %arg3[%c3_79, %c1_80, %c0_81, %c0_82] : memref<5x5x128x8xbf16, #tpu.memory_space<vmem>>, vector<1x1x128x8xbf16>
    %102 = vector.shape_cast %101 : vector<1x1x128x8xbf16> to vector<128x8xbf16>
    %cst_83 = arith.constant dense<0.000000e+00> : vector<256x8xf32>
    %103 = tpu.matmul %100, %102, %cst_83 {dimension_numbers = #tpu.dot_dimension_numbers<[1], [0], [0], [1], [0, 0, 1, 1], [], []>} : vector<256x128xbf16>, vector<128x8xbf16>, vector<256x8xf32> -> vector<256x8xf32>
    %104 = arith.addf %98, %103 : vector<256x8xf32>
    %105 = vector.extract_strided_slice %1 {offsets = [3, 2, 0], sizes = [16, 16, 128], strides = [1, 1, 1]} : vector<20x20x128xbf16> to vector<16x16x128xbf16>
    %106 = vector.shape_cast %105 : vector<16x16x128xbf16> to vector<256x128xbf16>
    %c3_84 = arith.constant 3 : index
    %c2_85 = arith.constant 2 : index
    %c0_86 = arith.constant 0 : index
    %c0_87 = arith.constant 0 : index
    %107 = vector.load %arg3[%c3_84, %c2_85, %c0_86, %c0_87] : memref<5x5x128x8xbf16, #tpu.memory_space<vmem>>, vector<1x1x128x8xbf16>
    %108 = vector.shape_cast %107 : vector<1x1x128x8xbf16> to vector<128x8xbf16>
    %cst_88 = arith.constant dense<0.000000e+00> : vector<256x8xf32>
    %109 = tpu.matmul %106, %108, %cst_88 {dimension_numbers = #tpu.dot_dimension_numbers<[1], [0], [0], [1], [0, 0, 1, 1], [], []>} : vector<256x128xbf16>, vector<128x8xbf16>, vector<256x8xf32> -> vector<256x8xf32>
    %110 = arith.addf %104, %109 : vector<256x8xf32>
    %111 = vector.extract_strided_slice %1 {offsets = [3, 3, 0], sizes = [16, 16, 128], strides = [1, 1, 1]} : vector<20x20x128xbf16> to vector<16x16x128xbf16>
    %112 = vector.shape_cast %111 : vector<16x16x128xbf16> to vector<256x128xbf16>
    %c3_89 = arith.constant 3 : index
    %c3_90 = arith.constant 3 : index
    %c0_91 = arith.constant 0 : index
    %c0_92 = arith.constant 0 : index
    %113 = vector.load %arg3[%c3_89, %c3_90, %c0_91, %c0_92] : memref<5x5x128x8xbf16, #tpu.memory_space<vmem>>, vector<1x1x128x8xbf16>
    %114 = vector.shape_cast %113 : vector<1x1x128x8xbf16> to vector<128x8xbf16>
    %cst_93 = arith.constant dense<0.000000e+00> : vector<256x8xf32>
    %115 = tpu.matmul %112, %114, %cst_93 {dimension_numbers = #tpu.dot_dimension_numbers<[1], [0], [0], [1], [0, 0, 1, 1], [], []>} : vector<256x128xbf16>, vector<128x8xbf16>, vector<256x8xf32> -> vector<256x8xf32>
    %116 = arith.addf %110, %115 : vector<256x8xf32>
    %117 = vector.extract_strided_slice %1 {offsets = [3, 4, 0], sizes = [16, 16, 128], strides = [1, 1, 1]} : vector<20x20x128xbf16> to vector<16x16x128xbf16>
    %118 = vector.shape_cast %117 : vector<16x16x128xbf16> to vector<256x128xbf16>
    %c3_94 = arith.constant 3 : index
    %c4_95 = arith.constant 4 : index
    %c0_96 = arith.constant 0 : index
    %c0_97 = arith.constant 0 : index
    %119 = vector.load %arg3[%c3_94, %c4_95, %c0_96, %c0_97] : memref<5x5x128x8xbf16, #tpu.memory_space<vmem>>, vector<1x1x128x8xbf16>
    %120 = vector.shape_cast %119 : vector<1x1x128x8xbf16> to vector<128x8xbf16>
    %cst_98 = arith.constant dense<0.000000e+00> : vector<256x8xf32>
    %121 = tpu.matmul %118, %120, %cst_98 {dimension_numbers = #tpu.dot_dimension_numbers<[1], [0], [0], [1], [0, 0, 1, 1], [], []>} : vector<256x128xbf16>, vector<128x8xbf16>, vector<256x8xf32> -> vector<256x8xf32>
    %122 = arith.addf %116, %121 : vector<256x8xf32>
    %123 = vector.extract_strided_slice %1 {offsets = [4, 0, 0], sizes = [16, 16, 128], strides = [1, 1, 1]} : vector<20x20x128xbf16> to vector<16x16x128xbf16>
    %124 = vector.shape_cast %123 : vector<16x16x128xbf16> to vector<256x128xbf16>
    %c4_99 = arith.constant 4 : index
    %c0_100 = arith.constant 0 : index
    %c0_101 = arith.constant 0 : index
    %c0_102 = arith.constant 0 : index
    %125 = vector.load %arg3[%c4_99, %c0_100, %c0_101, %c0_102] : memref<5x5x128x8xbf16, #tpu.memory_space<vmem>>, vector<1x1x128x8xbf16>
    %126 = vector.shape_cast %125 : vector<1x1x128x8xbf16> to vector<128x8xbf16>
    %cst_103 = arith.constant dense<0.000000e+00> : vector<256x8xf32>
    %127 = tpu.matmul %124, %126, %cst_103 {dimension_numbers = #tpu.dot_dimension_numbers<[1], [0], [0], [1], [0, 0, 1, 1], [], []>} : vector<256x128xbf16>, vector<128x8xbf16>, vector<256x8xf32> -> vector<256x8xf32>
    %128 = arith.addf %122, %127 : vector<256x8xf32>
    %129 = vector.extract_strided_slice %1 {offsets = [4, 1, 0], sizes = [16, 16, 128], strides = [1, 1, 1]} : vector<20x20x128xbf16> to vector<16x16x128xbf16>
    %130 = vector.shape_cast %129 : vector<16x16x128xbf16> to vector<256x128xbf16>
    %c4_104 = arith.constant 4 : index
    %c1_105 = arith.constant 1 : index
    %c0_106 = arith.constant 0 : index
    %c0_107 = arith.constant 0 : index
    %131 = vector.load %arg3[%c4_104, %c1_105, %c0_106, %c0_107] : memref<5x5x128x8xbf16, #tpu.memory_space<vmem>>, vector<1x1x128x8xbf16>
    %132 = vector.shape_cast %131 : vector<1x1x128x8xbf16> to vector<128x8xbf16>
    %cst_108 = arith.constant dense<0.000000e+00> : vector<256x8xf32>
    %133 = tpu.matmul %130, %132, %cst_108 {dimension_numbers = #tpu.dot_dimension_numbers<[1], [0], [0], [1], [0, 0, 1, 1], [], []>} : vector<256x128xbf16>, vector<128x8xbf16>, vector<256x8xf32> -> vector<256x8xf32>
    %134 = arith.addf %128, %133 : vector<256x8xf32>
    %135 = vector.extract_strided_slice %1 {offsets = [4, 2, 0], sizes = [16, 16, 128], strides = [1, 1, 1]} : vector<20x20x128xbf16> to vector<16x16x128xbf16>
    %136 = vector.shape_cast %135 : vector<16x16x128xbf16> to vector<256x128xbf16>
    %c4_109 = arith.constant 4 : index
    %c2_110 = arith.constant 2 : index
    %c0_111 = arith.constant 0 : index
    %c0_112 = arith.constant 0 : index
    %137 = vector.load %arg3[%c4_109, %c2_110, %c0_111, %c0_112] : memref<5x5x128x8xbf16, #tpu.memory_space<vmem>>, vector<1x1x128x8xbf16>
    %138 = vector.shape_cast %137 : vector<1x1x128x8xbf16> to vector<128x8xbf16>
    %cst_113 = arith.constant dense<0.000000e+00> : vector<256x8xf32>
    %139 = tpu.matmul %136, %138, %cst_113 {dimension_numbers = #tpu.dot_dimension_numbers<[1], [0], [0], [1], [0, 0, 1, 1], [], []>} : vector<256x128xbf16>, vector<128x8xbf16>, vector<256x8xf32> -> vector<256x8xf32>
    %140 = arith.addf %134, %139 : vector<256x8xf32>
    %141 = vector.extract_strided_slice %1 {offsets = [4, 3, 0], sizes = [16, 16, 128], strides = [1, 1, 1]} : vector<20x20x128xbf16> to vector<16x16x128xbf16>
    %142 = vector.shape_cast %141 : vector<16x16x128xbf16> to vector<256x128xbf16>
    %c4_114 = arith.constant 4 : index
    %c3_115 = arith.constant 3 : index
    %c0_116 = arith.constant 0 : index
    %c0_117 = arith.constant 0 : index
    %143 = vector.load %arg3[%c4_114, %c3_115, %c0_116, %c0_117] : memref<5x5x128x8xbf16, #tpu.memory_space<vmem>>, vector<1x1x128x8xbf16>
    %144 = vector.shape_cast %143 : vector<1x1x128x8xbf16> to vector<128x8xbf16>
    %cst_118 = arith.constant dense<0.000000e+00> : vector<256x8xf32>
    %145 = tpu.matmul %142, %144, %cst_118 {dimension_numbers = #tpu.dot_dimension_numbers<[1], [0], [0], [1], [0, 0, 1, 1], [], []>} : vector<256x128xbf16>, vector<128x8xbf16>, vector<256x8xf32> -> vector<256x8xf32>
    %146 = arith.addf %140, %145 : vector<256x8xf32>
    %147 = vector.extract_strided_slice %1 {offsets = [4, 4, 0], sizes = [16, 16, 128], strides = [1, 1, 1]} : vector<20x20x128xbf16> to vector<16x16x128xbf16>
    %148 = vector.shape_cast %147 : vector<16x16x128xbf16> to vector<256x128xbf16>
    %c4_119 = arith.constant 4 : index
    %c4_120 = arith.constant 4 : index
    %c0_121 = arith.constant 0 : index
    %c0_122 = arith.constant 0 : index
    %149 = vector.load %arg3[%c4_119, %c4_120, %c0_121, %c0_122] : memref<5x5x128x8xbf16, #tpu.memory_space<vmem>>, vector<1x1x128x8xbf16>
    %150 = vector.shape_cast %149 : vector<1x1x128x8xbf16> to vector<128x8xbf16>
    %cst_123 = arith.constant dense<0.000000e+00> : vector<256x8xf32>
    %151 = tpu.matmul %148, %150, %cst_123 {dimension_numbers = #tpu.dot_dimension_numbers<[1], [0], [0], [1], [0, 0, 1, 1], [], []>} : vector<256x128xbf16>, vector<128x8xbf16>, vector<256x8xf32> -> vector<256x8xf32>
    %152 = arith.addf %146, %151 : vector<256x8xf32>
    %153 = vector.shape_cast %152 : vector<256x8xf32> to vector<16x16x8xf32>
    %c0_124 = arith.constant 0 : index
    %c0_125 = arith.constant 0 : index
    %c0_126 = arith.constant 0 : index
    %c0_127 = arith.constant 0 : index
    %154 = vector.load %arg1[%c0_124, %c0_125, %c0_126, %c0_127] : memref<1x16x16x16xf32, #tpu.memory_space<vmem>>, vector<1x16x16x16xf32>
    %155 = vector.shape_cast %154 : vector<1x16x16x16xf32> to vector<16x16x16xf32>
    %156 = tpu.concatenate %155, %153 in 2 : vector<16x16x16xf32>, vector<16x16x8xf32> -> vector<16x16x24xf32>
    %c0_128 = arith.constant 0 : index
    %c0_129 = arith.constant 0 : index
    %c0_130 = arith.constant 0 : index
    %c0_131 = arith.constant 0 : index
    %157 = vector.load %arg4[%c0_128, %c0_129, %c0_130, %c0_131] : memref<1x16x16x24xf32, #tpu.memory_space<vmem>>, vector<1x16x16x24xf32>
    %158 = vector.shape_cast %157 : vector<1x16x16x24xf32> to vector<16x16x24xf32>
    %159 = vector.shape_cast %156 : vector<16x16x24xf32> to vector<1x16x16x24xf32>
    tpu.vector_store %arg4[%c0_128, %c0_129, %c0_130, %c0_131], %159 {strides = array<i32>} : memref<1x16x16x24xf32, #tpu.memory_space<vmem>>, vector<1x16x16x24xf32>,
    return
  }
  func.func @transform_0(%arg0: i32) -> (i32, i32, i32, i32) {
    %c0_i32 = arith.constant 0 : i32
    %c0_i32_0 = arith.constant 0 : i32
    %c0_i32_1 = arith.constant 0 : i32
    %c0_i32_2 = arith.constant 0 : i32
    return %arg0, %c0_i32, %c0_i32_0, %c0_i32_1 : i32, i32, i32, i32
  }
  func.func @transform_1(%arg0: i32) -> (i32, i32, i32, i32) {
    %c0_i32 = arith.constant 0 : i32
    %c0_i32_0 = arith.constant 0 : i32
    %c0_i32_1 = arith.constant 0 : i32
    %c0_i32_2 = arith.constant 0 : i32
    return %arg0, %c0_i32, %c0_i32_0, %c0_i32_1 : i32, i32, i32, i32
  }
  func.func @transform_2(%arg0: i32) -> (i32, i32, i32, i32) {
    %c0_i32 = arith.constant 0 : i32
    %c0_i32_0 = arith.constant 0 : i32
    %c0_i32_1 = arith.constant 0 : i32
    %c0_i32_2 = arith.constant 0 : i32
    %c0_i32_3 = arith.constant 0 : i32
    return %c0_i32, %c0_i32_0, %c0_i32_1, %c0_i32_2 : i32, i32, i32, i32
  }
  func.func @transform_3(%arg0: i32) -> (i32, i32, i32, i32) {
    %c0_i32 = arith.constant 0 : i32
    %c0_i32_0 = arith.constant 0 : i32
    %c0_i32_1 = arith.constant 0 : i32
    %c0_i32_2 = arith.constant 0 : i32
    return %arg0, %c0_i32, %c0_i32_0, %c0_i32_1 : i32, i32, i32, i32
  }
}

</mosaic_0001>

<llo_original>
// kernel: bottleneck_block1_forward.2
$region0: #{bottleneck_block1_forward.2}
  #allocation0 [shape = 'u32[]', space=smem, size = 0x4, offset = 0x4, fixed_abs, tag = 'smem constant byte address 0x4 - core index']
  #allocation1 [shape = 'u32[144,128]{1,0:T(1,128)}', space=vmem, size = 0x12000, scoped, tag = 'internal scratch']
  #allocation2 [shape = 'f32[256,128]{1,0:T(8,128)}', space=vmem, size = 0x20000, scoped, tag = 'scratch operand']
  %s0 = inlined_call_operand.vmem [shape: bf16[512,16], index: 0, kind: input, shape index: {}]
  %s1 = inlined_call_operand.vmem [shape: f32[1,16], index: 1, kind: input, shape index: {}]
  %s2 = inlined_call_operand.vmem [shape: f32[1,16], index: 2, kind: input, shape index: {}]
  %s3 = inlined_call_operand.vmem [shape: bf16[16,128], index: 3, kind: input, shape index: {}]
  %s4 = inlined_call_operand.vmem [shape: f32[1,128], index: 4, kind: input, shape index: {}]
  %s5 = inlined_call_operand.vmem [shape: f32[1,128], index: 5, kind: input, shape index: {}]
  %s6 = inlined_call_operand.vmem [shape: bf16[512,128], index: 6, kind: output, shape index: {}]
  %s7 = sld [smem:[#allocation0]]
  $region65: #{bottleneck_block1_forward.2} parent=0
    _
  %s9 = ssub.s32 1, %s7
  %s10 = scalar_select 0, %s9, %s7
  loop: start=0, step=1, limit=4
  $region2: #{bottleneck_block1_forward.2} parent=0 // loop_pre_header
    _
  $region3: #{bottleneck_block1_forward.2} parent=0 // loop_header
    %s12 = sphi 0, %s16
    %p13 = scmp.ge.s32.totalorder %s12, 4
    %s19 = sphi 0, %s38
    %s20 = sphi 0, %s34
    %s21 = sphi 0, %s30
    %s22 = sphi 0, %s19
    %s23 = sphi 0, %s20
    %s24 = sphi 0, %s21
    %s25 = sphi 0, %s22
    %s26 = sphi 0, %s23
    %s27 = sphi 0, %s24
    %s43 = sphi 0, %s45
    %s46 = sphi 0, %s43
    %s47 = sphi 0, %s46
    %s63 = sphi 0, %s47
    %s69 = sphi 0, %s71
    %s72 = sphi 0, %s69
    %s73 = sphi 0, %s72
    %s89 = sphi 0, %s73
    %s95 = sphi 0, %s97
    %s98 = sphi 0, %s95
    %s99 = sphi 0, %s98
    %s115 = sphi 0, %s99
    %s123 = sphi 0, %s125
    %s126 = sphi 0, %s123
    %s127 = sphi 0, %s126
    %s143 = sphi 0, %s127
    %s149 = sphi 0, %s151
    %s152 = sphi 0, %s149
    %s153 = sphi 0, %s152
    %s169 = sphi 0, %s153
    %s175 = sphi 0, %s177
    %s178 = sphi 0, %s175
    %s179 = sphi 0, %s178
    %s195 = sphi 0, %s179
    %s203 = sphi 0, %s205
    %s206 = sphi 0, %s203
    %s207 = sphi 0, %s206
    %s223 = sphi 0, %s207
  $region4: #{bottleneck_block1_forward.2} parent=0 // loop_header_branch
    %15 = sbr.rel (%p13) target = $region8
  $region5: #{bottleneck_block1_forward.2} parent=0 // loop_body
    %s17 = ssub.s32 %s12, 1
    %s18 = ssub.s32 %s12, 2
    %s28 = sadd.s32 1, %s21
    %p29 = scmp.ge.s32.totalorder %s28, 1
    %s30 = scalar_select %p29, 0, %s28
    %s31 = sadd.s32 1, %s20
    %s32 = scalar_select %p29, %s31, %s20
    %p33 = scmp.ge.s32.totalorder %s32, 1
    %s34 = scalar_select %p33, 0, %s32
    %s35 = sadd.s32 1, %s19
    %s36 = scalar_select %p33, %s35, %s19
    %p37 = scmp.ge.s32.totalorder %s36, 2
    %s38 = scalar_select %p37, 0, %s36
    %s39 = ssub.s32 %s19, %s38
    %s40 = ssub.s32 %s21, %s30
    %s41 = sor.u32 %s39, %s40
    %p42 = scmp.eq.s32.totalorder %s41, 0
    %s44 = sadd.s32 %s43, 1
    %s45 = scalar_select %p42, %s43, %s44
    %p48 = pneg %p42
    %p49 = scmp.eq.s32.totalorder %s12, 1
    %p50 = por %p48, %p49
    %p51 = scmp.ne.s32.totalorder %s43, %s46
    %p52 = scmp.eq.s32.totalorder %s12, 0
    %p53 = por %p51, %p52
    %p54 = scmp.ne.s32.totalorder %s43, %s46
    %p55 = scmp.eq.s32.totalorder %s17, 1
    %p56 = por %p54, %p55
    %p57 = scmp.ne.s32.totalorder %s46, %s47
    %p58 = scmp.eq.s32.totalorder %s17, 0
    %p59 = por %p57, %p58
    %p60 = scmp.ne.s32.totalorder %s46, %s47
    %p61 = scmp.eq.s32.totalorder %s18, 1
    %p62 = por %p60, %p61
    %p64 = scmp.ne.s32.totalorder %s47, %s63
    %p65 = scmp.eq.s32.totalorder %s18, 0
    %p66 = por %p64, %p65
    %s67 = ssub.s32 %s21, %s30
    %p68 = scmp.eq.s32.totalorder %s67, 0
    %s70 = sadd.s32 %s69, 1
    %s71 = scalar_select %p68, %s69, %s70
    %p74 = pneg %p68
    %p75 = scmp.eq.s32.totalorder %s12, 1
    %p76 = por %p74, %p75
    %p77 = scmp.ne.s32.totalorder %s69, %s72
    %p78 = scmp.eq.s32.totalorder %s12, 0
    %p79 = por %p77, %p78
    %p80 = scmp.ne.s32.totalorder %s69, %s72
    %p81 = scmp.eq.s32.totalorder %s17, 1
    %p82 = por %p80, %p81
    %p83 = scmp.ne.s32.totalorder %s72, %s73
    %p84 = scmp.eq.s32.totalorder %s17, 0
    %p85 = por %p83, %p84
    %p86 = scmp.ne.s32.totalorder %s72, %s73
    %p87 = scmp.eq.s32.totalorder %s18, 1
    %p88 = por %p86, %p87
    %p90 = scmp.ne.s32.totalorder %s73, %s89
    %p91 = scmp.eq.s32.totalorder %s18, 0
    %p92 = por %p90, %p91
    %s93 = ssub.s32 %s21, %s30
    %p94 = scmp.eq.s32.totalorder %s93, 0
    %s96 = sadd.s32 %s95, 1
    %s97 = scalar_select %p94, %s95, %s96
    %p100 = pneg %p94
    %p101 = scmp.eq.s32.totalorder %s12, 1
    %p102 = por %p100, %p101
    %p103 = scmp.ne.s32.totalorder %s95, %s98
    %p104 = scmp.eq.s32.totalorder %s12, 0
    %p105 = por %p103, %p104
    %p106 = scmp.ne.s32.totalorder %s95, %s98
    %p107 = scmp.eq.s32.totalorder %s17, 1
    %p108 = por %p106, %p107
    %p109 = scmp.ne.s32.totalorder %s98, %s99
    %p110 = scmp.eq.s32.totalorder %s17, 0
    %p111 = por %p109, %p110
    %p112 = scmp.ne.s32.totalorder %s98, %s99
    %p113 = scmp.eq.s32.totalorder %s18, 1
    %p114 = por %p112, %p113
    %p116 = scmp.ne.s32.totalorder %s99, %s115
    %p117 = scmp.eq.s32.totalorder %s18, 0
    %p118 = por %p116, %p117
    %s119 = ssub.s32 %s21, %s30
    %s120 = ssub.s32 %s20, %s34
    %s121 = sor.u32 %s119, %s120
    %p122 = scmp.eq.s32.totalorder %s121, 0
    %s124 = sadd.s32 %s123, 1
    %s125 = scalar_select %p122, %s123, %s124
    %p128 = pneg %p122
    %p129 = scmp.eq.s32.totalorder %s12, 1
    %p130 = por %p128, %p129
    %p131 = scmp.ne.s32.totalorder %s123, %s126
    %p132 = scmp.eq.s32.totalorder %s12, 0
    %p133 = por %p131, %p132
    %p134 = scmp.ne.s32.totalorder %s123, %s126
    %p135 = scmp.eq.s32.totalorder %s17, 1
    %p136 = por %p134, %p135
    %p137 = scmp.ne.s32.totalorder %s126, %s127
    %p138 = scmp.eq.s32.totalorder %s17, 0
    %p139 = por %p137, %p138
    %p140 = scmp.ne.s32.totalorder %s126, %s127
    %p141 = scmp.eq.s32.totalorder %s18, 1
    %p142 = por %p140, %p141
    %p144 = scmp.ne.s32.totalorder %s127, %s143
    %p145 = scmp.eq.s32.totalorder %s18, 0
    %p146 = por %p144, %p145
    %s147 = ssub.s32 %s20, %s34
    %p148 = scmp.eq.s32.totalorder %s147, 0
    %s150 = sadd.s32 %s149, 1
    %s151 = scalar_select %p148, %s149, %s150
    %p154 = pneg %p148
    %p155 = scmp.eq.s32.totalorder %s12, 1
    %p156 = por %p154, %p155
    %p157 = scmp.ne.s32.totalorder %s149, %s152
    %p158 = scmp.eq.s32.totalorder %s12, 0
    %p159 = por %p157, %p158
    %p160 = scmp.ne.s32.totalorder %s149, %s152
    %p161 = scmp.eq.s32.totalorder %s17, 1
    %p162 = por %p160, %p161
    %p163 = scmp.ne.s32.totalorder %s152, %s153
    %p164 = scmp.eq.s32.totalorder %s17, 0
    %p165 = por %p163, %p164
    %p166 = scmp.ne.s32.totalorder %s152, %s153
    %p167 = scmp.eq.s32.totalorder %s18, 1
    %p168 = por %p166, %p167
    %p170 = scmp.ne.s32.totalorder %s153, %s169
    %p171 = scmp.eq.s32.totalorder %s18, 0
    %p172 = por %p170, %p171
    %s173 = ssub.s32 %s20, %s34
    %p174 = scmp.eq.s32.totalorder %s173, 0
    %s176 = sadd.s32 %s175, 1
    %s177 = scalar_select %p174, %s175, %s176
    %p180 = pneg %p174
    %p181 = scmp.eq.s32.totalorder %s12, 1
    %p182 = por %p180, %p181
    %p183 = scmp.ne.s32.totalorder %s175, %s178
    %p184 = scmp.eq.s32.totalorder %s12, 0
    %p185 = por %p183, %p184
    %p186 = scmp.ne.s32.totalorder %s175, %s178
    %p187 = scmp.eq.s32.totalorder %s17, 1
    %p188 = por %p186, %p187
    %p189 = scmp.ne.s32.totalorder %s178, %s179
    %p190 = scmp.eq.s32.totalorder %s17, 0
    %p191 = por %p189, %p190
    %p192 = scmp.ne.s32.totalorder %s178, %s179
    %p193 = scmp.eq.s32.totalorder %s18, 1
    %p194 = por %p192, %p193
    %p196 = scmp.ne.s32.totalorder %s179, %s195
    %p197 = scmp.eq.s32.totalorder %s18, 0
    %p198 = por %p196, %p197
    %s199 = ssub.s32 %s19, %s38
    %s200 = ssub.s32 %s20, %s34
    %s201 = sor.u32 %s199, %s200
    %p202 = scmp.eq.s32.totalorder %s201, 0
    %s204 = sadd.s32 %s203, 1
    %s205 = scalar_select %p202, %s203, %s204
    %p208 = pneg %p202
    %p209 = scmp.eq.s32.totalorder %s12, 1
    %p210 = por %p208, %p209
    %p211 = scmp.ne.s32.totalorder %s203, %s206
    %p212 = scmp.eq.s32.totalorder %s12, 0
    %p213 = por %p211, %p212
    %p214 = scmp.ne.s32.totalorder %s203, %s206
    %p215 = scmp.eq.s32.totalorder %s17, 1
    %p216 = por %p214, %p215
    %p217 = scmp.ne.s32.totalorder %s206, %s207
    %p218 = scmp.eq.s32.totalorder %s17, 0
    %p219 = por %p217, %p218
    %p220 = scmp.ne.s32.totalorder %s206, %s207
    %p221 = scmp.eq.s32.totalorder %s18, 1
    %p222 = por %p220, %p221
    %p224 = scmp.ne.s32.totalorder %s207, %s223
    %p225 = scmp.eq.s32.totalorder %s18, 0
    %p226 = por %p224, %p225
    %p227 = scmp.le.s32.totalorder 1, %s12
    %p228 = scmp.lt.s32.totalorder %s12, 3
    %p229 = pnand %p227, %p228
    %p230 = pneg %p229
    // Predicated region
    $region9: #{bottleneck_block1_forward.2} parent=5 // pred_check
      _
    $region10: #{bottleneck_block1_forward.2} parent=5 // pred_check_branch
      %232 = sbr.rel (%p229) target = $region12
    $region11: #{bottleneck_block1_forward.2} parent=5 // pred_region
      %s233 = ssub.s32 %s12, 1
      // Predicated region
      $region13: #{bottleneck_block1_forward.2} parent=11 // pred_check
        %p234 = pneg %p85
      $region14: #{bottleneck_block1_forward.2} parent=11 // pred_check_branch
        %236 = sbr.rel (%p234) target = $region16
      $region15: #{bottleneck_block1_forward.2} parent=11 // pred_region
        %p237 = scmp.lt.s32.totalorder %s24, 0
        %s238 = scalar_select %p237, %s24, 0
        %s239 = scalar_lea.vmem %s1, %s238
      $region16: #{bottleneck_block1_forward.2} parent=11 // pred_fallthru
        _
      // Predicated region
      $region17: #{bottleneck_block1_forward.2} parent=11 // pred_check
        %p240 = pneg %p111
      $region18: #{bottleneck_block1_forward.2} parent=11 // pred_check_branch
        %242 = sbr.rel (%p240) target = $region20
      $region19: #{bottleneck_block1_forward.2} parent=11 // pred_region
        %p243 = scmp.lt.s32.totalorder %s24, 0
        %s244 = scalar_select %p243, %s24, 0
        %s245 = scalar_lea.vmem %s2, %s244
      $region20: #{bottleneck_block1_forward.2} parent=11 // pred_fallthru
        _
      // Predicated region
      $region21: #{bottleneck_block1_forward.2} parent=11 // pred_check
        %p246 = pneg %p139
      $region22: #{bottleneck_block1_forward.2} parent=11 // pred_check_branch
        %248 = sbr.rel (%p246) target = $region24
      $region23: #{bottleneck_block1_forward.2} parent=11 // pred_region
        %s249 = smul.u32 2, %s24
        %p250 = scmp.lt.s32.totalorder %s249, 1
        %s251 = scalar_select %p250, %s249, 1
        %p252 = scmp.lt.s32.totalorder %s23, 0
        %s253 = scalar_select %p252, %s23, 0
        %s254 = sadd.s32 %s253, %s251
        %s255 = smul.addr %s254, 4
        %s256 = scalar_lea.vmem %s3, %s255
        %s257 = smul.u32 2, %s24
      $region24: #{bottleneck_block1_forward.2} parent=11 // pred_fallthru
        _
      // Predicated region
      $region25: #{bottleneck_block1_forward.2} parent=11 // pred_check
        %p258 = pneg %p165
      $region26: #{bottleneck_block1_forward.2} parent=11 // pred_check_branch
        %260 = sbr.rel (%p258) target = $region28
      $region27: #{bottleneck_block1_forward.2} parent=11 // pred_region
        %p261 = scmp.lt.s32.totalorder %s23, 0
        %s262 = scalar_select %p261, %s23, 0
        %s263 = scalar_lea.vmem %s4, %s262
      $region28: #{bottleneck_block1_forward.2} parent=11 // pred_fallthru
        _
      // Predicated region
      $region29: #{bottleneck_block1_forward.2} parent=11 // pred_check
        %p264 = pneg %p191
      $region30: #{bottleneck_block1_forward.2} parent=11 // pred_check_branch
        %266 = sbr.rel (%p264) target = $region32
      $region31: #{bottleneck_block1_forward.2} parent=11 // pred_region
        %p267 = scmp.lt.s32.totalorder %s23, 0
        %s268 = scalar_select %p267, %s23, 0
        %s269 = scalar_lea.vmem %s5, %s268
      $region32: #{bottleneck_block1_forward.2} parent=11 // pred_fallthru
        _
    $region12: #{bottleneck_block1_forward.2} parent=5 // pred_fallthru
      _
    %p270 = scmp.lt.s32.totalorder %s12, 2
    // Predicated region
    $region33: #{bottleneck_block1_forward.2} parent=5 // pred_check
      %p271 = pneg %p270
    $region34: #{bottleneck_block1_forward.2} parent=5 // pred_check_branch
      %273 = sbr.rel (%p271) target = $region36
    $region35: #{bottleneck_block1_forward.2} parent=5 // pred_region
      // Predicated region
      $region37: #{bottleneck_block1_forward.2} parent=35 // pred_check
        %p274 = pneg %p53
      $region38: #{bottleneck_block1_forward.2} parent=35 // pred_check_branch
        %276 = sbr.rel (%p274) target = $region40
      $region39: #{bottleneck_block1_forward.2} parent=35 // pred_region
        %s277 = smul.u32 32, %s19
        %p278 = scmp.lt.s32.totalorder %s277, 63
        %s279 = scalar_select %p278, %s277, 63
        %p280 = scmp.lt.s32.totalorder %s21, 0
        %s281 = scalar_select %p280, %s21, 0
        %s282 = sadd.s32 %s281, %s279
        %s283 = smul.addr %s282, 4
        %s284 = scalar_lea.vmem %s0, %s283
        %s285 = smul.u32 32, %s19
      $region40: #{bottleneck_block1_forward.2} parent=35 // pred_fallthru
        _
    $region36: #{bottleneck_block1_forward.2} parent=5 // pred_fallthru
      _
    %p286 = scmp.le.s32.totalorder 1, %s12
    %p287 = scmp.lt.s32.totalorder %s12, 3
    %p288 = pnand %p286, %p287
    %p289 = pneg %p288
    // Predicated region
    $region41: #{bottleneck_block1_forward.2} parent=5 // pred_check
      _
    $region42: #{bottleneck_block1_forward.2} parent=5 // pred_check_branch
      %291 = sbr.rel (%p288) target = $region44
    $region43: #{bottleneck_block1_forward.2} parent=5 // pred_region
      %s292 = ssub.s32 %s12, 1
      %s293 = smul.u32 32, %s22
      %p294 = scmp.lt.s32.totalorder %s293, 63
      %s295 = scalar_select %p294, %s293, 63
      %p296 = scmp.lt.s32.totalorder %s24, 0
      %s297 = scalar_select %p296, %s24, 0
      %s298 = sadd.s32 %s297, %s295
      %s299 = smul.addr %s298, 4
      %s300 = scalar_lea.vmem %s0, %s299
      %p301 = pneg %p59
      %p302 = pneg %p56
      %p303 = scmp.lt.s32.totalorder %s24, 0
      %s304 = scalar_select %p303, %s24, 0
      %s305 = scalar_lea.vmem %s1, %s304
      %p306 = pneg %p85
      %p307 = pneg %p82
      %p308 = scmp.lt.s32.totalorder %s24, 0
      %s309 = scalar_select %p308, %s24, 0
      %s310 = scalar_lea.vmem %s2, %s309
      %p311 = pneg %p111
      %p312 = pneg %p108
      %s313 = smul.u32 2, %s24
      %p314 = scmp.lt.s32.totalorder %s313, 1
      %s315 = scalar_select %p314, %s313, 1
      %p316 = scmp.lt.s32.totalorder %s23, 0
      %s317 = scalar_select %p316, %s23, 0
      %s318 = sadd.s32 %s317, %s315
      %s319 = smul.addr %s318, 4
      %s320 = scalar_lea.vmem %s3, %s319
      %p321 = pneg %p139
      %p322 = pneg %p136
      %p323 = scmp.lt.s32.totalorder %s23, 0
      %s324 = scalar_select %p323, %s23, 0
      %s325 = scalar_lea.vmem %s4, %s324
      %p326 = pneg %p165
      %p327 = pneg %p162
      %p328 = scmp.lt.s32.totalorder %s23, 0
      %s329 = scalar_select %p328, %s23, 0
      %s330 = scalar_lea.vmem %s5, %s329
      %p331 = pneg %p191
      %p332 = pneg %p188
      %p333 = pneg %p219
      %p334 = pneg %p216
      %s335 = smul.u32 32, %s22
      %p336 = scmp.lt.s32.totalorder %s335, 63
      %s337 = scalar_select %p336, %s335, 63
      %p338 = scmp.lt.s32.totalorder %s23, 0
      %s339 = scalar_select %p338, %s23, 0
      %s340 = sadd.s32 %s339, %s337
      %s341 = smul.addr %s340, 4
      %s342 = scalar_lea.vmem %s6, %s341
      %s343 = smul.u32 32, %s22
      %p344 = scmp.lt.s32.totalorder %s343, 63
      %s345 = scalar_select %p344, %s343, 63
      %p346 = scmp.lt.s32.totalorder %s24, 0
      %s347 = scalar_select %p346, %s24, 0
      %s348 = sadd.s32 %s347, %s345
      %s349 = smul.addr %s348, 4
      %s350 = scalar_lea.vmem %s0, %s349
      %s351 = smul.u32 32, %s22
      %p352 = scmp.lt.s32.totalorder %s24, 0
      %s353 = scalar_select %p352, %s24, 0
      %s354 = scalar_lea.vmem %s1, %s353
      %p355 = scmp.lt.s32.totalorder %s24, 0
      %s356 = scalar_select %p355, %s24, 0
      %s357 = scalar_lea.vmem %s2, %s356
      %s358 = smul.u32 2, %s24
      %p359 = scmp.lt.s32.totalorder %s358, 1
      %s360 = scalar_select %p359, %s358, 1
      %p361 = scmp.lt.s32.totalorder %s23, 0
      %s362 = scalar_select %p361, %s23, 0
      %s363 = sadd.s32 %s362, %s360
      %s364 = smul.addr %s363, 4
      %s365 = scalar_lea.vmem %s3, %s364
      %s366 = smul.u32 2, %s24
      %p367 = scmp.lt.s32.totalorder %s23, 0
      %s368 = scalar_select %p367, %s23, 0
      %s369 = scalar_lea.vmem %s4, %s368
      %p370 = scmp.lt.s32.totalorder %s23, 0
      %s371 = scalar_select %p370, %s23, 0
      %s372 = scalar_lea.vmem %s5, %s371
      %s373 = smul.u32 32, %s22
      %p374 = scmp.lt.s32.totalorder %s373, 63
      %s375 = scalar_select %p374, %s373, 63
      %p376 = scmp.lt.s32.totalorder %s23, 0
      %s377 = scalar_select %p376, %s23, 0
      %s378 = sadd.s32 %s377, %s375
      %s379 = smul.addr %s378, 4
      %s380 = scalar_lea.vmem %s6, %s379
      %s381 = smul.u32 32, %s22
      %p383 = scmp.eq.s32.totalorder %s24, 0
      // Predicated region
      $region45: #{bottleneck_block1_forward.2} parent=43 // pred_check
        %p384 = pneg %p383
      $region46: #{bottleneck_block1_forward.2} parent=43 // pred_check_branch
        %386 = sbr.rel (%p384) target = $region48
      $region47: #{bottleneck_block1_forward.2} parent=43 // pred_region
        %387 = vst [vmem:[#allocation2] sm:$0xff] 0.0
        %388 = vst [vmem:[#allocation2 + $0x8] sm:$0xff] 0.0
        %389 = vst [vmem:[#allocation2 + $0x10] sm:$0xff] 0.0
        %390 = vst [vmem:[#allocation2 + $0x18] sm:$0xff] 0.0
        %391 = vst [vmem:[#allocation2 + $0x20] sm:$0xff] 0.0
        %392 = vst [vmem:[#allocation2 + $0x28] sm:$0xff] 0.0
        %393 = vst [vmem:[#allocation2 + $0x30] sm:$0xff] 0.0
        %394 = vst [vmem:[#allocation2 + $0x38] sm:$0xff] 0.0
        %395 = vst [vmem:[#allocation2 + $0x40] sm:$0xff] 0.0
        %396 = vst [vmem:[#allocation2 + $0x48] sm:$0xff] 0.0
        %397 = vst [vmem:[#allocation2 + $0x50] sm:$0xff] 0.0
        %398 = vst [vmem:[#allocation2 + $0x58] sm:$0xff] 0.0
        %399 = vst [vmem:[#allocation2 + $0x60] sm:$0xff] 0.0
        %400 = vst [vmem:[#allocation2 + $0x68] sm:$0xff] 0.0
        %401 = vst [vmem:[#allocation2 + $0x70] sm:$0xff] 0.0
        %402 = vst [vmem:[#allocation2 + $0x78] sm:$0xff] 0.0
        %403 = vst [vmem:[#allocation2 + $0x80] sm:$0xff] 0.0
        %404 = vst [vmem:[#allocation2 + $0x88] sm:$0xff] 0.0
        %405 = vst [vmem:[#allocation2 + $0x90] sm:$0xff] 0.0
        %406 = vst [vmem:[#allocation2 + $0x98] sm:$0xff] 0.0
        %407 = vst [vmem:[#allocation2 + $0xa0] sm:$0xff] 0.0
        %408 = vst [vmem:[#allocation2 + $0xa8] sm:$0xff] 0.0
        %409 = vst [vmem:[#allocation2 + $0xb0] sm:$0xff] 0.0
        %410 = vst [vmem:[#allocation2 + $0xb8] sm:$0xff] 0.0
        %411 = vst [vmem:[#allocation2 + $0xc0] sm:$0xff] 0.0
        %412 = vst [vmem:[#allocation2 + $0xc8] sm:$0xff] 0.0
        %413 = vst [vmem:[#allocation2 + $0xd0] sm:$0xff] 0.0
        %414 = vst [vmem:[#allocation2 + $0xd8] sm:$0xff] 0.0
        %415 = vst [vmem:[#allocation2 + $0xe0] sm:$0xff] 0.0
        %416 = vst [vmem:[#allocation2 + $0xe8] sm:$0xff] 0.0
        %417 = vst [vmem:[#allocation2 + $0xf0] sm:$0xff] 0.0
        %418 = vst [vmem:[#allocation2 + $0xf8] sm:$0xff] 0.0
      $region48: #{bottleneck_block1_forward.2} parent=43 // pred_fallthru
        _
      %v419 = vld [vmem:[%s350] sm:$0xf]
      %v420 = vld [vmem:[%s350 + $0x4] sm:$0xf]
      %v421 = vld [vmem:[%s350 + $0x8] sm:$0xf]
      %v422 = vld [vmem:[%s350 + $0xc] sm:$0xf]
      %v423 = vld [vmem:[%s350 + $0x10] sm:$0xf]
      %v424 = vld [vmem:[%s350 + $0x14] sm:$0xf]
      %v425 = vld [vmem:[%s350 + $0x18] sm:$0xf]
      %v426 = vld [vmem:[%s350 + $0x1c] sm:$0xf]
      %v427 = vld [vmem:[%s350 + $0x20] sm:$0xf]
      %v428 = vld [vmem:[%s350 + $0x24] sm:$0xf]
      %v429 = vld [vmem:[%s350 + $0x28] sm:$0xf]
      %v430 = vld [vmem:[%s350 + $0x2c] sm:$0xf]
      %v431 = vld [vmem:[%s350 + $0x30] sm:$0xf]
      %v432 = vld [vmem:[%s350 + $0x34] sm:$0xf]
      %v433 = vld [vmem:[%s350 + $0x38] sm:$0xf]
      %v434 = vld [vmem:[%s350 + $0x3c] sm:$0xf]
      %v435 = vld [vmem:[%s350 + $0x40] sm:$0xf]
      %v436 = vld [vmem:[%s350 + $0x44] sm:$0xf]
      %v437 = vld [vmem:[%s350 + $0x48] sm:$0xf]
      %v438 = vld [vmem:[%s350 + $0x4c] sm:$0xf]
      %v439 = vld [vmem:[%s350 + $0x50] sm:$0xf]
      %v440 = vld [vmem:[%s350 + $0x54] sm:$0xf]
      %v441 = vld [vmem:[%s350 + $0x58] sm:$0xf]
      %v442 = vld [vmem:[%s350 + $0x5c] sm:$0xf]
      %v443 = vld [vmem:[%s350 + $0x60] sm:$0xf]
      %v444 = vld [vmem:[%s350 + $0x64] sm:$0xf]
      %v445 = vld [vmem:[%s350 + $0x68] sm:$0xf]
      %v446 = vld [vmem:[%s350 + $0x6c] sm:$0xf]
      %v447 = vld [vmem:[%s350 + $0x70] sm:$0xf]
      %v448 = vld [vmem:[%s350 + $0x74] sm:$0xf]
      %v449 = vld [vmem:[%s350 + $0x78] sm:$0xf]
      %v450 = vld [vmem:[%s350 + $0x7c] sm:$0xf]
      %v451 = vunpack.c.l.bf16 %v419
      %v452 = vunpack.c.l.bf16 %v420
      %v453 = vunpack.c.l.bf16 %v421
      %v454 = vunpack.c.l.bf16 %v422
      %v455 = vunpack.c.l.bf16 %v423
      %v456 = vunpack.c.l.bf16 %v424
      %v457 = vunpack.c.l.bf16 %v425
      %v458 = vunpack.c.l.bf16 %v426
      %v459 = vunpack.c.l.bf16 %v427
      %v460 = vunpack.c.l.bf16 %v428
      %v461 = vunpack.c.l.bf16 %v429
      %v462 = vunpack.c.l.bf16 %v430
      %v463 = vunpack.c.l.bf16 %v431
      %v464 = vunpack.c.l.bf16 %v432
      %v465 = vunpack.c.l.bf16 %v433
      %v466 = vunpack.c.l.bf16 %v434
      %v467 = vunpack.c.l.bf16 %v435
      %v468 = vunpack.c.l.bf16 %v436
      %v469 = vunpack.c.l.bf16 %v437
      %v470 = vunpack.c.l.bf16 %v438
      %v471 = vunpack.c.l.bf16 %v439
      %v472 = vunpack.c.l.bf16 %v440
      %v473 = vunpack.c.l.bf16 %v441
      %v474 = vunpack.c.l.bf16 %v442
      %v475 = vunpack.c.l.bf16 %v443
      %v476 = vunpack.c.l.bf16 %v444
      %v477 = vunpack.c.l.bf16 %v445
      %v478 = vunpack.c.l.bf16 %v446
      %v479 = vunpack.c.l.bf16 %v447
      %v480 = vunpack.c.l.bf16 %v448
      %v481 = vunpack.c.l.bf16 %v449
      %v482 = vunpack.c.l.bf16 %v450
      %v483 = vld [vmem:[%s354] sm:$0x1]
      %v485 = vlaneseq
      %v486 = vshrl.u32 %v485, 7
      %v487 = vsub.s32 0, %v486
      %v488 = vrot.slane %v483, %v487
      %v490 = vmul.f32 %v451, %v488
      %v491 = vmul.f32 %v452, %v488
      %v492 = vmul.f32 %v453, %v488
      %v493 = vmul.f32 %v454, %v488
      %v494 = vmul.f32 %v455, %v488
      %v495 = vmul.f32 %v456, %v488
      %v496 = vmul.f32 %v457, %v488
      %v497 = vmul.f32 %v458, %v488
      %v498 = vmul.f32 %v459, %v488
      %v499 = vmul.f32 %v460, %v488
      %v500 = vmul.f32 %v461, %v488
      %v501 = vmul.f32 %v462, %v488
      %v502 = vmul.f32 %v463, %v488
      %v503 = vmul.f32 %v464, %v488
      %v504 = vmul.f32 %v465, %v488
      %v505 = vmul.f32 %v466, %v488
      %v506 = vmul.f32 %v467, %v488
      %v507 = vmul.f32 %v468, %v488
      %v508 = vmul.f32 %v469, %v488
      %v509 = vmul.f32 %v470, %v488
      %v510 = vmul.f32 %v471, %v488
      %v511 = vmul.f32 %v472, %v488
      %v512 = vmul.f32 %v473, %v488
      %v513 = vmul.f32 %v474, %v488
      %v514 = vmul.f32 %v475, %v488
      %v515 = vmul.f32 %v476, %v488
      %v516 = vmul.f32 %v477, %v488
      %v517 = vmul.f32 %v478, %v488
      %v518 = vmul.f32 %v479, %v488
      %v519 = vmul.f32 %v480, %v488
      %v520 = vmul.f32 %v481, %v488
      %v521 = vmul.f32 %v482, %v488
      %v522 = vld [vmem:[%s357] sm:$0x1]
      %v524 = vlaneseq
      %v525 = vshrl.u32 %v524, 7
      %v526 = vsub.s32 0, %v525
      %v527 = vrot.slane %v522, %v526
      %v529 = vadd.f32 %v490, %v527
      %v530 = vadd.f32 %v491, %v527
      %v531 = vadd.f32 %v492, %v527
      %v532 = vadd.f32 %v493, %v527
      %v533 = vadd.f32 %v494, %v527
      %v534 = vadd.f32 %v495, %v527
      %v535 = vadd.f32 %v496, %v527
      %v536 = vadd.f32 %v497, %v527
      %v537 = vadd.f32 %v498, %v527
      %v538 = vadd.f32 %v499, %v527
      %v539 = vadd.f32 %v500, %v527
      %v540 = vadd.f32 %v501, %v527
      %v541 = vadd.f32 %v502, %v527
      %v542 = vadd.f32 %v503, %v527
      %v543 = vadd.f32 %v504, %v527
      %v544 = vadd.f32 %v505, %v527
      %v545 = vadd.f32 %v506, %v527
      %v546 = vadd.f32 %v507, %v527
      %v547 = vadd.f32 %v508, %v527
      %v548 = vadd.f32 %v509, %v527
      %v549 = vadd.f32 %v510, %v527
      %v550 = vadd.f32 %v511, %v527
      %v551 = vadd.f32 %v512, %v527
      %v552 = vadd.f32 %v513, %v527
      %v553 = vadd.f32 %v514, %v527
      %v554 = vadd.f32 %v515, %v527
      %v555 = vadd.f32 %v516, %v527
      %v556 = vadd.f32 %v517, %v527
      %v557 = vadd.f32 %v518, %v527
      %v558 = vadd.f32 %v519, %v527
      %v559 = vadd.f32 %v520, %v527
      %v560 = vadd.f32 %v521, %v527
      %v561 = vmax.f32 %v529, 0.0
      %v562 = vmax.f32 %v530, 0.0
      %v563 = vmax.f32 %v531, 0.0
      %v564 = vmax.f32 %v532, 0.0
      %v565 = vmax.f32 %v533, 0.0
      %v566 = vmax.f32 %v534, 0.0
      %v567 = vmax.f32 %v535, 0.0
      %v568 = vmax.f32 %v536, 0.0
      %v569 = vmax.f32 %v537, 0.0
      %v570 = vmax.f32 %v538, 0.0
      %v571 = vmax.f32 %v539, 0.0
      %v572 = vmax.f32 %v540, 0.0
      %v573 = vmax.f32 %v541, 0.0
      %v574 = vmax.f32 %v542, 0.0
      %v575 = vmax.f32 %v543, 0.0
      %v576 = vmax.f32 %v544, 0.0
      %v577 = vmax.f32 %v545, 0.0
      %v578 = vmax.f32 %v546, 0.0
      %v579 = vmax.f32 %v547, 0.0
      %v580 = vmax.f32 %v548, 0.0
      %v581 = vmax.f32 %v549, 0.0
      %v582 = vmax.f32 %v550, 0.0
      %v583 = vmax.f32 %v551, 0.0
      %v584 = vmax.f32 %v552, 0.0
      %v585 = vmax.f32 %v553, 0.0
      %v586 = vmax.f32 %v554, 0.0
      %v587 = vmax.f32 %v555, 0.0
      %v588 = vmax.f32 %v556, 0.0
      %v589 = vmax.f32 %v557, 0.0
      %v590 = vmax.f32 %v558, 0.0
      %v591 = vmax.f32 %v559, 0.0
      %v592 = vmax.f32 %v560, 0.0
      %v593 = vld [vmem:[#allocation2] sm:$0xff]
      %v594 = vld [vmem:[#allocation2 + $0x8] sm:$0xff]
      %v595 = vld [vmem:[#allocation2 + $0x10] sm:$0xff]
      %v596 = vld [vmem:[#allocation2 + $0x18] sm:$0xff]
      %v597 = vld [vmem:[#allocation2 + $0x20] sm:$0xff]
      %v598 = vld [vmem:[#allocation2 + $0x28] sm:$0xff]
      %v599 = vld [vmem:[#allocation2 + $0x30] sm:$0xff]
      %v600 = vld [vmem:[#allocation2 + $0x38] sm:$0xff]
      %v601 = vld [vmem:[#allocation2 + $0x40] sm:$0xff]
      %v602 = vld [vmem:[#allocation2 + $0x48] sm:$0xff]
      %v603 = vld [vmem:[#allocation2 + $0x50] sm:$0xff]
      %v604 = vld [vmem:[#allocation2 + $0x58] sm:$0xff]
      %v605 = vld [vmem:[#allocation2 + $0x60] sm:$0xff]
      %v606 = vld [vmem:[#allocation2 + $0x68] sm:$0xff]
      %v607 = vld [vmem:[#allocation2 + $0x70] sm:$0xff]
      %v608 = vld [vmem:[#allocation2 + $0x78] sm:$0xff]
      %v609 = vld [vmem:[#allocation2 + $0x80] sm:$0xff]
      %v610 = vld [vmem:[#allocation2 + $0x88] sm:$0xff]
      %v611 = vld [vmem:[#allocation2 + $0x90] sm:$0xff]
      %v612 = vld [vmem:[#allocation2 + $0x98] sm:$0xff]
      %v613 = vld [vmem:[#allocation2 + $0xa0] sm:$0xff]
      %v614 = vld [vmem:[#allocation2 + $0xa8] sm:$0xff]
      %v615 = vld [vmem:[#allocation2 + $0xb0] sm:$0xff]
      %v616 = vld [vmem:[#allocation2 + $0xb8] sm:$0xff]
      %v617 = vld [vmem:[#allocation2 + $0xc0] sm:$0xff]
      %v618 = vld [vmem:[#allocation2 + $0xc8] sm:$0xff]
      %v619 = vld [vmem:[#allocation2 + $0xd0] sm:$0xff]
      %v620 = vld [vmem:[#allocation2 + $0xd8] sm:$0xff]
      %v621 = vld [vmem:[#allocation2 + $0xe0] sm:$0xff]
      %v622 = vld [vmem:[#allocation2 + $0xe8] sm:$0xff]
      %v623 = vld [vmem:[#allocation2 + $0xf0] sm:$0xff]
      %v624 = vld [vmem:[#allocation2 + $0xf8] sm:$0xff]
      %v625 = vpack.c.bf16 %v562, %v561
      %v626 = vpack.c.bf16 %v564, %v563
      %v627 = vpack.c.bf16 %v566, %v565
      %v628 = vpack.c.bf16 %v568, %v567
      %v629 = vpack.c.bf16 %v570, %v569
      %v630 = vpack.c.bf16 %v572, %v571
      %v631 = vpack.c.bf16 %v574, %v573
      %v632 = vpack.c.bf16 %v576, %v575
      %v633 = vpack.c.bf16 %v578, %v577
      %v634 = vpack.c.bf16 %v580, %v579
      %v635 = vpack.c.bf16 %v582, %v581
      %v636 = vpack.c.bf16 %v584, %v583
      %v637 = vpack.c.bf16 %v586, %v585
      %v638 = vpack.c.bf16 %v588, %v587
      %v639 = vpack.c.bf16 %v590, %v589
      %v640 = vpack.c.bf16 %v592, %v591
      %v641 = vld [vmem:[%s365] sm:$0xf]
      %v642 = vld [vmem:[%s365 + $0x4] sm:$0xf]
      %v645 = vunpack.c.l.b16 %v641
      %v646 = vunpack.c.l.b16 %v642
      %v647 = vpack.c.b16 %v646, %v645
      %vm649 = vcmask 130048
      %v651 = vsel %vm649, %v625, 0
      %v654 = vsel %vm649, %v626, 0
      %v657 = vsel %vm649, %v627, 0
      %v660 = vsel %vm649, %v628, 0
      %v663 = vsel %vm649, %v629, 0
      %v666 = vsel %vm649, %v630, 0
      %v669 = vsel %vm649, %v631, 0
      %v672 = vsel %vm649, %v632, 0
      %v675 = vsel %vm649, %v633, 0
      %v678 = vsel %vm649, %v634, 0
      %v681 = vsel %vm649, %v635, 0
      %v684 = vsel %vm649, %v636, 0
      %v687 = vsel %vm649, %v637, 0
      %v690 = vsel %vm649, %v638, 0
      %v693 = vsel %vm649, %v639, 0
      %v696 = vsel %vm649, %v640, 0
      %698 = vmatprep.subr.bf16.mxu0 0
      %699 = vmatpush1.bf16.msra.mxu0 %v647
      %700 = vmatprep.subr.bf16.mxu0 0
      %701 = vmatpush1.bf16.msra.mxu0 0
      %702 = vmatprep.subr.bf16.mxu0 0
      %703 = vmatpush1.bf16.msra.mxu0 0
      %704 = vmatprep.subr.bf16.mxu0 0
      %705 = vmatpush1.bf16.msra.mxu0 0
      %706 = vmatprep.subr.bf16.mxu0 0
      %707 = vmatpush1.bf16.msra.mxu0 0
      %708 = vmatprep.subr.bf16.mxu0 0
      %709 = vmatpush1.bf16.msra.mxu0 0
      %710 = vmatprep.subr.bf16.mxu0 0
      %711 = vmatpush1.bf16.msra.mxu0 0
      %712 = vmatprep.subr.bf16.mxu0 0
      %713 = vmatpush1.bf16.msra.mxu0 0
      %714 = vmatprep.subr.bf16.mxu0 0
      %715 = vmatpush1.bf16.msra.mxu0 0
      %716 = vmatprep.subr.bf16.mxu0 0
      %717 = vmatpush1.bf16.msra.mxu0 0
      %718 = vmatprep.subr.bf16.mxu0 0
      %719 = vmatpush1.bf16.msra.mxu0 0
      %720 = vmatprep.subr.bf16.mxu0 0
      %721 = vmatpush1.bf16.msra.mxu0 0
      %722 = vmatprep.subr.bf16.mxu0 0
      %723 = vmatpush1.bf16.msra.mxu0 0
      %724 = vmatprep.subr.bf16.mxu0 0
      %725 = vmatpush1.bf16.msra.mxu0 0
      %726 = vmatprep.subr.bf16.mxu0 0
      %727 = vmatpush1.bf16.msra.mxu0 0
      %728 = vmatprep.subr.bf16.mxu0 0
      %729 = vmatpush1.bf16.msra.mxu0 0
      %730 = vmatprep.mubr.bf16.mxu0 0
      %731 = vmatmul.mubr.bf16.gmra.mrb[0].mxu0 %v651
      %v732 = vpop.f32.mrb[0].mxu0
      %v733 = vadd.f32 0.0, %v732
      %v734 = vpop.f32.mrb[0].mxu0
      %v735 = vpop.f32.mrb[0].mxu0
      %v736 = vadd.f32 0.0, %v735
      %v737 = vpop.f32.mrb[0].mxu0
      %738 = vmatprep.mubr.bf16.mxu0 0
      %739 = vmatmul.mubr.bf16.gmra.mrb[0].mxu0 %v654
      %v740 = vpop.f32.mrb[0].mxu0
      %v741 = vadd.f32 0.0, %v740
      %v742 = vpop.f32.mrb[0].mxu0
      %v743 = vpop.f32.mrb[0].mxu0
      %v744 = vadd.f32 0.0, %v743
      %v745 = vpop.f32.mrb[0].mxu0
      %746 = vmatprep.mubr.bf16.mxu0 0
      %747 = vmatmul.mubr.bf16.gmra.mrb[0].mxu0 %v657
      %v748 = vpop.f32.mrb[0].mxu0
      %v749 = vadd.f32 0.0, %v748
      %v750 = vpop.f32.mrb[0].mxu0
      %v751 = vpop.f32.mrb[0].mxu0
      %v752 = vadd.f32 0.0, %v751
      %v753 = vpop.f32.mrb[0].mxu0
      %754 = vmatprep.mubr.bf16.mxu0 0
      %755 = vmatmul.mubr.bf16.gmra.mrb[0].mxu0 %v660
      %v756 = vpop.f32.mrb[0].mxu0
      %v757 = vadd.f32 0.0, %v756
      %v758 = vpop.f32.mrb[0].mxu0
      %v759 = vpop.f32.mrb[0].mxu0
      %v760 = vadd.f32 0.0, %v759
      %v761 = vpop.f32.mrb[0].mxu0
      %762 = vmatprep.mubr.bf16.mxu0 0
      %763 = vmatmul.mubr.bf16.gmra.mrb[0].mxu0 %v663
      %v764 = vpop.f32.mrb[0].mxu0
      %v765 = vadd.f32 0.0, %v764
      %v766 = vpop.f32.mrb[0].mxu0
      %v767 = vpop.f32.mrb[0].mxu0
      %v768 = vadd.f32 0.0, %v767
      %v769 = vpop.f32.mrb[0].mxu0
      %770 = vmatprep.mubr.bf16.mxu0 0
      %771 = vmatmul.mubr.bf16.gmra.mrb[0].mxu0 %v666
      %v772 = vpop.f32.mrb[0].mxu0
      %v773 = vadd.f32 0.0, %v772
      %v774 = vpop.f32.mrb[0].mxu0
      %v775 = vpop.f32.mrb[0].mxu0
      %v776 = vadd.f32 0.0, %v775
      %v777 = vpop.f32.mrb[0].mxu0
      %778 = vmatprep.mubr.bf16.mxu0 0
      %779 = vmatmul.mubr.bf16.gmra.mrb[0].mxu0 %v669
      %v780 = vpop.f32.mrb[0].mxu0
      %v781 = vadd.f32 0.0, %v780
      %v782 = vpop.f32.mrb[0].mxu0
      %v783 = vpop.f32.mrb[0].mxu0
      %v784 = vadd.f32 0.0, %v783
      %v785 = vpop.f32.mrb[0].mxu0
      %786 = vmatprep.mubr.bf16.mxu0 0
      %787 = vmatmul.mubr.bf16.gmra.mrb[0].mxu0 %v672
      %v788 = vpop.f32.mrb[0].mxu0
      %v789 = vadd.f32 0.0, %v788
      %v790 = vpop.f32.mrb[0].mxu0
      %v791 = vpop.f32.mrb[0].mxu0
      %v792 = vadd.f32 0.0, %v791
      %v793 = vpop.f32.mrb[0].mxu0
      %794 = vmatprep.mubr.bf16.mxu0 0
      %795 = vmatmul.mubr.bf16.gmra.mrb[0].mxu0 %v675
      %v796 = vpop.f32.mrb[0].mxu0
      %v797 = vadd.f32 0.0, %v796
      %v798 = vpop.f32.mrb[0].mxu0
      %v799 = vpop.f32.mrb[0].mxu0
      %v800 = vadd.f32 0.0, %v799
      %v801 = vpop.f32.mrb[0].mxu0
      %802 = vmatprep.mubr.bf16.mxu0 0
      %803 = vmatmul.mubr.bf16.gmra.mrb[0].mxu0 %v678
      %v804 = vpop.f32.mrb[0].mxu0
      %v805 = vadd.f32 0.0, %v804
      %v806 = vpop.f32.mrb[0].mxu0
      %v807 = vpop.f32.mrb[0].mxu0
      %v808 = vadd.f32 0.0, %v807
      %v809 = vpop.f32.mrb[0].mxu0
      %810 = vmatprep.mubr.bf16.mxu0 0
      %811 = vmatmul.mubr.bf16.gmra.mrb[0].mxu0 %v681
      %v812 = vpop.f32.mrb[0].mxu0
      %v813 = vadd.f32 0.0, %v812
      %v814 = vpop.f32.mrb[0].mxu0
      %v815 = vpop.f32.mrb[0].mxu0
      %v816 = vadd.f32 0.0, %v815
      %v817 = vpop.f32.mrb[0].mxu0
      %818 = vmatprep.mubr.bf16.mxu0 0
      %819 = vmatmul.mubr.bf16.gmra.mrb[0].mxu0 %v684
      %v820 = vpop.f32.mrb[0].mxu0
      %v821 = vadd.f32 0.0, %v820
      %v822 = vpop.f32.mrb[0].mxu0
      %v823 = vpop.f32.mrb[0].mxu0
      %v824 = vadd.f32 0.0, %v823
      %v825 = vpop.f32.mrb[0].mxu0
      %826 = vmatprep.mubr.bf16.mxu0 0
      %827 = vmatmul.mubr.bf16.gmra.mrb[0].mxu0 %v687
      %v828 = vpop.f32.mrb[0].mxu0
      %v829 = vadd.f32 0.0, %v828
      %v830 = vpop.f32.mrb[0].mxu0
      %v831 = vpop.f32.mrb[0].mxu0
      %v832 = vadd.f32 0.0, %v831
      %v833 = vpop.f32.mrb[0].mxu0
      %834 = vmatprep.mubr.bf16.mxu0 0
      %835 = vmatmul.mubr.bf16.gmra.mrb[0].mxu0 %v690
      %v836 = vpop.f32.mrb[0].mxu0
      %v837 = vadd.f32 0.0, %v836
      %v838 = vpop.f32.mrb[0].mxu0
      %v839 = vpop.f32.mrb[0].mxu0
      %v840 = vadd.f32 0.0, %v839
      %v841 = vpop.f32.mrb[0].mxu0
      %842 = vmatprep.mubr.bf16.mxu0 0
      %843 = vmatmul.mubr.bf16.gmra.mrb[0].mxu0 %v693
      %v844 = vpop.f32.mrb[0].mxu0
      %v845 = vadd.f32 0.0, %v844
      %v846 = vpop.f32.mrb[0].mxu0
      %v847 = vpop.f32.mrb[0].mxu0
      %v848 = vadd.f32 0.0, %v847
      %v849 = vpop.f32.mrb[0].mxu0
      %850 = vmatprep.mubr.bf16.mxu0 0
      %851 = vmatmul.mubr.bf16.gmra.mrb[0].mxu0 %v696
      %v852 = vpop.f32.mrb[0].mxu0
      %v853 = vadd.f32 0.0, %v852
      %v854 = vpop.f32.mrb[0].mxu0
      %v855 = vpop.f32.mrb[0].mxu0
      %v856 = vadd.f32 0.0, %v855
      %v857 = vpop.f32.mrb[0].mxu0
      %858 = vdwg.mxu0
      %v859 = vadd.f32 %v593, %v733
      %v860 = vadd.f32 %v594, %v736
      %v861 = vadd.f32 %v595, %v741
      %v862 = vadd.f32 %v596, %v744
      %v863 = vadd.f32 %v597, %v749
      %v864 = vadd.f32 %v598, %v752
      %v865 = vadd.f32 %v599, %v757
      %v866 = vadd.f32 %v600, %v760
      %v867 = vadd.f32 %v601, %v765
      %v868 = vadd.f32 %v602, %v768
      %v869 = vadd.f32 %v603, %v773
      %v870 = vadd.f32 %v604, %v776
      %v871 = vadd.f32 %v605, %v781
      %v872 = vadd.f32 %v606, %v784
      %v873 = vadd.f32 %v607, %v789
      %v874 = vadd.f32 %v608, %v792
      %v875 = vadd.f32 %v609, %v797
      %v876 = vadd.f32 %v610, %v800
      %v877 = vadd.f32 %v611, %v805
      %v878 = vadd.f32 %v612, %v808
      %v879 = vadd.f32 %v613, %v813
      %v880 = vadd.f32 %v614, %v816
      %v881 = vadd.f32 %v615, %v821
      %v882 = vadd.f32 %v616, %v824
      %v883 = vadd.f32 %v617, %v829
      %v884 = vadd.f32 %v618, %v832
      %v885 = vadd.f32 %v619, %v837
      %v886 = vadd.f32 %v620, %v840
      %v887 = vadd.f32 %v621, %v845
      %v888 = vadd.f32 %v622, %v848
      %v889 = vadd.f32 %v623, %v853
      %v890 = vadd.f32 %v624, %v856
      %891 = vst [vmem:[#allocation2] sm:$0xff] %v859
      %892 = vst [vmem:[#allocation2 + $0x8] sm:$0xff] %v860
      %893 = vst [vmem:[#allocation2 + $0x10] sm:$0xff] %v861
      %894 = vst [vmem:[#allocation2 + $0x18] sm:$0xff] %v862
      %895 = vst [vmem:[#allocation2 + $0x20] sm:$0xff] %v863
      %896 = vst [vmem:[#allocation2 + $0x28] sm:$0xff] %v864
      %897 = vst [vmem:[#allocation2 + $0x30] sm:$0xff] %v865
      %898 = vst [vmem:[#allocation2 + $0x38] sm:$0xff] %v866
      %899 = vst [vmem:[#allocation2 + $0x40] sm:$0xff] %v867
      %900 = vst [vmem:[#allocation2 + $0x48] sm:$0xff] %v868
      %901 = vst [vmem:[#allocation2 + $0x50] sm:$0xff] %v869
      %902 = vst [vmem:[#allocation2 + $0x58] sm:$0xff] %v870
      %903 = vst [vmem:[#allocation2 + $0x60] sm:$0xff] %v871
      %904 = vst [vmem:[#allocation2 + $0x68] sm:$0xff] %v872
      %905 = vst [vmem:[#allocation2 + $0x70] sm:$0xff] %v873
      %906 = vst [vmem:[#allocation2 + $0x78] sm:$0xff] %v874
      %907 = vst [vmem:[#allocation2 + $0x80] sm:$0xff] %v875
      %908 = vst [vmem:[#allocation2 + $0x88] sm:$0xff] %v876
      %909 = vst [vmem:[#allocation2 + $0x90] sm:$0xff] %v877
      %910 = vst [vmem:[#allocation2 + $0x98] sm:$0xff] %v878
      %911 = vst [vmem:[#allocation2 + $0xa0] sm:$0xff] %v879
      %912 = vst [vmem:[#allocation2 + $0xa8] sm:$0xff] %v880
      %913 = vst [vmem:[#allocation2 + $0xb0] sm:$0xff] %v881
      %914 = vst [vmem:[#allocation2 + $0xb8] sm:$0xff] %v882
      %915 = vst [vmem:[#allocation2 + $0xc0] sm:$0xff] %v883
      %916 = vst [vmem:[#allocation2 + $0xc8] sm:$0xff] %v884
      %917 = vst [vmem:[#allocation2 + $0xd0] sm:$0xff] %v885
      %918 = vst [vmem:[#allocation2 + $0xd8] sm:$0xff] %v886
      %919 = vst [vmem:[#allocation2 + $0xe0] sm:$0xff] %v887
      %920 = vst [vmem:[#allocation2 + $0xe8] sm:$0xff] %v888
      %921 = vst [vmem:[#allocation2 + $0xf0] sm:$0xff] %v889
      %922 = vst [vmem:[#allocation2 + $0xf8] sm:$0xff] %v890
      // Predicated region
      $region49: #{bottleneck_block1_forward.2} parent=43 // pred_check
        %p923 = pneg %p383
      $region50: #{bottleneck_block1_forward.2} parent=43 // pred_check_branch
        %925 = sbr.rel (%p923) target = $region52
      $region51: #{bottleneck_block1_forward.2} parent=43 // pred_region
        %v926 = vld [vmem:[#allocation2] sm:$0xff]
        %v927 = vld [vmem:[#allocation2 + $0x8] sm:$0xff]
        %v928 = vld [vmem:[#allocation2 + $0x10] sm:$0xff]
        %v929 = vld [vmem:[#allocation2 + $0x18] sm:$0xff]
        %v930 = vld [vmem:[#allocation2 + $0x20] sm:$0xff]
        %v931 = vld [vmem:[#allocation2 + $0x28] sm:$0xff]
        %v932 = vld [vmem:[#allocation2 + $0x30] sm:$0xff]
        %v933 = vld [vmem:[#allocation2 + $0x38] sm:$0xff]
        %v934 = vld [vmem:[#allocation2 + $0x40] sm:$0xff]
        %v935 = vld [vmem:[#allocation2 + $0x48] sm:$0xff]
        %v936 = vld [vmem:[#allocation2 + $0x50] sm:$0xff]
        %v937 = vld [vmem:[#allocation2 + $0x58] sm:$0xff]
        %v938 = vld [vmem:[#allocation2 + $0x60] sm:$0xff]
        %v939 = vld [vmem:[#allocation2 + $0x68] sm:$0xff]
        %v940 = vld [vmem:[#allocation2 + $0x70] sm:$0xff]
        %v941 = vld [vmem:[#allocation2 + $0x78] sm:$0xff]
        %v942 = vld [vmem:[#allocation2 + $0x80] sm:$0xff]
        %v943 = vld [vmem:[#allocation2 + $0x88] sm:$0xff]
        %v944 = vld [vmem:[#allocation2 + $0x90] sm:$0xff]
        %v945 = vld [vmem:[#allocation2 + $0x98] sm:$0xff]
        %v946 = vld [vmem:[#allocation2 + $0xa0] sm:$0xff]
        %v947 = vld [vmem:[#allocation2 + $0xa8] sm:$0xff]
        %v948 = vld [vmem:[#allocation2 + $0xb0] sm:$0xff]
        %v949 = vld [vmem:[#allocation2 + $0xb8] sm:$0xff]
        %v950 = vld [vmem:[#allocation2 + $0xc0] sm:$0xff]
        %v951 = vld [vmem:[#allocation2 + $0xc8] sm:$0xff]
        %v952 = vld [vmem:[#allocation2 + $0xd0] sm:$0xff]
        %v953 = vld [vmem:[#allocation2 + $0xd8] sm:$0xff]
        %v954 = vld [vmem:[#allocation2 + $0xe0] sm:$0xff]
        %v955 = vld [vmem:[#allocation2 + $0xe8] sm:$0xff]
        %v956 = vld [vmem:[#allocation2 + $0xf0] sm:$0xff]
        %v957 = vld [vmem:[#allocation2 + $0xf8] sm:$0xff]
        %v958 = vld [vmem:[%s369] sm:$0x1]
        %v960 = vlaneseq
        %v961 = vshrl.u32 %v960, 7
        %v962 = vsub.s32 0, %v961
        %v963 = vrot.slane %v958, %v962
        %v965 = vmul.f32 %v926, %v963
        %v966 = vmul.f32 %v927, %v963
        %v967 = vmul.f32 %v928, %v963
        %v968 = vmul.f32 %v929, %v963
        %v969 = vmul.f32 %v930, %v963
        %v970 = vmul.f32 %v931, %v963
        %v971 = vmul.f32 %v932, %v963
        %v972 = vmul.f32 %v933, %v963
        %v973 = vmul.f32 %v934, %v963
        %v974 = vmul.f32 %v935, %v963
        %v975 = vmul.f32 %v936, %v963
        %v976 = vmul.f32 %v937, %v963
        %v977 = vmul.f32 %v938, %v963
        %v978 = vmul.f32 %v939, %v963
        %v979 = vmul.f32 %v940, %v963
        %v980 = vmul.f32 %v941, %v963
        %v981 = vmul.f32 %v942, %v963
        %v982 = vmul.f32 %v943, %v963
        %v983 = vmul.f32 %v944, %v963
        %v984 = vmul.f32 %v945, %v963
        %v985 = vmul.f32 %v946, %v963
        %v986 = vmul.f32 %v947, %v963
        %v987 = vmul.f32 %v948, %v963
        %v988 = vmul.f32 %v949, %v963
        %v989 = vmul.f32 %v950, %v963
        %v990 = vmul.f32 %v951, %v963
        %v991 = vmul.f32 %v952, %v963
        %v992 = vmul.f32 %v953, %v963
        %v993 = vmul.f32 %v954, %v963
        %v994 = vmul.f32 %v955, %v963
        %v995 = vmul.f32 %v956, %v963
        %v996 = vmul.f32 %v957, %v963
        %v997 = vld [vmem:[%s372] sm:$0x1]
        %v999 = vlaneseq
        %v1000 = vshrl.u32 %v999, 7
        %v1001 = vsub.s32 0, %v1000
        %v1002 = vrot.slane %v997, %v1001
        %v1004 = vadd.f32 %v965, %v1002
        %v1005 = vadd.f32 %v966, %v1002
        %v1006 = vadd.f32 %v967, %v1002
        %v1007 = vadd.f32 %v968, %v1002
        %v1008 = vadd.f32 %v969, %v1002
        %v1009 = vadd.f32 %v970, %v1002
        %v1010 = vadd.f32 %v971, %v1002
        %v1011 = vadd.f32 %v972, %v1002
        %v1012 = vadd.f32 %v973, %v1002
        %v1013 = vadd.f32 %v974, %v1002
        %v1014 = vadd.f32 %v975, %v1002
        %v1015 = vadd.f32 %v976, %v1002
        %v1016 = vadd.f32 %v977, %v1002
        %v1017 = vadd.f32 %v978, %v1002
        %v1018 = vadd.f32 %v979, %v1002
        %v1019 = vadd.f32 %v980, %v1002
        %v1020 = vadd.f32 %v981, %v1002
        %v1021 = vadd.f32 %v982, %v1002
        %v1022 = vadd.f32 %v983, %v1002
        %v1023 = vadd.f32 %v984, %v1002
        %v1024 = vadd.f32 %v985, %v1002
        %v1025 = vadd.f32 %v986, %v1002
        %v1026 = vadd.f32 %v987, %v1002
        %v1027 = vadd.f32 %v988, %v1002
        %v1028 = vadd.f32 %v989, %v1002
        %v1029 = vadd.f32 %v990, %v1002
        %v1030 = vadd.f32 %v991, %v1002
        %v1031 = vadd.f32 %v992, %v1002
        %v1032 = vadd.f32 %v993, %v1002
        %v1033 = vadd.f32 %v994, %v1002
        %v1034 = vadd.f32 %v995, %v1002
        %v1035 = vadd.f32 %v996, %v1002
        %v1036 = vmax.f32 %v1004, 0.0
        %v1037 = vmax.f32 %v1005, 0.0
        %v1038 = vmax.f32 %v1006, 0.0
        %v1039 = vmax.f32 %v1007, 0.0
        %v1040 = vmax.f32 %v1008, 0.0
        %v1041 = vmax.f32 %v1009, 0.0
        %v1042 = vmax.f32 %v1010, 0.0
        %v1043 = vmax.f32 %v1011, 0.0
        %v1044 = vmax.f32 %v1012, 0.0
        %v1045 = vmax.f32 %v1013, 0.0
        %v1046 = vmax.f32 %v1014, 0.0
        %v1047 = vmax.f32 %v1015, 0.0
        %v1048 = vmax.f32 %v1016, 0.0
        %v1049 = vmax.f32 %v1017, 0.0
        %v1050 = vmax.f32 %v1018, 0.0
        %v1051 = vmax.f32 %v1019, 0.0
        %v1052 = vmax.f32 %v1020, 0.0
        %v1053 = vmax.f32 %v1021, 0.0
        %v1054 = vmax.f32 %v1022, 0.0
        %v1055 = vmax.f32 %v1023, 0.0
        %v1056 = vmax.f32 %v1024, 0.0
        %v1057 = vmax.f32 %v1025, 0.0
        %v1058 = vmax.f32 %v1026, 0.0
        %v1059 = vmax.f32 %v1027, 0.0
        %v1060 = vmax.f32 %v1028, 0.0
        %v1061 = vmax.f32 %v1029, 0.0
        %v1062 = vmax.f32 %v1030, 0.0
        %v1063 = vmax.f32 %v1031, 0.0
        %v1064 = vmax.f32 %v1032, 0.0
        %v1065 = vmax.f32 %v1033, 0.0
        %v1066 = vmax.f32 %v1034, 0.0
        %v1067 = vmax.f32 %v1035, 0.0
        %v1068 = vpack.c.bf16 %v1037, %v1036
        %v1069 = vpack.c.bf16 %v1039, %v1038
        %v1070 = vpack.c.bf16 %v1041, %v1040
        %v1071 = vpack.c.bf16 %v1043, %v1042
        %v1072 = vpack.c.bf16 %v1045, %v1044
        %v1073 = vpack.c.bf16 %v1047, %v1046
        %v1074 = vpack.c.bf16 %v1049, %v1048
        %v1075 = vpack.c.bf16 %v1051, %v1050
        %v1076 = vpack.c.bf16 %v1053, %v1052
        %v1077 = vpack.c.bf16 %v1055, %v1054
        %v1078 = vpack.c.bf16 %v1057, %v1056
        %v1079 = vpack.c.bf16 %v1059, %v1058
        %v1080 = vpack.c.bf16 %v1061, %v1060
        %v1081 = vpack.c.bf16 %v1063, %v1062
        %v1082 = vpack.c.bf16 %v1065, %v1064
        %v1083 = vpack.c.bf16 %v1067, %v1066
        %v1100 = vunpack.c.l.b16 %v1068
        %v1101 = vunpack.c.h.b16 %v1068
        %v1102 = vunpack.c.l.b16 %v1069
        %v1103 = vunpack.c.h.b16 %v1069
        %v1104 = vunpack.c.l.b16 %v1070
        %v1105 = vunpack.c.h.b16 %v1070
        %v1106 = vunpack.c.l.b16 %v1071
        %v1107 = vunpack.c.h.b16 %v1071
        %v1108 = vunpack.c.l.b16 %v1072
        %v1109 = vunpack.c.h.b16 %v1072
        %v1110 = vunpack.c.l.b16 %v1073
        %v1111 = vunpack.c.h.b16 %v1073
        %v1112 = vunpack.c.l.b16 %v1074
        %v1113 = vunpack.c.h.b16 %v1074
        %v1114 = vunpack.c.l.b16 %v1075
        %v1115 = vunpack.c.h.b16 %v1075
        %v1116 = vunpack.c.l.b16 %v1076
        %v1117 = vunpack.c.h.b16 %v1076
        %v1118 = vunpack.c.l.b16 %v1077
        %v1119 = vunpack.c.h.b16 %v1077
        %v1120 = vunpack.c.l.b16 %v1078
        %v1121 = vunpack.c.h.b16 %v1078
        %v1122 = vunpack.c.l.b16 %v1079
        %v1123 = vunpack.c.h.b16 %v1079
        %v1124 = vunpack.c.l.b16 %v1080
        %v1125 = vunpack.c.h.b16 %v1080
        %v1126 = vunpack.c.l.b16 %v1081
        %v1127 = vunpack.c.h.b16 %v1081
        %v1128 = vunpack.c.l.b16 %v1082
        %v1129 = vunpack.c.h.b16 %v1082
        %v1130 = vunpack.c.l.b16 %v1083
        %v1131 = vunpack.c.h.b16 %v1083
        %v1132 = vpack.c.b16 %v1100, %v1100
        %v1133 = vpack.c.b16 %v1101, %v1101
        %v1134 = vpack.c.b16 %v1102, %v1102
        %v1135 = vpack.c.b16 %v1103, %v1103
        %v1136 = vpack.c.b16 %v1104, %v1104
        %v1137 = vpack.c.b16 %v1105, %v1105
        %v1138 = vpack.c.b16 %v1106, %v1106
        %v1139 = vpack.c.b16 %v1107, %v1107
        %v1140 = vpack.c.b16 %v1108, %v1108
        %v1141 = vpack.c.b16 %v1109, %v1109
        %v1142 = vpack.c.b16 %v1110, %v1110
        %v1143 = vpack.c.b16 %v1111, %v1111
        %v1144 = vpack.c.b16 %v1112, %v1112
        %v1145 = vpack.c.b16 %v1113, %v1113
        %v1146 = vpack.c.b16 %v1114, %v1114
        %v1147 = vpack.c.b16 %v1115, %v1115
        %v1148 = vpack.c.b16 %v1116, %v1116
        %v1149 = vpack.c.b16 %v1117, %v1117
        %v1150 = vpack.c.b16 %v1118, %v1118
        %v1151 = vpack.c.b16 %v1119, %v1119
        %v1152 = vpack.c.b16 %v1120, %v1120
        %v1153 = vpack.c.b16 %v1121, %v1121
        %v1154 = vpack.c.b16 %v1122, %v1122
        %v1155 = vpack.c.b16 %v1123, %v1123
        %v1156 = vpack.c.b16 %v1124, %v1124
        %v1157 = vpack.c.b16 %v1125, %v1125
        %v1158 = vpack.c.b16 %v1126, %v1126
        %v1159 = vpack.c.b16 %v1127, %v1127
        %v1160 = vpack.c.b16 %v1128, %v1128
        %v1161 = vpack.c.b16 %v1129, %v1129
        %v1162 = vpack.c.b16 %v1130, %v1130
        %v1163 = vpack.c.b16 %v1131, %v1131
        %1196 = vst [vmem:[%s380] sm:$0xf] %v1132
        %1197 = vst [vmem:[%s380 + $0x4] sm:$0xf] %v1133
        %1198 = vst [vmem:[%s380 + $0x8] sm:$0xf] %v1134
        %1199 = vst [vmem:[%s380 + $0xc] sm:$0xf] %v1135
        %1200 = vst [vmem:[%s380 + $0x10] sm:$0xf] %v1136
        %1201 = vst [vmem:[%s380 + $0x14] sm:$0xf] %v1137
        %1202 = vst [vmem:[%s380 + $0x18] sm:$0xf] %v1138
        %1203 = vst [vmem:[%s380 + $0x1c] sm:$0xf] %v1139
        %1204 = vst [vmem:[%s380 + $0x20] sm:$0xf] %v1140
        %1205 = vst [vmem:[%s380 + $0x24] sm:$0xf] %v1141
        %1206 = vst [vmem:[%s380 + $0x28] sm:$0xf] %v1142
        %1207 = vst [vmem:[%s380 + $0x2c] sm:$0xf] %v1143
        %1208 = vst [vmem:[%s380 + $0x30] sm:$0xf] %v1144
        %1209 = vst [vmem:[%s380 + $0x34] sm:$0xf] %v1145
        %1210 = vst [vmem:[%s380 + $0x38] sm:$0xf] %v1146
        %1211 = vst [vmem:[%s380 + $0x3c] sm:$0xf] %v1147
        %1212 = vst [vmem:[%s380 + $0x40] sm:$0xf] %v1148
        %1213 = vst [vmem:[%s380 + $0x44] sm:$0xf] %v1149
        %1214 = vst [vmem:[%s380 + $0x48] sm:$0xf] %v1150
        %1215 = vst [vmem:[%s380 + $0x4c] sm:$0xf] %v1151
        %1216 = vst [vmem:[%s380 + $0x50] sm:$0xf] %v1152
        %1217 = vst [vmem:[%s380 + $0x54] sm:$0xf] %v1153
        %1218 = vst [vmem:[%s380 + $0x58] sm:$0xf] %v1154
        %1219 = vst [vmem:[%s380 + $0x5c] sm:$0xf] %v1155
        %1220 = vst [vmem:[%s380 + $0x60] sm:$0xf] %v1156
        %1221 = vst [vmem:[%s380 + $0x64] sm:$0xf] %v1157
        %1222 = vst [vmem:[%s380 + $0x68] sm:$0xf] %v1158
        %1223 = vst [vmem:[%s380 + $0x6c] sm:$0xf] %v1159
        %1224 = vst [vmem:[%s380 + $0x70] sm:$0xf] %v1160
        %1225 = vst [vmem:[%s380 + $0x74] sm:$0xf] %v1161
        %1226 = vst [vmem:[%s380 + $0x78] sm:$0xf] %v1162
        %1227 = vst [vmem:[%s380 + $0x7c] sm:$0xf] %v1163
      $region52: #{bottleneck_block1_forward.2} parent=43 // pred_fallthru
        _
      %s1228 = smul.u32 32, %s22
      %p1229 = scmp.lt.s32.totalorder %s1228, 63
      %s1230 = scalar_select %p1229, %s1228, 63
      %p1231 = scmp.lt.s32.totalorder %s23, 0
      %s1232 = scalar_select %p1231, %s23, 0
      %s1233 = sadd.s32 %s1232, %s1230
      %s1234 = smul.addr %s1233, 4
      %s1235 = scalar_lea.vmem %s6, %s1234
      // Predicated region
      $region53: #{bottleneck_block1_forward.2} parent=43 // pred_check
        %p1236 = pneg %p216
      $region54: #{bottleneck_block1_forward.2} parent=43 // pred_check_branch
        %1238 = sbr.rel (%p1236) target = $region56
      $region55: #{bottleneck_block1_forward.2} parent=43 // pred_region
        %s1239 = smul.u32 32, %s22
      $region56: #{bottleneck_block1_forward.2} parent=43 // pred_fallthru
        _
    $region44: #{bottleneck_block1_forward.2} parent=5 // pred_fallthru
      _
    %p1240 = scmp.le.s32.totalorder 2, %s12
    // Predicated region
    $region57: #{bottleneck_block1_forward.2} parent=5 // pred_check
      %p1241 = pneg %p1240
    $region58: #{bottleneck_block1_forward.2} parent=5 // pred_check_branch
      %1243 = sbr.rel (%p1241) target = $region60
    $region59: #{bottleneck_block1_forward.2} parent=5 // pred_region
      %s1244 = ssub.s32 %s12, 2
      // Predicated region
      $region61: #{bottleneck_block1_forward.2} parent=59 // pred_check
        %p1245 = pneg %p222
      $region62: #{bottleneck_block1_forward.2} parent=59 // pred_check_branch
        %1247 = sbr.rel (%p1245) target = $region64
      $region63: #{bottleneck_block1_forward.2} parent=59 // pred_region
        %s1248 = smul.u32 32, %s25
        %p1249 = scmp.lt.s32.totalorder %s1248, 63
        %s1250 = scalar_select %p1249, %s1248, 63
        %p1251 = scmp.lt.s32.totalorder %s26, 0
        %s1252 = scalar_select %p1251, %s26, 0
        %s1253 = sadd.s32 %s1252, %s1250
        %s1254 = smul.addr %s1253, 4
        %s1255 = scalar_lea.vmem %s6, %s1254
      $region64: #{bottleneck_block1_forward.2} parent=59 // pred_fallthru
        _
    $region60: #{bottleneck_block1_forward.2} parent=5 // pred_fallthru
      _
  $region6: #{bottleneck_block1_forward.2} parent=0 // loop_footer
    %s16 = sadd.s32 1, %s12
  $region7: #{bottleneck_block1_forward.2} parent=0 // loop_footer_branch
    %11 = sbr.rel target = $region3
  $region8: #{bottleneck_block1_forward.2} parent=0 // loop_exit
    _

// kernel: bottleneck_block1_forward.3
$region0: #{bottleneck_block1_forward.3}
  #allocation0 [shape = 'u32[]', space=smem, size = 0x4, offset = 0x4, fixed_abs, tag = 'smem constant byte address 0x4 - core index']
  #allocation1 [shape = 'u32[144,128]{1,0:T(1,128)}', space=vmem, size = 0x12000, scoped, tag = 'internal scratch']
  %s0 = inlined_call_operand.vmem [shape: f32[2,16,16,16], index: 0, kind: input, shape index: {}]
  %s1 = inlined_call_operand.vmem [shape: bf16[2,20,20,128], index: 1, kind: input, shape index: {}]
  %s2 = inlined_call_operand.vmem [shape: bf16[5,5,128,8], index: 2, kind: input, shape index: {}]
  %s3 = inlined_call_operand.hbm [shape: f32[2,16,16,24], index: 3, kind: output, shape index: {}]
  %s4 = sld [smem:[#allocation0]]
  $region45: #{bottleneck_block1_forward.3} parent=0
    _
  %s6 = ssub.s32 1, %s4
  %s7 = scalar_select 0, %s6, %s4
  $region1: #{bottleneck_block1_forward.3} parent=0
    #allocation2 [shape = 'u8[262144]{0}', space=vmem, size = 0x40000, scoped, tag = 'output window, operand 0']
    #allocation3 [shape = 's32[2]{0}', space=sflag, size = 0x8, scoped, tag = 'scoped memory for bottleneck_block1_forward.3']
    %8 = vsyncpa [#allocation3], 0
    %s9 = scalar_lea.sflag [#allocation3], 1
    %10 = vsyncpa %s9, 0
    loop: start=0, step=1, limit=4
    $region2: #{bottleneck_block1_forward.3} parent=1 // loop_pre_header
      _
    $region3: #{bottleneck_block1_forward.3} parent=1 // loop_header
      %s12 = sphi 0, %s16
      %p13 = scmp.ge.s32.totalorder %s12, 4
      %s22 = sphi 0, %s24
      %s25 = sphi 0, %s22
      %s26 = sphi 0, %s25
      %s42 = sphi 0, %s26
      %s48 = sphi 0, %s50
      %s51 = sphi 0, %s48
      %s52 = sphi 0, %s51
      %s68 = sphi 0, %s52
      %s72 = sphi 0, %s72
      %s74 = sphi 0, %s72
      %s75 = sphi 0, %s74
      %s89 = sphi 0, %s75
      %s95 = sphi 0, %s97
      %s98 = sphi 0, %s95
      %s99 = sphi 0, %s98
      %s115 = sphi 0, %s99
    $region4: #{bottleneck_block1_forward.3} parent=1 // loop_header_branch
      %15 = sbr.rel (%p13) target = $region8
    $region5: #{bottleneck_block1_forward.3} parent=1 // loop_body
      %s17 = ssub.s32 %s12, 1
      %s18 = ssub.s32 %s12, 2
      %s19 = sadd.s32 %s12, 1
      %s20 = ssub.s32 %s12, %s19
      %p21 = scmp.eq.s32.totalorder %s20, 0
      %s23 = sadd.s32 %s22, 1
      %s24 = scalar_select %p21, %s22, %s23
      %p27 = pneg %p21
      %p28 = scmp.eq.s32.totalorder %s12, 1
      %p29 = por %p27, %p28
      %p30 = scmp.ne.s32.totalorder %s22, %s25
      %p31 = scmp.eq.s32.totalorder %s12, 0
      %p32 = por %p30, %p31
      %p33 = scmp.ne.s32.totalorder %s22, %s25
      %p34 = scmp.eq.s32.totalorder %s17, 1
      %p35 = por %p33, %p34
      %p36 = scmp.ne.s32.totalorder %s25, %s26
      %p37 = scmp.eq.s32.totalorder %s17, 0
      %p38 = por %p36, %p37
      %p39 = scmp.ne.s32.totalorder %s25, %s26
      %p40 = scmp.eq.s32.totalorder %s18, 1
      %p41 = por %p39, %p40
      %p43 = scmp.ne.s32.totalorder %s26, %s42
      %p44 = scmp.eq.s32.totalorder %s18, 0
      %p45 = por %p43, %p44
      %s46 = ssub.s32 %s12, %s19
      %p47 = scmp.eq.s32.totalorder %s46, 0
      %s49 = sadd.s32 %s48, 1
      %s50 = scalar_select %p47, %s48, %s49
      %p53 = pneg %p47
      %p54 = scmp.eq.s32.totalorder %s12, 1
      %p55 = por %p53, %p54
      %p56 = scmp.ne.s32.totalorder %s48, %s51
      %p57 = scmp.eq.s32.totalorder %s12, 0
      %p58 = por %p56, %p57
      %p59 = scmp.ne.s32.totalorder %s48, %s51
      %p60 = scmp.eq.s32.totalorder %s17, 1
      %p61 = por %p59, %p60
      %p62 = scmp.ne.s32.totalorder %s51, %s52
      %p63 = scmp.eq.s32.totalorder %s17, 0
      %p64 = por %p62, %p63
      %p65 = scmp.ne.s32.totalorder %s51, %s52
      %p66 = scmp.eq.s32.totalorder %s18, 1
      %p67 = por %p65, %p66
      %p69 = scmp.ne.s32.totalorder %s52, %s68
      %p70 = scmp.eq.s32.totalorder %s18, 0
      %p71 = por %p69, %p70
      %s73 = sadd.s32 %s72, 1
      %p76 = scmp.eq.s32.totalorder %s12, 1
      %p77 = scmp.ne.s32.totalorder %s72, %s74
      %p78 = scmp.eq.s32.totalorder %s12, 0
      %p79 = por %p77, %p78
      %p80 = scmp.ne.s32.totalorder %s72, %s74
      %p81 = scmp.eq.s32.totalorder %s17, 1
      %p82 = por %p80, %p81
      %p83 = scmp.ne.s32.totalorder %s74, %s75
      %p84 = scmp.eq.s32.totalorder %s17, 0
      %p85 = por %p83, %p84
      %p86 = scmp.ne.s32.totalorder %s74, %s75
      %p87 = scmp.eq.s32.totalorder %s18, 1
      %p88 = por %p86, %p87
      %p90 = scmp.ne.s32.totalorder %s75, %s89
      %p91 = scmp.eq.s32.totalorder %s18, 0
      %p92 = por %p90, %p91
      %s93 = ssub.s32 %s12, %s19
      %p94 = scmp.eq.s32.totalorder %s93, 0
      %s96 = sadd.s32 %s95, 1
      %s97 = scalar_select %p94, %s95, %s96
      %p100 = pneg %p94
      %p101 = scmp.eq.s32.totalorder %s12, 1
      %p102 = por %p100, %p101
      %p103 = scmp.ne.s32.totalorder %s95, %s98
      %p104 = scmp.eq.s32.totalorder %s12, 0
      %p105 = por %p103, %p104
      %p106 = scmp.ne.s32.totalorder %s95, %s98
      %p107 = scmp.eq.s32.totalorder %s17, 1
      %p108 = por %p106, %p107
      %p109 = scmp.ne.s32.totalorder %s98, %s99
      %p110 = scmp.eq.s32.totalorder %s17, 0
      %p111 = por %p109, %p110
      %p112 = scmp.ne.s32.totalorder %s98, %s99
      %p113 = scmp.eq.s32.totalorder %s18, 1
      %p114 = por %p112, %p113
      %p116 = scmp.ne.s32.totalorder %s99, %s115
      %p117 = scmp.eq.s32.totalorder %s18, 0
      %p118 = por %p116, %p117
      %p119 = scmp.le.s32.totalorder 1, %s12
      %p120 = scmp.lt.s32.totalorder %s12, 3
      %p121 = pnand %p119, %p120
      %p122 = pneg %p121
      // Predicated region
      $region9: #{bottleneck_block1_forward.3} parent=5 // pred_check
        _
      $region10: #{bottleneck_block1_forward.3} parent=5 // pred_check_branch
        %124 = sbr.rel (%p121) target = $region12
      $region11: #{bottleneck_block1_forward.3} parent=5 // pred_region
        %s125 = ssub.s32 %s12, 1
        // Predicated region
        $region13: #{bottleneck_block1_forward.3} parent=11 // pred_check
          %p126 = pneg %p85
        $region14: #{bottleneck_block1_forward.3} parent=11 // pred_check_branch
          %128 = sbr.rel (%p126) target = $region16
        $region15: #{bottleneck_block1_forward.3} parent=11 // pred_region
          _
        $region16: #{bottleneck_block1_forward.3} parent=11 // pred_fallthru
          _
      $region12: #{bottleneck_block1_forward.3} parent=5 // pred_fallthru
        _
      %p129 = scmp.lt.s32.totalorder %s12, 2
      // Predicated region
      $region17: #{bottleneck_block1_forward.3} parent=5 // pred_check
        %p130 = pneg %p129
      $region18: #{bottleneck_block1_forward.3} parent=5 // pred_check_branch
        %132 = sbr.rel (%p130) target = $region20
      $region19: #{bottleneck_block1_forward.3} parent=5 // pred_region
        // Predicated region
        $region21: #{bottleneck_block1_forward.3} parent=19 // pred_check
          %p133 = pneg %p32
        $region22: #{bottleneck_block1_forward.3} parent=19 // pred_check_branch
          %135 = sbr.rel (%p133) target = $region24
        $region23: #{bottleneck_block1_forward.3} parent=19 // pred_region
          %p136 = scmp.lt.s32.totalorder %s12, 1
          %s137 = scalar_select %p136, %s12, 1
          %s138 = smul.addr %s137, 32
          %s139 = smul.addr %s138, 8
          %s140 = scalar_lea.vmem %s0, %s139
        $region24: #{bottleneck_block1_forward.3} parent=19 // pred_fallthru
          _
        // Predicated region
        $region25: #{bottleneck_block1_forward.3} parent=19 // pred_check
          %p141 = pneg %p58
        $region26: #{bottleneck_block1_forward.3} parent=19 // pred_check_branch
          %143 = sbr.rel (%p141) target = $region28
        $region27: #{bottleneck_block1_forward.3} parent=19 // pred_region
          %p144 = scmp.lt.s32.totalorder %s12, 1
          %s145 = scalar_select %p144, %s12, 1
          %s146 = smul.addr %s145, 60
          %s147 = smul.addr %s146, 4
          %s148 = scalar_lea.vmem %s1, %s147
        $region28: #{bottleneck_block1_forward.3} parent=19 // pred_fallthru
          _
      $region20: #{bottleneck_block1_forward.3} parent=5 // pred_fallthru
        _
      %p149 = scmp.le.s32.totalorder 1, %s12
      %p150 = scmp.lt.s32.totalorder %s12, 3
      %p151 = pnand %p149, %p150
      %p152 = pneg %p151
      // Predicated region
      $region29: #{bottleneck_block1_forward.3} parent=5 // pred_check
        _
      $region30: #{bottleneck_block1_forward.3} parent=5 // pred_check_branch
        %154 = sbr.rel (%p151) target = $region32
      $region31: #{bottleneck_block1_forward.3} parent=5 // pred_region
        %s155 = ssub.s32 %s12, 1
        %p156 = scmp.lt.s32.totalorder %s17, 1
        %s157 = scalar_select %p156, %s17, 1
        %s158 = smul.addr %s157, 32
        %s159 = smul.addr %s158, 8
        %s160 = scalar_lea.vmem %s0, %s159
        %p161 = pneg %p38
        %p162 = pneg %p35
        %p163 = scmp.lt.s32.totalorder %s17, 1
        %s164 = scalar_select %p163, %s17, 1
        %s165 = smul.addr %s164, 60
        %s166 = smul.addr %s165, 4
        %s167 = scalar_lea.vmem %s1, %s166
        %p168 = pneg %p64
        %p169 = pneg %p61
        %p170 = pneg %p85
        %p171 = pneg %p82
        %p172 = pneg %p111
        %p173 = pneg %p108
        %s174 = sand.u32 %s98, 1
        %s175 = scalar_lea.sflag [#allocation3], %s174
        %s176 = sand.u32 %s98, 1
        %s177 = smul.addr %s176, 256
        %s178 = scalar_lea.vmem [#allocation2], %s177
        %p179 = scmp.lt.s32.totalorder %s17, 1
        %s180 = scalar_select %p179, %s17, 1
        %s181 = smul.addr %s180, 32
        %s182 = smul.addr %s181, 8
        %s183 = scalar_lea.vmem %s0, %s182
        %p184 = scmp.lt.s32.totalorder %s17, 1
        %s185 = scalar_select %p184, %s17, 1
        %s186 = smul.addr %s185, 60
        %s187 = smul.addr %s186, 4
        %s188 = scalar_lea.vmem %s1, %s187
        %v190 = vld [vmem:[%s188] sm:$0xf]
        %v191 = vld [vmem:[%s188 + $0x4] sm:$0xf]
        %v192 = vld [vmem:[%s188 + $0x8] sm:$0x3]
        %v193 = vld [vmem:[%s188 + $0xc] sm:$0xf]
        %v194 = vld [vmem:[%s188 + $0x10] sm:$0xf]
        %v195 = vld [vmem:[%s188 + $0x14] sm:$0x3]
        %v196 = vld [vmem:[%s188 + $0x18] sm:$0xf]
        %v197 = vld [vmem:[%s188 + $0x1c] sm:$0xf]
        %v198 = vld [vmem:[%s188 + $0x20] sm:$0x3]
        %v199 = vld [vmem:[%s188 + $0x24] sm:$0xf]
        %v200 = vld [vmem:[%s188 + $0x28] sm:$0xf]
        %v201 = vld [vmem:[%s188 + $0x2c] sm:$0x3]
        %v202 = vld [vmem:[%s188 + $0x30] sm:$0xf]
        %v203 = vld [vmem:[%s188 + $0x34] sm:$0xf]
        %v204 = vld [vmem:[%s188 + $0x38] sm:$0x3]
        %v205 = vld [vmem:[%s188 + $0x3c] sm:$0xf]
        %v206 = vld [vmem:[%s188 + $0x40] sm:$0xf]
        %v207 = vld [vmem:[%s188 + $0x44] sm:$0x3]
        %v208 = vld [vmem:[%s188 + $0x48] sm:$0xf]
        %v209 = vld [vmem:[%s188 + $0x4c] sm:$0xf]
        %v210 = vld [vmem:[%s188 + $0x50] sm:$0x3]
        %v211 = vld [vmem:[%s188 + $0x54] sm:$0xf]
        %v212 = vld [vmem:[%s188 + $0x58] sm:$0xf]
        %v213 = vld [vmem:[%s188 + $0x5c] sm:$0x3]
        %v214 = vld [vmem:[%s188 + $0x60] sm:$0xf]
        %v215 = vld [vmem:[%s188 + $0x64] sm:$0xf]
        %v216 = vld [vmem:[%s188 + $0x68] sm:$0x3]
        %v217 = vld [vmem:[%s188 + $0x6c] sm:$0xf]
        %v218 = vld [vmem:[%s188 + $0x70] sm:$0xf]
        %v219 = vld [vmem:[%s188 + $0x74] sm:$0x3]
        %v220 = vld [vmem:[%s188 + $0x78] sm:$0xf]
        %v221 = vld [vmem:[%s188 + $0x7c] sm:$0xf]
        %v222 = vld [vmem:[%s188 + $0x80] sm:$0x3]
        %v223 = vld [vmem:[%s188 + $0x84] sm:$0xf]
        %v224 = vld [vmem:[%s188 + $0x88] sm:$0xf]
        %v225 = vld [vmem:[%s188 + $0x8c] sm:$0x3]
        %v226 = vld [vmem:[%s188 + $0x90] sm:$0xf]
        %v227 = vld [vmem:[%s188 + $0x94] sm:$0xf]
        %v228 = vld [vmem:[%s188 + $0x98] sm:$0x3]
        %v229 = vld [vmem:[%s188 + $0x9c] sm:$0xf]
        %v230 = vld [vmem:[%s188 + $0xa0] sm:$0xf]
        %v231 = vld [vmem:[%s188 + $0xa4] sm:$0x3]
        %v232 = vld [vmem:[%s188 + $0xa8] sm:$0xf]
        %v233 = vld [vmem:[%s188 + $0xac] sm:$0xf]
        %v234 = vld [vmem:[%s188 + $0xb0] sm:$0x3]
        %v235 = vld [vmem:[%s188 + $0xb4] sm:$0xf]
        %v236 = vld [vmem:[%s188 + $0xb8] sm:$0xf]
        %v237 = vld [vmem:[%s188 + $0xbc] sm:$0x3]
        %v238 = vld [vmem:[%s188 + $0xc0] sm:$0xf]
        %v239 = vld [vmem:[%s188 + $0xc4] sm:$0xf]
        %v240 = vld [vmem:[%s188 + $0xc8] sm:$0x3]
        %v241 = vld [vmem:[%s188 + $0xcc] sm:$0xf]
        %v242 = vld [vmem:[%s188 + $0xd0] sm:$0xf]
        %v243 = vld [vmem:[%s188 + $0xd4] sm:$0x3]
        %v244 = vld [vmem:[%s188 + $0xd8] sm:$0xf]
        %v245 = vld [vmem:[%s188 + $0xdc] sm:$0xf]
        %v246 = vld [vmem:[%s188 + $0xe0] sm:$0x3]
        %v247 = vld [vmem:[%s188 + $0xe4] sm:$0xf]
        %v248 = vld [vmem:[%s188 + $0xe8] sm:$0xf]
        %v249 = vld [vmem:[%s188 + $0xec] sm:$0x3]
        %v250 = vld [vmem:[%s2] sm:$0xf]
        %v251 = vld [vmem:[%s2 + $0x4] sm:$0xf]
        %v252 = vld [vmem:[%s2 + $0x8] sm:$0xf]
        %v253 = vld [vmem:[%s2 + $0xc] sm:$0xf]
        %v254 = vld [vmem:[%s2 + $0x10] sm:$0xf]
        %v255 = vld [vmem:[%s2 + $0x14] sm:$0xf]
        %v256 = vld [vmem:[%s2 + $0x18] sm:$0xf]
        %v257 = vld [vmem:[%s2 + $0x1c] sm:$0xf]
        %v258 = vld [vmem:[%s2 + $0x20] sm:$0xf]
        %v259 = vld [vmem:[%s2 + $0x24] sm:$0xf]
        %v260 = vld [vmem:[%s2 + $0x28] sm:$0xf]
        %v261 = vld [vmem:[%s2 + $0x2c] sm:$0xf]
        %v262 = vld [vmem:[%s2 + $0x30] sm:$0xf]
        %v263 = vld [vmem:[%s2 + $0x34] sm:$0xf]
        %v264 = vld [vmem:[%s2 + $0x38] sm:$0xf]
        %v265 = vld [vmem:[%s2 + $0x3c] sm:$0xf]
        %vm266 = vsmask.f32 3328
        %vm267 = vsmask.f32 7440
        %vm268 = vmor %vm266, %vm267
        %v270 = vshrl.u32 %v190, 16
        %v272 = vrot.slane %v270, 4
        %v273 = vshll.u32 %v190, 16
        %v275 = vrot.slane %v273, 5
        %v276 = vor.u32 %v272, %v275
        %v277 = vrot.slane %v276, 4
        %v279 = vshll.u32 %v191, 16
        %v281 = vrot.slane %v279, 5
        %v282 = vsel %vm268, %v277, %v281
        %v283 = vshrl.u32 %v191, 16
        %v285 = vrot.slane %v283, 4
        %v286 = vor.u32 %v285, %v281
        %v287 = vrot.slane %v286, 4
        %v289 = vshll.u32 %v192, 16
        %v291 = vrot.slane %v289, 5
        %v292 = vsel %vm268, %v287, %v291
        %v294 = vshrl.u32 %v193, 16
        %v296 = vrot.slane %v294, 4
        %v297 = vshll.u32 %v193, 16
        %v299 = vrot.slane %v297, 5
        %v300 = vor.u32 %v296, %v299
        %v301 = vrot.slane %v300, 4
        %v303 = vshll.u32 %v194, 16
        %v305 = vrot.slane %v303, 5
        %v306 = vsel %vm268, %v301, %v305
        %v307 = vshrl.u32 %v194, 16
        %v309 = vrot.slane %v307, 4
        %v310 = vor.u32 %v309, %v305
        %v311 = vrot.slane %v310, 4
        %v313 = vshll.u32 %v195, 16
        %v315 = vrot.slane %v313, 5
        %v316 = vsel %vm268, %v311, %v315
        %v318 = vshrl.u32 %v196, 16
        %v320 = vrot.slane %v318, 4
        %v321 = vshll.u32 %v196, 16
        %v323 = vrot.slane %v321, 5
        %v324 = vor.u32 %v320, %v323
        %v325 = vrot.slane %v324, 4
        %v327 = vshll.u32 %v197, 16
        %v329 = vrot.slane %v327, 5
        %v330 = vsel %vm268, %v325, %v329
        %v331 = vshrl.u32 %v197, 16
        %v333 = vrot.slane %v331, 4
        %v334 = vor.u32 %v333, %v329
        %v335 = vrot.slane %v334, 4
        %v337 = vshll.u32 %v198, 16
        %v339 = vrot.slane %v337, 5
        %v340 = vsel %vm268, %v335, %v339
        %v342 = vshrl.u32 %v199, 16
        %v344 = vrot.slane %v342, 4
        %v345 = vshll.u32 %v199, 16
        %v347 = vrot.slane %v345, 5
        %v348 = vor.u32 %v344, %v347
        %v349 = vrot.slane %v348, 4
        %v351 = vshll.u32 %v200, 16
        %v353 = vrot.slane %v351, 5
        %v354 = vsel %vm268, %v349, %v353
        %v355 = vshrl.u32 %v200, 16
        %v357 = vrot.slane %v355, 4
        %v358 = vor.u32 %v357, %v353
        %v359 = vrot.slane %v358, 4
        %v361 = vshll.u32 %v201, 16
        %v363 = vrot.slane %v361, 5
        %v364 = vsel %vm268, %v359, %v363
        %v366 = vshrl.u32 %v202, 16
        %v368 = vrot.slane %v366, 4
        %v369 = vshll.u32 %v202, 16
        %v371 = vrot.slane %v369, 5
        %v372 = vor.u32 %v368, %v371
        %v373 = vrot.slane %v372, 4
        %v375 = vshll.u32 %v203, 16
        %v377 = vrot.slane %v375, 5
        %v378 = vsel %vm268, %v373, %v377
        %v379 = vshrl.u32 %v203, 16
        %v381 = vrot.slane %v379, 4
        %v382 = vor.u32 %v381, %v377
        %v383 = vrot.slane %v382, 4
        %v385 = vshll.u32 %v204, 16
        %v387 = vrot.slane %v385, 5
        %v388 = vsel %vm268, %v383, %v387
        %v390 = vshrl.u32 %v205, 16
        %v392 = vrot.slane %v390, 4
        %v393 = vshll.u32 %v205, 16
        %v395 = vrot.slane %v393, 5
        %v396 = vor.u32 %v392, %v395
        %v397 = vrot.slane %v396, 4
        %v399 = vshll.u32 %v206, 16
        %v401 = vrot.slane %v399, 5
        %v402 = vsel %vm268, %v397, %v401
        %v403 = vshrl.u32 %v206, 16
        %v405 = vrot.slane %v403, 4
        %v406 = vor.u32 %v405, %v401
        %v407 = vrot.slane %v406, 4
        %v409 = vshll.u32 %v207, 16
        %v411 = vrot.slane %v409, 5
        %v412 = vsel %vm268, %v407, %v411
        %v414 = vshrl.u32 %v208, 16
        %v416 = vrot.slane %v414, 4
        %v417 = vshll.u32 %v208, 16
        %v419 = vrot.slane %v417, 5
        %v420 = vor.u32 %v416, %v419
        %v421 = vrot.slane %v420, 4
        %v423 = vshll.u32 %v209, 16
        %v425 = vrot.slane %v423, 5
        %v426 = vsel %vm268, %v421, %v425
        %v427 = vshrl.u32 %v209, 16
        %v429 = vrot.slane %v427, 4
        %v430 = vor.u32 %v429, %v425
        %v431 = vrot.slane %v430, 4
        %v433 = vshll.u32 %v210, 16
        %v435 = vrot.slane %v433, 5
        %v436 = vsel %vm268, %v431, %v435
        %v438 = vshrl.u32 %v211, 16
        %v440 = vrot.slane %v438, 4
        %v441 = vshll.u32 %v211, 16
        %v443 = vrot.slane %v441, 5
        %v444 = vor.u32 %v440, %v443
        %v445 = vrot.slane %v444, 4
        %v447 = vshll.u32 %v212, 16
        %v449 = vrot.slane %v447, 5
        %v450 = vsel %vm268, %v445, %v449
        %v451 = vshrl.u32 %v212, 16
        %v453 = vrot.slane %v451, 4
        %v454 = vor.u32 %v453, %v449
        %v455 = vrot.slane %v454, 4
        %v457 = vshll.u32 %v213, 16
        %v459 = vrot.slane %v457, 5
        %v460 = vsel %vm268, %v455, %v459
        %v462 = vshrl.u32 %v214, 16
        %v464 = vrot.slane %v462, 4
        %v465 = vshll.u32 %v214, 16
        %v467 = vrot.slane %v465, 5
        %v468 = vor.u32 %v464, %v467
        %v469 = vrot.slane %v468, 4
        %v471 = vshll.u32 %v215, 16
        %v473 = vrot.slane %v471, 5
        %v474 = vsel %vm268, %v469, %v473
        %v475 = vshrl.u32 %v215, 16
        %v477 = vrot.slane %v475, 4
        %v478 = vor.u32 %v477, %v473
        %v479 = vrot.slane %v478, 4
        %v481 = vshll.u32 %v216, 16
        %v483 = vrot.slane %v481, 5
        %v484 = vsel %vm268, %v479, %v483
        %v486 = vshrl.u32 %v217, 16
        %v488 = vrot.slane %v486, 4
        %v489 = vshll.u32 %v217, 16
        %v491 = vrot.slane %v489, 5
        %v492 = vor.u32 %v488, %v491
        %v493 = vrot.slane %v492, 4
        %v495 = vshll.u32 %v218, 16
        %v497 = vrot.slane %v495, 5
        %v498 = vsel %vm268, %v493, %v497
        %v499 = vshrl.u32 %v218, 16
        %v501 = vrot.slane %v499, 4
        %v502 = vor.u32 %v501, %v497
        %v503 = vrot.slane %v502, 4
        %v505 = vshll.u32 %v219, 16
        %v507 = vrot.slane %v505, 5
        %v508 = vsel %vm268, %v503, %v507
        %v510 = vshrl.u32 %v220, 16
        %v512 = vrot.slane %v510, 4
        %v513 = vshll.u32 %v220, 16
        %v515 = vrot.slane %v513, 5
        %v516 = vor.u32 %v512, %v515
        %v517 = vrot.slane %v516, 4
        %v519 = vshll.u32 %v221, 16
        %v521 = vrot.slane %v519, 5
        %v522 = vsel %vm268, %v517, %v521
        %v523 = vshrl.u32 %v221, 16
        %v525 = vrot.slane %v523, 4
        %v526 = vor.u32 %v525, %v521
        %v527 = vrot.slane %v526, 4
        %v529 = vshll.u32 %v222, 16
        %v531 = vrot.slane %v529, 5
        %v532 = vsel %vm268, %v527, %v531
        %v534 = vshrl.u32 %v223, 16
        %v536 = vrot.slane %v534, 4
        %v537 = vshll.u32 %v223, 16
        %v539 = vrot.slane %v537, 5
        %v540 = vor.u32 %v536, %v539
        %v541 = vrot.slane %v540, 4
        %v543 = vshll.u32 %v224, 16
        %v545 = vrot.slane %v543, 5
        %v546 = vsel %vm268, %v541, %v545
        %v547 = vshrl.u32 %v224, 16
        %v549 = vrot.slane %v547, 4
        %v550 = vor.u32 %v549, %v545
        %v551 = vrot.slane %v550, 4
        %v553 = vshll.u32 %v225, 16
        %v555 = vrot.slane %v553, 5
        %v556 = vsel %vm268, %v551, %v555
        %v558 = vshrl.u32 %v226, 16
        %v560 = vrot.slane %v558, 4
        %v561 = vshll.u32 %v226, 16
        %v563 = vrot.slane %v561, 5
        %v564 = vor.u32 %v560, %v563
        %v565 = vrot.slane %v564, 4
        %v567 = vshll.u32 %v227, 16
        %v569 = vrot.slane %v567, 5
        %v570 = vsel %vm268, %v565, %v569
        %v571 = vshrl.u32 %v227, 16
        %v573 = vrot.slane %v571, 4
        %v574 = vor.u32 %v573, %v569
        %v575 = vrot.slane %v574, 4
        %v577 = vshll.u32 %v228, 16
        %v579 = vrot.slane %v577, 5
        %v580 = vsel %vm268, %v575, %v579
        %v582 = vshrl.u32 %v229, 16
        %v584 = vrot.slane %v582, 4
        %v585 = vshll.u32 %v229, 16
        %v587 = vrot.slane %v585, 5
        %v588 = vor.u32 %v584, %v587
        %v589 = vrot.slane %v588, 4
        %v591 = vshll.u32 %v230, 16
        %v593 = vrot.slane %v591, 5
        %v594 = vsel %vm268, %v589, %v593
        %v595 = vshrl.u32 %v230, 16
        %v597 = vrot.slane %v595, 4
        %v598 = vor.u32 %v597, %v593
        %v599 = vrot.slane %v598, 4
        %v601 = vshll.u32 %v231, 16
        %v603 = vrot.slane %v601, 5
        %v604 = vsel %vm268, %v599, %v603
        %v606 = vshrl.u32 %v232, 16
        %v608 = vrot.slane %v606, 4
        %v609 = vshll.u32 %v232, 16
        %v611 = vrot.slane %v609, 5
        %v612 = vor.u32 %v608, %v611
        %v613 = vrot.slane %v612, 4
        %v615 = vshll.u32 %v233, 16
        %v617 = vrot.slane %v615, 5
        %v618 = vsel %vm268, %v613, %v617
        %v619 = vshrl.u32 %v233, 16
        %v621 = vrot.slane %v619, 4
        %v622 = vor.u32 %v621, %v617
        %v623 = vrot.slane %v622, 4
        %v625 = vshll.u32 %v234, 16
        %v627 = vrot.slane %v625, 5
        %v628 = vsel %vm268, %v623, %v627
        %v630 = vshrl.u32 %v235, 16
        %v632 = vrot.slane %v630, 4
        %v633 = vshll.u32 %v235, 16
        %v635 = vrot.slane %v633, 5
        %v636 = vor.u32 %v632, %v635
        %v637 = vrot.slane %v636, 4
        %v639 = vshll.u32 %v236, 16
        %v641 = vrot.slane %v639, 5
        %v642 = vsel %vm268, %v637, %v641
        %v643 = vshrl.u32 %v236, 16
        %v645 = vrot.slane %v643, 4
        %v646 = vor.u32 %v645, %v641
        %v647 = vrot.slane %v646, 4
        %v649 = vshll.u32 %v237, 16
        %v651 = vrot.slane %v649, 5
        %v652 = vsel %vm268, %v647, %v651
        %s653 = scalar_lea.vmem %s2, 64
        %v654 = vld [vmem:[%s653] sm:$0xf]
        %v655 = vld [vmem:[%s653 + $0x4] sm:$0xf]
        %v656 = vld [vmem:[%s653 + $0x8] sm:$0xf]
        %v657 = vld [vmem:[%s653 + $0xc] sm:$0xf]
        %v658 = vld [vmem:[%s653 + $0x10] sm:$0xf]
        %v659 = vld [vmem:[%s653 + $0x14] sm:$0xf]
        %v660 = vld [vmem:[%s653 + $0x18] sm:$0xf]
        %v661 = vld [vmem:[%s653 + $0x1c] sm:$0xf]
        %v662 = vld [vmem:[%s653 + $0x20] sm:$0xf]
        %v663 = vld [vmem:[%s653 + $0x24] sm:$0xf]
        %v664 = vld [vmem:[%s653 + $0x28] sm:$0xf]
        %v665 = vld [vmem:[%s653 + $0x2c] sm:$0xf]
        %v666 = vld [vmem:[%s653 + $0x30] sm:$0xf]
        %v667 = vld [vmem:[%s653 + $0x34] sm:$0xf]
        %v668 = vld [vmem:[%s653 + $0x38] sm:$0xf]
        %v669 = vld [vmem:[%s653 + $0x3c] sm:$0xf]
        %v670 = vunpack.c.l.b16 %v282
        %v671 = vunpack.c.l.b16 %v292
        %v672 = vunpack.c.l.b16 %v306
        %v673 = vunpack.c.l.b16 %v316
        %v674 = vunpack.c.l.b16 %v330
        %v675 = vunpack.c.l.b16 %v340
        %v676 = vunpack.c.l.b16 %v354
        %v677 = vunpack.c.l.b16 %v364
        %v678 = vunpack.c.l.b16 %v378
        %v679 = vunpack.c.l.b16 %v388
        %v680 = vunpack.c.l.b16 %v402
        %v681 = vunpack.c.l.b16 %v412
        %v682 = vunpack.c.l.b16 %v426
        %v683 = vunpack.c.l.b16 %v436
        %v684 = vunpack.c.l.b16 %v450
        %v685 = vunpack.c.l.b16 %v460
        %v686 = vunpack.c.l.b16 %v474
        %v687 = vunpack.c.l.b16 %v484
        %v688 = vunpack.c.l.b16 %v498
        %v689 = vunpack.c.l.b16 %v508
        %v690 = vunpack.c.l.b16 %v522
        %v691 = vunpack.c.l.b16 %v532
        %v692 = vunpack.c.l.b16 %v546
        %v693 = vunpack.c.l.b16 %v556
        %v694 = vunpack.c.l.b16 %v570
        %v695 = vunpack.c.l.b16 %v580
        %v696 = vunpack.c.l.b16 %v594
        %v697 = vunpack.c.l.b16 %v604
        %v698 = vunpack.c.l.b16 %v618
        %v699 = vunpack.c.l.b16 %v628
        %v700 = vunpack.c.l.b16 %v642
        %v701 = vunpack.c.l.b16 %v652
        %v702 = vpack.c.b16 %v671, %v670
        %v703 = vpack.c.b16 %v673, %v672
        %v704 = vpack.c.b16 %v675, %v674
        %v705 = vpack.c.b16 %v677, %v676
        %v706 = vpack.c.b16 %v679, %v678
        %v707 = vpack.c.b16 %v681, %v680
        %v708 = vpack.c.b16 %v683, %v682
        %v709 = vpack.c.b16 %v685, %v684
        %v710 = vpack.c.b16 %v687, %v686
        %v711 = vpack.c.b16 %v689, %v688
        %v712 = vpack.c.b16 %v691, %v690
        %v713 = vpack.c.b16 %v693, %v692
        %v714 = vpack.c.b16 %v695, %v694
        %v715 = vpack.c.b16 %v697, %v696
        %v716 = vpack.c.b16 %v699, %v698
        %v717 = vpack.c.b16 %v701, %v700
        %v750 = vunpack.c.l.b16 %v654
        %v751 = vunpack.c.l.b16 %v655
        %v752 = vunpack.c.l.b16 %v656
        %v753 = vunpack.c.l.b16 %v657
        %v754 = vunpack.c.l.b16 %v658
        %v755 = vunpack.c.l.b16 %v659
        %v756 = vunpack.c.l.b16 %v660
        %v757 = vunpack.c.l.b16 %v661
        %v758 = vunpack.c.l.b16 %v662
        %v759 = vunpack.c.l.b16 %v663
        %v760 = vunpack.c.l.b16 %v664
        %v761 = vunpack.c.l.b16 %v665
        %v762 = vunpack.c.l.b16 %v666
        %v763 = vunpack.c.l.b16 %v667
        %v764 = vunpack.c.l.b16 %v668
        %v765 = vunpack.c.l.b16 %v669
        %v766 = vpack.c.b16 %v751, %v750
        %v767 = vpack.c.b16 %v753, %v752
        %v768 = vpack.c.b16 %v755, %v754
        %v769 = vpack.c.b16 %v757, %v756
        %v770 = vpack.c.b16 %v759, %v758
        %v771 = vpack.c.b16 %v761, %v760
        %v772 = vpack.c.b16 %v763, %v762
        %v773 = vpack.c.b16 %v765, %v764
        %782 = vmatprep.subr.bf16.mxu0 0
        %783 = vmatpush1.bf16.msra.mxu0 %v766
        %784 = vmatprep.subr.bf16.mxu0 0
        %785 = vmatpush1.bf16.msra.mxu0 %v767
        %786 = vmatprep.subr.bf16.mxu0 0
        %787 = vmatpush1.bf16.msra.mxu0 %v768
        %788 = vmatprep.subr.bf16.mxu0 0
        %789 = vmatpush1.bf16.msra.mxu0 %v769
        %790 = vmatprep.subr.bf16.mxu0 0
        %791 = vmatpush1.bf16.msra.mxu0 %v770
        %792 = vmatprep.subr.bf16.mxu0 0
        %793 = vmatpush1.bf16.msra.mxu0 %v771
        %794 = vmatprep.subr.bf16.mxu0 0
        %795 = vmatpush1.bf16.msra.mxu0 %v772
        %796 = vmatprep.subr.bf16.mxu0 0
        %797 = vmatpush1.bf16.msra.mxu0 %v773
        %798 = vmatprep.subr.bf16.mxu0 0
        %799 = vmatpush1.bf16.msra.mxu0 0
        %800 = vmatprep.subr.bf16.mxu0 0
        %801 = vmatpush1.bf16.msra.mxu0 0
        %802 = vmatprep.subr.bf16.mxu0 0
        %803 = vmatpush1.bf16.msra.mxu0 0
        %804 = vmatprep.subr.bf16.mxu0 0
        %805 = vmatpush1.bf16.msra.mxu0 0
        %806 = vmatprep.subr.bf16.mxu0 0
        %807 = vmatpush1.bf16.msra.mxu0 0
        %808 = vmatprep.subr.bf16.mxu0 0
        %809 = vmatpush1.bf16.msra.mxu0 0
        %810 = vmatprep.subr.bf16.mxu0 0
        %811 = vmatpush1.bf16.msra.mxu0 0
        %812 = vmatprep.subr.bf16.mxu0 0
        %813 = vmatpush1.bf16.msra.mxu0 0
        %814 = vmatprep.mubr.bf16.mxu0 0
        %815 = vmatmul.mubr.bf16.gmra.mrb[0].mxu0 %v702
        %v816 = vpop.f32.mrb[0].mxu0
        %v817 = vadd.f32 0.0, %v816
        %v818 = vpop.f32.mrb[0].mxu0
        %v819 = vpop.f32.mrb[0].mxu0
        %v820 = vadd.f32 0.0, %v819
        %v821 = vpop.f32.mrb[0].mxu0
        %822 = vmatprep.mubr.bf16.mxu0 0
        %823 = vmatmul.mubr.bf16.gmra.mrb[0].mxu0 %v703
        %v824 = vpop.f32.mrb[0].mxu0
        %v825 = vadd.f32 0.0, %v824
        %v826 = vpop.f32.mrb[0].mxu0
        %v827 = vpop.f32.mrb[0].mxu0
        %v828 = vadd.f32 0.0, %v827
        %v829 = vpop.f32.mrb[0].mxu0
        %830 = vmatprep.mubr.bf16.mxu0 0
        %831 = vmatmul.mubr.bf16.gmra.mrb[0].mxu0 %v704
        %v832 = vpop.f32.mrb[0].mxu0
        %v833 = vadd.f32 0.0, %v832
        %v834 = vpop.f32.mrb[0].mxu0
        %v835 = vpop.f32.mrb[0].mxu0
        %v836 = vadd.f32 0.0, %v835
        %v837 = vpop.f32.mrb[0].mxu0
        %838 = vmatprep.mubr.bf16.mxu0 0
        %839 = vmatmul.mubr.bf16.gmra.mrb[0].mxu0 %v705
        %v840 = vpop.f32.mrb[0].mxu0
        %v841 = vadd.f32 0.0, %v840
        %v842 = vpop.f32.mrb[0].mxu0
        %v843 = vpop.f32.mrb[0].mxu0
        %v844 = vadd.f32 0.0, %v843
        %v845 = vpop.f32.mrb[0].mxu0
        %846 = vmatprep.mubr.bf16.mxu0 0
        %847 = vmatmul.mubr.bf16.gmra.mrb[0].mxu0 %v706
        %v848 = vpop.f32.mrb[0].mxu0
        %v849 = vadd.f32 0.0, %v848
        %v850 = vpop.f32.mrb[0].mxu0
        %v851 = vpop.f32.mrb[0].mxu0
        %v852 = vadd.f32 0.0, %v851
        %v853 = vpop.f32.mrb[0].mxu0
        %854 = vmatprep.mubr.bf16.mxu0 0
        %855 = vmatmul.mubr.bf16.gmra.mrb[0].mxu0 %v707
        %v856 = vpop.f32.mrb[0].mxu0
        %v857 = vadd.f32 0.0, %v856
        %v858 = vpop.f32.mrb[0].mxu0
        %v859 = vpop.f32.mrb[0].mxu0
        %v860 = vadd.f32 0.0, %v859
        %v861 = vpop.f32.mrb[0].mxu0
        %862 = vmatprep.mubr.bf16.mxu0 0
        %863 = vmatmul.mubr.bf16.gmra.mrb[0].mxu0 %v708
        %v864 = vpop.f32.mrb[0].mxu0
        %v865 = vadd.f32 0.0, %v864
        %v866 = vpop.f32.mrb[0].mxu0
        %v867 = vpop.f32.mrb[0].mxu0
        %v868 = vadd.f32 0.0, %v867
        %v869 = vpop.f32.mrb[0].mxu0
        %870 = vmatprep.mubr.bf16.mxu0 0
        %871 = vmatmul.mubr.bf16.gmra.mrb[0].mxu0 %v709
        %v872 = vpop.f32.mrb[0].mxu0
        %v873 = vadd.f32 0.0, %v872
        %v874 = vpop.f32.mrb[0].mxu0
        %v875 = vpop.f32.mrb[0].mxu0
        %v876 = vadd.f32 0.0, %v875
        %v877 = vpop.f32.mrb[0].mxu0
        %878 = vmatprep.mubr.bf16.mxu0 0
        %879 = vmatmul.mubr.bf16.gmra.mrb[0].mxu0 %v710
        %v880 = vpop.f32.mrb[0].mxu0
        %v881 = vadd.f32 0.0, %v880
        %v882 = vpop.f32.mrb[0].mxu0
        %v883 = vpop.f32.mrb[0].mxu0
        %v884 = vadd.f32 0.0, %v883
        %v885 = vpop.f32.mrb[0].mxu0
        %886 = vmatprep.mubr.bf16.mxu0 0
        %887 = vmatmul.mubr.bf16.gmra.mrb[0].mxu0 %v711
        %v888 = vpop.f32.mrb[0].mxu0
        %v889 = vadd.f32 0.0, %v888
        %v890 = vpop.f32.mrb[0].mxu0
        %v891 = vpop.f32.mrb[0].mxu0
        %v892 = vadd.f32 0.0, %v891
        %v893 = vpop.f32.mrb[0].mxu0
        %894 = vmatprep.mubr.bf16.mxu0 0
        %895 = vmatmul.mubr.bf16.gmra.mrb[0].mxu0 %v712
        %v896 = vpop.f32.mrb[0].mxu0
        %v897 = vadd.f32 0.0, %v896
        %v898 = vpop.f32.mrb[0].mxu0
        %v899 = vpop.f32.mrb[0].mxu0
        %v900 = vadd.f32 0.0, %v899
        %v901 = vpop.f32.mrb[0].mxu0
        %902 = vmatprep.mubr.bf16.mxu0 0
        %903 = vmatmul.mubr.bf16.gmra.mrb[0].mxu0 %v713
        %v904 = vpop.f32.mrb[0].mxu0
        %v905 = vadd.f32 0.0, %v904
        %v906 = vpop.f32.mrb[0].mxu0
        %v907 = vpop.f32.mrb[0].mxu0
        %v908 = vadd.f32 0.0, %v907
        %v909 = vpop.f32.mrb[0].mxu0
        %910 = vmatprep.mubr.bf16.mxu0 0
        %911 = vmatmul.mubr.bf16.gmra.mrb[0].mxu0 %v714
        %v912 = vpop.f32.mrb[0].mxu0
        %v913 = vadd.f32 0.0, %v912
        %v914 = vpop.f32.mrb[0].mxu0
        %v915 = vpop.f32.mrb[0].mxu0
        %v916 = vadd.f32 0.0, %v915
        %v917 = vpop.f32.mrb[0].mxu0
        %918 = vmatprep.mubr.bf16.mxu0 0
        %919 = vmatmul.mubr.bf16.gmra.mrb[0].mxu0 %v715
        %v920 = vpop.f32.mrb[0].mxu0
        %v921 = vadd.f32 0.0, %v920
        %v922 = vpop.f32.mrb[0].mxu0
        %v923 = vpop.f32.mrb[0].mxu0
        %v924 = vadd.f32 0.0, %v923
        %v925 = vpop.f32.mrb[0].mxu0
        %926 = vmatprep.mubr.bf16.mxu0 0
        %927 = vmatmul.mubr.bf16.gmra.mrb[0].mxu0 %v716
        %v928 = vpop.f32.mrb[0].mxu0
        %v929 = vadd.f32 0.0, %v928
        %v930 = vpop.f32.mrb[0].mxu0
        %v931 = vpop.f32.mrb[0].mxu0
        %v932 = vadd.f32 0.0, %v931
        %v933 = vpop.f32.mrb[0].mxu0
        %934 = vmatprep.mubr.bf16.mxu0 0
        %935 = vmatmul.mubr.bf16.gmra.mrb[0].mxu0 %v717
        %v936 = vpop.f32.mrb[0].mxu0
        %v937 = vadd.f32 0.0, %v936
        %v938 = vpop.f32.mrb[0].mxu0
        %v939 = vpop.f32.mrb[0].mxu0
        %v940 = vadd.f32 0.0, %v939
        %v941 = vpop.f32.mrb[0].mxu0
        %942 = vdwg.mxu0
        %v975 = vunpack.c.l.b16 %v190
        %v976 = vunpack.c.l.b16 %v191
        %v977 = vunpack.c.l.b16 %v193
        %v978 = vunpack.c.l.b16 %v194
        %v979 = vunpack.c.l.b16 %v196
        %v980 = vunpack.c.l.b16 %v197
        %v981 = vunpack.c.l.b16 %v199
        %v982 = vunpack.c.l.b16 %v200
        %v983 = vunpack.c.l.b16 %v202
        %v984 = vunpack.c.l.b16 %v203
        %v985 = vunpack.c.l.b16 %v205
        %v986 = vunpack.c.l.b16 %v206
        %v987 = vunpack.c.l.b16 %v208
        %v988 = vunpack.c.l.b16 %v209
        %v989 = vunpack.c.l.b16 %v211
        %v990 = vunpack.c.l.b16 %v212
        %v991 = vunpack.c.l.b16 %v214
        %v992 = vunpack.c.l.b16 %v215
        %v993 = vunpack.c.l.b16 %v217
        %v994 = vunpack.c.l.b16 %v218
        %v995 = vunpack.c.l.b16 %v220
        %v996 = vunpack.c.l.b16 %v221
        %v997 = vunpack.c.l.b16 %v223
        %v998 = vunpack.c.l.b16 %v224
        %v999 = vunpack.c.l.b16 %v226
        %v1000 = vunpack.c.l.b16 %v227
        %v1001 = vunpack.c.l.b16 %v229
        %v1002 = vunpack.c.l.b16 %v230
        %v1003 = vunpack.c.l.b16 %v232
        %v1004 = vunpack.c.l.b16 %v233
        %v1005 = vunpack.c.l.b16 %v235
        %v1006 = vunpack.c.l.b16 %v236
        %v1007 = vpack.c.b16 %v976, %v975
        %v1008 = vpack.c.b16 %v978, %v977
        %v1009 = vpack.c.b16 %v980, %v979
        %v1010 = vpack.c.b16 %v982, %v981
        %v1011 = vpack.c.b16 %v984, %v983
        %v1012 = vpack.c.b16 %v986, %v985
        %v1013 = vpack.c.b16 %v988, %v987
        %v1014 = vpack.c.b16 %v990, %v989
        %v1015 = vpack.c.b16 %v992, %v991
        %v1016 = vpack.c.b16 %v994, %v993
        %v1017 = vpack.c.b16 %v996, %v995
        %v1018 = vpack.c.b16 %v998, %v997
        %v1019 = vpack.c.b16 %v1000, %v999
        %v1020 = vpack.c.b16 %v1002, %v1001
        %v1021 = vpack.c.b16 %v1004, %v1003
        %v1022 = vpack.c.b16 %v1006, %v1005
        %v1055 = vunpack.c.l.b16 %v250
        %v1056 = vunpack.c.l.b16 %v251
        %v1057 = vunpack.c.l.b16 %v252
        %v1058 = vunpack.c.l.b16 %v253
        %v1059 = vunpack.c.l.b16 %v254
        %v1060 = vunpack.c.l.b16 %v255
        %v1061 = vunpack.c.l.b16 %v256
        %v1062 = vunpack.c.l.b16 %v257
        %v1063 = vunpack.c.l.b16 %v258
        %v1064 = vunpack.c.l.b16 %v259
        %v1065 = vunpack.c.l.b16 %v260
        %v1066 = vunpack.c.l.b16 %v261
        %v1067 = vunpack.c.l.b16 %v262
        %v1068 = vunpack.c.l.b16 %v263
        %v1069 = vunpack.c.l.b16 %v264
        %v1070 = vunpack.c.l.b16 %v265
        %v1071 = vpack.c.b16 %v1056, %v1055
        %v1072 = vpack.c.b16 %v1058, %v1057
        %v1073 = vpack.c.b16 %v1060, %v1059
        %v1074 = vpack.c.b16 %v1062, %v1061
        %v1075 = vpack.c.b16 %v1064, %v1063
        %v1076 = vpack.c.b16 %v1066, %v1065
        %v1077 = vpack.c.b16 %v1068, %v1067
        %v1078 = vpack.c.b16 %v1070, %v1069
        %1087 = vmatprep.subr.bf16.mxu0 0
        %1088 = vmatpush1.bf16.msra.mxu0 %v1071
        %1089 = vmatprep.subr.bf16.mxu0 0
        %1090 = vmatpush1.bf16.msra.mxu0 %v1072
        %1091 = vmatprep.subr.bf16.mxu0 0
        %1092 = vmatpush1.bf16.msra.mxu0 %v1073
        %1093 = vmatprep.subr.bf16.mxu0 0
        %1094 = vmatpush1.bf16.msra.mxu0 %v1074
        %1095 = vmatprep.subr.bf16.mxu0 0
        %1096 = vmatpush1.bf16.msra.mxu0 %v1075
        %1097 = vmatprep.subr.bf16.mxu0 0
        %1098 = vmatpush1.bf16.msra.mxu0 %v1076
        %1099 = vmatprep.subr.bf16.mxu0 0
        %1100 = vmatpush1.bf16.msra.mxu0 %v1077
        %1101 = vmatprep.subr.bf16.mxu0 0
        %1102 = vmatpush1.bf16.msra.mxu0 %v1078
        %1103 = vmatprep.subr.bf16.mxu0 0
        %1104 = vmatpush1.bf16.msra.mxu0 0
        %1105 = vmatprep.subr.bf16.mxu0 0
        %1106 = vmatpush1.bf16.msra.mxu0 0
        %1107 = vmatprep.subr.bf16.mxu0 0
        %1108 = vmatpush1.bf16.msra.mxu0 0
        %1109 = vmatprep.subr.bf16.mxu0 0
        %1110 = vmatpush1.bf16.msra.mxu0 0
        %1111 = vmatprep.subr.bf16.mxu0 0
        %1112 = vmatpush1.bf16.msra.mxu0 0
        %1113 = vmatprep.subr.bf16.mxu0 0
        %1114 = vmatpush1.bf16.msra.mxu0 0
        %1115 = vmatprep.subr.bf16.mxu0 0
        %1116 = vmatpush1.bf16.msra.mxu0 0
        %1117 = vmatprep.subr.bf16.mxu0 0
        %1118 = vmatpush1.bf16.msra.mxu0 0
        %1119 = vmatprep.mubr.bf16.mxu0 0
        %1120 = vmatmul.mubr.bf16.gmra.mrb[0].mxu0 %v1007
        %v1121 = vpop.f32.mrb[0].mxu0
        %v1122 = vadd.f32 %v817, %v1121
        %v1123 = vpop.f32.mrb[0].mxu0
        %v1124 = vpop.f32.mrb[0].mxu0
        %v1125 = vadd.f32 %v820, %v1124
        %v1126 = vpop.f32.mrb[0].mxu0
        %1127 = vmatprep.mubr.bf16.mxu0 0
        %1128 = vmatmul.mubr.bf16.gmra.mrb[0].mxu0 %v1008
        %v1129 = vpop.f32.mrb[0].mxu0
        %v1130 = vadd.f32 %v825, %v1129
        %v1131 = vpop.f32.mrb[0].mxu0
        %v1132 = vpop.f32.mrb[0].mxu0
        %v1133 = vadd.f32 %v828, %v1132
        %v1134 = vpop.f32.mrb[0].mxu0
        %1135 = vmatprep.mubr.bf16.mxu0 0
        %1136 = vmatmul.mubr.bf16.gmra.mrb[0].mxu0 %v1009
        %v1137 = vpop.f32.mrb[0].mxu0
        %v1138 = vadd.f32 %v833, %v1137
        %v1139 = vpop.f32.mrb[0].mxu0
        %v1140 = vpop.f32.mrb[0].mxu0
        %v1141 = vadd.f32 %v836, %v1140
        %v1142 = vpop.f32.mrb[0].mxu0
        %1143 = vmatprep.mubr.bf16.mxu0 0
        %1144 = vmatmul.mubr.bf16.gmra.mrb[0].mxu0 %v1010
        %v1145 = vpop.f32.mrb[0].mxu0
        %v1146 = vadd.f32 %v841, %v1145
        %v1147 = vpop.f32.mrb[0].mxu0
        %v1148 = vpop.f32.mrb[0].mxu0
        %v1149 = vadd.f32 %v844, %v1148
        %v1150 = vpop.f32.mrb[0].mxu0
        %1151 = vmatprep.mubr.bf16.mxu0 0
        %1152 = vmatmul.mubr.bf16.gmra.mrb[0].mxu0 %v1011
        %v1153 = vpop.f32.mrb[0].mxu0
        %v1154 = vadd.f32 %v849, %v1153
        %v1155 = vpop.f32.mrb[0].mxu0
        %v1156 = vpop.f32.mrb[0].mxu0
        %v1157 = vadd.f32 %v852, %v1156
        %v1158 = vpop.f32.mrb[0].mxu0
        %1159 = vmatprep.mubr.bf16.mxu0 0
        %1160 = vmatmul.mubr.bf16.gmra.mrb[0].mxu0 %v1012
        %v1161 = vpop.f32.mrb[0].mxu0
        %v1162 = vadd.f32 %v857, %v1161
        %v1163 = vpop.f32.mrb[0].mxu0
        %v1164 = vpop.f32.mrb[0].mxu0
        %v1165 = vadd.f32 %v860, %v1164
        %v1166 = vpop.f32.mrb[0].mxu0
        %1167 = vmatprep.mubr.bf16.mxu0 0
        %1168 = vmatmul.mubr.bf16.gmra.mrb[0].mxu0 %v1013
        %v1169 = vpop.f32.mrb[0].mxu0
        %v1170 = vadd.f32 %v865, %v1169
        %v1171 = vpop.f32.mrb[0].mxu0
        %v1172 = vpop.f32.mrb[0].mxu0
        %v1173 = vadd.f32 %v868, %v1172
        %v1174 = vpop.f32.mrb[0].mxu0
        %1175 = vmatprep.mubr.bf16.mxu0 0
        %1176 = vmatmul.mubr.bf16.gmra.mrb[0].mxu0 %v1014
        %v1177 = vpop.f32.mrb[0].mxu0
        %v1178 = vadd.f32 %v873, %v1177
        %v1179 = vpop.f32.mrb[0].mxu0
        %v1180 = vpop.f32.mrb[0].mxu0
        %v1181 = vadd.f32 %v876, %v1180
        %v1182 = vpop.f32.mrb[0].mxu0
        %1183 = vmatprep.mubr.bf16.mxu0 0
        %1184 = vmatmul.mubr.bf16.gmra.mrb[0].mxu0 %v1015
        %v1185 = vpop.f32.mrb[0].mxu0
        %v1186 = vadd.f32 %v881, %v1185
        %v1187 = vpop.f32.mrb[0].mxu0
        %v1188 = vpop.f32.mrb[0].mxu0
        %v1189 = vadd.f32 %v884, %v1188
        %v1190 = vpop.f32.mrb[0].mxu0
        %1191 = vmatprep.mubr.bf16.mxu0 0
        %1192 = vmatmul.mubr.bf16.gmra.mrb[0].mxu0 %v1016
        %v1193 = vpop.f32.mrb[0].mxu0
        %v1194 = vadd.f32 %v889, %v1193
        %v1195 = vpop.f32.mrb[0].mxu0
        %v1196 = vpop.f32.mrb[0].mxu0
        %v1197 = vadd.f32 %v892, %v1196
        %v1198 = vpop.f32.mrb[0].mxu0
        %1199 = vmatprep.mubr.bf16.mxu0 0
        %1200 = vmatmul.mubr.bf16.gmra.mrb[0].mxu0 %v1017
        %v1201 = vpop.f32.mrb[0].mxu0
        %v1202 = vadd.f32 %v897, %v1201
        %v1203 = vpop.f32.mrb[0].mxu0
        %v1204 = vpop.f32.mrb[0].mxu0
        %v1205 = vadd.f32 %v900, %v1204
        %v1206 = vpop.f32.mrb[0].mxu0
        %1207 = vmatprep.mubr.bf16.mxu0 0
        %1208 = vmatmul.mubr.bf16.gmra.mrb[0].mxu0 %v1018
        %v1209 = vpop.f32.mrb[0].mxu0
        %v1210 = vadd.f32 %v905, %v1209
        %v1211 = vpop.f32.mrb[0].mxu0
        %v1212 = vpop.f32.mrb[0].mxu0
        %v1213 = vadd.f32 %v908, %v1212
        %v1214 = vpop.f32.mrb[0].mxu0
        %1215 = vmatprep.mubr.bf16.mxu0 0
        %1216 = vmatmul.mubr.bf16.gmra.mrb[0].mxu0 %v1019
        %v1217 = vpop.f32.mrb[0].mxu0
        %v1218 = vadd.f32 %v913, %v1217
        %v1219 = vpop.f32.mrb[0].mxu0
        %v1220 = vpop.f32.mrb[0].mxu0
        %v1221 = vadd.f32 %v916, %v1220
        %v1222 = vpop.f32.mrb[0].mxu0
        %1223 = vmatprep.mubr.bf16.mxu0 0
        %1224 = vmatmul.mubr.bf16.gmra.mrb[0].mxu0 %v1020
        %v1225 = vpop.f32.mrb[0].mxu0
        %v1226 = vadd.f32 %v921, %v1225
        %v1227 = vpop.f32.mrb[0].mxu0
        %v1228 = vpop.f32.mrb[0].mxu0
        %v1229 = vadd.f32 %v924, %v1228
        %v1230 = vpop.f32.mrb[0].mxu0
        %1231 = vmatprep.mubr.bf16.mxu0 0
        %1232 = vmatmul.mubr.bf16.gmra.mrb[0].mxu0 %v1021
        %v1233 = vpop.f32.mrb[0].mxu0
        %v1234 = vadd.f32 %v929, %v1233
        %v1235 = vpop.f32.mrb[0].mxu0
        %v1236 = vpop.f32.mrb[0].mxu0
        %v1237 = vadd.f32 %v932, %v1236
        %v1238 = vpop.f32.mrb[0].mxu0
        %1239 = vmatprep.mubr.bf16.mxu0 0
        %1240 = vmatmul.mubr.bf16.gmra.mrb[0].mxu0 %v1022
        %v1241 = vpop.f32.mrb[0].mxu0
        %v1242 = vadd.f32 %v937, %v1241
        %v1243 = vpop.f32.mrb[0].mxu0
        %v1244 = vpop.f32.mrb[0].mxu0
        %v1245 = vadd.f32 %v940, %v1244
        %v1246 = vpop.f32.mrb[0].mxu0
        %1247 = vdwg.mxu0
        %vm1264 = vcmask 1042432
        %vm1265 = vcmask 1046532
        %vm1266 = vmor %vm1264, %vm1265
        %v1267 = vrot.slane %v190, 5
        %v1268 = vrot.slane %v1267, 4
        %v1269 = vrot.slane %v191, 5
        %v1270 = vsel %vm1266, %v1268, %v1269
        %v1271 = vrot.slane %v1269, 4
        %v1272 = vrot.slane %v192, 5
        %v1273 = vsel %vm1266, %v1271, %v1272
        %v1274 = vrot.slane %v193, 5
        %v1275 = vrot.slane %v1274, 4
        %v1276 = vrot.slane %v194, 5
        %v1277 = vsel %vm1266, %v1275, %v1276
        %v1278 = vrot.slane %v1276, 4
        %v1279 = vrot.slane %v195, 5
        %v1280 = vsel %vm1266, %v1278, %v1279
        %v1281 = vrot.slane %v196, 5
        %v1282 = vrot.slane %v1281, 4
        %v1283 = vrot.slane %v197, 5
        %v1284 = vsel %vm1266, %v1282, %v1283
        %v1285 = vrot.slane %v1283, 4
        %v1286 = vrot.slane %v198, 5
        %v1287 = vsel %vm1266, %v1285, %v1286
        %v1288 = vrot.slane %v199, 5
        %v1289 = vrot.slane %v1288, 4
        %v1290 = vrot.slane %v200, 5
        %v1291 = vsel %vm1266, %v1289, %v1290
        %v1292 = vrot.slane %v1290, 4
        %v1293 = vrot.slane %v201, 5
        %v1294 = vsel %vm1266, %v1292, %v1293
        %v1295 = vrot.slane %v202, 5
        %v1296 = vrot.slane %v1295, 4
        %v1297 = vrot.slane %v203, 5
        %v1298 = vsel %vm1266, %v1296, %v1297
        %v1299 = vrot.slane %v1297, 4
        %v1300 = vrot.slane %v204, 5
        %v1301 = vsel %vm1266, %v1299, %v1300
        %v1302 = vrot.slane %v205, 5
        %v1303 = vrot.slane %v1302, 4
        %v1304 = vrot.slane %v206, 5
        %v1305 = vsel %vm1266, %v1303, %v1304
        %v1306 = vrot.slane %v1304, 4
        %v1307 = vrot.slane %v207, 5
        %v1308 = vsel %vm1266, %v1306, %v1307
        %v1309 = vrot.slane %v208, 5
        %v1310 = vrot.slane %v1309, 4
        %v1311 = vrot.slane %v209, 5
        %v1312 = vsel %vm1266, %v1310, %v1311
        %v1313 = vrot.slane %v1311, 4
        %v1314 = vrot.slane %v210, 5
        %v1315 = vsel %vm1266, %v1313, %v1314
        %v1316 = vrot.slane %v211, 5
        %v1317 = vrot.slane %v1316, 4
        %v1318 = vrot.slane %v212, 5
        %v1319 = vsel %vm1266, %v1317, %v1318
        %v1320 = vrot.slane %v1318, 4
        %v1321 = vrot.slane %v213, 5
        %v1322 = vsel %vm1266, %v1320, %v1321
        %v1323 = vrot.slane %v214, 5
        %v1324 = vrot.slane %v1323, 4
        %v1325 = vrot.slane %v215, 5
        %v1326 = vsel %vm1266, %v1324, %v1325
        %v1327 = vrot.slane %v1325, 4
        %v1328 = vrot.slane %v216, 5
        %v1329 = vsel %vm1266, %v1327, %v1328
        %v1330 = vrot.slane %v217, 5
        %v1331 = vrot.slane %v1330, 4
        %v1332 = vrot.slane %v218, 5
        %v1333 = vsel %vm1266, %v1331, %v1332
        %v1334 = vrot.slane %v1332, 4
        %v1335 = vrot.slane %v219, 5
        %v1336 = vsel %vm1266, %v1334, %v1335
        %v1337 = vrot.slane %v220, 5
        %v1338 = vrot.slane %v1337, 4
        %v1339 = vrot.slane %v221, 5
        %v1340 = vsel %vm1266, %v1338, %v1339
        %v1341 = vrot.slane %v1339, 4
        %v1342 = vrot.slane %v222, 5
        %v1343 = vsel %vm1266, %v1341, %v1342
        %v1344 = vrot.slane %v223, 5
        %v1345 = vrot.slane %v1344, 4
        %v1346 = vrot.slane %v224, 5
        %v1347 = vsel %vm1266, %v1345, %v1346
        %v1348 = vrot.slane %v1346, 4
        %v1349 = vrot.slane %v225, 5
        %v1350 = vsel %vm1266, %v1348, %v1349
        %v1351 = vrot.slane %v226, 5
        %v1352 = vrot.slane %v1351, 4
        %v1353 = vrot.slane %v227, 5
        %v1354 = vsel %vm1266, %v1352, %v1353
        %v1355 = vrot.slane %v1353, 4
        %v1356 = vrot.slane %v228, 5
        %v1357 = vsel %vm1266, %v1355, %v1356
        %v1358 = vrot.slane %v229, 5
        %v1359 = vrot.slane %v1358, 4
        %v1360 = vrot.slane %v230, 5
        %v1361 = vsel %vm1266, %v1359, %v1360
        %v1362 = vrot.slane %v1360, 4
        %v1363 = vrot.slane %v231, 5
        %v1364 = vsel %vm1266, %v1362, %v1363
        %v1365 = vrot.slane %v232, 5
        %v1366 = vrot.slane %v1365, 4
        %v1367 = vrot.slane %v233, 5
        %v1368 = vsel %vm1266, %v1366, %v1367
        %v1369 = vrot.slane %v1367, 4
        %v1370 = vrot.slane %v234, 5
        %v1371 = vsel %vm1266, %v1369, %v1370
        %v1372 = vrot.slane %v235, 5
        %v1373 = vrot.slane %v1372, 4
        %v1374 = vrot.slane %v236, 5
        %v1375 = vsel %vm1266, %v1373, %v1374
        %v1376 = vrot.slane %v1374, 4
        %v1377 = vrot.slane %v237, 5
        %v1378 = vsel %vm1266, %v1376, %v1377
        %s1379 = scalar_lea.vmem %s2, 128
        %v1380 = vld [vmem:[%s1379] sm:$0xf]
        %v1381 = vld [vmem:[%s1379 + $0x4] sm:$0xf]
        %v1382 = vld [vmem:[%s1379 + $0x8] sm:$0xf]
        %v1383 = vld [vmem:[%s1379 + $0xc] sm:$0xf]
        %v1384 = vld [vmem:[%s1379 + $0x10] sm:$0xf]
        %v1385 = vld [vmem:[%s1379 + $0x14] sm:$0xf]
        %v1386 = vld [vmem:[%s1379 + $0x18] sm:$0xf]
        %v1387 = vld [vmem:[%s1379 + $0x1c] sm:$0xf]
        %v1388 = vld [vmem:[%s1379 + $0x20] sm:$0xf]
        %v1389 = vld [vmem:[%s1379 + $0x24] sm:$0xf]
        %v1390 = vld [vmem:[%s1379 + $0x28] sm:$0xf]
        %v1391 = vld [vmem:[%s1379 + $0x2c] sm:$0xf]
        %v1392 = vld [vmem:[%s1379 + $0x30] sm:$0xf]
        %v1393 = vld [vmem:[%s1379 + $0x34] sm:$0xf]
        %v1394 = vld [vmem:[%s1379 + $0x38] sm:$0xf]
        %v1395 = vld [vmem:[%s1379 + $0x3c] sm:$0xf]
        %v1396 = vunpack.c.l.b16 %v1270
        %v1397 = vunpack.c.l.b16 %v1273
        %v1398 = vunpack.c.l.b16 %v1277
        %v1399 = vunpack.c.l.b16 %v1280
        %v1400 = vunpack.c.l.b16 %v1284
        %v1401 = vunpack.c.l.b16 %v1287
        %v1402 = vunpack.c.l.b16 %v1291
        %v1403 = vunpack.c.l.b16 %v1294
        %v1404 = vunpack.c.l.b16 %v1298
        %v1405 = vunpack.c.l.b16 %v1301
        %v1406 = vunpack.c.l.b16 %v1305
        %v1407 = vunpack.c.l.b16 %v1308
        %v1408 = vunpack.c.l.b16 %v1312
        %v1409 = vunpack.c.l.b16 %v1315
        %v1410 = vunpack.c.l.b16 %v1319
        %v1411 = vunpack.c.l.b16 %v1322
        %v1412 = vunpack.c.l.b16 %v1326
        %v1413 = vunpack.c.l.b16 %v1329
        %v1414 = vunpack.c.l.b16 %v1333
        %v1415 = vunpack.c.l.b16 %v1336
        %v1416 = vunpack.c.l.b16 %v1340
        %v1417 = vunpack.c.l.b16 %v1343
        %v1418 = vunpack.c.l.b16 %v1347
        %v1419 = vunpack.c.l.b16 %v1350
        %v1420 = vunpack.c.l.b16 %v1354
        %v1421 = vunpack.c.l.b16 %v1357
        %v1422 = vunpack.c.l.b16 %v1361
        %v1423 = vunpack.c.l.b16 %v1364
        %v1424 = vunpack.c.l.b16 %v1368
        %v1425 = vunpack.c.l.b16 %v1371
        %v1426 = vunpack.c.l.b16 %v1375
        %v1427 = vunpack.c.l.b16 %v1378
        %v1428 = vpack.c.b16 %v1397, %v1396
        %v1429 = vpack.c.b16 %v1399, %v1398
        %v1430 = vpack.c.b16 %v1401, %v1400
        %v1431 = vpack.c.b16 %v1403, %v1402
        %v1432 = vpack.c.b16 %v1405, %v1404
        %v1433 = vpack.c.b16 %v1407, %v1406
        %v1434 = vpack.c.b16 %v1409, %v1408
        %v1435 = vpack.c.b16 %v1411, %v1410
        %v1436 = vpack.c.b16 %v1413, %v1412
        %v1437 = vpack.c.b16 %v1415, %v1414
        %v1438 = vpack.c.b16 %v1417, %v1416
        %v1439 = vpack.c.b16 %v1419, %v1418
        %v1440 = vpack.c.b16 %v1421, %v1420
        %v1441 = vpack.c.b16 %v1423, %v1422
        %v1442 = vpack.c.b16 %v1425, %v1424
        %v1443 = vpack.c.b16 %v1427, %v1426
        %v1476 = vunpack.c.l.b16 %v1380
        %v1477 = vunpack.c.l.b16 %v1381
        %v1478 = vunpack.c.l.b16 %v1382
        %v1479 = vunpack.c.l.b16 %v1383
        %v1480 = vunpack.c.l.b16 %v1384
        %v1481 = vunpack.c.l.b16 %v1385
        %v1482 = vunpack.c.l.b16 %v1386
        %v1483 = vunpack.c.l.b16 %v1387
        %v1484 = vunpack.c.l.b16 %v1388
        %v1485 = vunpack.c.l.b16 %v1389
        %v1486 = vunpack.c.l.b16 %v1390
        %v1487 = vunpack.c.l.b16 %v1391
        %v1488 = vunpack.c.l.b16 %v1392
        %v1489 = vunpack.c.l.b16 %v1393
        %v1490 = vunpack.c.l.b16 %v1394
        %v1491 = vunpack.c.l.b16 %v1395
        %v1492 = vpack.c.b16 %v1477, %v1476
        %v1493 = vpack.c.b16 %v1479, %v1478
        %v1494 = vpack.c.b16 %v1481, %v1480
        %v1495 = vpack.c.b16 %v1483, %v1482
        %v1496 = vpack.c.b16 %v1485, %v1484
        %v1497 = vpack.c.b16 %v1487, %v1486
        %v1498 = vpack.c.b16 %v1489, %v1488
        %v1499 = vpack.c.b16 %v1491, %v1490
        %1508 = vmatprep.subr.bf16.mxu0 0
        %1509 = vmatpush1.bf16.msra.mxu0 %v1492
        %1510 = vmatprep.subr.bf16.mxu0 0
        %1511 = vmatpush1.bf16.msra.mxu0 %v1493
        %1512 = vmatprep.subr.bf16.mxu0 0
        %1513 = vmatpush1.bf16.msra.mxu0 %v1494
        %1514 = vmatprep.subr.bf16.mxu0 0
        %1515 = vmatpush1.bf16.msra.mxu0 %v1495
        %1516 = vmatprep.subr.bf16.mxu0 0
        %1517 = vmatpush1.bf16.msra.mxu0 %v1496
        %1518 = vmatprep.subr.bf16.mxu0 0
        %1519 = vmatpush1.bf16.msra.mxu0 %v1497
        %1520 = vmatprep.subr.bf16.mxu0 0
        %1521 = vmatpush1.bf16.msra.mxu0 %v1498
        %1522 = vmatprep.subr.bf16.mxu0 0
        %1523 = vmatpush1.bf16.msra.mxu0 %v1499
        %1524 = vmatprep.subr.bf16.mxu0 0
        %1525 = vmatpush1.bf16.msra.mxu0 0
        %1526 = vmatprep.subr.bf16.mxu0 0
        %1527 = vmatpush1.bf16.msra.mxu0 0
        %1528 = vmatprep.subr.bf16.mxu0 0
        %1529 = vmatpush1.bf16.msra.mxu0 0
        %1530 = vmatprep.subr.bf16.mxu0 0
        %1531 = vmatpush1.bf16.msra.mxu0 0
        %1532 = vmatprep.subr.bf16.mxu0 0
        %1533 = vmatpush1.bf16.msra.mxu0 0
        %1534 = vmatprep.subr.bf16.mxu0 0
        %1535 = vmatpush1.bf16.msra.mxu0 0
        %1536 = vmatprep.subr.bf16.mxu0 0
        %1537 = vmatpush1.bf16.msra.mxu0 0
        %1538 = vmatprep.subr.bf16.mxu0 0
        %1539 = vmatpush1.bf16.msra.mxu0 0
        %1540 = vmatprep.mubr.bf16.mxu0 0
        %1541 = vmatmul.mubr.bf16.gmra.mrb[0].mxu0 %v1428
        %v1542 = vpop.f32.mrb[0].mxu0
        %v1543 = vadd.f32 0.0, %v1542
        %v1544 = vpop.f32.mrb[0].mxu0
        %v1545 = vpop.f32.mrb[0].mxu0
        %v1546 = vadd.f32 0.0, %v1545
        %v1547 = vpop.f32.mrb[0].mxu0
        %1548 = vmatprep.mubr.bf16.mxu0 0
        %1549 = vmatmul.mubr.bf16.gmra.mrb[0].mxu0 %v1429
        %v1550 = vpop.f32.mrb[0].mxu0
        %v1551 = vadd.f32 0.0, %v1550
        %v1552 = vpop.f32.mrb[0].mxu0
        %v1553 = vpop.f32.mrb[0].mxu0
        %v1554 = vadd.f32 0.0, %v1553
        %v1555 = vpop.f32.mrb[0].mxu0
        %1556 = vmatprep.mubr.bf16.mxu0 0
        %1557 = vmatmul.mubr.bf16.gmra.mrb[0].mxu0 %v1430
        %v1558 = vpop.f32.mrb[0].mxu0
        %v1559 = vadd.f32 0.0, %v1558
        %v1560 = vpop.f32.mrb[0].mxu0
        %v1561 = vpop.f32.mrb[0].mxu0
        %v1562 = vadd.f32 0.0, %v1561
        %v1563 = vpop.f32.mrb[0].mxu0
        %1564 = vmatprep.mubr.bf16.mxu0 0
        %1565 = vmatmul.mubr.bf16.gmra.mrb[0].mxu0 %v1431
        %v1566 = vpop.f32.mrb[0].mxu0
        %v1567 = vadd.f32 0.0, %v1566
        %v1568 = vpop.f32.mrb[0].mxu0
        %v1569 = vpop.f32.mrb[0].mxu0
        %v1570 = vadd.f32 0.0, %v1569
        %v1571 = vpop.f32.mrb[0].mxu0
        %1572 = vmatprep.mubr.bf16.mxu0 0
        %1573 = vmatmul.mubr.bf16.gmra.mrb[0].mxu0 %v1432
        %v1574 = vpop.f32.mrb[0].mxu0
        %v1575 = vadd.f32 0.0, %v1574
        %v1576 = vpop.f32.mrb[0].mxu0
        %v1577 = vpop.f32.mrb[0].mxu0
        %v1578 = vadd.f32 0.0, %v1577
        %v1579 = vpop.f32.mrb[0].mxu0
        %1580 = vmatprep.mubr.bf16.mxu0 0
        %1581 = vmatmul.mubr.bf16.gmra.mrb[0].mxu0 %v1433
        %v1582 = vpop.f32.mrb[0].mxu0
        %v1583 = vadd.f32 0.0, %v1582
        %v1584 = vpop.f32.mrb[0].mxu0
        %v1585 = vpop.f32.mrb[0].mxu0
        %v1586 = vadd.f32 0.0, %v1585
        %v1587 = vpop.f32.mrb[0].mxu0
        %1588 = vmatprep.mubr.bf16.mxu0 0
        %1589 = vmatmul.mubr.bf16.gmra.mrb[0].mxu0 %v1434
        %v1590 = vpop.f32.mrb[0].mxu0
        %v1591 = vadd.f32 0.0, %v1590
        %v1592 = vpop.f32.mrb[0].mxu0
        %v1593 = vpop.f32.mrb[0].mxu0
        %v1594 = vadd.f32 0.0, %v1593
        %v1595 = vpop.f32.mrb[0].mxu0
        %1596 = vmatprep.mubr.bf16.mxu0 0
        %1597 = vmatmul.mubr.bf16.gmra.mrb[0].mxu0 %v1435
        %v1598 = vpop.f32.mrb[0].mxu0
        %v1599 = vadd.f32 0.0, %v1598
        %v1600 = vpop.f32.mrb[0].mxu0
        %v1601 = vpop.f32.mrb[0].mxu0
        %v1602 = vadd.f32 0.0, %v1601
        %v1603 = vpop.f32.mrb[0].mxu0
        %1604 = vmatprep.mubr.bf16.mxu0 0
        %1605 = vmatmul.mubr.bf16.gmra.mrb[0].mxu0 %v1436
        %v1606 = vpop.f32.mrb[0].mxu0
        %v1607 = vadd.f32 0.0, %v1606
        %v1608 = vpop.f32.mrb[0].mxu0
        %v1609 = vpop.f32.mrb[0].mxu0
        %v1610 = vadd.f32 0.0, %v1609
        %v1611 = vpop.f32.mrb[0].mxu0
        %1612 = vmatprep.mubr.bf16.mxu0 0
        %1613 = vmatmul.mubr.bf16.gmra.mrb[0].mxu0 %v1437
        %v1614 = vpop.f32.mrb[0].mxu0
        %v1615 = vadd.f32 0.0, %v1614
        %v1616 = vpop.f32.mrb[0].mxu0
        %v1617 = vpop.f32.mrb[0].mxu0
        %v1618 = vadd.f32 0.0, %v1617
        %v1619 = vpop.f32.mrb[0].mxu0
        %1620 = vmatprep.mubr.bf16.mxu0 0
        %1621 = vmatmul.mubr.bf16.gmra.mrb[0].mxu0 %v1438
        %v1622 = vpop.f32.mrb[0].mxu0
        %v1623 = vadd.f32 0.0, %v1622
        %v1624 = vpop.f32.mrb[0].mxu0
        %v1625 = vpop.f32.mrb[0].mxu0
        %v1626 = vadd.f32 0.0, %v1625
        %v1627 = vpop.f32.mrb[0].mxu0
        %1628 = vmatprep.mubr.bf16.mxu0 0
        %1629 = vmatmul.mubr.bf16.gmra.mrb[0].mxu0 %v1439
        %v1630 = vpop.f32.mrb[0].mxu0
        %v1631 = vadd.f32 0.0, %v1630
        %v1632 = vpop.f32.mrb[0].mxu0
        %v1633 = vpop.f32.mrb[0].mxu0
        %v1634 = vadd.f32 0.0, %v1633
        %v1635 = vpop.f32.mrb[0].mxu0
        %1636 = vmatprep.mubr.bf16.mxu0 0
        %1637 = vmatmul.mubr.bf16.gmra.mrb[0].mxu0 %v1440
        %v1638 = vpop.f32.mrb[0].mxu0
        %v1639 = vadd.f32 0.0, %v1638
        %v1640 = vpop.f32.mrb[0].mxu0
        %v1641 = vpop.f32.mrb[0].mxu0
        %v1642 = vadd.f32 0.0, %v1641
        %v1643 = vpop.f32.mrb[0].mxu0
        %1644 = vmatprep.mubr.bf16.mxu0 0
        %1645 = vmatmul.mubr.bf16.gmra.mrb[0].mxu0 %v1441
        %v1646 = vpop.f32.mrb[0].mxu0
        %v1647 = vadd.f32 0.0, %v1646
        %v1648 = vpop.f32.mrb[0].mxu0
        %v1649 = vpop.f32.mrb[0].mxu0
        %v1650 = vadd.f32 0.0, %v1649
        %v1651 = vpop.f32.mrb[0].mxu0
        %1652 = vmatprep.mubr.bf16.mxu0 0
        %1653 = vmatmul.mubr.bf16.gmra.mrb[0].mxu0 %v1442
        %v1654 = vpop.f32.mrb[0].mxu0
        %v1655 = vadd.f32 0.0, %v1654
        %v1656 = vpop.f32.mrb[0].mxu0
        %v1657 = vpop.f32.mrb[0].mxu0
        %v1658 = vadd.f32 0.0, %v1657
        %v1659 = vpop.f32.mrb[0].mxu0
        %1660 = vmatprep.mubr.bf16.mxu0 0
        %1661 = vmatmul.mubr.bf16.gmra.mrb[0].mxu0 %v1443
        %v1662 = vpop.f32.mrb[0].mxu0
        %v1663 = vadd.f32 0.0, %v1662
        %v1664 = vpop.f32.mrb[0].mxu0
        %v1665 = vpop.f32.mrb[0].mxu0
        %v1666 = vadd.f32 0.0, %v1665
        %v1667 = vpop.f32.mrb[0].mxu0
        %1668 = vdwg.mxu0
        %v1669 = vadd.f32 %v1122, %v1543
        %v1670 = vadd.f32 %v1125, %v1546
        %v1671 = vadd.f32 %v1130, %v1551
        %v1672 = vadd.f32 %v1133, %v1554
        %v1673 = vadd.f32 %v1138, %v1559
        %v1674 = vadd.f32 %v1141, %v1562
        %v1675 = vadd.f32 %v1146, %v1567
        %v1676 = vadd.f32 %v1149, %v1570
        %v1677 = vadd.f32 %v1154, %v1575
        %v1678 = vadd.f32 %v1157, %v1578
        %v1679 = vadd.f32 %v1162, %v1583
        %v1680 = vadd.f32 %v1165, %v1586
        %v1681 = vadd.f32 %v1170, %v1591
        %v1682 = vadd.f32 %v1173, %v1594
        %v1683 = vadd.f32 %v1178, %v1599
        %v1684 = vadd.f32 %v1181, %v1602
        %v1685 = vadd.f32 %v1186, %v1607
        %v1686 = vadd.f32 %v1189, %v1610
        %v1687 = vadd.f32 %v1194, %v1615
        %v1688 = vadd.f32 %v1197, %v1618
        %v1689 = vadd.f32 %v1202, %v1623
        %v1690 = vadd.f32 %v1205, %v1626
        %v1691 = vadd.f32 %v1210, %v1631
        %v1692 = vadd.f32 %v1213, %v1634
        %v1693 = vadd.f32 %v1218, %v1639
        %v1694 = vadd.f32 %v1221, %v1642
        %v1695 = vadd.f32 %v1226, %v1647
        %v1696 = vadd.f32 %v1229, %v1650
        %v1697 = vadd.f32 %v1234, %v1655
        %v1698 = vadd.f32 %v1237, %v1658
        %v1699 = vadd.f32 %v1242, %v1663
        %v1700 = vadd.f32 %v1245, %v1666
        %vm1701 = vsmask.f32 2304
        %vm1702 = vsmask.f32 6416
        %vm1703 = vmor %vm1701, %vm1702
        %v1704 = vrot.slane %v270, 5
        %v1705 = vrot.slane %v273, 6
        %v1706 = vor.u32 %v1704, %v1705
        %v1707 = vrot.slane %v1706, 4
        %v1708 = vrot.slane %v283, 5
        %v1709 = vrot.slane %v279, 6
        %v1710 = vor.u32 %v1708, %v1709
        %v1711 = vsel %vm1703, %v1707, %v1710
        %v1712 = vrot.slane %v1710, 4
        %v1713 = vshrl.u32 %v192, 16
        %v1715 = vrot.slane %v1713, 5
        %v1716 = vrot.slane %v289, 6
        %v1717 = vor.u32 %v1715, %v1716
        %v1718 = vsel %vm1703, %v1712, %v1717
        %v1719 = vrot.slane %v294, 5
        %v1720 = vrot.slane %v297, 6
        %v1721 = vor.u32 %v1719, %v1720
        %v1722 = vrot.slane %v1721, 4
        %v1723 = vrot.slane %v307, 5
        %v1724 = vrot.slane %v303, 6
        %v1725 = vor.u32 %v1723, %v1724
        %v1726 = vsel %vm1703, %v1722, %v1725
        %v1727 = vrot.slane %v1725, 4
        %v1728 = vshrl.u32 %v195, 16
        %v1730 = vrot.slane %v1728, 5
        %v1731 = vrot.slane %v313, 6
        %v1732 = vor.u32 %v1730, %v1731
        %v1733 = vsel %vm1703, %v1727, %v1732
        %v1734 = vrot.slane %v318, 5
        %v1735 = vrot.slane %v321, 6
        %v1736 = vor.u32 %v1734, %v1735
        %v1737 = vrot.slane %v1736, 4
        %v1738 = vrot.slane %v331, 5
        %v1739 = vrot.slane %v327, 6
        %v1740 = vor.u32 %v1738, %v1739
        %v1741 = vsel %vm1703, %v1737, %v1740
        %v1742 = vrot.slane %v1740, 4
        %v1743 = vshrl.u32 %v198, 16
        %v1745 = vrot.slane %v1743, 5
        %v1746 = vrot.slane %v337, 6
        %v1747 = vor.u32 %v1745, %v1746
        %v1748 = vsel %vm1703, %v1742, %v1747
        %v1749 = vrot.slane %v342, 5
        %v1750 = vrot.slane %v345, 6
        %v1751 = vor.u32 %v1749, %v1750
        %v1752 = vrot.slane %v1751, 4
        %v1753 = vrot.slane %v355, 5
        %v1754 = vrot.slane %v351, 6
        %v1755 = vor.u32 %v1753, %v1754
        %v1756 = vsel %vm1703, %v1752, %v1755
        %v1757 = vrot.slane %v1755, 4
        %v1758 = vshrl.u32 %v201, 16
        %v1760 = vrot.slane %v1758, 5
        %v1761 = vrot.slane %v361, 6
        %v1762 = vor.u32 %v1760, %v1761
        %v1763 = vsel %vm1703, %v1757, %v1762
        %v1764 = vrot.slane %v366, 5
        %v1765 = vrot.slane %v369, 6
        %v1766 = vor.u32 %v1764, %v1765
        %v1767 = vrot.slane %v1766, 4
        %v1768 = vrot.slane %v379, 5
        %v1769 = vrot.slane %v375, 6
        %v1770 = vor.u32 %v1768, %v1769
        %v1771 = vsel %vm1703, %v1767, %v1770
        %v1772 = vrot.slane %v1770, 4
        %v1773 = vshrl.u32 %v204, 16
        %v1775 = vrot.slane %v1773, 5
        %v1776 = vrot.slane %v385, 6
        %v1777 = vor.u32 %v1775, %v1776
        %v1778 = vsel %vm1703, %v1772, %v1777
        %v1779 = vrot.slane %v390, 5
        %v1780 = vrot.slane %v393, 6
        %v1781 = vor.u32 %v1779, %v1780
        %v1782 = vrot.slane %v1781, 4
        %v1783 = vrot.slane %v403, 5
        %v1784 = vrot.slane %v399, 6
        %v1785 = vor.u32 %v1783, %v1784
        %v1786 = vsel %vm1703, %v1782, %v1785
        %v1787 = vrot.slane %v1785, 4
        %v1788 = vshrl.u32 %v207, 16
        %v1790 = vrot.slane %v1788, 5
        %v1791 = vrot.slane %v409, 6
        %v1792 = vor.u32 %v1790, %v1791
        %v1793 = vsel %vm1703, %v1787, %v1792
        %v1794 = vrot.slane %v414, 5
        %v1795 = vrot.slane %v417, 6
        %v1796 = vor.u32 %v1794, %v1795
        %v1797 = vrot.slane %v1796, 4
        %v1798 = vrot.slane %v427, 5
        %v1799 = vrot.slane %v423, 6
        %v1800 = vor.u32 %v1798, %v1799
        %v1801 = vsel %vm1703, %v1797, %v1800
        %v1802 = vrot.slane %v1800, 4
        %v1803 = vshrl.u32 %v210, 16
        %v1805 = vrot.slane %v1803, 5
        %v1806 = vrot.slane %v433, 6
        %v1807 = vor.u32 %v1805, %v1806
        %v1808 = vsel %vm1703, %v1802, %v1807
        %v1809 = vrot.slane %v438, 5
        %v1810 = vrot.slane %v441, 6
        %v1811 = vor.u32 %v1809, %v1810
        %v1812 = vrot.slane %v1811, 4
        %v1813 = vrot.slane %v451, 5
        %v1814 = vrot.slane %v447, 6
        %v1815 = vor.u32 %v1813, %v1814
        %v1816 = vsel %vm1703, %v1812, %v1815
        %v1817 = vrot.slane %v1815, 4
        %v1818 = vshrl.u32 %v213, 16
        %v1820 = vrot.slane %v1818, 5
        %v1821 = vrot.slane %v457, 6
        %v1822 = vor.u32 %v1820, %v1821
        %v1823 = vsel %vm1703, %v1817, %v1822
        %v1824 = vrot.slane %v462, 5
        %v1825 = vrot.slane %v465, 6
        %v1826 = vor.u32 %v1824, %v1825
        %v1827 = vrot.slane %v1826, 4
        %v1828 = vrot.slane %v475, 5
        %v1829 = vrot.slane %v471, 6
        %v1830 = vor.u32 %v1828, %v1829
        %v1831 = vsel %vm1703, %v1827, %v1830
        %v1832 = vrot.slane %v1830, 4
        %v1833 = vshrl.u32 %v216, 16
        %v1835 = vrot.slane %v1833, 5
        %v1836 = vrot.slane %v481, 6
        %v1837 = vor.u32 %v1835, %v1836
        %v1838 = vsel %vm1703, %v1832, %v1837
        %v1839 = vrot.slane %v486, 5
        %v1840 = vrot.slane %v489, 6
        %v1841 = vor.u32 %v1839, %v1840
        %v1842 = vrot.slane %v1841, 4
        %v1843 = vrot.slane %v499, 5
        %v1844 = vrot.slane %v495, 6
        %v1845 = vor.u32 %v1843, %v1844
        %v1846 = vsel %vm1703, %v1842, %v1845
        %v1847 = vrot.slane %v1845, 4
        %v1848 = vshrl.u32 %v219, 16
        %v1850 = vrot.slane %v1848, 5
        %v1851 = vrot.slane %v505, 6
        %v1852 = vor.u32 %v1850, %v1851
        %v1853 = vsel %vm1703, %v1847, %v1852
        %v1854 = vrot.slane %v510, 5
        %v1855 = vrot.slane %v513, 6
        %v1856 = vor.u32 %v1854, %v1855
        %v1857 = vrot.slane %v1856, 4
        %v1858 = vrot.slane %v523, 5
        %v1859 = vrot.slane %v519, 6
        %v1860 = vor.u32 %v1858, %v1859
        %v1861 = vsel %vm1703, %v1857, %v1860
        %v1862 = vrot.slane %v1860, 4
        %v1863 = vshrl.u32 %v222, 16
        %v1865 = vrot.slane %v1863, 5
        %v1866 = vrot.slane %v529, 6
        %v1867 = vor.u32 %v1865, %v1866
        %v1868 = vsel %vm1703, %v1862, %v1867
        %v1869 = vrot.slane %v534, 5
        %v1870 = vrot.slane %v537, 6
        %v1871 = vor.u32 %v1869, %v1870
        %v1872 = vrot.slane %v1871, 4
        %v1873 = vrot.slane %v547, 5
        %v1874 = vrot.slane %v543, 6
        %v1875 = vor.u32 %v1873, %v1874
        %v1876 = vsel %vm1703, %v1872, %v1875
        %v1877 = vrot.slane %v1875, 4
        %v1878 = vshrl.u32 %v225, 16
        %v1880 = vrot.slane %v1878, 5
        %v1881 = vrot.slane %v553, 6
        %v1882 = vor.u32 %v1880, %v1881
        %v1883 = vsel %vm1703, %v1877, %v1882
        %v1884 = vrot.slane %v558, 5
        %v1885 = vrot.slane %v561, 6
        %v1886 = vor.u32 %v1884, %v1885
        %v1887 = vrot.slane %v1886, 4
        %v1888 = vrot.slane %v571, 5
        %v1889 = vrot.slane %v567, 6
        %v1890 = vor.u32 %v1888, %v1889
        %v1891 = vsel %vm1703, %v1887, %v1890
        %v1892 = vrot.slane %v1890, 4
        %v1893 = vshrl.u32 %v228, 16
        %v1895 = vrot.slane %v1893, 5
        %v1896 = vrot.slane %v577, 6
        %v1897 = vor.u32 %v1895, %v1896
        %v1898 = vsel %vm1703, %v1892, %v1897
        %v1899 = vrot.slane %v582, 5
        %v1900 = vrot.slane %v585, 6
        %v1901 = vor.u32 %v1899, %v1900
        %v1902 = vrot.slane %v1901, 4
        %v1903 = vrot.slane %v595, 5
        %v1904 = vrot.slane %v591, 6
        %v1905 = vor.u32 %v1903, %v1904
        %v1906 = vsel %vm1703, %v1902, %v1905
        %v1907 = vrot.slane %v1905, 4
        %v1908 = vshrl.u32 %v231, 16
        %v1910 = vrot.slane %v1908, 5
        %v1911 = vrot.slane %v601, 6
        %v1912 = vor.u32 %v1910, %v1911
        %v1913 = vsel %vm1703, %v1907, %v1912
        %v1914 = vrot.slane %v606, 5
        %v1915 = vrot.slane %v609, 6
        %v1916 = vor.u32 %v1914, %v1915
        %v1917 = vrot.slane %v1916, 4
        %v1918 = vrot.slane %v619, 5
        %v1919 = vrot.slane %v615, 6
        %v1920 = vor.u32 %v1918, %v1919
        %v1921 = vsel %vm1703, %v1917, %v1920
        %v1922 = vrot.slane %v1920, 4
        %v1923 = vshrl.u32 %v234, 16
        %v1925 = vrot.slane %v1923, 5
        %v1926 = vrot.slane %v625, 6
        %v1927 = vor.u32 %v1925, %v1926
        %v1928 = vsel %vm1703, %v1922, %v1927
        %v1929 = vrot.slane %v630, 5
        %v1930 = vrot.slane %v633, 6
        %v1931 = vor.u32 %v1929, %v1930
        %v1932 = vrot.slane %v1931, 4
        %v1933 = vrot.slane %v643, 5
        %v1934 = vrot.slane %v639, 6
        %v1935 = vor.u32 %v1933, %v1934
        %v1936 = vsel %vm1703, %v1932, %v1935
        %v1937 = vrot.slane %v1935, 4
        %v1938 = vshrl.u32 %v237, 16
        %v1940 = vrot.slane %v1938, 5
        %v1941 = vrot.slane %v649, 6
        %v1942 = vor.u32 %v1940, %v1941
        %v1943 = vsel %vm1703, %v1937, %v1942
        %s1944 = scalar_lea.vmem %s2, 192
        %v1945 = vld [vmem:[%s1944] sm:$0xf]
        %v1946 = vld [vmem:[%s1944 + $0x4] sm:$0xf]
        %v1947 = vld [vmem:[%s1944 + $0x8] sm:$0xf]
        %v1948 = vld [vmem:[%s1944 + $0xc] sm:$0xf]
        %v1949 = vld [vmem:[%s1944 + $0x10] sm:$0xf]
        %v1950 = vld [vmem:[%s1944 + $0x14] sm:$0xf]
        %v1951 = vld [vmem:[%s1944 + $0x18] sm:$0xf]
        %v1952 = vld [vmem:[%s1944 + $0x1c] sm:$0xf]
        %v1953 = vld [vmem:[%s1944 + $0x20] sm:$0xf]
        %v1954 = vld [vmem:[%s1944 + $0x24] sm:$0xf]
        %v1955 = vld [vmem:[%s1944 + $0x28] sm:$0xf]
        %v1956 = vld [vmem:[%s1944 + $0x2c] sm:$0xf]
        %v1957 = vld [vmem:[%s1944 + $0x30] sm:$0xf]
        %v1958 = vld [vmem:[%s1944 + $0x34] sm:$0xf]
        %v1959 = vld [vmem:[%s1944 + $0x38] sm:$0xf]
        %v1960 = vld [vmem:[%s1944 + $0x3c] sm:$0xf]
        %v1961 = vunpack.c.l.b16 %v1711
        %v1962 = vunpack.c.l.b16 %v1718
        %v1963 = vunpack.c.l.b16 %v1726
        %v1964 = vunpack.c.l.b16 %v1733
        %v1965 = vunpack.c.l.b16 %v1741
        %v1966 = vunpack.c.l.b16 %v1748
        %v1967 = vunpack.c.l.b16 %v1756
        %v1968 = vunpack.c.l.b16 %v1763
        %v1969 = vunpack.c.l.b16 %v1771
        %v1970 = vunpack.c.l.b16 %v1778
        %v1971 = vunpack.c.l.b16 %v1786
        %v1972 = vunpack.c.l.b16 %v1793
        %v1973 = vunpack.c.l.b16 %v1801
        %v1974 = vunpack.c.l.b16 %v1808
        %v1975 = vunpack.c.l.b16 %v1816
        %v1976 = vunpack.c.l.b16 %v1823
        %v1977 = vunpack.c.l.b16 %v1831
        %v1978 = vunpack.c.l.b16 %v1838
        %v1979 = vunpack.c.l.b16 %v1846
        %v1980 = vunpack.c.l.b16 %v1853
        %v1981 = vunpack.c.l.b16 %v1861
        %v1982 = vunpack.c.l.b16 %v1868
        %v1983 = vunpack.c.l.b16 %v1876
        %v1984 = vunpack.c.l.b16 %v1883
        %v1985 = vunpack.c.l.b16 %v1891
        %v1986 = vunpack.c.l.b16 %v1898
        %v1987 = vunpack.c.l.b16 %v1906
        %v1988 = vunpack.c.l.b16 %v1913
        %v1989 = vunpack.c.l.b16 %v1921
        %v1990 = vunpack.c.l.b16 %v1928
        %v1991 = vunpack.c.l.b16 %v1936
        %v1992 = vunpack.c.l.b16 %v1943
        %v1993 = vpack.c.b16 %v1962, %v1961
        %v1994 = vpack.c.b16 %v1964, %v1963
        %v1995 = vpack.c.b16 %v1966, %v1965
        %v1996 = vpack.c.b16 %v1968, %v1967
        %v1997 = vpack.c.b16 %v1970, %v1969
        %v1998 = vpack.c.b16 %v1972, %v1971
        %v1999 = vpack.c.b16 %v1974, %v1973
        %v2000 = vpack.c.b16 %v1976, %v1975
        %v2001 = vpack.c.b16 %v1978, %v1977
        %v2002 = vpack.c.b16 %v1980, %v1979
        %v2003 = vpack.c.b16 %v1982, %v1981
        %v2004 = vpack.c.b16 %v1984, %v1983
        %v2005 = vpack.c.b16 %v1986, %v1985
        %v2006 = vpack.c.b16 %v1988, %v1987
        %v2007 = vpack.c.b16 %v1990, %v1989
        %v2008 = vpack.c.b16 %v1992, %v1991
        %v2041 = vunpack.c.l.b16 %v1945
        %v2042 = vunpack.c.l.b16 %v1946
        %v2043 = vunpack.c.l.b16 %v1947
        %v2044 = vunpack.c.l.b16 %v1948
        %v2045 = vunpack.c.l.b16 %v1949
        %v2046 = vunpack.c.l.b16 %v1950
        %v2047 = vunpack.c.l.b16 %v1951
        %v2048 = vunpack.c.l.b16 %v1952
        %v2049 = vunpack.c.l.b16 %v1953
        %v2050 = vunpack.c.l.b16 %v1954
        %v2051 = vunpack.c.l.b16 %v1955
        %v2052 = vunpack.c.l.b16 %v1956
        %v2053 = vunpack.c.l.b16 %v1957
        %v2054 = vunpack.c.l.b16 %v1958
        %v2055 = vunpack.c.l.b16 %v1959
        %v2056 = vunpack.c.l.b16 %v1960
        %v2057 = vpack.c.b16 %v2042, %v2041
        %v2058 = vpack.c.b16 %v2044, %v2043
        %v2059 = vpack.c.b16 %v2046, %v2045
        %v2060 = vpack.c.b16 %v2048, %v2047
        %v2061 = vpack.c.b16 %v2050, %v2049
        %v2062 = vpack.c.b16 %v2052, %v2051
        %v2063 = vpack.c.b16 %v2054, %v2053
        %v2064 = vpack.c.b16 %v2056, %v2055
        %2073 = vmatprep.subr.bf16.mxu0 0
        %2074 = vmatpush1.bf16.msra.mxu0 %v2057
        %2075 = vmatprep.subr.bf16.mxu0 0
        %2076 = vmatpush1.bf16.msra.mxu0 %v2058
        %2077 = vmatprep.subr.bf16.mxu0 0
        %2078 = vmatpush1.bf16.msra.mxu0 %v2059
        %2079 = vmatprep.subr.bf16.mxu0 0
        %2080 = vmatpush1.bf16.msra.mxu0 %v2060
        %2081 = vmatprep.subr.bf16.mxu0 0
        %2082 = vmatpush1.bf16.msra.mxu0 %v2061
        %2083 = vmatprep.subr.bf16.mxu0 0
        %2084 = vmatpush1.bf16.msra.mxu0 %v2062
        %2085 = vmatprep.subr.bf16.mxu0 0
        %2086 = vmatpush1.bf16.msra.mxu0 %v2063
        %2087 = vmatprep.subr.bf16.mxu0 0
        %2088 = vmatpush1.bf16.msra.mxu0 %v2064
        %2089 = vmatprep.subr.bf16.mxu0 0
        %2090 = vmatpush1.bf16.msra.mxu0 0
        %2091 = vmatprep.subr.bf16.mxu0 0
        %2092 = vmatpush1.bf16.msra.mxu0 0
        %2093 = vmatprep.subr.bf16.mxu0 0
        %2094 = vmatpush1.bf16.msra.mxu0 0
        %2095 = vmatprep.subr.bf16.mxu0 0
        %2096 = vmatpush1.bf16.msra.mxu0 0
        %2097 = vmatprep.subr.bf16.mxu0 0
        %2098 = vmatpush1.bf16.msra.mxu0 0
        %2099 = vmatprep.subr.bf16.mxu0 0
        %2100 = vmatpush1.bf16.msra.mxu0 0
        %2101 = vmatprep.subr.bf16.mxu0 0
        %2102 = vmatpush1.bf16.msra.mxu0 0
        %2103 = vmatprep.subr.bf16.mxu0 0
        %2104 = vmatpush1.bf16.msra.mxu0 0
        %2105 = vmatprep.mubr.bf16.mxu0 0
        %2106 = vmatmul.mubr.bf16.gmra.mrb[0].mxu0 %v1993
        %v2107 = vpop.f32.mrb[0].mxu0
        %v2108 = vadd.f32 0.0, %v2107
        %v2109 = vpop.f32.mrb[0].mxu0
        %v2110 = vpop.f32.mrb[0].mxu0
        %v2111 = vadd.f32 0.0, %v2110
        %v2112 = vpop.f32.mrb[0].mxu0
        %2113 = vmatprep.mubr.bf16.mxu0 0
        %2114 = vmatmul.mubr.bf16.gmra.mrb[0].mxu0 %v1994
        %v2115 = vpop.f32.mrb[0].mxu0
        %v2116 = vadd.f32 0.0, %v2115
        %v2117 = vpop.f32.mrb[0].mxu0
        %v2118 = vpop.f32.mrb[0].mxu0
        %v2119 = vadd.f32 0.0, %v2118
        %v2120 = vpop.f32.mrb[0].mxu0
        %2121 = vmatprep.mubr.bf16.mxu0 0
        %2122 = vmatmul.mubr.bf16.gmra.mrb[0].mxu0 %v1995
        %v2123 = vpop.f32.mrb[0].mxu0
        %v2124 = vadd.f32 0.0, %v2123
        %v2125 = vpop.f32.mrb[0].mxu0
        %v2126 = vpop.f32.mrb[0].mxu0
        %v2127 = vadd.f32 0.0, %v2126
        %v2128 = vpop.f32.mrb[0].mxu0
        %2129 = vmatprep.mubr.bf16.mxu0 0
        %2130 = vmatmul.mubr.bf16.gmra.mrb[0].mxu0 %v1996
        %v2131 = vpop.f32.mrb[0].mxu0
        %v2132 = vadd.f32 0.0, %v2131
        %v2133 = vpop.f32.mrb[0].mxu0
        %v2134 = vpop.f32.mrb[0].mxu0
        %v2135 = vadd.f32 0.0, %v2134
        %v2136 = vpop.f32.mrb[0].mxu0
        %2137 = vmatprep.mubr.bf16.mxu0 0
        %2138 = vmatmul.mubr.bf16.gmra.mrb[0].mxu0 %v1997
        %v2139 = vpop.f32.mrb[0].mxu0
        %v2140 = vadd.f32 0.0, %v2139
        %v2141 = vpop.f32.mrb[0].mxu0
        %v2142 = vpop.f32.mrb[0].mxu0
        %v2143 = vadd.f32 0.0, %v2142
        %v2144 = vpop.f32.mrb[0].mxu0
        %2145 = vmatprep.mubr.bf16.mxu0 0
        %2146 = vmatmul.mubr.bf16.gmra.mrb[0].mxu0 %v1998
        %v2147 = vpop.f32.mrb[0].mxu0
        %v2148 = vadd.f32 0.0, %v2147
        %v2149 = vpop.f32.mrb[0].mxu0
        %v2150 = vpop.f32.mrb[0].mxu0
        %v2151 = vadd.f32 0.0, %v2150
        %v2152 = vpop.f32.mrb[0].mxu0
        %2153 = vmatprep.mubr.bf16.mxu0 0
        %2154 = vmatmul.mubr.bf16.gmra.mrb[0].mxu0 %v1999
        %v2155 = vpop.f32.mrb[0].mxu0
        %v2156 = vadd.f32 0.0, %v2155
        %v2157 = vpop.f32.mrb[0].mxu0
        %v2158 = vpop.f32.mrb[0].mxu0
        %v2159 = vadd.f32 0.0, %v2158
        %v2160 = vpop.f32.mrb[0].mxu0
        %2161 = vmatprep.mubr.bf16.mxu0 0
        %2162 = vmatmul.mubr.bf16.gmra.mrb[0].mxu0 %v2000
        %v2163 = vpop.f32.mrb[0].mxu0
        %v2164 = vadd.f32 0.0, %v2163
        %v2165 = vpop.f32.mrb[0].mxu0
        %v2166 = vpop.f32.mrb[0].mxu0
        %v2167 = vadd.f32 0.0, %v2166
        %v2168 = vpop.f32.mrb[0].mxu0
        %2169 = vmatprep.mubr.bf16.mxu0 0
        %2170 = vmatmul.mubr.bf16.gmra.mrb[0].mxu0 %v2001
        %v2171 = vpop.f32.mrb[0].mxu0
        %v2172 = vadd.f32 0.0, %v2171
        %v2173 = vpop.f32.mrb[0].mxu0
        %v2174 = vpop.f32.mrb[0].mxu0
        %v2175 = vadd.f32 0.0, %v2174
        %v2176 = vpop.f32.mrb[0].mxu0
        %2177 = vmatprep.mubr.bf16.mxu0 0
        %2178 = vmatmul.mubr.bf16.gmra.mrb[0].mxu0 %v2002
        %v2179 = vpop.f32.mrb[0].mxu0
        %v2180 = vadd.f32 0.0, %v2179
        %v2181 = vpop.f32.mrb[0].mxu0
        %v2182 = vpop.f32.mrb[0].mxu0
        %v2183 = vadd.f32 0.0, %v2182
        %v2184 = vpop.f32.mrb[0].mxu0
        %2185 = vmatprep.mubr.bf16.mxu0 0
        %2186 = vmatmul.mubr.bf16.gmra.mrb[0].mxu0 %v2003
        %v2187 = vpop.f32.mrb[0].mxu0
        %v2188 = vadd.f32 0.0, %v2187
        %v2189 = vpop.f32.mrb[0].mxu0
        %v2190 = vpop.f32.mrb[0].mxu0
        %v2191 = vadd.f32 0.0, %v2190
        %v2192 = vpop.f32.mrb[0].mxu0
        %2193 = vmatprep.mubr.bf16.mxu0 0
        %2194 = vmatmul.mubr.bf16.gmra.mrb[0].mxu0 %v2004
        %v2195 = vpop.f32.mrb[0].mxu0
        %v2196 = vadd.f32 0.0, %v2195
        %v2197 = vpop.f32.mrb[0].mxu0
        %v2198 = vpop.f32.mrb[0].mxu0
        %v2199 = vadd.f32 0.0, %v2198
        %v2200 = vpop.f32.mrb[0].mxu0
        %2201 = vmatprep.mubr.bf16.mxu0 0
        %2202 = vmatmul.mubr.bf16.gmra.mrb[0].mxu0 %v2005
        %v2203 = vpop.f32.mrb[0].mxu0
        %v2204 = vadd.f32 0.0, %v2203
        %v2205 = vpop.f32.mrb[0].mxu0
        %v2206 = vpop.f32.mrb[0].mxu0
        %v2207 = vadd.f32 0.0, %v2206
        %v2208 = vpop.f32.mrb[0].mxu0
        %2209 = vmatprep.mubr.bf16.mxu0 0
        %2210 = vmatmul.mubr.bf16.gmra.mrb[0].mxu0 %v2006
        %v2211 = vpop.f32.mrb[0].mxu0
        %v2212 = vadd.f32 0.0, %v2211
        %v2213 = vpop.f32.mrb[0].mxu0
        %v2214 = vpop.f32.mrb[0].mxu0
        %v2215 = vadd.f32 0.0, %v2214
        %v2216 = vpop.f32.mrb[0].mxu0
        %2217 = vmatprep.mubr.bf16.mxu0 0
        %2218 = vmatmul.mubr.bf16.gmra.mrb[0].mxu0 %v2007
        %v2219 = vpop.f32.mrb[0].mxu0
        %v2220 = vadd.f32 0.0, %v2219
        %v2221 = vpop.f32.mrb[0].mxu0
        %v2222 = vpop.f32.mrb[0].mxu0
        %v2223 = vadd.f32 0.0, %v2222
        %v2224 = vpop.f32.mrb[0].mxu0
        %2225 = vmatprep.mubr.bf16.mxu0 0
        %2226 = vmatmul.mubr.bf16.gmra.mrb[0].mxu0 %v2008
        %v2227 = vpop.f32.mrb[0].mxu0
        %v2228 = vadd.f32 0.0, %v2227
        %v2229 = vpop.f32.mrb[0].mxu0
        %v2230 = vpop.f32.mrb[0].mxu0
        %v2231 = vadd.f32 0.0, %v2230
        %v2232 = vpop.f32.mrb[0].mxu0
        %2233 = vdwg.mxu0
        %v2234 = vadd.f32 %v1669, %v2108
        %v2235 = vadd.f32 %v1670, %v2111
        %v2236 = vadd.f32 %v1671, %v2116
        %v2237 = vadd.f32 %v1672, %v2119
        %v2238 = vadd.f32 %v1673, %v2124
        %v2239 = vadd.f32 %v1674, %v2127
        %v2240 = vadd.f32 %v1675, %v2132
        %v2241 = vadd.f32 %v1676, %v2135
        %v2242 = vadd.f32 %v1677, %v2140
        %v2243 = vadd.f32 %v1678, %v2143
        %v2244 = vadd.f32 %v1679, %v2148
        %v2245 = vadd.f32 %v1680, %v2151
        %v2246 = vadd.f32 %v1681, %v2156
        %v2247 = vadd.f32 %v1682, %v2159
        %v2248 = vadd.f32 %v1683, %v2164
        %v2249 = vadd.f32 %v1684, %v2167
        %v2250 = vadd.f32 %v1685, %v2172
        %v2251 = vadd.f32 %v1686, %v2175
        %v2252 = vadd.f32 %v1687, %v2180
        %v2253 = vadd.f32 %v1688, %v2183
        %v2254 = vadd.f32 %v1689, %v2188
        %v2255 = vadd.f32 %v1690, %v2191
        %v2256 = vadd.f32 %v1691, %v2196
        %v2257 = vadd.f32 %v1692, %v2199
        %v2258 = vadd.f32 %v1693, %v2204
        %v2259 = vadd.f32 %v1694, %v2207
        %v2260 = vadd.f32 %v1695, %v2212
        %v2261 = vadd.f32 %v1696, %v2215
        %v2262 = vadd.f32 %v1697, %v2220
        %v2263 = vadd.f32 %v1698, %v2223
        %v2264 = vadd.f32 %v1699, %v2228
        %v2265 = vadd.f32 %v1700, %v2231
        %vm2266 = vcmask 1041408
        %vm2267 = vcmask 1045508
        %vm2268 = vmor %vm2266, %vm2267
        %v2269 = vrot.slane %v190, 6
        %v2270 = vrot.slane %v2269, 4
        %v2271 = vrot.slane %v191, 6
        %v2272 = vsel %vm2268, %v2270, %v2271
        %v2273 = vrot.slane %v2271, 4
        %v2274 = vrot.slane %v192, 6
        %v2275 = vsel %vm2268, %v2273, %v2274
        %v2276 = vrot.slane %v193, 6
        %v2277 = vrot.slane %v2276, 4
        %v2278 = vrot.slane %v194, 6
        %v2279 = vsel %vm2268, %v2277, %v2278
        %v2280 = vrot.slane %v2278, 4
        %v2281 = vrot.slane %v195, 6
        %v2282 = vsel %vm2268, %v2280, %v2281
        %v2283 = vrot.slane %v196, 6
        %v2284 = vrot.slane %v2283, 4
        %v2285 = vrot.slane %v197, 6
        %v2286 = vsel %vm2268, %v2284, %v2285
        %v2287 = vrot.slane %v2285, 4
        %v2288 = vrot.slane %v198, 6
        %v2289 = vsel %vm2268, %v2287, %v2288
        %v2290 = vrot.slane %v199, 6
        %v2291 = vrot.slane %v2290, 4
        %v2292 = vrot.slane %v200, 6
        %v2293 = vsel %vm2268, %v2291, %v2292
        %v2294 = vrot.slane %v2292, 4
        %v2295 = vrot.slane %v201, 6
        %v2296 = vsel %vm2268, %v2294, %v2295
        %v2297 = vrot.slane %v202, 6
        %v2298 = vrot.slane %v2297, 4
        %v2299 = vrot.slane %v203, 6
        %v2300 = vsel %vm2268, %v2298, %v2299
        %v2301 = vrot.slane %v2299, 4
        %v2302 = vrot.slane %v204, 6
        %v2303 = vsel %vm2268, %v2301, %v2302
        %v2304 = vrot.slane %v205, 6
        %v2305 = vrot.slane %v2304, 4
        %v2306 = vrot.slane %v206, 6
        %v2307 = vsel %vm2268, %v2305, %v2306
        %v2308 = vrot.slane %v2306, 4
        %v2309 = vrot.slane %v207, 6
        %v2310 = vsel %vm2268, %v2308, %v2309
        %v2311 = vrot.slane %v208, 6
        %v2312 = vrot.slane %v2311, 4
        %v2313 = vrot.slane %v209, 6
        %v2314 = vsel %vm2268, %v2312, %v2313
        %v2315 = vrot.slane %v2313, 4
        %v2316 = vrot.slane %v210, 6
        %v2317 = vsel %vm2268, %v2315, %v2316
        %v2318 = vrot.slane %v211, 6
        %v2319 = vrot.slane %v2318, 4
        %v2320 = vrot.slane %v212, 6
        %v2321 = vsel %vm2268, %v2319, %v2320
        %v2322 = vrot.slane %v2320, 4
        %v2323 = vrot.slane %v213, 6
        %v2324 = vsel %vm2268, %v2322, %v2323
        %v2325 = vrot.slane %v214, 6
        %v2326 = vrot.slane %v2325, 4
        %v2327 = vrot.slane %v215, 6
        %v2328 = vsel %vm2268, %v2326, %v2327
        %v2329 = vrot.slane %v2327, 4
        %v2330 = vrot.slane %v216, 6
        %v2331 = vsel %vm2268, %v2329, %v2330
        %v2332 = vrot.slane %v217, 6
        %v2333 = vrot.slane %v2332, 4
        %v2334 = vrot.slane %v218, 6
        %v2335 = vsel %vm2268, %v2333, %v2334
        %v2336 = vrot.slane %v2334, 4
        %v2337 = vrot.slane %v219, 6
        %v2338 = vsel %vm2268, %v2336, %v2337
        %v2339 = vrot.slane %v220, 6
        %v2340 = vrot.slane %v2339, 4
        %v2341 = vrot.slane %v221, 6
        %v2342 = vsel %vm2268, %v2340, %v2341
        %v2343 = vrot.slane %v2341, 4
        %v2344 = vrot.slane %v222, 6
        %v2345 = vsel %vm2268, %v2343, %v2344
        %v2346 = vrot.slane %v223, 6
        %v2347 = vrot.slane %v2346, 4
        %v2348 = vrot.slane %v224, 6
        %v2349 = vsel %vm2268, %v2347, %v2348
        %v2350 = vrot.slane %v2348, 4
        %v2351 = vrot.slane %v225, 6
        %v2352 = vsel %vm2268, %v2350, %v2351
        %v2353 = vrot.slane %v226, 6
        %v2354 = vrot.slane %v2353, 4
        %v2355 = vrot.slane %v227, 6
        %v2356 = vsel %vm2268, %v2354, %v2355
        %v2357 = vrot.slane %v2355, 4
        %v2358 = vrot.slane %v228, 6
        %v2359 = vsel %vm2268, %v2357, %v2358
        %v2360 = vrot.slane %v229, 6
        %v2361 = vrot.slane %v2360, 4
        %v2362 = vrot.slane %v230, 6
        %v2363 = vsel %vm2268, %v2361, %v2362
        %v2364 = vrot.slane %v2362, 4
        %v2365 = vrot.slane %v231, 6
        %v2366 = vsel %vm2268, %v2364, %v2365
        %v2367 = vrot.slane %v232, 6
        %v2368 = vrot.slane %v2367, 4
        %v2369 = vrot.slane %v233, 6
        %v2370 = vsel %vm2268, %v2368, %v2369
        %v2371 = vrot.slane %v2369, 4
        %v2372 = vrot.slane %v234, 6
        %v2373 = vsel %vm2268, %v2371, %v2372
        %v2374 = vrot.slane %v235, 6
        %v2375 = vrot.slane %v2374, 4
        %v2376 = vrot.slane %v236, 6
        %v2377 = vsel %vm2268, %v2375, %v2376
        %v2378 = vrot.slane %v2376, 4
        %v2379 = vrot.slane %v237, 6
        %v2380 = vsel %vm2268, %v2378, %v2379
        %s2381 = scalar_lea.vmem %s2, 256
        %v2382 = vld [vmem:[%s2381] sm:$0xf]
        %v2383 = vld [vmem:[%s2381 + $0x4] sm:$0xf]
        %v2384 = vld [vmem:[%s2381 + $0x8] sm:$0xf]
        %v2385 = vld [vmem:[%s2381 + $0xc] sm:$0xf]
        %v2386 = vld [vmem:[%s2381 + $0x10] sm:$0xf]
        %v2387 = vld [vmem:[%s2381 + $0x14] sm:$0xf]
        %v2388 = vld [vmem:[%s2381 + $0x18] sm:$0xf]
        %v2389 = vld [vmem:[%s2381 + $0x1c] sm:$0xf]
        %v2390 = vld [vmem:[%s2381 + $0x20] sm:$0xf]
        %v2391 = vld [vmem:[%s2381 + $0x24] sm:$0xf]
        %v2392 = vld [vmem:[%s2381 + $0x28] sm:$0xf]
        %v2393 = vld [vmem:[%s2381 + $0x2c] sm:$0xf]
        %v2394 = vld [vmem:[%s2381 + $0x30] sm:$0xf]
        %v2395 = vld [vmem:[%s2381 + $0x34] sm:$0xf]
        %v2396 = vld [vmem:[%s2381 + $0x38] sm:$0xf]
        %v2397 = vld [vmem:[%s2381 + $0x3c] sm:$0xf]
        %v2398 = vunpack.c.l.b16 %v2272
        %v2399 = vunpack.c.l.b16 %v2275
        %v2400 = vunpack.c.l.b16 %v2279
        %v2401 = vunpack.c.l.b16 %v2282
        %v2402 = vunpack.c.l.b16 %v2286
        %v2403 = vunpack.c.l.b16 %v2289
        %v2404 = vunpack.c.l.b16 %v2293
        %v2405 = vunpack.c.l.b16 %v2296
        %v2406 = vunpack.c.l.b16 %v2300
        %v2407 = vunpack.c.l.b16 %v2303
        %v2408 = vunpack.c.l.b16 %v2307
        %v2409 = vunpack.c.l.b16 %v2310
        %v2410 = vunpack.c.l.b16 %v2314
        %v2411 = vunpack.c.l.b16 %v2317
        %v2412 = vunpack.c.l.b16 %v2321
        %v2413 = vunpack.c.l.b16 %v2324
        %v2414 = vunpack.c.l.b16 %v2328
        %v2415 = vunpack.c.l.b16 %v2331
        %v2416 = vunpack.c.l.b16 %v2335
        %v2417 = vunpack.c.l.b16 %v2338
        %v2418 = vunpack.c.l.b16 %v2342
        %v2419 = vunpack.c.l.b16 %v2345
        %v2420 = vunpack.c.l.b16 %v2349
        %v2421 = vunpack.c.l.b16 %v2352
        %v2422 = vunpack.c.l.b16 %v2356
        %v2423 = vunpack.c.l.b16 %v2359
        %v2424 = vunpack.c.l.b16 %v2363
        %v2425 = vunpack.c.l.b16 %v2366
        %v2426 = vunpack.c.l.b16 %v2370
        %v2427 = vunpack.c.l.b16 %v2373
        %v2428 = vunpack.c.l.b16 %v2377
        %v2429 = vunpack.c.l.b16 %v2380
        %v2430 = vpack.c.b16 %v2399, %v2398
        %v2431 = vpack.c.b16 %v2401, %v2400
        %v2432 = vpack.c.b16 %v2403, %v2402
        %v2433 = vpack.c.b16 %v2405, %v2404
        %v2434 = vpack.c.b16 %v2407, %v2406
        %v2435 = vpack.c.b16 %v2409, %v2408
        %v2436 = vpack.c.b16 %v2411, %v2410
        %v2437 = vpack.c.b16 %v2413, %v2412
        %v2438 = vpack.c.b16 %v2415, %v2414
        %v2439 = vpack.c.b16 %v2417, %v2416
        %v2440 = vpack.c.b16 %v2419, %v2418
        %v2441 = vpack.c.b16 %v2421, %v2420
        %v2442 = vpack.c.b16 %v2423, %v2422
        %v2443 = vpack.c.b16 %v2425, %v2424
        %v2444 = vpack.c.b16 %v2427, %v2426
        %v2445 = vpack.c.b16 %v2429, %v2428
        %v2478 = vunpack.c.l.b16 %v2382
        %v2479 = vunpack.c.l.b16 %v2383
        %v2480 = vunpack.c.l.b16 %v2384
        %v2481 = vunpack.c.l.b16 %v2385
        %v2482 = vunpack.c.l.b16 %v2386
        %v2483 = vunpack.c.l.b16 %v2387
        %v2484 = vunpack.c.l.b16 %v2388
        %v2485 = vunpack.c.l.b16 %v2389
        %v2486 = vunpack.c.l.b16 %v2390
        %v2487 = vunpack.c.l.b16 %v2391
        %v2488 = vunpack.c.l.b16 %v2392
        %v2489 = vunpack.c.l.b16 %v2393
        %v2490 = vunpack.c.l.b16 %v2394
        %v2491 = vunpack.c.l.b16 %v2395
        %v2492 = vunpack.c.l.b16 %v2396
        %v2493 = vunpack.c.l.b16 %v2397
        %v2494 = vpack.c.b16 %v2479, %v2478
        %v2495 = vpack.c.b16 %v2481, %v2480
        %v2496 = vpack.c.b16 %v2483, %v2482
        %v2497 = vpack.c.b16 %v2485, %v2484
        %v2498 = vpack.c.b16 %v2487, %v2486
        %v2499 = vpack.c.b16 %v2489, %v2488
        %v2500 = vpack.c.b16 %v2491, %v2490
        %v2501 = vpack.c.b16 %v2493, %v2492
        %2510 = vmatprep.subr.bf16.mxu0 0
        %2511 = vmatpush1.bf16.msra.mxu0 %v2494
        %2512 = vmatprep.subr.bf16.mxu0 0
        %2513 = vmatpush1.bf16.msra.mxu0 %v2495
        %2514 = vmatprep.subr.bf16.mxu0 0
        %2515 = vmatpush1.bf16.msra.mxu0 %v2496
        %2516 = vmatprep.subr.bf16.mxu0 0
        %2517 = vmatpush1.bf16.msra.mxu0 %v2497
        %2518 = vmatprep.subr.bf16.mxu0 0
        %2519 = vmatpush1.bf16.msra.mxu0 %v2498
        %2520 = vmatprep.subr.bf16.mxu0 0
        %2521 = vmatpush1.bf16.msra.mxu0 %v2499
        %2522 = vmatprep.subr.bf16.mxu0 0
        %2523 = vmatpush1.bf16.msra.mxu0 %v2500
        %2524 = vmatprep.subr.bf16.mxu0 0
        %2525 = vmatpush1.bf16.msra.mxu0 %v2501
        %2526 = vmatprep.subr.bf16.mxu0 0
        %2527 = vmatpush1.bf16.msra.mxu0 0
        %2528 = vmatprep.subr.bf16.mxu0 0
        %2529 = vmatpush1.bf16.msra.mxu0 0
        %2530 = vmatprep.subr.bf16.mxu0 0
        %2531 = vmatpush1.bf16.msra.mxu0 0
        %2532 = vmatprep.subr.bf16.mxu0 0
        %2533 = vmatpush1.bf16.msra.mxu0 0
        %2534 = vmatprep.subr.bf16.mxu0 0
        %2535 = vmatpush1.bf16.msra.mxu0 0
        %2536 = vmatprep.subr.bf16.mxu0 0
        %2537 = vmatpush1.bf16.msra.mxu0 0
        %2538 = vmatprep.subr.bf16.mxu0 0
        %2539 = vmatpush1.bf16.msra.mxu0 0
        %2540 = vmatprep.subr.bf16.mxu0 0
        %2541 = vmatpush1.bf16.msra.mxu0 0
        %2542 = vmatprep.mubr.bf16.mxu0 0
        %2543 = vmatmul.mubr.bf16.gmra.mrb[0].mxu0 %v2430
        %v2544 = vpop.f32.mrb[0].mxu0
        %v2545 = vadd.f32 0.0, %v2544
        %v2546 = vpop.f32.mrb[0].mxu0
        %v2547 = vpop.f32.mrb[0].mxu0
        %v2548 = vadd.f32 0.0, %v2547
        %v2549 = vpop.f32.mrb[0].mxu0
        %2550 = vmatprep.mubr.bf16.mxu0 0
        %2551 = vmatmul.mubr.bf16.gmra.mrb[0].mxu0 %v2431
        %v2552 = vpop.f32.mrb[0].mxu0
        %v2553 = vadd.f32 0.0, %v2552
        %v2554 = vpop.f32.mrb[0].mxu0
        %v2555 = vpop.f32.mrb[0].mxu0
        %v2556 = vadd.f32 0.0, %v2555
        %v2557 = vpop.f32.mrb[0].mxu0
        %2558 = vmatprep.mubr.bf16.mxu0 0
        %2559 = vmatmul.mubr.bf16.gmra.mrb[0].mxu0 %v2432
        %v2560 = vpop.f32.mrb[0].mxu0
        %v2561 = vadd.f32 0.0, %v2560
        %v2562 = vpop.f32.mrb[0].mxu0
        %v2563 = vpop.f32.mrb[0].mxu0
        %v2564 = vadd.f32 0.0, %v2563
        %v2565 = vpop.f32.mrb[0].mxu0
        %2566 = vmatprep.mubr.bf16.mxu0 0
        %2567 = vmatmul.mubr.bf16.gmra.mrb[0].mxu0 %v2433
        %v2568 = vpop.f32.mrb[0].mxu0
        %v2569 = vadd.f32 0.0, %v2568
        %v2570 = vpop.f32.mrb[0].mxu0
        %v2571 = vpop.f32.mrb[0].mxu0
        %v2572 = vadd.f32 0.0, %v2571
        %v2573 = vpop.f32.mrb[0].mxu0
        %2574 = vmatprep.mubr.bf16.mxu0 0
        %2575 = vmatmul.mubr.bf16.gmra.mrb[0].mxu0 %v2434
        %v2576 = vpop.f32.mrb[0].mxu0
        %v2577 = vadd.f32 0.0, %v2576
        %v2578 = vpop.f32.mrb[0].mxu0
        %v2579 = vpop.f32.mrb[0].mxu0
        %v2580 = vadd.f32 0.0, %v2579
        %v2581 = vpop.f32.mrb[0].mxu0
        %2582 = vmatprep.mubr.bf16.mxu0 0
        %2583 = vmatmul.mubr.bf16.gmra.mrb[0].mxu0 %v2435
        %v2584 = vpop.f32.mrb[0].mxu0
        %v2585 = vadd.f32 0.0, %v2584
        %v2586 = vpop.f32.mrb[0].mxu0
        %v2587 = vpop.f32.mrb[0].mxu0
        %v2588 = vadd.f32 0.0, %v2587
        %v2589 = vpop.f32.mrb[0].mxu0
        %2590 = vmatprep.mubr.bf16.mxu0 0
        %2591 = vmatmul.mubr.bf16.gmra.mrb[0].mxu0 %v2436
        %v2592 = vpop.f32.mrb[0].mxu0
        %v2593 = vadd.f32 0.0, %v2592
        %v2594 = vpop.f32.mrb[0].mxu0
        %v2595 = vpop.f32.mrb[0].mxu0
        %v2596 = vadd.f32 0.0, %v2595
        %v2597 = vpop.f32.mrb[0].mxu0
        %2598 = vmatprep.mubr.bf16.mxu0 0
        %2599 = vmatmul.mubr.bf16.gmra.mrb[0].mxu0 %v2437
        %v2600 = vpop.f32.mrb[0].mxu0
        %v2601 = vadd.f32 0.0, %v2600
        %v2602 = vpop.f32.mrb[0].mxu0
        %v2603 = vpop.f32.mrb[0].mxu0
        %v2604 = vadd.f32 0.0, %v2603
        %v2605 = vpop.f32.mrb[0].mxu0
        %2606 = vmatprep.mubr.bf16.mxu0 0
        %2607 = vmatmul.mubr.bf16.gmra.mrb[0].mxu0 %v2438
        %v2608 = vpop.f32.mrb[0].mxu0
        %v2609 = vadd.f32 0.0, %v2608
        %v2610 = vpop.f32.mrb[0].mxu0
        %v2611 = vpop.f32.mrb[0].mxu0
        %v2612 = vadd.f32 0.0, %v2611
        %v2613 = vpop.f32.mrb[0].mxu0
        %2614 = vmatprep.mubr.bf16.mxu0 0
        %2615 = vmatmul.mubr.bf16.gmra.mrb[0].mxu0 %v2439
        %v2616 = vpop.f32.mrb[0].mxu0
        %v2617 = vadd.f32 0.0, %v2616
        %v2618 = vpop.f32.mrb[0].mxu0
        %v2619 = vpop.f32.mrb[0].mxu0
        %v2620 = vadd.f32 0.0, %v2619
        %v2621 = vpop.f32.mrb[0].mxu0
        %2622 = vmatprep.mubr.bf16.mxu0 0
        %2623 = vmatmul.mubr.bf16.gmra.mrb[0].mxu0 %v2440
        %v2624 = vpop.f32.mrb[0].mxu0
        %v2625 = vadd.f32 0.0, %v2624
        %v2626 = vpop.f32.mrb[0].mxu0
        %v2627 = vpop.f32.mrb[0].mxu0
        %v2628 = vadd.f32 0.0, %v2627
        %v2629 = vpop.f32.mrb[0].mxu0
        %2630 = vmatprep.mubr.bf16.mxu0 0
        %2631 = vmatmul.mubr.bf16.gmra.mrb[0].mxu0 %v2441
        %v2632 = vpop.f32.mrb[0].mxu0
        %v2633 = vadd.f32 0.0, %v2632
        %v2634 = vpop.f32.mrb[0].mxu0
        %v2635 = vpop.f32.mrb[0].mxu0
        %v2636 = vadd.f32 0.0, %v2635
        %v2637 = vpop.f32.mrb[0].mxu0
        %2638 = vmatprep.mubr.bf16.mxu0 0
        %2639 = vmatmul.mubr.bf16.gmra.mrb[0].mxu0 %v2442
        %v2640 = vpop.f32.mrb[0].mxu0
        %v2641 = vadd.f32 0.0, %v2640
        %v2642 = vpop.f32.mrb[0].mxu0
        %v2643 = vpop.f32.mrb[0].mxu0
        %v2644 = vadd.f32 0.0, %v2643
        %v2645 = vpop.f32.mrb[0].mxu0
        %2646 = vmatprep.mubr.bf16.mxu0 0
        %2647 = vmatmul.mubr.bf16.gmra.mrb[0].mxu0 %v2443
        %v2648 = vpop.f32.mrb[0].mxu0
        %v2649 = vadd.f32 0.0, %v2648
        %v2650 = vpop.f32.mrb[0].mxu0
        %v2651 = vpop.f32.mrb[0].mxu0
        %v2652 = vadd.f32 0.0, %v2651
        %v2653 = vpop.f32.mrb[0].mxu0
        %2654 = vmatprep.mubr.bf16.mxu0 0
        %2655 = vmatmul.mubr.bf16.gmra.mrb[0].mxu0 %v2444
        %v2656 = vpop.f32.mrb[0].mxu0
        %v2657 = vadd.f32 0.0, %v2656
        %v2658 = vpop.f32.mrb[0].mxu0
        %v2659 = vpop.f32.mrb[0].mxu0
        %v2660 = vadd.f32 0.0, %v2659
        %v2661 = vpop.f32.mrb[0].mxu0
        %2662 = vmatprep.mubr.bf16.mxu0 0
        %2663 = vmatmul.mubr.bf16.gmra.mrb[0].mxu0 %v2445
        %v2664 = vpop.f32.mrb[0].mxu0
        %v2665 = vadd.f32 0.0, %v2664
        %v2666 = vpop.f32.mrb[0].mxu0
        %v2667 = vpop.f32.mrb[0].mxu0
        %v2668 = vadd.f32 0.0, %v2667
        %v2669 = vpop.f32.mrb[0].mxu0
        %2670 = vdwg.mxu0
        %v2671 = vadd.f32 %v2234, %v2545
        %v2672 = vadd.f32 %v2235, %v2548
        %v2673 = vadd.f32 %v2236, %v2553
        %v2674 = vadd.f32 %v2237, %v2556
        %v2675 = vadd.f32 %v2238, %v2561
        %v2676 = vadd.f32 %v2239, %v2564
        %v2677 = vadd.f32 %v2240, %v2569
        %v2678 = vadd.f32 %v2241, %v2572
        %v2679 = vadd.f32 %v2242, %v2577
        %v2680 = vadd.f32 %v2243, %v2580
        %v2681 = vadd.f32 %v2244, %v2585
        %v2682 = vadd.f32 %v2245, %v2588
        %v2683 = vadd.f32 %v2246, %v2593
        %v2684 = vadd.f32 %v2247, %v2596
        %v2685 = vadd.f32 %v2248, %v2601
        %v2686 = vadd.f32 %v2249, %v2604
        %v2687 = vadd.f32 %v2250, %v2609
        %v2688 = vadd.f32 %v2251, %v2612
        %v2689 = vadd.f32 %v2252, %v2617
        %v2690 = vadd.f32 %v2253, %v2620
        %v2691 = vadd.f32 %v2254, %v2625
        %v2692 = vadd.f32 %v2255, %v2628
        %v2693 = vadd.f32 %v2256, %v2633
        %v2694 = vadd.f32 %v2257, %v2636
        %v2695 = vadd.f32 %v2258, %v2641
        %v2696 = vadd.f32 %v2259, %v2644
        %v2697 = vadd.f32 %v2260, %v2649
        %v2698 = vadd.f32 %v2261, %v2652
        %v2699 = vadd.f32 %v2262, %v2657
        %v2700 = vadd.f32 %v2263, %v2660
        %v2701 = vadd.f32 %v2264, %v2665
        %v2702 = vadd.f32 %v2265, %v2668
        %s2703 = scalar_lea.vmem %s2, 320
        %v2704 = vld [vmem:[%s2703] sm:$0xf]
        %v2705 = vld [vmem:[%s2703 + $0x4] sm:$0xf]
        %v2706 = vld [vmem:[%s2703 + $0x8] sm:$0xf]
        %v2707 = vld [vmem:[%s2703 + $0xc] sm:$0xf]
        %v2708 = vld [vmem:[%s2703 + $0x10] sm:$0xf]
        %v2709 = vld [vmem:[%s2703 + $0x14] sm:$0xf]
        %v2710 = vld [vmem:[%s2703 + $0x18] sm:$0xf]
        %v2711 = vld [vmem:[%s2703 + $0x1c] sm:$0xf]
        %v2712 = vld [vmem:[%s2703 + $0x20] sm:$0xf]
        %v2713 = vld [vmem:[%s2703 + $0x24] sm:$0xf]
        %v2714 = vld [vmem:[%s2703 + $0x28] sm:$0xf]
        %v2715 = vld [vmem:[%s2703 + $0x2c] sm:$0xf]
        %v2716 = vld [vmem:[%s2703 + $0x30] sm:$0xf]
        %v2717 = vld [vmem:[%s2703 + $0x34] sm:$0xf]
        %v2718 = vld [vmem:[%s2703 + $0x38] sm:$0xf]
        %v2719 = vld [vmem:[%s2703 + $0x3c] sm:$0xf]
        %v2722 = vunpack.c.l.b16 %v238
        %v2723 = vunpack.c.l.b16 %v239
        %v2724 = vpack.c.b16 %v2723, %v2722
        %v2742 = vunpack.c.l.b16 %v2704
        %v2743 = vunpack.c.l.b16 %v2705
        %v2744 = vunpack.c.l.b16 %v2706
        %v2745 = vunpack.c.l.b16 %v2707
        %v2746 = vunpack.c.l.b16 %v2708
        %v2747 = vunpack.c.l.b16 %v2709
        %v2748 = vunpack.c.l.b16 %v2710
        %v2749 = vunpack.c.l.b16 %v2711
        %v2750 = vunpack.c.l.b16 %v2712
        %v2751 = vunpack.c.l.b16 %v2713
        %v2752 = vunpack.c.l.b16 %v2714
        %v2753 = vunpack.c.l.b16 %v2715
        %v2754 = vunpack.c.l.b16 %v2716
        %v2755 = vunpack.c.l.b16 %v2717
        %v2756 = vunpack.c.l.b16 %v2718
        %v2757 = vunpack.c.l.b16 %v2719
        %v2758 = vpack.c.b16 %v2743, %v2742
        %v2759 = vpack.c.b16 %v2745, %v2744
        %v2760 = vpack.c.b16 %v2747, %v2746
        %v2761 = vpack.c.b16 %v2749, %v2748
        %v2762 = vpack.c.b16 %v2751, %v2750
        %v2763 = vpack.c.b16 %v2753, %v2752
        %v2764 = vpack.c.b16 %v2755, %v2754
        %v2765 = vpack.c.b16 %v2757, %v2756
        %2774 = vmatprep.subr.bf16.mxu0 0
        %2775 = vmatpush1.bf16.msra.mxu0 %v2758
        %2776 = vmatprep.subr.bf16.mxu0 0
        %2777 = vmatpush1.bf16.msra.mxu0 %v2759
        %2778 = vmatprep.subr.bf16.mxu0 0
        %2779 = vmatpush1.bf16.msra.mxu0 %v2760
        %2780 = vmatprep.subr.bf16.mxu0 0
        %2781 = vmatpush1.bf16.msra.mxu0 %v2761
        %2782 = vmatprep.subr.bf16.mxu0 0
        %2783 = vmatpush1.bf16.msra.mxu0 %v2762
        %2784 = vmatprep.subr.bf16.mxu0 0
        %2785 = vmatpush1.bf16.msra.mxu0 %v2763
        %2786 = vmatprep.subr.bf16.mxu0 0
        %2787 = vmatpush1.bf16.msra.mxu0 %v2764
        %2788 = vmatprep.subr.bf16.mxu0 0
        %2789 = vmatpush1.bf16.msra.mxu0 %v2765
        %2790 = vmatprep.subr.bf16.mxu0 0
        %2791 = vmatpush1.bf16.msra.mxu0 0
        %2792 = vmatprep.subr.bf16.mxu0 0
        %2793 = vmatpush1.bf16.msra.mxu0 0
        %2794 = vmatprep.subr.bf16.mxu0 0
        %2795 = vmatpush1.bf16.msra.mxu0 0
        %2796 = vmatprep.subr.bf16.mxu0 0
        %2797 = vmatpush1.bf16.msra.mxu0 0
        %2798 = vmatprep.subr.bf16.mxu0 0
        %2799 = vmatpush1.bf16.msra.mxu0 0
        %2800 = vmatprep.subr.bf16.mxu0 0
        %2801 = vmatpush1.bf16.msra.mxu0 0
        %2802 = vmatprep.subr.bf16.mxu0 0
        %2803 = vmatpush1.bf16.msra.mxu0 0
        %2804 = vmatprep.subr.bf16.mxu0 0
        %2805 = vmatpush1.bf16.msra.mxu0 0
        %2806 = vmatprep.mubr.bf16.mxu0 0
        %2807 = vmatmul.mubr.bf16.gmra.mrb[0].mxu0 %v1008
        %v2808 = vpop.f32.mrb[0].mxu0
        %v2809 = vadd.f32 0.0, %v2808
        %v2810 = vpop.f32.mrb[0].mxu0
        %v2811 = vpop.f32.mrb[0].mxu0
        %v2812 = vadd.f32 0.0, %v2811
        %v2813 = vpop.f32.mrb[0].mxu0
        %2814 = vmatprep.mubr.bf16.mxu0 0
        %2815 = vmatmul.mubr.bf16.gmra.mrb[0].mxu0 %v1009
        %v2816 = vpop.f32.mrb[0].mxu0
        %v2817 = vadd.f32 0.0, %v2816
        %v2818 = vpop.f32.mrb[0].mxu0
        %v2819 = vpop.f32.mrb[0].mxu0
        %v2820 = vadd.f32 0.0, %v2819
        %v2821 = vpop.f32.mrb[0].mxu0
        %2822 = vmatprep.mubr.bf16.mxu0 0
        %2823 = vmatmul.mubr.bf16.gmra.mrb[0].mxu0 %v1010
        %v2824 = vpop.f32.mrb[0].mxu0
        %v2825 = vadd.f32 0.0, %v2824
        %v2826 = vpop.f32.mrb[0].mxu0
        %v2827 = vpop.f32.mrb[0].mxu0
        %v2828 = vadd.f32 0.0, %v2827
        %v2829 = vpop.f32.mrb[0].mxu0
        %2830 = vmatprep.mubr.bf16.mxu0 0
        %2831 = vmatmul.mubr.bf16.gmra.mrb[0].mxu0 %v1011
        %v2832 = vpop.f32.mrb[0].mxu0
        %v2833 = vadd.f32 0.0, %v2832
        %v2834 = vpop.f32.mrb[0].mxu0
        %v2835 = vpop.f32.mrb[0].mxu0
        %v2836 = vadd.f32 0.0, %v2835
        %v2837 = vpop.f32.mrb[0].mxu0
        %2838 = vmatprep.mubr.bf16.mxu0 0
        %2839 = vmatmul.mubr.bf16.gmra.mrb[0].mxu0 %v1012
        %v2840 = vpop.f32.mrb[0].mxu0
        %v2841 = vadd.f32 0.0, %v2840
        %v2842 = vpop.f32.mrb[0].mxu0
        %v2843 = vpop.f32.mrb[0].mxu0
        %v2844 = vadd.f32 0.0, %v2843
        %v2845 = vpop.f32.mrb[0].mxu0
        %2846 = vmatprep.mubr.bf16.mxu0 0
        %2847 = vmatmul.mubr.bf16.gmra.mrb[0].mxu0 %v1013
        %v2848 = vpop.f32.mrb[0].mxu0
        %v2849 = vadd.f32 0.0, %v2848
        %v2850 = vpop.f32.mrb[0].mxu0
        %v2851 = vpop.f32.mrb[0].mxu0
        %v2852 = vadd.f32 0.0, %v2851
        %v2853 = vpop.f32.mrb[0].mxu0
        %2854 = vmatprep.mubr.bf16.mxu0 0
        %2855 = vmatmul.mubr.bf16.gmra.mrb[0].mxu0 %v1014
        %v2856 = vpop.f32.mrb[0].mxu0
        %v2857 = vadd.f32 0.0, %v2856
        %v2858 = vpop.f32.mrb[0].mxu0
        %v2859 = vpop.f32.mrb[0].mxu0
        %v2860 = vadd.f32 0.0, %v2859
        %v2861 = vpop.f32.mrb[0].mxu0
        %2862 = vmatprep.mubr.bf16.mxu0 0
        %2863 = vmatmul.mubr.bf16.gmra.mrb[0].mxu0 %v1015
        %v2864 = vpop.f32.mrb[0].mxu0
        %v2865 = vadd.f32 0.0, %v2864
        %v2866 = vpop.f32.mrb[0].mxu0
        %v2867 = vpop.f32.mrb[0].mxu0
        %v2868 = vadd.f32 0.0, %v2867
        %v2869 = vpop.f32.mrb[0].mxu0
        %2870 = vmatprep.mubr.bf16.mxu0 0
        %2871 = vmatmul.mubr.bf16.gmra.mrb[0].mxu0 %v1016
        %v2872 = vpop.f32.mrb[0].mxu0
        %v2873 = vadd.f32 0.0, %v2872
        %v2874 = vpop.f32.mrb[0].mxu0
        %v2875 = vpop.f32.mrb[0].mxu0
        %v2876 = vadd.f32 0.0, %v2875
        %v2877 = vpop.f32.mrb[0].mxu0
        %2878 = vmatprep.mubr.bf16.mxu0 0
        %2879 = vmatmul.mubr.bf16.gmra.mrb[0].mxu0 %v1017
        %v2880 = vpop.f32.mrb[0].mxu0
        %v2881 = vadd.f32 0.0, %v2880
        %v2882 = vpop.f32.mrb[0].mxu0
        %v2883 = vpop.f32.mrb[0].mxu0
        %v2884 = vadd.f32 0.0, %v2883
        %v2885 = vpop.f32.mrb[0].mxu0
        %2886 = vmatprep.mubr.bf16.mxu0 0
        %2887 = vmatmul.mubr.bf16.gmra.mrb[0].mxu0 %v1018
        %v2888 = vpop.f32.mrb[0].mxu0
        %v2889 = vadd.f32 0.0, %v2888
        %v2890 = vpop.f32.mrb[0].mxu0
        %v2891 = vpop.f32.mrb[0].mxu0
        %v2892 = vadd.f32 0.0, %v2891
        %v2893 = vpop.f32.mrb[0].mxu0
        %2894 = vmatprep.mubr.bf16.mxu0 0
        %2895 = vmatmul.mubr.bf16.gmra.mrb[0].mxu0 %v1019
        %v2896 = vpop.f32.mrb[0].mxu0
        %v2897 = vadd.f32 0.0, %v2896
        %v2898 = vpop.f32.mrb[0].mxu0
        %v2899 = vpop.f32.mrb[0].mxu0
        %v2900 = vadd.f32 0.0, %v2899
        %v2901 = vpop.f32.mrb[0].mxu0
        %2902 = vmatprep.mubr.bf16.mxu0 0
        %2903 = vmatmul.mubr.bf16.gmra.mrb[0].mxu0 %v1020
        %v2904 = vpop.f32.mrb[0].mxu0
        %v2905 = vadd.f32 0.0, %v2904
        %v2906 = vpop.f32.mrb[0].mxu0
        %v2907 = vpop.f32.mrb[0].mxu0
        %v2908 = vadd.f32 0.0, %v2907
        %v2909 = vpop.f32.mrb[0].mxu0
        %2910 = vmatprep.mubr.bf16.mxu0 0
        %2911 = vmatmul.mubr.bf16.gmra.mrb[0].mxu0 %v1021
        %v2912 = vpop.f32.mrb[0].mxu0
        %v2913 = vadd.f32 0.0, %v2912
        %v2914 = vpop.f32.mrb[0].mxu0
        %v2915 = vpop.f32.mrb[0].mxu0
        %v2916 = vadd.f32 0.0, %v2915
        %v2917 = vpop.f32.mrb[0].mxu0
        %2918 = vmatprep.mubr.bf16.mxu0 0
        %2919 = vmatmul.mubr.bf16.gmra.mrb[0].mxu0 %v1022
        %v2920 = vpop.f32.mrb[0].mxu0
        %v2921 = vadd.f32 0.0, %v2920
        %v2922 = vpop.f32.mrb[0].mxu0
        %v2923 = vpop.f32.mrb[0].mxu0
        %v2924 = vadd.f32 0.0, %v2923
        %v2925 = vpop.f32.mrb[0].mxu0
        %2926 = vmatprep.mubr.bf16.mxu0 0
        %2927 = vmatmul.mubr.bf16.gmra.mrb[0].mxu0 %v2724
        %v2928 = vpop.f32.mrb[0].mxu0
        %v2929 = vadd.f32 0.0, %v2928
        %v2930 = vpop.f32.mrb[0].mxu0
        %v2931 = vpop.f32.mrb[0].mxu0
        %v2932 = vadd.f32 0.0, %v2931
        %v2933 = vpop.f32.mrb[0].mxu0
        %2934 = vdwg.mxu0
        %v2935 = vadd.f32 %v2671, %v2809
        %v2936 = vadd.f32 %v2672, %v2812
        %v2937 = vadd.f32 %v2673, %v2817
        %v2938 = vadd.f32 %v2674, %v2820
        %v2939 = vadd.f32 %v2675, %v2825
        %v2940 = vadd.f32 %v2676, %v2828
        %v2941 = vadd.f32 %v2677, %v2833
        %v2942 = vadd.f32 %v2678, %v2836
        %v2943 = vadd.f32 %v2679, %v2841
        %v2944 = vadd.f32 %v2680, %v2844
        %v2945 = vadd.f32 %v2681, %v2849
        %v2946 = vadd.f32 %v2682, %v2852
        %v2947 = vadd.f32 %v2683, %v2857
        %v2948 = vadd.f32 %v2684, %v2860
        %v2949 = vadd.f32 %v2685, %v2865
        %v2950 = vadd.f32 %v2686, %v2868
        %v2951 = vadd.f32 %v2687, %v2873
        %v2952 = vadd.f32 %v2688, %v2876
        %v2953 = vadd.f32 %v2689, %v2881
        %v2954 = vadd.f32 %v2690, %v2884
        %v2955 = vadd.f32 %v2691, %v2889
        %v2956 = vadd.f32 %v2692, %v2892
        %v2957 = vadd.f32 %v2693, %v2897
        %v2958 = vadd.f32 %v2694, %v2900
        %v2959 = vadd.f32 %v2695, %v2905
        %v2960 = vadd.f32 %v2696, %v2908
        %v2961 = vadd.f32 %v2697, %v2913
        %v2962 = vadd.f32 %v2698, %v2916
        %v2963 = vadd.f32 %v2699, %v2921
        %v2964 = vadd.f32 %v2700, %v2924
        %v2965 = vadd.f32 %v2701, %v2929
        %v2966 = vadd.f32 %v2702, %v2932
        %v2968 = vshrl.u32 %v238, 16
        %v2970 = vrot.slane %v2968, 4
        %v2971 = vshll.u32 %v238, 16
        %v2973 = vrot.slane %v2971, 5
        %v2974 = vor.u32 %v2970, %v2973
        %v2975 = vrot.slane %v2974, 4
        %v2977 = vshll.u32 %v239, 16
        %v2979 = vrot.slane %v2977, 5
        %v2980 = vsel %vm268, %v2975, %v2979
        %v2981 = vshrl.u32 %v239, 16
        %v2983 = vrot.slane %v2981, 4
        %v2984 = vor.u32 %v2983, %v2979
        %v2985 = vrot.slane %v2984, 4
        %v2987 = vshll.u32 %v240, 16
        %v2989 = vrot.slane %v2987, 5
        %v2990 = vsel %vm268, %v2985, %v2989
        %s2991 = scalar_lea.vmem %s2, 384
        %v2992 = vld [vmem:[%s2991] sm:$0xf]
        %v2993 = vld [vmem:[%s2991 + $0x4] sm:$0xf]
        %v2994 = vld [vmem:[%s2991 + $0x8] sm:$0xf]
        %v2995 = vld [vmem:[%s2991 + $0xc] sm:$0xf]
        %v2996 = vld [vmem:[%s2991 + $0x10] sm:$0xf]
        %v2997 = vld [vmem:[%s2991 + $0x14] sm:$0xf]
        %v2998 = vld [vmem:[%s2991 + $0x18] sm:$0xf]
        %v2999 = vld [vmem:[%s2991 + $0x1c] sm:$0xf]
        %v3000 = vld [vmem:[%s2991 + $0x20] sm:$0xf]
        %v3001 = vld [vmem:[%s2991 + $0x24] sm:$0xf]
        %v3002 = vld [vmem:[%s2991 + $0x28] sm:$0xf]
        %v3003 = vld [vmem:[%s2991 + $0x2c] sm:$0xf]
        %v3004 = vld [vmem:[%s2991 + $0x30] sm:$0xf]
        %v3005 = vld [vmem:[%s2991 + $0x34] sm:$0xf]
        %v3006 = vld [vmem:[%s2991 + $0x38] sm:$0xf]
        %v3007 = vld [vmem:[%s2991 + $0x3c] sm:$0xf]
        %v3008 = vunpack.c.l.b16 %v2980
        %v3009 = vunpack.c.l.b16 %v2990
        %v3010 = vpack.c.b16 %v3009, %v3008
        %v3028 = vunpack.c.l.b16 %v2992
        %v3029 = vunpack.c.l.b16 %v2993
        %v3030 = vunpack.c.l.b16 %v2994
        %v3031 = vunpack.c.l.b16 %v2995
        %v3032 = vunpack.c.l.b16 %v2996
        %v3033 = vunpack.c.l.b16 %v2997
        %v3034 = vunpack.c.l.b16 %v2998
        %v3035 = vunpack.c.l.b16 %v2999
        %v3036 = vunpack.c.l.b16 %v3000
        %v3037 = vunpack.c.l.b16 %v3001
        %v3038 = vunpack.c.l.b16 %v3002
        %v3039 = vunpack.c.l.b16 %v3003
        %v3040 = vunpack.c.l.b16 %v3004
        %v3041 = vunpack.c.l.b16 %v3005
        %v3042 = vunpack.c.l.b16 %v3006
        %v3043 = vunpack.c.l.b16 %v3007
        %v3044 = vpack.c.b16 %v3029, %v3028
        %v3045 = vpack.c.b16 %v3031, %v3030
        %v3046 = vpack.c.b16 %v3033, %v3032
        %v3047 = vpack.c.b16 %v3035, %v3034
        %v3048 = vpack.c.b16 %v3037, %v3036
        %v3049 = vpack.c.b16 %v3039, %v3038
        %v3050 = vpack.c.b16 %v3041, %v3040
        %v3051 = vpack.c.b16 %v3043, %v3042
        %3060 = vmatprep.subr.bf16.mxu0 0
        %3061 = vmatpush1.bf16.msra.mxu0 %v3044
        %3062 = vmatprep.subr.bf16.mxu0 0
        %3063 = vmatpush1.bf16.msra.mxu0 %v3045
        %3064 = vmatprep.subr.bf16.mxu0 0
        %3065 = vmatpush1.bf16.msra.mxu0 %v3046
        %3066 = vmatprep.subr.bf16.mxu0 0
        %3067 = vmatpush1.bf16.msra.mxu0 %v3047
        %3068 = vmatprep.subr.bf16.mxu0 0
        %3069 = vmatpush1.bf16.msra.mxu0 %v3048
        %3070 = vmatprep.subr.bf16.mxu0 0
        %3071 = vmatpush1.bf16.msra.mxu0 %v3049
        %3072 = vmatprep.subr.bf16.mxu0 0
        %3073 = vmatpush1.bf16.msra.mxu0 %v3050
        %3074 = vmatprep.subr.bf16.mxu0 0
        %3075 = vmatpush1.bf16.msra.mxu0 %v3051
        %3076 = vmatprep.subr.bf16.mxu0 0
        %3077 = vmatpush1.bf16.msra.mxu0 0
        %3078 = vmatprep.subr.bf16.mxu0 0
        %3079 = vmatpush1.bf16.msra.mxu0 0
        %3080 = vmatprep.subr.bf16.mxu0 0
        %3081 = vmatpush1.bf16.msra.mxu0 0
        %3082 = vmatprep.subr.bf16.mxu0 0
        %3083 = vmatpush1.bf16.msra.mxu0 0
        %3084 = vmatprep.subr.bf16.mxu0 0
        %3085 = vmatpush1.bf16.msra.mxu0 0
        %3086 = vmatprep.subr.bf16.mxu0 0
        %3087 = vmatpush1.bf16.msra.mxu0 0
        %3088 = vmatprep.subr.bf16.mxu0 0
        %3089 = vmatpush1.bf16.msra.mxu0 0
        %3090 = vmatprep.subr.bf16.mxu0 0
        %3091 = vmatpush1.bf16.msra.mxu0 0
        %3092 = vmatprep.mubr.bf16.mxu0 0
        %3093 = vmatmul.mubr.bf16.gmra.mrb[0].mxu0 %v703
        %v3094 = vpop.f32.mrb[0].mxu0
        %v3095 = vadd.f32 0.0, %v3094
        %v3096 = vpop.f32.mrb[0].mxu0
        %v3097 = vpop.f32.mrb[0].mxu0
        %v3098 = vadd.f32 0.0, %v3097
        %v3099 = vpop.f32.mrb[0].mxu0
        %3100 = vmatprep.mubr.bf16.mxu0 0
        %3101 = vmatmul.mubr.bf16.gmra.mrb[0].mxu0 %v704
        %v3102 = vpop.f32.mrb[0].mxu0
        %v3103 = vadd.f32 0.0, %v3102
        %v3104 = vpop.f32.mrb[0].mxu0
        %v3105 = vpop.f32.mrb[0].mxu0
        %v3106 = vadd.f32 0.0, %v3105
        %v3107 = vpop.f32.mrb[0].mxu0
        %3108 = vmatprep.mubr.bf16.mxu0 0
        %3109 = vmatmul.mubr.bf16.gmra.mrb[0].mxu0 %v705
        %v3110 = vpop.f32.mrb[0].mxu0
        %v3111 = vadd.f32 0.0, %v3110
        %v3112 = vpop.f32.mrb[0].mxu0
        %v3113 = vpop.f32.mrb[0].mxu0
        %v3114 = vadd.f32 0.0, %v3113
        %v3115 = vpop.f32.mrb[0].mxu0
        %3116 = vmatprep.mubr.bf16.mxu0 0
        %3117 = vmatmul.mubr.bf16.gmra.mrb[0].mxu0 %v706
        %v3118 = vpop.f32.mrb[0].mxu0
        %v3119 = vadd.f32 0.0, %v3118
        %v3120 = vpop.f32.mrb[0].mxu0
        %v3121 = vpop.f32.mrb[0].mxu0
        %v3122 = vadd.f32 0.0, %v3121
        %v3123 = vpop.f32.mrb[0].mxu0
        %3124 = vmatprep.mubr.bf16.mxu0 0
        %3125 = vmatmul.mubr.bf16.gmra.mrb[0].mxu0 %v707
        %v3126 = vpop.f32.mrb[0].mxu0
        %v3127 = vadd.f32 0.0, %v3126
        %v3128 = vpop.f32.mrb[0].mxu0
        %v3129 = vpop.f32.mrb[0].mxu0
        %v3130 = vadd.f32 0.0, %v3129
        %v3131 = vpop.f32.mrb[0].mxu0
        %3132 = vmatprep.mubr.bf16.mxu0 0
        %3133 = vmatmul.mubr.bf16.gmra.mrb[0].mxu0 %v708
        %v3134 = vpop.f32.mrb[0].mxu0
        %v3135 = vadd.f32 0.0, %v3134
        %v3136 = vpop.f32.mrb[0].mxu0
        %v3137 = vpop.f32.mrb[0].mxu0
        %v3138 = vadd.f32 0.0, %v3137
        %v3139 = vpop.f32.mrb[0].mxu0
        %3140 = vmatprep.mubr.bf16.mxu0 0
        %3141 = vmatmul.mubr.bf16.gmra.mrb[0].mxu0 %v709
        %v3142 = vpop.f32.mrb[0].mxu0
        %v3143 = vadd.f32 0.0, %v3142
        %v3144 = vpop.f32.mrb[0].mxu0
        %v3145 = vpop.f32.mrb[0].mxu0
        %v3146 = vadd.f32 0.0, %v3145
        %v3147 = vpop.f32.mrb[0].mxu0
        %3148 = vmatprep.mubr.bf16.mxu0 0
        %3149 = vmatmul.mubr.bf16.gmra.mrb[0].mxu0 %v710
        %v3150 = vpop.f32.mrb[0].mxu0
        %v3151 = vadd.f32 0.0, %v3150
        %v3152 = vpop.f32.mrb[0].mxu0
        %v3153 = vpop.f32.mrb[0].mxu0
        %v3154 = vadd.f32 0.0, %v3153
        %v3155 = vpop.f32.mrb[0].mxu0
        %3156 = vmatprep.mubr.bf16.mxu0 0
        %3157 = vmatmul.mubr.bf16.gmra.mrb[0].mxu0 %v711
        %v3158 = vpop.f32.mrb[0].mxu0
        %v3159 = vadd.f32 0.0, %v3158
        %v3160 = vpop.f32.mrb[0].mxu0
        %v3161 = vpop.f32.mrb[0].mxu0
        %v3162 = vadd.f32 0.0, %v3161
        %v3163 = vpop.f32.mrb[0].mxu0
        %3164 = vmatprep.mubr.bf16.mxu0 0
        %3165 = vmatmul.mubr.bf16.gmra.mrb[0].mxu0 %v712
        %v3166 = vpop.f32.mrb[0].mxu0
        %v3167 = vadd.f32 0.0, %v3166
        %v3168 = vpop.f32.mrb[0].mxu0
        %v3169 = vpop.f32.mrb[0].mxu0
        %v3170 = vadd.f32 0.0, %v3169
        %v3171 = vpop.f32.mrb[0].mxu0
        %3172 = vmatprep.mubr.bf16.mxu0 0
        %3173 = vmatmul.mubr.bf16.gmra.mrb[0].mxu0 %v713
        %v3174 = vpop.f32.mrb[0].mxu0
        %v3175 = vadd.f32 0.0, %v3174
        %v3176 = vpop.f32.mrb[0].mxu0
        %v3177 = vpop.f32.mrb[0].mxu0
        %v3178 = vadd.f32 0.0, %v3177
        %v3179 = vpop.f32.mrb[0].mxu0
        %3180 = vmatprep.mubr.bf16.mxu0 0
        %3181 = vmatmul.mubr.bf16.gmra.mrb[0].mxu0 %v714
        %v3182 = vpop.f32.mrb[0].mxu0
        %v3183 = vadd.f32 0.0, %v3182
        %v3184 = vpop.f32.mrb[0].mxu0
        %v3185 = vpop.f32.mrb[0].mxu0
        %v3186 = vadd.f32 0.0, %v3185
        %v3187 = vpop.f32.mrb[0].mxu0
        %3188 = vmatprep.mubr.bf16.mxu0 0
        %3189 = vmatmul.mubr.bf16.gmra.mrb[0].mxu0 %v715
        %v3190 = vpop.f32.mrb[0].mxu0
        %v3191 = vadd.f32 0.0, %v3190
        %v3192 = vpop.f32.mrb[0].mxu0
        %v3193 = vpop.f32.mrb[0].mxu0
        %v3194 = vadd.f32 0.0, %v3193
        %v3195 = vpop.f32.mrb[0].mxu0
        %3196 = vmatprep.mubr.bf16.mxu0 0
        %3197 = vmatmul.mubr.bf16.gmra.mrb[0].mxu0 %v716
        %v3198 = vpop.f32.mrb[0].mxu0
        %v3199 = vadd.f32 0.0, %v3198
        %v3200 = vpop.f32.mrb[0].mxu0
        %v3201 = vpop.f32.mrb[0].mxu0
        %v3202 = vadd.f32 0.0, %v3201
        %v3203 = vpop.f32.mrb[0].mxu0
        %3204 = vmatprep.mubr.bf16.mxu0 0
        %3205 = vmatmul.mubr.bf16.gmra.mrb[0].mxu0 %v717
        %v3206 = vpop.f32.mrb[0].mxu0
        %v3207 = vadd.f32 0.0, %v3206
        %v3208 = vpop.f32.mrb[0].mxu0
        %v3209 = vpop.f32.mrb[0].mxu0
        %v3210 = vadd.f32 0.0, %v3209
        %v3211 = vpop.f32.mrb[0].mxu0
        %3212 = vmatprep.mubr.bf16.mxu0 0
        %3213 = vmatmul.mubr.bf16.gmra.mrb[0].mxu0 %v3010
        %v3214 = vpop.f32.mrb[0].mxu0
        %v3215 = vadd.f32 0.0, %v3214
        %v3216 = vpop.f32.mrb[0].mxu0
        %v3217 = vpop.f32.mrb[0].mxu0
        %v3218 = vadd.f32 0.0, %v3217
        %v3219 = vpop.f32.mrb[0].mxu0
        %3220 = vdwg.mxu0
        %v3221 = vadd.f32 %v2935, %v3095
        %v3222 = vadd.f32 %v2936, %v3098
        %v3223 = vadd.f32 %v2937, %v3103
        %v3224 = vadd.f32 %v2938, %v3106
        %v3225 = vadd.f32 %v2939, %v3111
        %v3226 = vadd.f32 %v2940, %v3114
        %v3227 = vadd.f32 %v2941, %v3119
        %v3228 = vadd.f32 %v2942, %v3122
        %v3229 = vadd.f32 %v2943, %v3127
        %v3230 = vadd.f32 %v2944, %v3130
        %v3231 = vadd.f32 %v2945, %v3135
        %v3232 = vadd.f32 %v2946, %v3138
        %v3233 = vadd.f32 %v2947, %v3143
        %v3234 = vadd.f32 %v2948, %v3146
        %v3235 = vadd.f32 %v2949, %v3151
        %v3236 = vadd.f32 %v2950, %v3154
        %v3237 = vadd.f32 %v2951, %v3159
        %v3238 = vadd.f32 %v2952, %v3162
        %v3239 = vadd.f32 %v2953, %v3167
        %v3240 = vadd.f32 %v2954, %v3170
        %v3241 = vadd.f32 %v2955, %v3175
        %v3242 = vadd.f32 %v2956, %v3178
        %v3243 = vadd.f32 %v2957, %v3183
        %v3244 = vadd.f32 %v2958, %v3186
        %v3245 = vadd.f32 %v2959, %v3191
        %v3246 = vadd.f32 %v2960, %v3194
        %v3247 = vadd.f32 %v2961, %v3199
        %v3248 = vadd.f32 %v2962, %v3202
        %v3249 = vadd.f32 %v2963, %v3207
        %v3250 = vadd.f32 %v2964, %v3210
        %v3251 = vadd.f32 %v2965, %v3215
        %v3252 = vadd.f32 %v2966, %v3218
        %v3254 = vrot.slane %v238, 5
        %v3255 = vrot.slane %v3254, 4
        %v3256 = vrot.slane %v239, 5
        %v3257 = vsel %vm1266, %v3255, %v3256
        %v3258 = vrot.slane %v3256, 4
        %v3259 = vrot.slane %v240, 5
        %v3260 = vsel %vm1266, %v3258, %v3259
        %s3261 = scalar_lea.vmem %s2, 448
        %v3262 = vld [vmem:[%s3261] sm:$0xf]
        %v3263 = vld [vmem:[%s3261 + $0x4] sm:$0xf]
        %v3264 = vld [vmem:[%s3261 + $0x8] sm:$0xf]
        %v3265 = vld [vmem:[%s3261 + $0xc] sm:$0xf]
        %v3266 = vld [vmem:[%s3261 + $0x10] sm:$0xf]
        %v3267 = vld [vmem:[%s3261 + $0x14] sm:$0xf]
        %v3268 = vld [vmem:[%s3261 + $0x18] sm:$0xf]
        %v3269 = vld [vmem:[%s3261 + $0x1c] sm:$0xf]
        %v3270 = vld [vmem:[%s3261 + $0x20] sm:$0xf]
        %v3271 = vld [vmem:[%s3261 + $0x24] sm:$0xf]
        %v3272 = vld [vmem:[%s3261 + $0x28] sm:$0xf]
        %v3273 = vld [vmem:[%s3261 + $0x2c] sm:$0xf]
        %v3274 = vld [vmem:[%s3261 + $0x30] sm:$0xf]
        %v3275 = vld [vmem:[%s3261 + $0x34] sm:$0xf]
        %v3276 = vld [vmem:[%s3261 + $0x38] sm:$0xf]
        %v3277 = vld [vmem:[%s3261 + $0x3c] sm:$0xf]
        %v3278 = vunpack.c.l.b16 %v3257
        %v3279 = vunpack.c.l.b16 %v3260
        %v3280 = vpack.c.b16 %v3279, %v3278
        %v3298 = vunpack.c.l.b16 %v3262
        %v3299 = vunpack.c.l.b16 %v3263
        %v3300 = vunpack.c.l.b16 %v3264
        %v3301 = vunpack.c.l.b16 %v3265
        %v3302 = vunpack.c.l.b16 %v3266
        %v3303 = vunpack.c.l.b16 %v3267
        %v3304 = vunpack.c.l.b16 %v3268
        %v3305 = vunpack.c.l.b16 %v3269
        %v3306 = vunpack.c.l.b16 %v3270
        %v3307 = vunpack.c.l.b16 %v3271
        %v3308 = vunpack.c.l.b16 %v3272
        %v3309 = vunpack.c.l.b16 %v3273
        %v3310 = vunpack.c.l.b16 %v3274
        %v3311 = vunpack.c.l.b16 %v3275
        %v3312 = vunpack.c.l.b16 %v3276
        %v3313 = vunpack.c.l.b16 %v3277
        %v3314 = vpack.c.b16 %v3299, %v3298
        %v3315 = vpack.c.b16 %v3301, %v3300
        %v3316 = vpack.c.b16 %v3303, %v3302
        %v3317 = vpack.c.b16 %v3305, %v3304
        %v3318 = vpack.c.b16 %v3307, %v3306
        %v3319 = vpack.c.b16 %v3309, %v3308
        %v3320 = vpack.c.b16 %v3311, %v3310
        %v3321 = vpack.c.b16 %v3313, %v3312
        %3330 = vmatprep.subr.bf16.mxu0 0
        %3331 = vmatpush1.bf16.msra.mxu0 %v3314
        %3332 = vmatprep.subr.bf16.mxu0 0
        %3333 = vmatpush1.bf16.msra.mxu0 %v3315
        %3334 = vmatprep.subr.bf16.mxu0 0
        %3335 = vmatpush1.bf16.msra.mxu0 %v3316
        %3336 = vmatprep.subr.bf16.mxu0 0
        %3337 = vmatpush1.bf16.msra.mxu0 %v3317
        %3338 = vmatprep.subr.bf16.mxu0 0
        %3339 = vmatpush1.bf16.msra.mxu0 %v3318
        %3340 = vmatprep.subr.bf16.mxu0 0
        %3341 = vmatpush1.bf16.msra.mxu0 %v3319
        %3342 = vmatprep.subr.bf16.mxu0 0
        %3343 = vmatpush1.bf16.msra.mxu0 %v3320
        %3344 = vmatprep.subr.bf16.mxu0 0
        %3345 = vmatpush1.bf16.msra.mxu0 %v3321
        %3346 = vmatprep.subr.bf16.mxu0 0
        %3347 = vmatpush1.bf16.msra.mxu0 0
        %3348 = vmatprep.subr.bf16.mxu0 0
        %3349 = vmatpush1.bf16.msra.mxu0 0
        %3350 = vmatprep.subr.bf16.mxu0 0
        %3351 = vmatpush1.bf16.msra.mxu0 0
        %3352 = vmatprep.subr.bf16.mxu0 0
        %3353 = vmatpush1.bf16.msra.mxu0 0
        %3354 = vmatprep.subr.bf16.mxu0 0
        %3355 = vmatpush1.bf16.msra.mxu0 0
        %3356 = vmatprep.subr.bf16.mxu0 0
        %3357 = vmatpush1.bf16.msra.mxu0 0
        %3358 = vmatprep.subr.bf16.mxu0 0
        %3359 = vmatpush1.bf16.msra.mxu0 0
        %3360 = vmatprep.subr.bf16.mxu0 0
        %3361 = vmatpush1.bf16.msra.mxu0 0
        %3362 = vmatprep.mubr.bf16.mxu0 0
        %3363 = vmatmul.mubr.bf16.gmra.mrb[0].mxu0 %v1429
        %v3364 = vpop.f32.mrb[0].mxu0
        %v3365 = vadd.f32 0.0, %v3364
        %v3366 = vpop.f32.mrb[0].mxu0
        %v3367 = vpop.f32.mrb[0].mxu0
        %v3368 = vadd.f32 0.0, %v3367
        %v3369 = vpop.f32.mrb[0].mxu0
        %3370 = vmatprep.mubr.bf16.mxu0 0
        %3371 = vmatmul.mubr.bf16.gmra.mrb[0].mxu0 %v1430
        %v3372 = vpop.f32.mrb[0].mxu0
        %v3373 = vadd.f32 0.0, %v3372
        %v3374 = vpop.f32.mrb[0].mxu0
        %v3375 = vpop.f32.mrb[0].mxu0
        %v3376 = vadd.f32 0.0, %v3375
        %v3377 = vpop.f32.mrb[0].mxu0
        %3378 = vmatprep.mubr.bf16.mxu0 0
        %3379 = vmatmul.mubr.bf16.gmra.mrb[0].mxu0 %v1431
        %v3380 = vpop.f32.mrb[0].mxu0
        %v3381 = vadd.f32 0.0, %v3380
        %v3382 = vpop.f32.mrb[0].mxu0
        %v3383 = vpop.f32.mrb[0].mxu0
        %v3384 = vadd.f32 0.0, %v3383
        %v3385 = vpop.f32.mrb[0].mxu0
        %3386 = vmatprep.mubr.bf16.mxu0 0
        %3387 = vmatmul.mubr.bf16.gmra.mrb[0].mxu0 %v1432
        %v3388 = vpop.f32.mrb[0].mxu0
        %v3389 = vadd.f32 0.0, %v3388
        %v3390 = vpop.f32.mrb[0].mxu0
        %v3391 = vpop.f32.mrb[0].mxu0
        %v3392 = vadd.f32 0.0, %v3391
        %v3393 = vpop.f32.mrb[0].mxu0
        %3394 = vmatprep.mubr.bf16.mxu0 0
        %3395 = vmatmul.mubr.bf16.gmra.mrb[0].mxu0 %v1433
        %v3396 = vpop.f32.mrb[0].mxu0
        %v3397 = vadd.f32 0.0, %v3396
        %v3398 = vpop.f32.mrb[0].mxu0
        %v3399 = vpop.f32.mrb[0].mxu0
        %v3400 = vadd.f32 0.0, %v3399
        %v3401 = vpop.f32.mrb[0].mxu0
        %3402 = vmatprep.mubr.bf16.mxu0 0
        %3403 = vmatmul.mubr.bf16.gmra.mrb[0].mxu0 %v1434
        %v3404 = vpop.f32.mrb[0].mxu0
        %v3405 = vadd.f32 0.0, %v3404
        %v3406 = vpop.f32.mrb[0].mxu0
        %v3407 = vpop.f32.mrb[0].mxu0
        %v3408 = vadd.f32 0.0, %v3407
        %v3409 = vpop.f32.mrb[0].mxu0
        %3410 = vmatprep.mubr.bf16.mxu0 0
        %3411 = vmatmul.mubr.bf16.gmra.mrb[0].mxu0 %v1435
        %v3412 = vpop.f32.mrb[0].mxu0
        %v3413 = vadd.f32 0.0, %v3412
        %v3414 = vpop.f32.mrb[0].mxu0
        %v3415 = vpop.f32.mrb[0].mxu0
        %v3416 = vadd.f32 0.0, %v3415
        %v3417 = vpop.f32.mrb[0].mxu0
        %3418 = vmatprep.mubr.bf16.mxu0 0
        %3419 = vmatmul.mubr.bf16.gmra.mrb[0].mxu0 %v1436
        %v3420 = vpop.f32.mrb[0].mxu0
        %v3421 = vadd.f32 0.0, %v3420
        %v3422 = vpop.f32.mrb[0].mxu0
        %v3423 = vpop.f32.mrb[0].mxu0
        %v3424 = vadd.f32 0.0, %v3423
        %v3425 = vpop.f32.mrb[0].mxu0
        %3426 = vmatprep.mubr.bf16.mxu0 0
        %3427 = vmatmul.mubr.bf16.gmra.mrb[0].mxu0 %v1437
        %v3428 = vpop.f32.mrb[0].mxu0
        %v3429 = vadd.f32 0.0, %v3428
        %v3430 = vpop.f32.mrb[0].mxu0
        %v3431 = vpop.f32.mrb[0].mxu0
        %v3432 = vadd.f32 0.0, %v3431
        %v3433 = vpop.f32.mrb[0].mxu0
        %3434 = vmatprep.mubr.bf16.mxu0 0
        %3435 = vmatmul.mubr.bf16.gmra.mrb[0].mxu0 %v1438
        %v3436 = vpop.f32.mrb[0].mxu0
        %v3437 = vadd.f32 0.0, %v3436
        %v3438 = vpop.f32.mrb[0].mxu0
        %v3439 = vpop.f32.mrb[0].mxu0
        %v3440 = vadd.f32 0.0, %v3439
        %v3441 = vpop.f32.mrb[0].mxu0
        %3442 = vmatprep.mubr.bf16.mxu0 0
        %3443 = vmatmul.mubr.bf16.gmra.mrb[0].mxu0 %v1439
        %v3444 = vpop.f32.mrb[0].mxu0
        %v3445 = vadd.f32 0.0, %v3444
        %v3446 = vpop.f32.mrb[0].mxu0
        %v3447 = vpop.f32.mrb[0].mxu0
        %v3448 = vadd.f32 0.0, %v3447
        %v3449 = vpop.f32.mrb[0].mxu0
        %3450 = vmatprep.mubr.bf16.mxu0 0
        %3451 = vmatmul.mubr.bf16.gmra.mrb[0].mxu0 %v1440
        %v3452 = vpop.f32.mrb[0].mxu0
        %v3453 = vadd.f32 0.0, %v3452
        %v3454 = vpop.f32.mrb[0].mxu0
        %v3455 = vpop.f32.mrb[0].mxu0
        %v3456 = vadd.f32 0.0, %v3455
        %v3457 = vpop.f32.mrb[0].mxu0
        %3458 = vmatprep.mubr.bf16.mxu0 0
        %3459 = vmatmul.mubr.bf16.gmra.mrb[0].mxu0 %v1441
        %v3460 = vpop.f32.mrb[0].mxu0
        %v3461 = vadd.f32 0.0, %v3460
        %v3462 = vpop.f32.mrb[0].mxu0
        %v3463 = vpop.f32.mrb[0].mxu0
        %v3464 = vadd.f32 0.0, %v3463
        %v3465 = vpop.f32.mrb[0].mxu0
        %3466 = vmatprep.mubr.bf16.mxu0 0
        %3467 = vmatmul.mubr.bf16.gmra.mrb[0].mxu0 %v1442
        %v3468 = vpop.f32.mrb[0].mxu0
        %v3469 = vadd.f32 0.0, %v3468
        %v3470 = vpop.f32.mrb[0].mxu0
        %v3471 = vpop.f32.mrb[0].mxu0
        %v3472 = vadd.f32 0.0, %v3471
        %v3473 = vpop.f32.mrb[0].mxu0
        %3474 = vmatprep.mubr.bf16.mxu0 0
        %3475 = vmatmul.mubr.bf16.gmra.mrb[0].mxu0 %v1443
        %v3476 = vpop.f32.mrb[0].mxu0
        %v3477 = vadd.f32 0.0, %v3476
        %v3478 = vpop.f32.mrb[0].mxu0
        %v3479 = vpop.f32.mrb[0].mxu0
        %v3480 = vadd.f32 0.0, %v3479
        %v3481 = vpop.f32.mrb[0].mxu0
        %3482 = vmatprep.mubr.bf16.mxu0 0
        %3483 = vmatmul.mubr.bf16.gmra.mrb[0].mxu0 %v3280
        %v3484 = vpop.f32.mrb[0].mxu0
        %v3485 = vadd.f32 0.0, %v3484
        %v3486 = vpop.f32.mrb[0].mxu0
        %v3487 = vpop.f32.mrb[0].mxu0
        %v3488 = vadd.f32 0.0, %v3487
        %v3489 = vpop.f32.mrb[0].mxu0
        %3490 = vdwg.mxu0
        %v3491 = vadd.f32 %v3221, %v3365
        %v3492 = vadd.f32 %v3222, %v3368
        %v3493 = vadd.f32 %v3223, %v3373
        %v3494 = vadd.f32 %v3224, %v3376
        %v3495 = vadd.f32 %v3225, %v3381
        %v3496 = vadd.f32 %v3226, %v3384
        %v3497 = vadd.f32 %v3227, %v3389
        %v3498 = vadd.f32 %v3228, %v3392
        %v3499 = vadd.f32 %v3229, %v3397
        %v3500 = vadd.f32 %v3230, %v3400
        %v3501 = vadd.f32 %v3231, %v3405
        %v3502 = vadd.f32 %v3232, %v3408
        %v3503 = vadd.f32 %v3233, %v3413
        %v3504 = vadd.f32 %v3234, %v3416
        %v3505 = vadd.f32 %v3235, %v3421
        %v3506 = vadd.f32 %v3236, %v3424
        %v3507 = vadd.f32 %v3237, %v3429
        %v3508 = vadd.f32 %v3238, %v3432
        %v3509 = vadd.f32 %v3239, %v3437
        %v3510 = vadd.f32 %v3240, %v3440
        %v3511 = vadd.f32 %v3241, %v3445
        %v3512 = vadd.f32 %v3242, %v3448
        %v3513 = vadd.f32 %v3243, %v3453
        %v3514 = vadd.f32 %v3244, %v3456
        %v3515 = vadd.f32 %v3245, %v3461
        %v3516 = vadd.f32 %v3246, %v3464
        %v3517 = vadd.f32 %v3247, %v3469
        %v3518 = vadd.f32 %v3248, %v3472
        %v3519 = vadd.f32 %v3249, %v3477
        %v3520 = vadd.f32 %v3250, %v3480
        %v3521 = vadd.f32 %v3251, %v3485
        %v3522 = vadd.f32 %v3252, %v3488
        %v3523 = vrot.slane %v2968, 5
        %v3524 = vrot.slane %v2971, 6
        %v3525 = vor.u32 %v3523, %v3524
        %v3526 = vrot.slane %v3525, 4
        %v3527 = vrot.slane %v2981, 5
        %v3528 = vrot.slane %v2977, 6
        %v3529 = vor.u32 %v3527, %v3528
        %v3530 = vsel %vm1703, %v3526, %v3529
        %v3531 = vrot.slane %v3529, 4
        %v3532 = vshrl.u32 %v240, 16
        %v3534 = vrot.slane %v3532, 5
        %v3535 = vrot.slane %v2987, 6
        %v3536 = vor.u32 %v3534, %v3535
        %v3537 = vsel %vm1703, %v3531, %v3536
        %s3538 = scalar_lea.vmem %s2, 512
        %v3539 = vld [vmem:[%s3538] sm:$0xf]
        %v3540 = vld [vmem:[%s3538 + $0x4] sm:$0xf]
        %v3541 = vld [vmem:[%s3538 + $0x8] sm:$0xf]
        %v3542 = vld [vmem:[%s3538 + $0xc] sm:$0xf]
        %v3543 = vld [vmem:[%s3538 + $0x10] sm:$0xf]
        %v3544 = vld [vmem:[%s3538 + $0x14] sm:$0xf]
        %v3545 = vld [vmem:[%s3538 + $0x18] sm:$0xf]
        %v3546 = vld [vmem:[%s3538 + $0x1c] sm:$0xf]
        %v3547 = vld [vmem:[%s3538 + $0x20] sm:$0xf]
        %v3548 = vld [vmem:[%s3538 + $0x24] sm:$0xf]
        %v3549 = vld [vmem:[%s3538 + $0x28] sm:$0xf]
        %v3550 = vld [vmem:[%s3538 + $0x2c] sm:$0xf]
        %v3551 = vld [vmem:[%s3538 + $0x30] sm:$0xf]
        %v3552 = vld [vmem:[%s3538 + $0x34] sm:$0xf]
        %v3553 = vld [vmem:[%s3538 + $0x38] sm:$0xf]
        %v3554 = vld [vmem:[%s3538 + $0x3c] sm:$0xf]
        %v3555 = vunpack.c.l.b16 %v3530
        %v3556 = vunpack.c.l.b16 %v3537
        %v3557 = vpack.c.b16 %v3556, %v3555
        %v3575 = vunpack.c.l.b16 %v3539
        %v3576 = vunpack.c.l.b16 %v3540
        %v3577 = vunpack.c.l.b16 %v3541
        %v3578 = vunpack.c.l.b16 %v3542
        %v3579 = vunpack.c.l.b16 %v3543
        %v3580 = vunpack.c.l.b16 %v3544
        %v3581 = vunpack.c.l.b16 %v3545
        %v3582 = vunpack.c.l.b16 %v3546
        %v3583 = vunpack.c.l.b16 %v3547
        %v3584 = vunpack.c.l.b16 %v3548
        %v3585 = vunpack.c.l.b16 %v3549
        %v3586 = vunpack.c.l.b16 %v3550
        %v3587 = vunpack.c.l.b16 %v3551
        %v3588 = vunpack.c.l.b16 %v3552
        %v3589 = vunpack.c.l.b16 %v3553
        %v3590 = vunpack.c.l.b16 %v3554
        %v3591 = vpack.c.b16 %v3576, %v3575
        %v3592 = vpack.c.b16 %v3578, %v3577
        %v3593 = vpack.c.b16 %v3580, %v3579
        %v3594 = vpack.c.b16 %v3582, %v3581
        %v3595 = vpack.c.b16 %v3584, %v3583
        %v3596 = vpack.c.b16 %v3586, %v3585
        %v3597 = vpack.c.b16 %v3588, %v3587
        %v3598 = vpack.c.b16 %v3590, %v3589
        %3607 = vmatprep.subr.bf16.mxu0 0
        %3608 = vmatpush1.bf16.msra.mxu0 %v3591
        %3609 = vmatprep.subr.bf16.mxu0 0
        %3610 = vmatpush1.bf16.msra.mxu0 %v3592
        %3611 = vmatprep.subr.bf16.mxu0 0
        %3612 = vmatpush1.bf16.msra.mxu0 %v3593
        %3613 = vmatprep.subr.bf16.mxu0 0
        %3614 = vmatpush1.bf16.msra.mxu0 %v3594
        %3615 = vmatprep.subr.bf16.mxu0 0
        %3616 = vmatpush1.bf16.msra.mxu0 %v3595
        %3617 = vmatprep.subr.bf16.mxu0 0
        %3618 = vmatpush1.bf16.msra.mxu0 %v3596
        %3619 = vmatprep.subr.bf16.mxu0 0
        %3620 = vmatpush1.bf16.msra.mxu0 %v3597
        %3621 = vmatprep.subr.bf16.mxu0 0
        %3622 = vmatpush1.bf16.msra.mxu0 %v3598
        %3623 = vmatprep.subr.bf16.mxu0 0
        %3624 = vmatpush1.bf16.msra.mxu0 0
        %3625 = vmatprep.subr.bf16.mxu0 0
        %3626 = vmatpush1.bf16.msra.mxu0 0
        %3627 = vmatprep.subr.bf16.mxu0 0
        %3628 = vmatpush1.bf16.msra.mxu0 0
        %3629 = vmatprep.subr.bf16.mxu0 0
        %3630 = vmatpush1.bf16.msra.mxu0 0
        %3631 = vmatprep.subr.bf16.mxu0 0
        %3632 = vmatpush1.bf16.msra.mxu0 0
        %3633 = vmatprep.subr.bf16.mxu0 0
        %3634 = vmatpush1.bf16.msra.mxu0 0
        %3635 = vmatprep.subr.bf16.mxu0 0
        %3636 = vmatpush1.bf16.msra.mxu0 0
        %3637 = vmatprep.subr.bf16.mxu0 0
        %3638 = vmatpush1.bf16.msra.mxu0 0
        %3639 = vmatprep.mubr.bf16.mxu0 0
        %3640 = vmatmul.mubr.bf16.gmra.mrb[0].mxu0 %v1994
        %v3641 = vpop.f32.mrb[0].mxu0
        %v3642 = vadd.f32 0.0, %v3641
        %v3643 = vpop.f32.mrb[0].mxu0
        %v3644 = vpop.f32.mrb[0].mxu0
        %v3645 = vadd.f32 0.0, %v3644
        %v3646 = vpop.f32.mrb[0].mxu0
        %3647 = vmatprep.mubr.bf16.mxu0 0
        %3648 = vmatmul.mubr.bf16.gmra.mrb[0].mxu0 %v1995
        %v3649 = vpop.f32.mrb[0].mxu0
        %v3650 = vadd.f32 0.0, %v3649
        %v3651 = vpop.f32.mrb[0].mxu0
        %v3652 = vpop.f32.mrb[0].mxu0
        %v3653 = vadd.f32 0.0, %v3652
        %v3654 = vpop.f32.mrb[0].mxu0
        %3655 = vmatprep.mubr.bf16.mxu0 0
        %3656 = vmatmul.mubr.bf16.gmra.mrb[0].mxu0 %v1996
        %v3657 = vpop.f32.mrb[0].mxu0
        %v3658 = vadd.f32 0.0, %v3657
        %v3659 = vpop.f32.mrb[0].mxu0
        %v3660 = vpop.f32.mrb[0].mxu0
        %v3661 = vadd.f32 0.0, %v3660
        %v3662 = vpop.f32.mrb[0].mxu0
        %3663 = vmatprep.mubr.bf16.mxu0 0
        %3664 = vmatmul.mubr.bf16.gmra.mrb[0].mxu0 %v1997
        %v3665 = vpop.f32.mrb[0].mxu0
        %v3666 = vadd.f32 0.0, %v3665
        %v3667 = vpop.f32.mrb[0].mxu0
        %v3668 = vpop.f32.mrb[0].mxu0
        %v3669 = vadd.f32 0.0, %v3668
        %v3670 = vpop.f32.mrb[0].mxu0
        %3671 = vmatprep.mubr.bf16.mxu0 0
        %3672 = vmatmul.mubr.bf16.gmra.mrb[0].mxu0 %v1998
        %v3673 = vpop.f32.mrb[0].mxu0
        %v3674 = vadd.f32 0.0, %v3673
        %v3675 = vpop.f32.mrb[0].mxu0
        %v3676 = vpop.f32.mrb[0].mxu0
        %v3677 = vadd.f32 0.0, %v3676
        %v3678 = vpop.f32.mrb[0].mxu0
        %3679 = vmatprep.mubr.bf16.mxu0 0
        %3680 = vmatmul.mubr.bf16.gmra.mrb[0].mxu0 %v1999
        %v3681 = vpop.f32.mrb[0].mxu0
        %v3682 = vadd.f32 0.0, %v3681
        %v3683 = vpop.f32.mrb[0].mxu0
        %v3684 = vpop.f32.mrb[0].mxu0
        %v3685 = vadd.f32 0.0, %v3684
        %v3686 = vpop.f32.mrb[0].mxu0
        %3687 = vmatprep.mubr.bf16.mxu0 0
        %3688 = vmatmul.mubr.bf16.gmra.mrb[0].mxu0 %v2000
        %v3689 = vpop.f32.mrb[0].mxu0
        %v3690 = vadd.f32 0.0, %v3689
        %v3691 = vpop.f32.mrb[0].mxu0
        %v3692 = vpop.f32.mrb[0].mxu0
        %v3693 = vadd.f32 0.0, %v3692
        %v3694 = vpop.f32.mrb[0].mxu0
        %3695 = vmatprep.mubr.bf16.mxu0 0
        %3696 = vmatmul.mubr.bf16.gmra.mrb[0].mxu0 %v2001
        %v3697 = vpop.f32.mrb[0].mxu0
        %v3698 = vadd.f32 0.0, %v3697
        %v3699 = vpop.f32.mrb[0].mxu0
        %v3700 = vpop.f32.mrb[0].mxu0
        %v3701 = vadd.f32 0.0, %v3700
        %v3702 = vpop.f32.mrb[0].mxu0
        %3703 = vmatprep.mubr.bf16.mxu0 0
        %3704 = vmatmul.mubr.bf16.gmra.mrb[0].mxu0 %v2002
        %v3705 = vpop.f32.mrb[0].mxu0
        %v3706 = vadd.f32 0.0, %v3705
        %v3707 = vpop.f32.mrb[0].mxu0
        %v3708 = vpop.f32.mrb[0].mxu0
        %v3709 = vadd.f32 0.0, %v3708
        %v3710 = vpop.f32.mrb[0].mxu0
        %3711 = vmatprep.mubr.bf16.mxu0 0
        %3712 = vmatmul.mubr.bf16.gmra.mrb[0].mxu0 %v2003
        %v3713 = vpop.f32.mrb[0].mxu0
        %v3714 = vadd.f32 0.0, %v3713
        %v3715 = vpop.f32.mrb[0].mxu0
        %v3716 = vpop.f32.mrb[0].mxu0
        %v3717 = vadd.f32 0.0, %v3716
        %v3718 = vpop.f32.mrb[0].mxu0
        %3719 = vmatprep.mubr.bf16.mxu0 0
        %3720 = vmatmul.mubr.bf16.gmra.mrb[0].mxu0 %v2004
        %v3721 = vpop.f32.mrb[0].mxu0
        %v3722 = vadd.f32 0.0, %v3721
        %v3723 = vpop.f32.mrb[0].mxu0
        %v3724 = vpop.f32.mrb[0].mxu0
        %v3725 = vadd.f32 0.0, %v3724
        %v3726 = vpop.f32.mrb[0].mxu0
        %3727 = vmatprep.mubr.bf16.mxu0 0
        %3728 = vmatmul.mubr.bf16.gmra.mrb[0].mxu0 %v2005
        %v3729 = vpop.f32.mrb[0].mxu0
        %v3730 = vadd.f32 0.0, %v3729
        %v3731 = vpop.f32.mrb[0].mxu0
        %v3732 = vpop.f32.mrb[0].mxu0
        %v3733 = vadd.f32 0.0, %v3732
        %v3734 = vpop.f32.mrb[0].mxu0
        %3735 = vmatprep.mubr.bf16.mxu0 0
        %3736 = vmatmul.mubr.bf16.gmra.mrb[0].mxu0 %v2006
        %v3737 = vpop.f32.mrb[0].mxu0
        %v3738 = vadd.f32 0.0, %v3737
        %v3739 = vpop.f32.mrb[0].mxu0
        %v3740 = vpop.f32.mrb[0].mxu0
        %v3741 = vadd.f32 0.0, %v3740
        %v3742 = vpop.f32.mrb[0].mxu0
        %3743 = vmatprep.mubr.bf16.mxu0 0
        %3744 = vmatmul.mubr.bf16.gmra.mrb[0].mxu0 %v2007
        %v3745 = vpop.f32.mrb[0].mxu0
        %v3746 = vadd.f32 0.0, %v3745
        %v3747 = vpop.f32.mrb[0].mxu0
        %v3748 = vpop.f32.mrb[0].mxu0
        %v3749 = vadd.f32 0.0, %v3748
        %v3750 = vpop.f32.mrb[0].mxu0
        %3751 = vmatprep.mubr.bf16.mxu0 0
        %3752 = vmatmul.mubr.bf16.gmra.mrb[0].mxu0 %v2008
        %v3753 = vpop.f32.mrb[0].mxu0
        %v3754 = vadd.f32 0.0, %v3753
        %v3755 = vpop.f32.mrb[0].mxu0
        %v3756 = vpop.f32.mrb[0].mxu0
        %v3757 = vadd.f32 0.0, %v3756
        %v3758 = vpop.f32.mrb[0].mxu0
        %3759 = vmatprep.mubr.bf16.mxu0 0
        %3760 = vmatmul.mubr.bf16.gmra.mrb[0].mxu0 %v3557
        %v3761 = vpop.f32.mrb[0].mxu0
        %v3762 = vadd.f32 0.0, %v3761
        %v3763 = vpop.f32.mrb[0].mxu0
        %v3764 = vpop.f32.mrb[0].mxu0
        %v3765 = vadd.f32 0.0, %v3764
        %v3766 = vpop.f32.mrb[0].mxu0
        %3767 = vdwg.mxu0
        %v3768 = vadd.f32 %v3491, %v3642
        %v3769 = vadd.f32 %v3492, %v3645
        %v3770 = vadd.f32 %v3493, %v3650
        %v3771 = vadd.f32 %v3494, %v3653
        %v3772 = vadd.f32 %v3495, %v3658
        %v3773 = vadd.f32 %v3496, %v3661
        %v3774 = vadd.f32 %v3497, %v3666
        %v3775 = vadd.f32 %v3498, %v3669
        %v3776 = vadd.f32 %v3499, %v3674
        %v3777 = vadd.f32 %v3500, %v3677
        %v3778 = vadd.f32 %v3501, %v3682
        %v3779 = vadd.f32 %v3502, %v3685
        %v3780 = vadd.f32 %v3503, %v3690
        %v3781 = vadd.f32 %v3504, %v3693
        %v3782 = vadd.f32 %v3505, %v3698
        %v3783 = vadd.f32 %v3506, %v3701
        %v3784 = vadd.f32 %v3507, %v3706
        %v3785 = vadd.f32 %v3508, %v3709
        %v3786 = vadd.f32 %v3509, %v3714
        %v3787 = vadd.f32 %v3510, %v3717
        %v3788 = vadd.f32 %v3511, %v3722
        %v3789 = vadd.f32 %v3512, %v3725
        %v3790 = vadd.f32 %v3513, %v3730
        %v3791 = vadd.f32 %v3514, %v3733
        %v3792 = vadd.f32 %v3515, %v3738
        %v3793 = vadd.f32 %v3516, %v3741
        %v3794 = vadd.f32 %v3517, %v3746
        %v3795 = vadd.f32 %v3518, %v3749
        %v3796 = vadd.f32 %v3519, %v3754
        %v3797 = vadd.f32 %v3520, %v3757
        %v3798 = vadd.f32 %v3521, %v3762
        %v3799 = vadd.f32 %v3522, %v3765
        %v3800 = vrot.slane %v238, 6
        %v3801 = vrot.slane %v3800, 4
        %v3802 = vrot.slane %v239, 6
        %v3803 = vsel %vm2268, %v3801, %v3802
        %v3804 = vrot.slane %v3802, 4
        %v3805 = vrot.slane %v240, 6
        %v3806 = vsel %vm2268, %v3804, %v3805
        %s3807 = scalar_lea.vmem %s2, 576
        %v3808 = vld [vmem:[%s3807] sm:$0xf]
        %v3809 = vld [vmem:[%s3807 + $0x4] sm:$0xf]
        %v3810 = vld [vmem:[%s3807 + $0x8] sm:$0xf]
        %v3811 = vld [vmem:[%s3807 + $0xc] sm:$0xf]
        %v3812 = vld [vmem:[%s3807 + $0x10] sm:$0xf]
        %v3813 = vld [vmem:[%s3807 + $0x14] sm:$0xf]
        %v3814 = vld [vmem:[%s3807 + $0x18] sm:$0xf]
        %v3815 = vld [vmem:[%s3807 + $0x1c] sm:$0xf]
        %v3816 = vld [vmem:[%s3807 + $0x20] sm:$0xf]
        %v3817 = vld [vmem:[%s3807 + $0x24] sm:$0xf]
        %v3818 = vld [vmem:[%s3807 + $0x28] sm:$0xf]
        %v3819 = vld [vmem:[%s3807 + $0x2c] sm:$0xf]
        %v3820 = vld [vmem:[%s3807 + $0x30] sm:$0xf]
        %v3821 = vld [vmem:[%s3807 + $0x34] sm:$0xf]
        %v3822 = vld [vmem:[%s3807 + $0x38] sm:$0xf]
        %v3823 = vld [vmem:[%s3807 + $0x3c] sm:$0xf]
        %v3824 = vunpack.c.l.b16 %v3803
        %v3825 = vunpack.c.l.b16 %v3806
        %v3826 = vpack.c.b16 %v3825, %v3824
        %v3844 = vunpack.c.l.b16 %v3808
        %v3845 = vunpack.c.l.b16 %v3809
        %v3846 = vunpack.c.l.b16 %v3810
        %v3847 = vunpack.c.l.b16 %v3811
        %v3848 = vunpack.c.l.b16 %v3812
        %v3849 = vunpack.c.l.b16 %v3813
        %v3850 = vunpack.c.l.b16 %v3814
        %v3851 = vunpack.c.l.b16 %v3815
        %v3852 = vunpack.c.l.b16 %v3816
        %v3853 = vunpack.c.l.b16 %v3817
        %v3854 = vunpack.c.l.b16 %v3818
        %v3855 = vunpack.c.l.b16 %v3819
        %v3856 = vunpack.c.l.b16 %v3820
        %v3857 = vunpack.c.l.b16 %v3821
        %v3858 = vunpack.c.l.b16 %v3822
        %v3859 = vunpack.c.l.b16 %v3823
        %v3860 = vpack.c.b16 %v3845, %v3844
        %v3861 = vpack.c.b16 %v3847, %v3846
        %v3862 = vpack.c.b16 %v3849, %v3848
        %v3863 = vpack.c.b16 %v3851, %v3850
        %v3864 = vpack.c.b16 %v3853, %v3852
        %v3865 = vpack.c.b16 %v3855, %v3854
        %v3866 = vpack.c.b16 %v3857, %v3856
        %v3867 = vpack.c.b16 %v3859, %v3858
        %3876 = vmatprep.subr.bf16.mxu0 0
        %3877 = vmatpush1.bf16.msra.mxu0 %v3860
        %3878 = vmatprep.subr.bf16.mxu0 0
        %3879 = vmatpush1.bf16.msra.mxu0 %v3861
        %3880 = vmatprep.subr.bf16.mxu0 0
        %3881 = vmatpush1.bf16.msra.mxu0 %v3862
        %3882 = vmatprep.subr.bf16.mxu0 0
        %3883 = vmatpush1.bf16.msra.mxu0 %v3863
        %3884 = vmatprep.subr.bf16.mxu0 0
        %3885 = vmatpush1.bf16.msra.mxu0 %v3864
        %3886 = vmatprep.subr.bf16.mxu0 0
        %3887 = vmatpush1.bf16.msra.mxu0 %v3865
        %3888 = vmatprep.subr.bf16.mxu0 0
        %3889 = vmatpush1.bf16.msra.mxu0 %v3866
        %3890 = vmatprep.subr.bf16.mxu0 0
        %3891 = vmatpush1.bf16.msra.mxu0 %v3867
        %3892 = vmatprep.subr.bf16.mxu0 0
        %3893 = vmatpush1.bf16.msra.mxu0 0
        %3894 = vmatprep.subr.bf16.mxu0 0
        %3895 = vmatpush1.bf16.msra.mxu0 0
        %3896 = vmatprep.subr.bf16.mxu0 0
        %3897 = vmatpush1.bf16.msra.mxu0 0
        %3898 = vmatprep.subr.bf16.mxu0 0
        %3899 = vmatpush1.bf16.msra.mxu0 0
        %3900 = vmatprep.subr.bf16.mxu0 0
        %3901 = vmatpush1.bf16.msra.mxu0 0
        %3902 = vmatprep.subr.bf16.mxu0 0
        %3903 = vmatpush1.bf16.msra.mxu0 0
        %3904 = vmatprep.subr.bf16.mxu0 0
        %3905 = vmatpush1.bf16.msra.mxu0 0
        %3906 = vmatprep.subr.bf16.mxu0 0
        %3907 = vmatpush1.bf16.msra.mxu0 0
        %3908 = vmatprep.mubr.bf16.mxu0 0
        %3909 = vmatmul.mubr.bf16.gmra.mrb[0].mxu0 %v2431
        %v3910 = vpop.f32.mrb[0].mxu0
        %v3911 = vadd.f32 0.0, %v3910
        %v3912 = vpop.f32.mrb[0].mxu0
        %v3913 = vpop.f32.mrb[0].mxu0
        %v3914 = vadd.f32 0.0, %v3913
        %v3915 = vpop.f32.mrb[0].mxu0
        %3916 = vmatprep.mubr.bf16.mxu0 0
        %3917 = vmatmul.mubr.bf16.gmra.mrb[0].mxu0 %v2432
        %v3918 = vpop.f32.mrb[0].mxu0
        %v3919 = vadd.f32 0.0, %v3918
        %v3920 = vpop.f32.mrb[0].mxu0
        %v3921 = vpop.f32.mrb[0].mxu0
        %v3922 = vadd.f32 0.0, %v3921
        %v3923 = vpop.f32.mrb[0].mxu0
        %3924 = vmatprep.mubr.bf16.mxu0 0
        %3925 = vmatmul.mubr.bf16.gmra.mrb[0].mxu0 %v2433
        %v3926 = vpop.f32.mrb[0].mxu0
        %v3927 = vadd.f32 0.0, %v3926
        %v3928 = vpop.f32.mrb[0].mxu0
        %v3929 = vpop.f32.mrb[0].mxu0
        %v3930 = vadd.f32 0.0, %v3929
        %v3931 = vpop.f32.mrb[0].mxu0
        %3932 = vmatprep.mubr.bf16.mxu0 0
        %3933 = vmatmul.mubr.bf16.gmra.mrb[0].mxu0 %v2434
        %v3934 = vpop.f32.mrb[0].mxu0
        %v3935 = vadd.f32 0.0, %v3934
        %v3936 = vpop.f32.mrb[0].mxu0
        %v3937 = vpop.f32.mrb[0].mxu0
        %v3938 = vadd.f32 0.0, %v3937
        %v3939 = vpop.f32.mrb[0].mxu0
        %3940 = vmatprep.mubr.bf16.mxu0 0
        %3941 = vmatmul.mubr.bf16.gmra.mrb[0].mxu0 %v2435
        %v3942 = vpop.f32.mrb[0].mxu0
        %v3943 = vadd.f32 0.0, %v3942
        %v3944 = vpop.f32.mrb[0].mxu0
        %v3945 = vpop.f32.mrb[0].mxu0
        %v3946 = vadd.f32 0.0, %v3945
        %v3947 = vpop.f32.mrb[0].mxu0
        %3948 = vmatprep.mubr.bf16.mxu0 0
        %3949 = vmatmul.mubr.bf16.gmra.mrb[0].mxu0 %v2436
        %v3950 = vpop.f32.mrb[0].mxu0
        %v3951 = vadd.f32 0.0, %v3950
        %v3952 = vpop.f32.mrb[0].mxu0
        %v3953 = vpop.f32.mrb[0].mxu0
        %v3954 = vadd.f32 0.0, %v3953
        %v3955 = vpop.f32.mrb[0].mxu0
        %3956 = vmatprep.mubr.bf16.mxu0 0
        %3957 = vmatmul.mubr.bf16.gmra.mrb[0].mxu0 %v2437
        %v3958 = vpop.f32.mrb[0].mxu0
        %v3959 = vadd.f32 0.0, %v3958
        %v3960 = vpop.f32.mrb[0].mxu0
        %v3961 = vpop.f32.mrb[0].mxu0
        %v3962 = vadd.f32 0.0, %v3961
        %v3963 = vpop.f32.mrb[0].mxu0
        %3964 = vmatprep.mubr.bf16.mxu0 0
        %3965 = vmatmul.mubr.bf16.gmra.mrb[0].mxu0 %v2438
        %v3966 = vpop.f32.mrb[0].mxu0
        %v3967 = vadd.f32 0.0, %v3966
        %v3968 = vpop.f32.mrb[0].mxu0
        %v3969 = vpop.f32.mrb[0].mxu0
        %v3970 = vadd.f32 0.0, %v3969
        %v3971 = vpop.f32.mrb[0].mxu0
        %3972 = vmatprep.mubr.bf16.mxu0 0
        %3973 = vmatmul.mubr.bf16.gmra.mrb[0].mxu0 %v2439
        %v3974 = vpop.f32.mrb[0].mxu0
        %v3975 = vadd.f32 0.0, %v3974
        %v3976 = vpop.f32.mrb[0].mxu0
        %v3977 = vpop.f32.mrb[0].mxu0
        %v3978 = vadd.f32 0.0, %v3977
        %v3979 = vpop.f32.mrb[0].mxu0
        %3980 = vmatprep.mubr.bf16.mxu0 0
        %3981 = vmatmul.mubr.bf16.gmra.mrb[0].mxu0 %v2440
        %v3982 = vpop.f32.mrb[0].mxu0
        %v3983 = vadd.f32 0.0, %v3982
        %v3984 = vpop.f32.mrb[0].mxu0
        %v3985 = vpop.f32.mrb[0].mxu0
        %v3986 = vadd.f32 0.0, %v3985
        %v3987 = vpop.f32.mrb[0].mxu0
        %3988 = vmatprep.mubr.bf16.mxu0 0
        %3989 = vmatmul.mubr.bf16.gmra.mrb[0].mxu0 %v2441
        %v3990 = vpop.f32.mrb[0].mxu0
        %v3991 = vadd.f32 0.0, %v3990
        %v3992 = vpop.f32.mrb[0].mxu0
        %v3993 = vpop.f32.mrb[0].mxu0
        %v3994 = vadd.f32 0.0, %v3993
        %v3995 = vpop.f32.mrb[0].mxu0
        %3996 = vmatprep.mubr.bf16.mxu0 0
        %3997 = vmatmul.mubr.bf16.gmra.mrb[0].mxu0 %v2442
        %v3998 = vpop.f32.mrb[0].mxu0
        %v3999 = vadd.f32 0.0, %v3998
        %v4000 = vpop.f32.mrb[0].mxu0
        %v4001 = vpop.f32.mrb[0].mxu0
        %v4002 = vadd.f32 0.0, %v4001
        %v4003 = vpop.f32.mrb[0].mxu0
        %4004 = vmatprep.mubr.bf16.mxu0 0
        %4005 = vmatmul.mubr.bf16.gmra.mrb[0].mxu0 %v2443
        %v4006 = vpop.f32.mrb[0].mxu0
        %v4007 = vadd.f32 0.0, %v4006
        %v4008 = vpop.f32.mrb[0].mxu0
        %v4009 = vpop.f32.mrb[0].mxu0
        %v4010 = vadd.f32 0.0, %v4009
        %v4011 = vpop.f32.mrb[0].mxu0
        %4012 = vmatprep.mubr.bf16.mxu0 0
        %4013 = vmatmul.mubr.bf16.gmra.mrb[0].mxu0 %v2444
        %v4014 = vpop.f32.mrb[0].mxu0
        %v4015 = vadd.f32 0.0, %v4014
        %v4016 = vpop.f32.mrb[0].mxu0
        %v4017 = vpop.f32.mrb[0].mxu0
        %v4018 = vadd.f32 0.0, %v4017
        %v4019 = vpop.f32.mrb[0].mxu0
        %4020 = vmatprep.mubr.bf16.mxu0 0
        %4021 = vmatmul.mubr.bf16.gmra.mrb[0].mxu0 %v2445
        %v4022 = vpop.f32.mrb[0].mxu0
        %v4023 = vadd.f32 0.0, %v4022
        %v4024 = vpop.f32.mrb[0].mxu0
        %v4025 = vpop.f32.mrb[0].mxu0
        %v4026 = vadd.f32 0.0, %v4025
        %v4027 = vpop.f32.mrb[0].mxu0
        %4028 = vmatprep.mubr.bf16.mxu0 0
        %4029 = vmatmul.mubr.bf16.gmra.mrb[0].mxu0 %v3826
        %v4030 = vpop.f32.mrb[0].mxu0
        %v4031 = vadd.f32 0.0, %v4030
        %v4032 = vpop.f32.mrb[0].mxu0
        %v4033 = vpop.f32.mrb[0].mxu0
        %v4034 = vadd.f32 0.0, %v4033
        %v4035 = vpop.f32.mrb[0].mxu0
        %4036 = vdwg.mxu0
        %v4037 = vadd.f32 %v3768, %v3911
        %v4038 = vadd.f32 %v3769, %v3914
        %v4039 = vadd.f32 %v3770, %v3919
        %v4040 = vadd.f32 %v3771, %v3922
        %v4041 = vadd.f32 %v3772, %v3927
        %v4042 = vadd.f32 %v3773, %v3930
        %v4043 = vadd.f32 %v3774, %v3935
        %v4044 = vadd.f32 %v3775, %v3938
        %v4045 = vadd.f32 %v3776, %v3943
        %v4046 = vadd.f32 %v3777, %v3946
        %v4047 = vadd.f32 %v3778, %v3951
        %v4048 = vadd.f32 %v3779, %v3954
        %v4049 = vadd.f32 %v3780, %v3959
        %v4050 = vadd.f32 %v3781, %v3962
        %v4051 = vadd.f32 %v3782, %v3967
        %v4052 = vadd.f32 %v3783, %v3970
        %v4053 = vadd.f32 %v3784, %v3975
        %v4054 = vadd.f32 %v3785, %v3978
        %v4055 = vadd.f32 %v3786, %v3983
        %v4056 = vadd.f32 %v3787, %v3986
        %v4057 = vadd.f32 %v3788, %v3991
        %v4058 = vadd.f32 %v3789, %v3994
        %v4059 = vadd.f32 %v3790, %v3999
        %v4060 = vadd.f32 %v3791, %v4002
        %v4061 = vadd.f32 %v3792, %v4007
        %v4062 = vadd.f32 %v3793, %v4010
        %v4063 = vadd.f32 %v3794, %v4015
        %v4064 = vadd.f32 %v3795, %v4018
        %v4065 = vadd.f32 %v3796, %v4023
        %v4066 = vadd.f32 %v3797, %v4026
        %v4067 = vadd.f32 %v3798, %v4031
        %v4068 = vadd.f32 %v3799, %v4034
        %s4069 = scalar_lea.vmem %s2, 640
        %v4070 = vld [vmem:[%s4069] sm:$0xf]
        %v4071 = vld [vmem:[%s4069 + $0x4] sm:$0xf]
        %v4072 = vld [vmem:[%s4069 + $0x8] sm:$0xf]
        %v4073 = vld [vmem:[%s4069 + $0xc] sm:$0xf]
        %v4074 = vld [vmem:[%s4069 + $0x10] sm:$0xf]
        %v4075 = vld [vmem:[%s4069 + $0x14] sm:$0xf]
        %v4076 = vld [vmem:[%s4069 + $0x18] sm:$0xf]
        %v4077 = vld [vmem:[%s4069 + $0x1c] sm:$0xf]
        %v4078 = vld [vmem:[%s4069 + $0x20] sm:$0xf]
        %v4079 = vld [vmem:[%s4069 + $0x24] sm:$0xf]
        %v4080 = vld [vmem:[%s4069 + $0x28] sm:$0xf]
        %v4081 = vld [vmem:[%s4069 + $0x2c] sm:$0xf]
        %v4082 = vld [vmem:[%s4069 + $0x30] sm:$0xf]
        %v4083 = vld [vmem:[%s4069 + $0x34] sm:$0xf]
        %v4084 = vld [vmem:[%s4069 + $0x38] sm:$0xf]
        %v4085 = vld [vmem:[%s4069 + $0x3c] sm:$0xf]
        %v4088 = vunpack.c.l.b16 %v241
        %v4089 = vunpack.c.l.b16 %v242
        %v4090 = vpack.c.b16 %v4089, %v4088
        %v4108 = vunpack.c.l.b16 %v4070
        %v4109 = vunpack.c.l.b16 %v4071
        %v4110 = vunpack.c.l.b16 %v4072
        %v4111 = vunpack.c.l.b16 %v4073
        %v4112 = vunpack.c.l.b16 %v4074
        %v4113 = vunpack.c.l.b16 %v4075
        %v4114 = vunpack.c.l.b16 %v4076
        %v4115 = vunpack.c.l.b16 %v4077
        %v4116 = vunpack.c.l.b16 %v4078
        %v4117 = vunpack.c.l.b16 %v4079
        %v4118 = vunpack.c.l.b16 %v4080
        %v4119 = vunpack.c.l.b16 %v4081
        %v4120 = vunpack.c.l.b16 %v4082
        %v4121 = vunpack.c.l.b16 %v4083
        %v4122 = vunpack.c.l.b16 %v4084
        %v4123 = vunpack.c.l.b16 %v4085
        %v4124 = vpack.c.b16 %v4109, %v4108
        %v4125 = vpack.c.b16 %v4111, %v4110
        %v4126 = vpack.c.b16 %v4113, %v4112
        %v4127 = vpack.c.b16 %v4115, %v4114
        %v4128 = vpack.c.b16 %v4117, %v4116
        %v4129 = vpack.c.b16 %v4119, %v4118
        %v4130 = vpack.c.b16 %v4121, %v4120
        %v4131 = vpack.c.b16 %v4123, %v4122
        %4140 = vmatprep.subr.bf16.mxu0 0
        %4141 = vmatpush1.bf16.msra.mxu0 %v4124
        %4142 = vmatprep.subr.bf16.mxu0 0
        %4143 = vmatpush1.bf16.msra.mxu0 %v4125
        %4144 = vmatprep.subr.bf16.mxu0 0
        %4145 = vmatpush1.bf16.msra.mxu0 %v4126
        %4146 = vmatprep.subr.bf16.mxu0 0
        %4147 = vmatpush1.bf16.msra.mxu0 %v4127
        %4148 = vmatprep.subr.bf16.mxu0 0
        %4149 = vmatpush1.bf16.msra.mxu0 %v4128
        %4150 = vmatprep.subr.bf16.mxu0 0
        %4151 = vmatpush1.bf16.msra.mxu0 %v4129
        %4152 = vmatprep.subr.bf16.mxu0 0
        %4153 = vmatpush1.bf16.msra.mxu0 %v4130
        %4154 = vmatprep.subr.bf16.mxu0 0
        %4155 = vmatpush1.bf16.msra.mxu0 %v4131
        %4156 = vmatprep.subr.bf16.mxu0 0
        %4157 = vmatpush1.bf16.msra.mxu0 0
        %4158 = vmatprep.subr.bf16.mxu0 0
        %4159 = vmatpush1.bf16.msra.mxu0 0
        %4160 = vmatprep.subr.bf16.mxu0 0
        %4161 = vmatpush1.bf16.msra.mxu0 0
        %4162 = vmatprep.subr.bf16.mxu0 0
        %4163 = vmatpush1.bf16.msra.mxu0 0
        %4164 = vmatprep.subr.bf16.mxu0 0
        %4165 = vmatpush1.bf16.msra.mxu0 0
        %4166 = vmatprep.subr.bf16.mxu0 0
        %4167 = vmatpush1.bf16.msra.mxu0 0
        %4168 = vmatprep.subr.bf16.mxu0 0
        %4169 = vmatpush1.bf16.msra.mxu0 0
        %4170 = vmatprep.subr.bf16.mxu0 0
        %4171 = vmatpush1.bf16.msra.mxu0 0
        %4172 = vmatprep.mubr.bf16.mxu0 0
        %4173 = vmatmul.mubr.bf16.gmra.mrb[0].mxu0 %v1009
        %v4174 = vpop.f32.mrb[0].mxu0
        %v4175 = vadd.f32 0.0, %v4174
        %v4176 = vpop.f32.mrb[0].mxu0
        %v4177 = vpop.f32.mrb[0].mxu0
        %v4178 = vadd.f32 0.0, %v4177
        %v4179 = vpop.f32.mrb[0].mxu0
        %4180 = vmatprep.mubr.bf16.mxu0 0
        %4181 = vmatmul.mubr.bf16.gmra.mrb[0].mxu0 %v1010
        %v4182 = vpop.f32.mrb[0].mxu0
        %v4183 = vadd.f32 0.0, %v4182
        %v4184 = vpop.f32.mrb[0].mxu0
        %v4185 = vpop.f32.mrb[0].mxu0
        %v4186 = vadd.f32 0.0, %v4185
        %v4187 = vpop.f32.mrb[0].mxu0
        %4188 = vmatprep.mubr.bf16.mxu0 0
        %4189 = vmatmul.mubr.bf16.gmra.mrb[0].mxu0 %v1011
        %v4190 = vpop.f32.mrb[0].mxu0
        %v4191 = vadd.f32 0.0, %v4190
        %v4192 = vpop.f32.mrb[0].mxu0
        %v4193 = vpop.f32.mrb[0].mxu0
        %v4194 = vadd.f32 0.0, %v4193
        %v4195 = vpop.f32.mrb[0].mxu0
        %4196 = vmatprep.mubr.bf16.mxu0 0
        %4197 = vmatmul.mubr.bf16.gmra.mrb[0].mxu0 %v1012
        %v4198 = vpop.f32.mrb[0].mxu0
        %v4199 = vadd.f32 0.0, %v4198
        %v4200 = vpop.f32.mrb[0].mxu0
        %v4201 = vpop.f32.mrb[0].mxu0
        %v4202 = vadd.f32 0.0, %v4201
        %v4203 = vpop.f32.mrb[0].mxu0
        %4204 = vmatprep.mubr.bf16.mxu0 0
        %4205 = vmatmul.mubr.bf16.gmra.mrb[0].mxu0 %v1013
        %v4206 = vpop.f32.mrb[0].mxu0
        %v4207 = vadd.f32 0.0, %v4206
        %v4208 = vpop.f32.mrb[0].mxu0
        %v4209 = vpop.f32.mrb[0].mxu0
        %v4210 = vadd.f32 0.0, %v4209
        %v4211 = vpop.f32.mrb[0].mxu0
        %4212 = vmatprep.mubr.bf16.mxu0 0
        %4213 = vmatmul.mubr.bf16.gmra.mrb[0].mxu0 %v1014
        %v4214 = vpop.f32.mrb[0].mxu0
        %v4215 = vadd.f32 0.0, %v4214
        %v4216 = vpop.f32.mrb[0].mxu0
        %v4217 = vpop.f32.mrb[0].mxu0
        %v4218 = vadd.f32 0.0, %v4217
        %v4219 = vpop.f32.mrb[0].mxu0
        %4220 = vmatprep.mubr.bf16.mxu0 0
        %4221 = vmatmul.mubr.bf16.gmra.mrb[0].mxu0 %v1015
        %v4222 = vpop.f32.mrb[0].mxu0
        %v4223 = vadd.f32 0.0, %v4222
        %v4224 = vpop.f32.mrb[0].mxu0
        %v4225 = vpop.f32.mrb[0].mxu0
        %v4226 = vadd.f32 0.0, %v4225
        %v4227 = vpop.f32.mrb[0].mxu0
        %4228 = vmatprep.mubr.bf16.mxu0 0
        %4229 = vmatmul.mubr.bf16.gmra.mrb[0].mxu0 %v1016
        %v4230 = vpop.f32.mrb[0].mxu0
        %v4231 = vadd.f32 0.0, %v4230
        %v4232 = vpop.f32.mrb[0].mxu0
        %v4233 = vpop.f32.mrb[0].mxu0
        %v4234 = vadd.f32 0.0, %v4233
        %v4235 = vpop.f32.mrb[0].mxu0
        %4236 = vmatprep.mubr.bf16.mxu0 0
        %4237 = vmatmul.mubr.bf16.gmra.mrb[0].mxu0 %v1017
        %v4238 = vpop.f32.mrb[0].mxu0
        %v4239 = vadd.f32 0.0, %v4238
        %v4240 = vpop.f32.mrb[0].mxu0
        %v4241 = vpop.f32.mrb[0].mxu0
        %v4242 = vadd.f32 0.0, %v4241
        %v4243 = vpop.f32.mrb[0].mxu0
        %4244 = vmatprep.mubr.bf16.mxu0 0
        %4245 = vmatmul.mubr.bf16.gmra.mrb[0].mxu0 %v1018
        %v4246 = vpop.f32.mrb[0].mxu0
        %v4247 = vadd.f32 0.0, %v4246
        %v4248 = vpop.f32.mrb[0].mxu0
        %v4249 = vpop.f32.mrb[0].mxu0
        %v4250 = vadd.f32 0.0, %v4249
        %v4251 = vpop.f32.mrb[0].mxu0
        %4252 = vmatprep.mubr.bf16.mxu0 0
        %4253 = vmatmul.mubr.bf16.gmra.mrb[0].mxu0 %v1019
        %v4254 = vpop.f32.mrb[0].mxu0
        %v4255 = vadd.f32 0.0, %v4254
        %v4256 = vpop.f32.mrb[0].mxu0
        %v4257 = vpop.f32.mrb[0].mxu0
        %v4258 = vadd.f32 0.0, %v4257
        %v4259 = vpop.f32.mrb[0].mxu0
        %4260 = vmatprep.mubr.bf16.mxu0 0
        %4261 = vmatmul.mubr.bf16.gmra.mrb[0].mxu0 %v1020
        %v4262 = vpop.f32.mrb[0].mxu0
        %v4263 = vadd.f32 0.0, %v4262
        %v4264 = vpop.f32.mrb[0].mxu0
        %v4265 = vpop.f32.mrb[0].mxu0
        %v4266 = vadd.f32 0.0, %v4265
        %v4267 = vpop.f32.mrb[0].mxu0
        %4268 = vmatprep.mubr.bf16.mxu0 0
        %4269 = vmatmul.mubr.bf16.gmra.mrb[0].mxu0 %v1021
        %v4270 = vpop.f32.mrb[0].mxu0
        %v4271 = vadd.f32 0.0, %v4270
        %v4272 = vpop.f32.mrb[0].mxu0
        %v4273 = vpop.f32.mrb[0].mxu0
        %v4274 = vadd.f32 0.0, %v4273
        %v4275 = vpop.f32.mrb[0].mxu0
        %4276 = vmatprep.mubr.bf16.mxu0 0
        %4277 = vmatmul.mubr.bf16.gmra.mrb[0].mxu0 %v1022
        %v4278 = vpop.f32.mrb[0].mxu0
        %v4279 = vadd.f32 0.0, %v4278
        %v4280 = vpop.f32.mrb[0].mxu0
        %v4281 = vpop.f32.mrb[0].mxu0
        %v4282 = vadd.f32 0.0, %v4281
        %v4283 = vpop.f32.mrb[0].mxu0
        %4284 = vmatprep.mubr.bf16.mxu0 0
        %4285 = vmatmul.mubr.bf16.gmra.mrb[0].mxu0 %v2724
        %v4286 = vpop.f32.mrb[0].mxu0
        %v4287 = vadd.f32 0.0, %v4286
        %v4288 = vpop.f32.mrb[0].mxu0
        %v4289 = vpop.f32.mrb[0].mxu0
        %v4290 = vadd.f32 0.0, %v4289
        %v4291 = vpop.f32.mrb[0].mxu0
        %4292 = vmatprep.mubr.bf16.mxu0 0
        %4293 = vmatmul.mubr.bf16.gmra.mrb[0].mxu0 %v4090
        %v4294 = vpop.f32.mrb[0].mxu0
        %v4295 = vadd.f32 0.0, %v4294
        %v4296 = vpop.f32.mrb[0].mxu0
        %v4297 = vpop.f32.mrb[0].mxu0
        %v4298 = vadd.f32 0.0, %v4297
        %v4299 = vpop.f32.mrb[0].mxu0
        %4300 = vdwg.mxu0
        %v4301 = vadd.f32 %v4037, %v4175
        %v4302 = vadd.f32 %v4038, %v4178
        %v4303 = vadd.f32 %v4039, %v4183
        %v4304 = vadd.f32 %v4040, %v4186
        %v4305 = vadd.f32 %v4041, %v4191
        %v4306 = vadd.f32 %v4042, %v4194
        %v4307 = vadd.f32 %v4043, %v4199
        %v4308 = vadd.f32 %v4044, %v4202
        %v4309 = vadd.f32 %v4045, %v4207
        %v4310 = vadd.f32 %v4046, %v4210
        %v4311 = vadd.f32 %v4047, %v4215
        %v4312 = vadd.f32 %v4048, %v4218
        %v4313 = vadd.f32 %v4049, %v4223
        %v4314 = vadd.f32 %v4050, %v4226
        %v4315 = vadd.f32 %v4051, %v4231
        %v4316 = vadd.f32 %v4052, %v4234
        %v4317 = vadd.f32 %v4053, %v4239
        %v4318 = vadd.f32 %v4054, %v4242
        %v4319 = vadd.f32 %v4055, %v4247
        %v4320 = vadd.f32 %v4056, %v4250
        %v4321 = vadd.f32 %v4057, %v4255
        %v4322 = vadd.f32 %v4058, %v4258
        %v4323 = vadd.f32 %v4059, %v4263
        %v4324 = vadd.f32 %v4060, %v4266
        %v4325 = vadd.f32 %v4061, %v4271
        %v4326 = vadd.f32 %v4062, %v4274
        %v4327 = vadd.f32 %v4063, %v4279
        %v4328 = vadd.f32 %v4064, %v4282
        %v4329 = vadd.f32 %v4065, %v4287
        %v4330 = vadd.f32 %v4066, %v4290
        %v4331 = vadd.f32 %v4067, %v4295
        %v4332 = vadd.f32 %v4068, %v4298
        %v4334 = vshrl.u32 %v241, 16
        %v4336 = vrot.slane %v4334, 4
        %v4337 = vshll.u32 %v241, 16
        %v4339 = vrot.slane %v4337, 5
        %v4340 = vor.u32 %v4336, %v4339
        %v4341 = vrot.slane %v4340, 4
        %v4343 = vshll.u32 %v242, 16
        %v4345 = vrot.slane %v4343, 5
        %v4346 = vsel %vm268, %v4341, %v4345
        %v4347 = vshrl.u32 %v242, 16
        %v4349 = vrot.slane %v4347, 4
        %v4350 = vor.u32 %v4349, %v4345
        %v4351 = vrot.slane %v4350, 4
        %v4353 = vshll.u32 %v243, 16
        %v4355 = vrot.slane %v4353, 5
        %v4356 = vsel %vm268, %v4351, %v4355
        %s4357 = scalar_lea.vmem %s2, 704
        %v4358 = vld [vmem:[%s4357] sm:$0xf]
        %v4359 = vld [vmem:[%s4357 + $0x4] sm:$0xf]
        %v4360 = vld [vmem:[%s4357 + $0x8] sm:$0xf]
        %v4361 = vld [vmem:[%s4357 + $0xc] sm:$0xf]
        %v4362 = vld [vmem:[%s4357 + $0x10] sm:$0xf]
        %v4363 = vld [vmem:[%s4357 + $0x14] sm:$0xf]
        %v4364 = vld [vmem:[%s4357 + $0x18] sm:$0xf]
        %v4365 = vld [vmem:[%s4357 + $0x1c] sm:$0xf]
        %v4366 = vld [vmem:[%s4357 + $0x20] sm:$0xf]
        %v4367 = vld [vmem:[%s4357 + $0x24] sm:$0xf]
        %v4368 = vld [vmem:[%s4357 + $0x28] sm:$0xf]
        %v4369 = vld [vmem:[%s4357 + $0x2c] sm:$0xf]
        %v4370 = vld [vmem:[%s4357 + $0x30] sm:$0xf]
        %v4371 = vld [vmem:[%s4357 + $0x34] sm:$0xf]
        %v4372 = vld [vmem:[%s4357 + $0x38] sm:$0xf]
        %v4373 = vld [vmem:[%s4357 + $0x3c] sm:$0xf]
        %v4374 = vunpack.c.l.b16 %v4346
        %v4375 = vunpack.c.l.b16 %v4356
        %v4376 = vpack.c.b16 %v4375, %v4374
        %v4394 = vunpack.c.l.b16 %v4358
        %v4395 = vunpack.c.l.b16 %v4359
        %v4396 = vunpack.c.l.b16 %v4360
        %v4397 = vunpack.c.l.b16 %v4361
        %v4398 = vunpack.c.l.b16 %v4362
        %v4399 = vunpack.c.l.b16 %v4363
        %v4400 = vunpack.c.l.b16 %v4364
        %v4401 = vunpack.c.l.b16 %v4365
        %v4402 = vunpack.c.l.b16 %v4366
        %v4403 = vunpack.c.l.b16 %v4367
        %v4404 = vunpack.c.l.b16 %v4368
        %v4405 = vunpack.c.l.b16 %v4369
        %v4406 = vunpack.c.l.b16 %v4370
        %v4407 = vunpack.c.l.b16 %v4371
        %v4408 = vunpack.c.l.b16 %v4372
        %v4409 = vunpack.c.l.b16 %v4373
        %v4410 = vpack.c.b16 %v4395, %v4394
        %v4411 = vpack.c.b16 %v4397, %v4396
        %v4412 = vpack.c.b16 %v4399, %v4398
        %v4413 = vpack.c.b16 %v4401, %v4400
        %v4414 = vpack.c.b16 %v4403, %v4402
        %v4415 = vpack.c.b16 %v4405, %v4404
        %v4416 = vpack.c.b16 %v4407, %v4406
        %v4417 = vpack.c.b16 %v4409, %v4408
        %4426 = vmatprep.subr.bf16.mxu0 0
        %4427 = vmatpush1.bf16.msra.mxu0 %v4410
        %4428 = vmatprep.subr.bf16.mxu0 0
        %4429 = vmatpush1.bf16.msra.mxu0 %v4411
        %4430 = vmatprep.subr.bf16.mxu0 0
        %4431 = vmatpush1.bf16.msra.mxu0 %v4412
        %4432 = vmatprep.subr.bf16.mxu0 0
        %4433 = vmatpush1.bf16.msra.mxu0 %v4413
        %4434 = vmatprep.subr.bf16.mxu0 0
        %4435 = vmatpush1.bf16.msra.mxu0 %v4414
        %4436 = vmatprep.subr.bf16.mxu0 0
        %4437 = vmatpush1.bf16.msra.mxu0 %v4415
        %4438 = vmatprep.subr.bf16.mxu0 0
        %4439 = vmatpush1.bf16.msra.mxu0 %v4416
        %4440 = vmatprep.subr.bf16.mxu0 0
        %4441 = vmatpush1.bf16.msra.mxu0 %v4417
        %4442 = vmatprep.subr.bf16.mxu0 0
        %4443 = vmatpush1.bf16.msra.mxu0 0
        %4444 = vmatprep.subr.bf16.mxu0 0
        %4445 = vmatpush1.bf16.msra.mxu0 0
        %4446 = vmatprep.subr.bf16.mxu0 0
        %4447 = vmatpush1.bf16.msra.mxu0 0
        %4448 = vmatprep.subr.bf16.mxu0 0
        %4449 = vmatpush1.bf16.msra.mxu0 0
        %4450 = vmatprep.subr.bf16.mxu0 0
        %4451 = vmatpush1.bf16.msra.mxu0 0
        %4452 = vmatprep.subr.bf16.mxu0 0
        %4453 = vmatpush1.bf16.msra.mxu0 0
        %4454 = vmatprep.subr.bf16.mxu0 0
        %4455 = vmatpush1.bf16.msra.mxu0 0
        %4456 = vmatprep.subr.bf16.mxu0 0
        %4457 = vmatpush1.bf16.msra.mxu0 0
        %4458 = vmatprep.mubr.bf16.mxu0 0
        %4459 = vmatmul.mubr.bf16.gmra.mrb[0].mxu0 %v704
        %v4460 = vpop.f32.mrb[0].mxu0
        %v4461 = vadd.f32 0.0, %v4460
        %v4462 = vpop.f32.mrb[0].mxu0
        %v4463 = vpop.f32.mrb[0].mxu0
        %v4464 = vadd.f32 0.0, %v4463
        %v4465 = vpop.f32.mrb[0].mxu0
        %4466 = vmatprep.mubr.bf16.mxu0 0
        %4467 = vmatmul.mubr.bf16.gmra.mrb[0].mxu0 %v705
        %v4468 = vpop.f32.mrb[0].mxu0
        %v4469 = vadd.f32 0.0, %v4468
        %v4470 = vpop.f32.mrb[0].mxu0
        %v4471 = vpop.f32.mrb[0].mxu0
        %v4472 = vadd.f32 0.0, %v4471
        %v4473 = vpop.f32.mrb[0].mxu0
        %4474 = vmatprep.mubr.bf16.mxu0 0
        %4475 = vmatmul.mubr.bf16.gmra.mrb[0].mxu0 %v706
        %v4476 = vpop.f32.mrb[0].mxu0
        %v4477 = vadd.f32 0.0, %v4476
        %v4478 = vpop.f32.mrb[0].mxu0
        %v4479 = vpop.f32.mrb[0].mxu0
        %v4480 = vadd.f32 0.0, %v4479
        %v4481 = vpop.f32.mrb[0].mxu0
        %4482 = vmatprep.mubr.bf16.mxu0 0
        %4483 = vmatmul.mubr.bf16.gmra.mrb[0].mxu0 %v707
        %v4484 = vpop.f32.mrb[0].mxu0
        %v4485 = vadd.f32 0.0, %v4484
        %v4486 = vpop.f32.mrb[0].mxu0
        %v4487 = vpop.f32.mrb[0].mxu0
        %v4488 = vadd.f32 0.0, %v4487
        %v4489 = vpop.f32.mrb[0].mxu0
        %4490 = vmatprep.mubr.bf16.mxu0 0
        %4491 = vmatmul.mubr.bf16.gmra.mrb[0].mxu0 %v708
        %v4492 = vpop.f32.mrb[0].mxu0
        %v4493 = vadd.f32 0.0, %v4492
        %v4494 = vpop.f32.mrb[0].mxu0
        %v4495 = vpop.f32.mrb[0].mxu0
        %v4496 = vadd.f32 0.0, %v4495
        %v4497 = vpop.f32.mrb[0].mxu0
        %4498 = vmatprep.mubr.bf16.mxu0 0
        %4499 = vmatmul.mubr.bf16.gmra.mrb[0].mxu0 %v709
        %v4500 = vpop.f32.mrb[0].mxu0
        %v4501 = vadd.f32 0.0, %v4500
        %v4502 = vpop.f32.mrb[0].mxu0
        %v4503 = vpop.f32.mrb[0].mxu0
        %v4504 = vadd.f32 0.0, %v4503
        %v4505 = vpop.f32.mrb[0].mxu0
        %4506 = vmatprep.mubr.bf16.mxu0 0
        %4507 = vmatmul.mubr.bf16.gmra.mrb[0].mxu0 %v710
        %v4508 = vpop.f32.mrb[0].mxu0
        %v4509 = vadd.f32 0.0, %v4508
        %v4510 = vpop.f32.mrb[0].mxu0
        %v4511 = vpop.f32.mrb[0].mxu0
        %v4512 = vadd.f32 0.0, %v4511
        %v4513 = vpop.f32.mrb[0].mxu0
        %4514 = vmatprep.mubr.bf16.mxu0 0
        %4515 = vmatmul.mubr.bf16.gmra.mrb[0].mxu0 %v711
        %v4516 = vpop.f32.mrb[0].mxu0
        %v4517 = vadd.f32 0.0, %v4516
        %v4518 = vpop.f32.mrb[0].mxu0
        %v4519 = vpop.f32.mrb[0].mxu0
        %v4520 = vadd.f32 0.0, %v4519
        %v4521 = vpop.f32.mrb[0].mxu0
        %4522 = vmatprep.mubr.bf16.mxu0 0
        %4523 = vmatmul.mubr.bf16.gmra.mrb[0].mxu0 %v712
        %v4524 = vpop.f32.mrb[0].mxu0
        %v4525 = vadd.f32 0.0, %v4524
        %v4526 = vpop.f32.mrb[0].mxu0
        %v4527 = vpop.f32.mrb[0].mxu0
        %v4528 = vadd.f32 0.0, %v4527
        %v4529 = vpop.f32.mrb[0].mxu0
        %4530 = vmatprep.mubr.bf16.mxu0 0
        %4531 = vmatmul.mubr.bf16.gmra.mrb[0].mxu0 %v713
        %v4532 = vpop.f32.mrb[0].mxu0
        %v4533 = vadd.f32 0.0, %v4532
        %v4534 = vpop.f32.mrb[0].mxu0
        %v4535 = vpop.f32.mrb[0].mxu0
        %v4536 = vadd.f32 0.0, %v4535
        %v4537 = vpop.f32.mrb[0].mxu0
        %4538 = vmatprep.mubr.bf16.mxu0 0
        %4539 = vmatmul.mubr.bf16.gmra.mrb[0].mxu0 %v714
        %v4540 = vpop.f32.mrb[0].mxu0
        %v4541 = vadd.f32 0.0, %v4540
        %v4542 = vpop.f32.mrb[0].mxu0
        %v4543 = vpop.f32.mrb[0].mxu0
        %v4544 = vadd.f32 0.0, %v4543
        %v4545 = vpop.f32.mrb[0].mxu0
        %4546 = vmatprep.mubr.bf16.mxu0 0
        %4547 = vmatmul.mubr.bf16.gmra.mrb[0].mxu0 %v715
        %v4548 = vpop.f32.mrb[0].mxu0
        %v4549 = vadd.f32 0.0, %v4548
        %v4550 = vpop.f32.mrb[0].mxu0
        %v4551 = vpop.f32.mrb[0].mxu0
        %v4552 = vadd.f32 0.0, %v4551
        %v4553 = vpop.f32.mrb[0].mxu0
        %4554 = vmatprep.mubr.bf16.mxu0 0
        %4555 = vmatmul.mubr.bf16.gmra.mrb[0].mxu0 %v716
        %v4556 = vpop.f32.mrb[0].mxu0
        %v4557 = vadd.f32 0.0, %v4556
        %v4558 = vpop.f32.mrb[0].mxu0
        %v4559 = vpop.f32.mrb[0].mxu0
        %v4560 = vadd.f32 0.0, %v4559
        %v4561 = vpop.f32.mrb[0].mxu0
        %4562 = vmatprep.mubr.bf16.mxu0 0
        %4563 = vmatmul.mubr.bf16.gmra.mrb[0].mxu0 %v717
        %v4564 = vpop.f32.mrb[0].mxu0
        %v4565 = vadd.f32 0.0, %v4564
        %v4566 = vpop.f32.mrb[0].mxu0
        %v4567 = vpop.f32.mrb[0].mxu0
        %v4568 = vadd.f32 0.0, %v4567
        %v4569 = vpop.f32.mrb[0].mxu0
        %4570 = vmatprep.mubr.bf16.mxu0 0
        %4571 = vmatmul.mubr.bf16.gmra.mrb[0].mxu0 %v3010
        %v4572 = vpop.f32.mrb[0].mxu0
        %v4573 = vadd.f32 0.0, %v4572
        %v4574 = vpop.f32.mrb[0].mxu0
        %v4575 = vpop.f32.mrb[0].mxu0
        %v4576 = vadd.f32 0.0, %v4575
        %v4577 = vpop.f32.mrb[0].mxu0
        %4578 = vmatprep.mubr.bf16.mxu0 0
        %4579 = vmatmul.mubr.bf16.gmra.mrb[0].mxu0 %v4376
        %v4580 = vpop.f32.mrb[0].mxu0
        %v4581 = vadd.f32 0.0, %v4580
        %v4582 = vpop.f32.mrb[0].mxu0
        %v4583 = vpop.f32.mrb[0].mxu0
        %v4584 = vadd.f32 0.0, %v4583
        %v4585 = vpop.f32.mrb[0].mxu0
        %4586 = vdwg.mxu0
        %v4587 = vadd.f32 %v4301, %v4461
        %v4588 = vadd.f32 %v4302, %v4464
        %v4589 = vadd.f32 %v4303, %v4469
        %v4590 = vadd.f32 %v4304, %v4472
        %v4591 = vadd.f32 %v4305, %v4477
        %v4592 = vadd.f32 %v4306, %v4480
        %v4593 = vadd.f32 %v4307, %v4485
        %v4594 = vadd.f32 %v4308, %v4488
        %v4595 = vadd.f32 %v4309, %v4493
        %v4596 = vadd.f32 %v4310, %v4496
        %v4597 = vadd.f32 %v4311, %v4501
        %v4598 = vadd.f32 %v4312, %v4504
        %v4599 = vadd.f32 %v4313, %v4509
        %v4600 = vadd.f32 %v4314, %v4512
        %v4601 = vadd.f32 %v4315, %v4517
        %v4602 = vadd.f32 %v4316, %v4520
        %v4603 = vadd.f32 %v4317, %v4525
        %v4604 = vadd.f32 %v4318, %v4528
        %v4605 = vadd.f32 %v4319, %v4533
        %v4606 = vadd.f32 %v4320, %v4536
        %v4607 = vadd.f32 %v4321, %v4541
        %v4608 = vadd.f32 %v4322, %v4544
        %v4609 = vadd.f32 %v4323, %v4549
        %v4610 = vadd.f32 %v4324, %v4552
        %v4611 = vadd.f32 %v4325, %v4557
        %v4612 = vadd.f32 %v4326, %v4560
        %v4613 = vadd.f32 %v4327, %v4565
        %v4614 = vadd.f32 %v4328, %v4568
        %v4615 = vadd.f32 %v4329, %v4573
        %v4616 = vadd.f32 %v4330, %v4576
        %v4617 = vadd.f32 %v4331, %v4581
        %v4618 = vadd.f32 %v4332, %v4584
        %v4620 = vrot.slane %v241, 5
        %v4621 = vrot.slane %v4620, 4
        %v4622 = vrot.slane %v242, 5
        %v4623 = vsel %vm1266, %v4621, %v4622
        %v4624 = vrot.slane %v4622, 4
        %v4625 = vrot.slane %v243, 5
        %v4626 = vsel %vm1266, %v4624, %v4625
        %s4627 = scalar_lea.vmem %s2, 768
        %v4628 = vld [vmem:[%s4627] sm:$0xf]
        %v4629 = vld [vmem:[%s4627 + $0x4] sm:$0xf]
        %v4630 = vld [vmem:[%s4627 + $0x8] sm:$0xf]
        %v4631 = vld [vmem:[%s4627 + $0xc] sm:$0xf]
        %v4632 = vld [vmem:[%s4627 + $0x10] sm:$0xf]
        %v4633 = vld [vmem:[%s4627 + $0x14] sm:$0xf]
        %v4634 = vld [vmem:[%s4627 + $0x18] sm:$0xf]
        %v4635 = vld [vmem:[%s4627 + $0x1c] sm:$0xf]
        %v4636 = vld [vmem:[%s4627 + $0x20] sm:$0xf]
        %v4637 = vld [vmem:[%s4627 + $0x24] sm:$0xf]
        %v4638 = vld [vmem:[%s4627 + $0x28] sm:$0xf]
        %v4639 = vld [vmem:[%s4627 + $0x2c] sm:$0xf]
        %v4640 = vld [vmem:[%s4627 + $0x30] sm:$0xf]
        %v4641 = vld [vmem:[%s4627 + $0x34] sm:$0xf]
        %v4642 = vld [vmem:[%s4627 + $0x38] sm:$0xf]
        %v4643 = vld [vmem:[%s4627 + $0x3c] sm:$0xf]
        %v4644 = vunpack.c.l.b16 %v4623
        %v4645 = vunpack.c.l.b16 %v4626
        %v4646 = vpack.c.b16 %v4645, %v4644
        %v4664 = vunpack.c.l.b16 %v4628
        %v4665 = vunpack.c.l.b16 %v4629
        %v4666 = vunpack.c.l.b16 %v4630
        %v4667 = vunpack.c.l.b16 %v4631
        %v4668 = vunpack.c.l.b16 %v4632
        %v4669 = vunpack.c.l.b16 %v4633
        %v4670 = vunpack.c.l.b16 %v4634
        %v4671 = vunpack.c.l.b16 %v4635
        %v4672 = vunpack.c.l.b16 %v4636
        %v4673 = vunpack.c.l.b16 %v4637
        %v4674 = vunpack.c.l.b16 %v4638
        %v4675 = vunpack.c.l.b16 %v4639
        %v4676 = vunpack.c.l.b16 %v4640
        %v4677 = vunpack.c.l.b16 %v4641
        %v4678 = vunpack.c.l.b16 %v4642
        %v4679 = vunpack.c.l.b16 %v4643
        %v4680 = vpack.c.b16 %v4665, %v4664
        %v4681 = vpack.c.b16 %v4667, %v4666
        %v4682 = vpack.c.b16 %v4669, %v4668
        %v4683 = vpack.c.b16 %v4671, %v4670
        %v4684 = vpack.c.b16 %v4673, %v4672
        %v4685 = vpack.c.b16 %v4675, %v4674
        %v4686 = vpack.c.b16 %v4677, %v4676
        %v4687 = vpack.c.b16 %v4679, %v4678
        %4696 = vmatprep.subr.bf16.mxu0 0
        %4697 = vmatpush1.bf16.msra.mxu0 %v4680
        %4698 = vmatprep.subr.bf16.mxu0 0
        %4699 = vmatpush1.bf16.msra.mxu0 %v4681
        %4700 = vmatprep.subr.bf16.mxu0 0
        %4701 = vmatpush1.bf16.msra.mxu0 %v4682
        %4702 = vmatprep.subr.bf16.mxu0 0
        %4703 = vmatpush1.bf16.msra.mxu0 %v4683
        %4704 = vmatprep.subr.bf16.mxu0 0
        %4705 = vmatpush1.bf16.msra.mxu0 %v4684
        %4706 = vmatprep.subr.bf16.mxu0 0
        %4707 = vmatpush1.bf16.msra.mxu0 %v4685
        %4708 = vmatprep.subr.bf16.mxu0 0
        %4709 = vmatpush1.bf16.msra.mxu0 %v4686
        %4710 = vmatprep.subr.bf16.mxu0 0
        %4711 = vmatpush1.bf16.msra.mxu0 %v4687
        %4712 = vmatprep.subr.bf16.mxu0 0
        %4713 = vmatpush1.bf16.msra.mxu0 0
        %4714 = vmatprep.subr.bf16.mxu0 0
        %4715 = vmatpush1.bf16.msra.mxu0 0
        %4716 = vmatprep.subr.bf16.mxu0 0
        %4717 = vmatpush1.bf16.msra.mxu0 0
        %4718 = vmatprep.subr.bf16.mxu0 0
        %4719 = vmatpush1.bf16.msra.mxu0 0
        %4720 = vmatprep.subr.bf16.mxu0 0
        %4721 = vmatpush1.bf16.msra.mxu0 0
        %4722 = vmatprep.subr.bf16.mxu0 0
        %4723 = vmatpush1.bf16.msra.mxu0 0
        %4724 = vmatprep.subr.bf16.mxu0 0
        %4725 = vmatpush1.bf16.msra.mxu0 0
        %4726 = vmatprep.subr.bf16.mxu0 0
        %4727 = vmatpush1.bf16.msra.mxu0 0
        %4728 = vmatprep.mubr.bf16.mxu0 0
        %4729 = vmatmul.mubr.bf16.gmra.mrb[0].mxu0 %v1430
        %v4730 = vpop.f32.mrb[0].mxu0
        %v4731 = vadd.f32 0.0, %v4730
        %v4732 = vpop.f32.mrb[0].mxu0
        %v4733 = vpop.f32.mrb[0].mxu0
        %v4734 = vadd.f32 0.0, %v4733
        %v4735 = vpop.f32.mrb[0].mxu0
        %4736 = vmatprep.mubr.bf16.mxu0 0
        %4737 = vmatmul.mubr.bf16.gmra.mrb[0].mxu0 %v1431
        %v4738 = vpop.f32.mrb[0].mxu0
        %v4739 = vadd.f32 0.0, %v4738
        %v4740 = vpop.f32.mrb[0].mxu0
        %v4741 = vpop.f32.mrb[0].mxu0
        %v4742 = vadd.f32 0.0, %v4741
        %v4743 = vpop.f32.mrb[0].mxu0
        %4744 = vmatprep.mubr.bf16.mxu0 0
        %4745 = vmatmul.mubr.bf16.gmra.mrb[0].mxu0 %v1432
        %v4746 = vpop.f32.mrb[0].mxu0
        %v4747 = vadd.f32 0.0, %v4746
        %v4748 = vpop.f32.mrb[0].mxu0
        %v4749 = vpop.f32.mrb[0].mxu0
        %v4750 = vadd.f32 0.0, %v4749
        %v4751 = vpop.f32.mrb[0].mxu0
        %4752 = vmatprep.mubr.bf16.mxu0 0
        %4753 = vmatmul.mubr.bf16.gmra.mrb[0].mxu0 %v1433
        %v4754 = vpop.f32.mrb[0].mxu0
        %v4755 = vadd.f32 0.0, %v4754
        %v4756 = vpop.f32.mrb[0].mxu0
        %v4757 = vpop.f32.mrb[0].mxu0
        %v4758 = vadd.f32 0.0, %v4757
        %v4759 = vpop.f32.mrb[0].mxu0
        %4760 = vmatprep.mubr.bf16.mxu0 0
        %4761 = vmatmul.mubr.bf16.gmra.mrb[0].mxu0 %v1434
        %v4762 = vpop.f32.mrb[0].mxu0
        %v4763 = vadd.f32 0.0, %v4762
        %v4764 = vpop.f32.mrb[0].mxu0
        %v4765 = vpop.f32.mrb[0].mxu0
        %v4766 = vadd.f32 0.0, %v4765
        %v4767 = vpop.f32.mrb[0].mxu0
        %4768 = vmatprep.mubr.bf16.mxu0 0
        %4769 = vmatmul.mubr.bf16.gmra.mrb[0].mxu0 %v1435
        %v4770 = vpop.f32.mrb[0].mxu0
        %v4771 = vadd.f32 0.0, %v4770
        %v4772 = vpop.f32.mrb[0].mxu0
        %v4773 = vpop.f32.mrb[0].mxu0
        %v4774 = vadd.f32 0.0, %v4773
        %v4775 = vpop.f32.mrb[0].mxu0
        %4776 = vmatprep.mubr.bf16.mxu0 0
        %4777 = vmatmul.mubr.bf16.gmra.mrb[0].mxu0 %v1436
        %v4778 = vpop.f32.mrb[0].mxu0
        %v4779 = vadd.f32 0.0, %v4778
        %v4780 = vpop.f32.mrb[0].mxu0
        %v4781 = vpop.f32.mrb[0].mxu0
        %v4782 = vadd.f32 0.0, %v4781
        %v4783 = vpop.f32.mrb[0].mxu0
        %4784 = vmatprep.mubr.bf16.mxu0 0
        %4785 = vmatmul.mubr.bf16.gmra.mrb[0].mxu0 %v1437
        %v4786 = vpop.f32.mrb[0].mxu0
        %v4787 = vadd.f32 0.0, %v4786
        %v4788 = vpop.f32.mrb[0].mxu0
        %v4789 = vpop.f32.mrb[0].mxu0
        %v4790 = vadd.f32 0.0, %v4789
        %v4791 = vpop.f32.mrb[0].mxu0
        %4792 = vmatprep.mubr.bf16.mxu0 0
        %4793 = vmatmul.mubr.bf16.gmra.mrb[0].mxu0 %v1438
        %v4794 = vpop.f32.mrb[0].mxu0
        %v4795 = vadd.f32 0.0, %v4794
        %v4796 = vpop.f32.mrb[0].mxu0
        %v4797 = vpop.f32.mrb[0].mxu0
        %v4798 = vadd.f32 0.0, %v4797
        %v4799 = vpop.f32.mrb[0].mxu0
        %4800 = vmatprep.mubr.bf16.mxu0 0
        %4801 = vmatmul.mubr.bf16.gmra.mrb[0].mxu0 %v1439
        %v4802 = vpop.f32.mrb[0].mxu0
        %v4803 = vadd.f32 0.0, %v4802
        %v4804 = vpop.f32.mrb[0].mxu0
        %v4805 = vpop.f32.mrb[0].mxu0
        %v4806 = vadd.f32 0.0, %v4805
        %v4807 = vpop.f32.mrb[0].mxu0
        %4808 = vmatprep.mubr.bf16.mxu0 0
        %4809 = vmatmul.mubr.bf16.gmra.mrb[0].mxu0 %v1440
        %v4810 = vpop.f32.mrb[0].mxu0
        %v4811 = vadd.f32 0.0, %v4810
        %v4812 = vpop.f32.mrb[0].mxu0
        %v4813 = vpop.f32.mrb[0].mxu0
        %v4814 = vadd.f32 0.0, %v4813
        %v4815 = vpop.f32.mrb[0].mxu0
        %4816 = vmatprep.mubr.bf16.mxu0 0
        %4817 = vmatmul.mubr.bf16.gmra.mrb[0].mxu0 %v1441
        %v4818 = vpop.f32.mrb[0].mxu0
        %v4819 = vadd.f32 0.0, %v4818
        %v4820 = vpop.f32.mrb[0].mxu0
        %v4821 = vpop.f32.mrb[0].mxu0
        %v4822 = vadd.f32 0.0, %v4821
        %v4823 = vpop.f32.mrb[0].mxu0
        %4824 = vmatprep.mubr.bf16.mxu0 0
        %4825 = vmatmul.mubr.bf16.gmra.mrb[0].mxu0 %v1442
        %v4826 = vpop.f32.mrb[0].mxu0
        %v4827 = vadd.f32 0.0, %v4826
        %v4828 = vpop.f32.mrb[0].mxu0
        %v4829 = vpop.f32.mrb[0].mxu0
        %v4830 = vadd.f32 0.0, %v4829
        %v4831 = vpop.f32.mrb[0].mxu0
        %4832 = vmatprep.mubr.bf16.mxu0 0
        %4833 = vmatmul.mubr.bf16.gmra.mrb[0].mxu0 %v1443
        %v4834 = vpop.f32.mrb[0].mxu0
        %v4835 = vadd.f32 0.0, %v4834
        %v4836 = vpop.f32.mrb[0].mxu0
        %v4837 = vpop.f32.mrb[0].mxu0
        %v4838 = vadd.f32 0.0, %v4837
        %v4839 = vpop.f32.mrb[0].mxu0
        %4840 = vmatprep.mubr.bf16.mxu0 0
        %4841 = vmatmul.mubr.bf16.gmra.mrb[0].mxu0 %v3280
        %v4842 = vpop.f32.mrb[0].mxu0
        %v4843 = vadd.f32 0.0, %v4842
        %v4844 = vpop.f32.mrb[0].mxu0
        %v4845 = vpop.f32.mrb[0].mxu0
        %v4846 = vadd.f32 0.0, %v4845
        %v4847 = vpop.f32.mrb[0].mxu0
        %4848 = vmatprep.mubr.bf16.mxu0 0
        %4849 = vmatmul.mubr.bf16.gmra.mrb[0].mxu0 %v4646
        %v4850 = vpop.f32.mrb[0].mxu0
        %v4851 = vadd.f32 0.0, %v4850
        %v4852 = vpop.f32.mrb[0].mxu0
        %v4853 = vpop.f32.mrb[0].mxu0
        %v4854 = vadd.f32 0.0, %v4853
        %v4855 = vpop.f32.mrb[0].mxu0
        %4856 = vdwg.mxu0
        %v4857 = vadd.f32 %v4587, %v4731
        %v4858 = vadd.f32 %v4588, %v4734
        %v4859 = vadd.f32 %v4589, %v4739
        %v4860 = vadd.f32 %v4590, %v4742
        %v4861 = vadd.f32 %v4591, %v4747
        %v4862 = vadd.f32 %v4592, %v4750
        %v4863 = vadd.f32 %v4593, %v4755
        %v4864 = vadd.f32 %v4594, %v4758
        %v4865 = vadd.f32 %v4595, %v4763
        %v4866 = vadd.f32 %v4596, %v4766
        %v4867 = vadd.f32 %v4597, %v4771
        %v4868 = vadd.f32 %v4598, %v4774
        %v4869 = vadd.f32 %v4599, %v4779
        %v4870 = vadd.f32 %v4600, %v4782
        %v4871 = vadd.f32 %v4601, %v4787
        %v4872 = vadd.f32 %v4602, %v4790
        %v4873 = vadd.f32 %v4603, %v4795
        %v4874 = vadd.f32 %v4604, %v4798
        %v4875 = vadd.f32 %v4605, %v4803
        %v4876 = vadd.f32 %v4606, %v4806
        %v4877 = vadd.f32 %v4607, %v4811
        %v4878 = vadd.f32 %v4608, %v4814
        %v4879 = vadd.f32 %v4609, %v4819
        %v4880 = vadd.f32 %v4610, %v4822
        %v4881 = vadd.f32 %v4611, %v4827
        %v4882 = vadd.f32 %v4612, %v4830
        %v4883 = vadd.f32 %v4613, %v4835
        %v4884 = vadd.f32 %v4614, %v4838
        %v4885 = vadd.f32 %v4615, %v4843
        %v4886 = vadd.f32 %v4616, %v4846
        %v4887 = vadd.f32 %v4617, %v4851
        %v4888 = vadd.f32 %v4618, %v4854
        %v4889 = vrot.slane %v4334, 5
        %v4890 = vrot.slane %v4337, 6
        %v4891 = vor.u32 %v4889, %v4890
        %v4892 = vrot.slane %v4891, 4
        %v4893 = vrot.slane %v4347, 5
        %v4894 = vrot.slane %v4343, 6
        %v4895 = vor.u32 %v4893, %v4894
        %v4896 = vsel %vm1703, %v4892, %v4895
        %v4897 = vrot.slane %v4895, 4
        %v4898 = vshrl.u32 %v243, 16
        %v4900 = vrot.slane %v4898, 5
        %v4901 = vrot.slane %v4353, 6
        %v4902 = vor.u32 %v4900, %v4901
        %v4903 = vsel %vm1703, %v4897, %v4902
        %s4904 = scalar_lea.vmem %s2, 832
        %v4905 = vld [vmem:[%s4904] sm:$0xf]
        %v4906 = vld [vmem:[%s4904 + $0x4] sm:$0xf]
        %v4907 = vld [vmem:[%s4904 + $0x8] sm:$0xf]
        %v4908 = vld [vmem:[%s4904 + $0xc] sm:$0xf]
        %v4909 = vld [vmem:[%s4904 + $0x10] sm:$0xf]
        %v4910 = vld [vmem:[%s4904 + $0x14] sm:$0xf]
        %v4911 = vld [vmem:[%s4904 + $0x18] sm:$0xf]
        %v4912 = vld [vmem:[%s4904 + $0x1c] sm:$0xf]
        %v4913 = vld [vmem:[%s4904 + $0x20] sm:$0xf]
        %v4914 = vld [vmem:[%s4904 + $0x24] sm:$0xf]
        %v4915 = vld [vmem:[%s4904 + $0x28] sm:$0xf]
        %v4916 = vld [vmem:[%s4904 + $0x2c] sm:$0xf]
        %v4917 = vld [vmem:[%s4904 + $0x30] sm:$0xf]
        %v4918 = vld [vmem:[%s4904 + $0x34] sm:$0xf]
        %v4919 = vld [vmem:[%s4904 + $0x38] sm:$0xf]
        %v4920 = vld [vmem:[%s4904 + $0x3c] sm:$0xf]
        %v4921 = vunpack.c.l.b16 %v4896
        %v4922 = vunpack.c.l.b16 %v4903
        %v4923 = vpack.c.b16 %v4922, %v4921
        %v4941 = vunpack.c.l.b16 %v4905
        %v4942 = vunpack.c.l.b16 %v4906
        %v4943 = vunpack.c.l.b16 %v4907
        %v4944 = vunpack.c.l.b16 %v4908
        %v4945 = vunpack.c.l.b16 %v4909
        %v4946 = vunpack.c.l.b16 %v4910
        %v4947 = vunpack.c.l.b16 %v4911
        %v4948 = vunpack.c.l.b16 %v4912
        %v4949 = vunpack.c.l.b16 %v4913
        %v4950 = vunpack.c.l.b16 %v4914
        %v4951 = vunpack.c.l.b16 %v4915
        %v4952 = vunpack.c.l.b16 %v4916
        %v4953 = vunpack.c.l.b16 %v4917
        %v4954 = vunpack.c.l.b16 %v4918
        %v4955 = vunpack.c.l.b16 %v4919
        %v4956 = vunpack.c.l.b16 %v4920
        %v4957 = vpack.c.b16 %v4942, %v4941
        %v4958 = vpack.c.b16 %v4944, %v4943
        %v4959 = vpack.c.b16 %v4946, %v4945
        %v4960 = vpack.c.b16 %v4948, %v4947
        %v4961 = vpack.c.b16 %v4950, %v4949
        %v4962 = vpack.c.b16 %v4952, %v4951
        %v4963 = vpack.c.b16 %v4954, %v4953
        %v4964 = vpack.c.b16 %v4956, %v4955
        %4973 = vmatprep.subr.bf16.mxu0 0
        %4974 = vmatpush1.bf16.msra.mxu0 %v4957
        %4975 = vmatprep.subr.bf16.mxu0 0
        %4976 = vmatpush1.bf16.msra.mxu0 %v4958
        %4977 = vmatprep.subr.bf16.mxu0 0
        %4978 = vmatpush1.bf16.msra.mxu0 %v4959
        %4979 = vmatprep.subr.bf16.mxu0 0
        %4980 = vmatpush1.bf16.msra.mxu0 %v4960
        %4981 = vmatprep.subr.bf16.mxu0 0
        %4982 = vmatpush1.bf16.msra.mxu0 %v4961
        %4983 = vmatprep.subr.bf16.mxu0 0
        %4984 = vmatpush1.bf16.msra.mxu0 %v4962
        %4985 = vmatprep.subr.bf16.mxu0 0
        %4986 = vmatpush1.bf16.msra.mxu0 %v4963
        %4987 = vmatprep.subr.bf16.mxu0 0
        %4988 = vmatpush1.bf16.msra.mxu0 %v4964
        %4989 = vmatprep.subr.bf16.mxu0 0
        %4990 = vmatpush1.bf16.msra.mxu0 0
        %4991 = vmatprep.subr.bf16.mxu0 0
        %4992 = vmatpush1.bf16.msra.mxu0 0
        %4993 = vmatprep.subr.bf16.mxu0 0
        %4994 = vmatpush1.bf16.msra.mxu0 0
        %4995 = vmatprep.subr.bf16.mxu0 0
        %4996 = vmatpush1.bf16.msra.mxu0 0
        %4997 = vmatprep.subr.bf16.mxu0 0
        %4998 = vmatpush1.bf16.msra.mxu0 0
        %4999 = vmatprep.subr.bf16.mxu0 0
        %5000 = vmatpush1.bf16.msra.mxu0 0
        %5001 = vmatprep.subr.bf16.mxu0 0
        %5002 = vmatpush1.bf16.msra.mxu0 0
        %5003 = vmatprep.subr.bf16.mxu0 0
        %5004 = vmatpush1.bf16.msra.mxu0 0
        %5005 = vmatprep.mubr.bf16.mxu0 0
        %5006 = vmatmul.mubr.bf16.gmra.mrb[0].mxu0 %v1995
        %v5007 = vpop.f32.mrb[0].mxu0
        %v5008 = vadd.f32 0.0, %v5007
        %v5009 = vpop.f32.mrb[0].mxu0
        %v5010 = vpop.f32.mrb[0].mxu0
        %v5011 = vadd.f32 0.0, %v5010
        %v5012 = vpop.f32.mrb[0].mxu0
        %5013 = vmatprep.mubr.bf16.mxu0 0
        %5014 = vmatmul.mubr.bf16.gmra.mrb[0].mxu0 %v1996
        %v5015 = vpop.f32.mrb[0].mxu0
        %v5016 = vadd.f32 0.0, %v5015
        %v5017 = vpop.f32.mrb[0].mxu0
        %v5018 = vpop.f32.mrb[0].mxu0
        %v5019 = vadd.f32 0.0, %v5018
        %v5020 = vpop.f32.mrb[0].mxu0
        %5021 = vmatprep.mubr.bf16.mxu0 0
        %5022 = vmatmul.mubr.bf16.gmra.mrb[0].mxu0 %v1997
        %v5023 = vpop.f32.mrb[0].mxu0
        %v5024 = vadd.f32 0.0, %v5023
        %v5025 = vpop.f32.mrb[0].mxu0
        %v5026 = vpop.f32.mrb[0].mxu0
        %v5027 = vadd.f32 0.0, %v5026
        %v5028 = vpop.f32.mrb[0].mxu0
        %5029 = vmatprep.mubr.bf16.mxu0 0
        %5030 = vmatmul.mubr.bf16.gmra.mrb[0].mxu0 %v1998
        %v5031 = vpop.f32.mrb[0].mxu0
        %v5032 = vadd.f32 0.0, %v5031
        %v5033 = vpop.f32.mrb[0].mxu0
        %v5034 = vpop.f32.mrb[0].mxu0
        %v5035 = vadd.f32 0.0, %v5034
        %v5036 = vpop.f32.mrb[0].mxu0
        %5037 = vmatprep.mubr.bf16.mxu0 0
        %5038 = vmatmul.mubr.bf16.gmra.mrb[0].mxu0 %v1999
        %v5039 = vpop.f32.mrb[0].mxu0
        %v5040 = vadd.f32 0.0, %v5039
        %v5041 = vpop.f32.mrb[0].mxu0
        %v5042 = vpop.f32.mrb[0].mxu0
        %v5043 = vadd.f32 0.0, %v5042
        %v5044 = vpop.f32.mrb[0].mxu0
        %5045 = vmatprep.mubr.bf16.mxu0 0
        %5046 = vmatmul.mubr.bf16.gmra.mrb[0].mxu0 %v2000
        %v5047 = vpop.f32.mrb[0].mxu0
        %v5048 = vadd.f32 0.0, %v5047
        %v5049 = vpop.f32.mrb[0].mxu0
        %v5050 = vpop.f32.mrb[0].mxu0
        %v5051 = vadd.f32 0.0, %v5050
        %v5052 = vpop.f32.mrb[0].mxu0
        %5053 = vmatprep.mubr.bf16.mxu0 0
        %5054 = vmatmul.mubr.bf16.gmra.mrb[0].mxu0 %v2001
        %v5055 = vpop.f32.mrb[0].mxu0
        %v5056 = vadd.f32 0.0, %v5055
        %v5057 = vpop.f32.mrb[0].mxu0
        %v5058 = vpop.f32.mrb[0].mxu0
        %v5059 = vadd.f32 0.0, %v5058
        %v5060 = vpop.f32.mrb[0].mxu0
        %5061 = vmatprep.mubr.bf16.mxu0 0
        %5062 = vmatmul.mubr.bf16.gmra.mrb[0].mxu0 %v2002
        %v5063 = vpop.f32.mrb[0].mxu0
        %v5064 = vadd.f32 0.0, %v5063
        %v5065 = vpop.f32.mrb[0].mxu0
        %v5066 = vpop.f32.mrb[0].mxu0
        %v5067 = vadd.f32 0.0, %v5066
        %v5068 = vpop.f32.mrb[0].mxu0
        %5069 = vmatprep.mubr.bf16.mxu0 0
        %5070 = vmatmul.mubr.bf16.gmra.mrb[0].mxu0 %v2003
        %v5071 = vpop.f32.mrb[0].mxu0
        %v5072 = vadd.f32 0.0, %v5071
        %v5073 = vpop.f32.mrb[0].mxu0
        %v5074 = vpop.f32.mrb[0].mxu0
        %v5075 = vadd.f32 0.0, %v5074
        %v5076 = vpop.f32.mrb[0].mxu0
        %5077 = vmatprep.mubr.bf16.mxu0 0
        %5078 = vmatmul.mubr.bf16.gmra.mrb[0].mxu0 %v2004
        %v5079 = vpop.f32.mrb[0].mxu0
        %v5080 = vadd.f32 0.0, %v5079
        %v5081 = vpop.f32.mrb[0].mxu0
        %v5082 = vpop.f32.mrb[0].mxu0
        %v5083 = vadd.f32 0.0, %v5082
        %v5084 = vpop.f32.mrb[0].mxu0
        %5085 = vmatprep.mubr.bf16.mxu0 0
        %5086 = vmatmul.mubr.bf16.gmra.mrb[0].mxu0 %v2005
        %v5087 = vpop.f32.mrb[0].mxu0
        %v5088 = vadd.f32 0.0, %v5087
        %v5089 = vpop.f32.mrb[0].mxu0
        %v5090 = vpop.f32.mrb[0].mxu0
        %v5091 = vadd.f32 0.0, %v5090
        %v5092 = vpop.f32.mrb[0].mxu0
        %5093 = vmatprep.mubr.bf16.mxu0 0
        %5094 = vmatmul.mubr.bf16.gmra.mrb[0].mxu0 %v2006
        %v5095 = vpop.f32.mrb[0].mxu0
        %v5096 = vadd.f32 0.0, %v5095
        %v5097 = vpop.f32.mrb[0].mxu0
        %v5098 = vpop.f32.mrb[0].mxu0
        %v5099 = vadd.f32 0.0, %v5098
        %v5100 = vpop.f32.mrb[0].mxu0
        %5101 = vmatprep.mubr.bf16.mxu0 0
        %5102 = vmatmul.mubr.bf16.gmra.mrb[0].mxu0 %v2007
        %v5103 = vpop.f32.mrb[0].mxu0
        %v5104 = vadd.f32 0.0, %v5103
        %v5105 = vpop.f32.mrb[0].mxu0
        %v5106 = vpop.f32.mrb[0].mxu0
        %v5107 = vadd.f32 0.0, %v5106
        %v5108 = vpop.f32.mrb[0].mxu0
        %5109 = vmatprep.mubr.bf16.mxu0 0
        %5110 = vmatmul.mubr.bf16.gmra.mrb[0].mxu0 %v2008
        %v5111 = vpop.f32.mrb[0].mxu0
        %v5112 = vadd.f32 0.0, %v5111
        %v5113 = vpop.f32.mrb[0].mxu0
        %v5114 = vpop.f32.mrb[0].mxu0
        %v5115 = vadd.f32 0.0, %v5114
        %v5116 = vpop.f32.mrb[0].mxu0
        %5117 = vmatprep.mubr.bf16.mxu0 0
        %5118 = vmatmul.mubr.bf16.gmra.mrb[0].mxu0 %v3557
        %v5119 = vpop.f32.mrb[0].mxu0
        %v5120 = vadd.f32 0.0, %v5119
        %v5121 = vpop.f32.mrb[0].mxu0
        %v5122 = vpop.f32.mrb[0].mxu0
        %v5123 = vadd.f32 0.0, %v5122
        %v5124 = vpop.f32.mrb[0].mxu0
        %5125 = vmatprep.mubr.bf16.mxu0 0
        %5126 = vmatmul.mubr.bf16.gmra.mrb[0].mxu0 %v4923
        %v5127 = vpop.f32.mrb[0].mxu0
        %v5128 = vadd.f32 0.0, %v5127
        %v5129 = vpop.f32.mrb[0].mxu0
        %v5130 = vpop.f32.mrb[0].mxu0
        %v5131 = vadd.f32 0.0, %v5130
        %v5132 = vpop.f32.mrb[0].mxu0
        %5133 = vdwg.mxu0
        %v5134 = vadd.f32 %v4857, %v5008
        %v5135 = vadd.f32 %v4858, %v5011
        %v5136 = vadd.f32 %v4859, %v5016
        %v5137 = vadd.f32 %v4860, %v5019
        %v5138 = vadd.f32 %v4861, %v5024
        %v5139 = vadd.f32 %v4862, %v5027
        %v5140 = vadd.f32 %v4863, %v5032
        %v5141 = vadd.f32 %v4864, %v5035
        %v5142 = vadd.f32 %v4865, %v5040
        %v5143 = vadd.f32 %v4866, %v5043
        %v5144 = vadd.f32 %v4867, %v5048
        %v5145 = vadd.f32 %v4868, %v5051
        %v5146 = vadd.f32 %v4869, %v5056
        %v5147 = vadd.f32 %v4870, %v5059
        %v5148 = vadd.f32 %v4871, %v5064
        %v5149 = vadd.f32 %v4872, %v5067
        %v5150 = vadd.f32 %v4873, %v5072
        %v5151 = vadd.f32 %v4874, %v5075
        %v5152 = vadd.f32 %v4875, %v5080
        %v5153 = vadd.f32 %v4876, %v5083
        %v5154 = vadd.f32 %v4877, %v5088
        %v5155 = vadd.f32 %v4878, %v5091
        %v5156 = vadd.f32 %v4879, %v5096
        %v5157 = vadd.f32 %v4880, %v5099
        %v5158 = vadd.f32 %v4881, %v5104
        %v5159 = vadd.f32 %v4882, %v5107
        %v5160 = vadd.f32 %v4883, %v5112
        %v5161 = vadd.f32 %v4884, %v5115
        %v5162 = vadd.f32 %v4885, %v5120
        %v5163 = vadd.f32 %v4886, %v5123
        %v5164 = vadd.f32 %v4887, %v5128
        %v5165 = vadd.f32 %v4888, %v5131
        %v5166 = vrot.slane %v241, 6
        %v5167 = vrot.slane %v5166, 4
        %v5168 = vrot.slane %v242, 6
        %v5169 = vsel %vm2268, %v5167, %v5168
        %v5170 = vrot.slane %v5168, 4
        %v5171 = vrot.slane %v243, 6
        %v5172 = vsel %vm2268, %v5170, %v5171
        %s5173 = scalar_lea.vmem %s2, 896
        %v5174 = vld [vmem:[%s5173] sm:$0xf]
        %v5175 = vld [vmem:[%s5173 + $0x4] sm:$0xf]
        %v5176 = vld [vmem:[%s5173 + $0x8] sm:$0xf]
        %v5177 = vld [vmem:[%s5173 + $0xc] sm:$0xf]
        %v5178 = vld [vmem:[%s5173 + $0x10] sm:$0xf]
        %v5179 = vld [vmem:[%s5173 + $0x14] sm:$0xf]
        %v5180 = vld [vmem:[%s5173 + $0x18] sm:$0xf]
        %v5181 = vld [vmem:[%s5173 + $0x1c] sm:$0xf]
        %v5182 = vld [vmem:[%s5173 + $0x20] sm:$0xf]
        %v5183 = vld [vmem:[%s5173 + $0x24] sm:$0xf]
        %v5184 = vld [vmem:[%s5173 + $0x28] sm:$0xf]
        %v5185 = vld [vmem:[%s5173 + $0x2c] sm:$0xf]
        %v5186 = vld [vmem:[%s5173 + $0x30] sm:$0xf]
        %v5187 = vld [vmem:[%s5173 + $0x34] sm:$0xf]
        %v5188 = vld [vmem:[%s5173 + $0x38] sm:$0xf]
        %v5189 = vld [vmem:[%s5173 + $0x3c] sm:$0xf]
        %v5190 = vunpack.c.l.b16 %v5169
        %v5191 = vunpack.c.l.b16 %v5172
        %v5192 = vpack.c.b16 %v5191, %v5190
        %v5210 = vunpack.c.l.b16 %v5174
        %v5211 = vunpack.c.l.b16 %v5175
        %v5212 = vunpack.c.l.b16 %v5176
        %v5213 = vunpack.c.l.b16 %v5177
        %v5214 = vunpack.c.l.b16 %v5178
        %v5215 = vunpack.c.l.b16 %v5179
        %v5216 = vunpack.c.l.b16 %v5180
        %v5217 = vunpack.c.l.b16 %v5181
        %v5218 = vunpack.c.l.b16 %v5182
        %v5219 = vunpack.c.l.b16 %v5183
        %v5220 = vunpack.c.l.b16 %v5184
        %v5221 = vunpack.c.l.b16 %v5185
        %v5222 = vunpack.c.l.b16 %v5186
        %v5223 = vunpack.c.l.b16 %v5187
        %v5224 = vunpack.c.l.b16 %v5188
        %v5225 = vunpack.c.l.b16 %v5189
        %v5226 = vpack.c.b16 %v5211, %v5210
        %v5227 = vpack.c.b16 %v5213, %v5212
        %v5228 = vpack.c.b16 %v5215, %v5214
        %v5229 = vpack.c.b16 %v5217, %v5216
        %v5230 = vpack.c.b16 %v5219, %v5218
        %v5231 = vpack.c.b16 %v5221, %v5220
        %v5232 = vpack.c.b16 %v5223, %v5222
        %v5233 = vpack.c.b16 %v5225, %v5224
        %5242 = vmatprep.subr.bf16.mxu0 0
        %5243 = vmatpush1.bf16.msra.mxu0 %v5226
        %5244 = vmatprep.subr.bf16.mxu0 0
        %5245 = vmatpush1.bf16.msra.mxu0 %v5227
        %5246 = vmatprep.subr.bf16.mxu0 0
        %5247 = vmatpush1.bf16.msra.mxu0 %v5228
        %5248 = vmatprep.subr.bf16.mxu0 0
        %5249 = vmatpush1.bf16.msra.mxu0 %v5229
        %5250 = vmatprep.subr.bf16.mxu0 0
        %5251 = vmatpush1.bf16.msra.mxu0 %v5230
        %5252 = vmatprep.subr.bf16.mxu0 0
        %5253 = vmatpush1.bf16.msra.mxu0 %v5231
        %5254 = vmatprep.subr.bf16.mxu0 0
        %5255 = vmatpush1.bf16.msra.mxu0 %v5232
        %5256 = vmatprep.subr.bf16.mxu0 0
        %5257 = vmatpush1.bf16.msra.mxu0 %v5233
        %5258 = vmatprep.subr.bf16.mxu0 0
        %5259 = vmatpush1.bf16.msra.mxu0 0
        %5260 = vmatprep.subr.bf16.mxu0 0
        %5261 = vmatpush1.bf16.msra.mxu0 0
        %5262 = vmatprep.subr.bf16.mxu0 0
        %5263 = vmatpush1.bf16.msra.mxu0 0
        %5264 = vmatprep.subr.bf16.mxu0 0
        %5265 = vmatpush1.bf16.msra.mxu0 0
        %5266 = vmatprep.subr.bf16.mxu0 0
        %5267 = vmatpush1.bf16.msra.mxu0 0
        %5268 = vmatprep.subr.bf16.mxu0 0
        %5269 = vmatpush1.bf16.msra.mxu0 0
        %5270 = vmatprep.subr.bf16.mxu0 0
        %5271 = vmatpush1.bf16.msra.mxu0 0
        %5272 = vmatprep.subr.bf16.mxu0 0
        %5273 = vmatpush1.bf16.msra.mxu0 0
        %5274 = vmatprep.mubr.bf16.mxu0 0
        %5275 = vmatmul.mubr.bf16.gmra.mrb[0].mxu0 %v2432
        %v5276 = vpop.f32.mrb[0].mxu0
        %v5277 = vadd.f32 0.0, %v5276
        %v5278 = vpop.f32.mrb[0].mxu0
        %v5279 = vpop.f32.mrb[0].mxu0
        %v5280 = vadd.f32 0.0, %v5279
        %v5281 = vpop.f32.mrb[0].mxu0
        %5282 = vmatprep.mubr.bf16.mxu0 0
        %5283 = vmatmul.mubr.bf16.gmra.mrb[0].mxu0 %v2433
        %v5284 = vpop.f32.mrb[0].mxu0
        %v5285 = vadd.f32 0.0, %v5284
        %v5286 = vpop.f32.mrb[0].mxu0
        %v5287 = vpop.f32.mrb[0].mxu0
        %v5288 = vadd.f32 0.0, %v5287
        %v5289 = vpop.f32.mrb[0].mxu0
        %5290 = vmatprep.mubr.bf16.mxu0 0
        %5291 = vmatmul.mubr.bf16.gmra.mrb[0].mxu0 %v2434
        %v5292 = vpop.f32.mrb[0].mxu0
        %v5293 = vadd.f32 0.0, %v5292
        %v5294 = vpop.f32.mrb[0].mxu0
        %v5295 = vpop.f32.mrb[0].mxu0
        %v5296 = vadd.f32 0.0, %v5295
        %v5297 = vpop.f32.mrb[0].mxu0
        %5298 = vmatprep.mubr.bf16.mxu0 0
        %5299 = vmatmul.mubr.bf16.gmra.mrb[0].mxu0 %v2435
        %v5300 = vpop.f32.mrb[0].mxu0
        %v5301 = vadd.f32 0.0, %v5300
        %v5302 = vpop.f32.mrb[0].mxu0
        %v5303 = vpop.f32.mrb[0].mxu0
        %v5304 = vadd.f32 0.0, %v5303
        %v5305 = vpop.f32.mrb[0].mxu0
        %5306 = vmatprep.mubr.bf16.mxu0 0
        %5307 = vmatmul.mubr.bf16.gmra.mrb[0].mxu0 %v2436
        %v5308 = vpop.f32.mrb[0].mxu0
        %v5309 = vadd.f32 0.0, %v5308
        %v5310 = vpop.f32.mrb[0].mxu0
        %v5311 = vpop.f32.mrb[0].mxu0
        %v5312 = vadd.f32 0.0, %v5311
        %v5313 = vpop.f32.mrb[0].mxu0
        %5314 = vmatprep.mubr.bf16.mxu0 0
        %5315 = vmatmul.mubr.bf16.gmra.mrb[0].mxu0 %v2437
        %v5316 = vpop.f32.mrb[0].mxu0
        %v5317 = vadd.f32 0.0, %v5316
        %v5318 = vpop.f32.mrb[0].mxu0
        %v5319 = vpop.f32.mrb[0].mxu0
        %v5320 = vadd.f32 0.0, %v5319
        %v5321 = vpop.f32.mrb[0].mxu0
        %5322 = vmatprep.mubr.bf16.mxu0 0
        %5323 = vmatmul.mubr.bf16.gmra.mrb[0].mxu0 %v2438
        %v5324 = vpop.f32.mrb[0].mxu0
        %v5325 = vadd.f32 0.0, %v5324
        %v5326 = vpop.f32.mrb[0].mxu0
        %v5327 = vpop.f32.mrb[0].mxu0
        %v5328 = vadd.f32 0.0, %v5327
        %v5329 = vpop.f32.mrb[0].mxu0
        %5330 = vmatprep.mubr.bf16.mxu0 0
        %5331 = vmatmul.mubr.bf16.gmra.mrb[0].mxu0 %v2439
        %v5332 = vpop.f32.mrb[0].mxu0
        %v5333 = vadd.f32 0.0, %v5332
        %v5334 = vpop.f32.mrb[0].mxu0
        %v5335 = vpop.f32.mrb[0].mxu0
        %v5336 = vadd.f32 0.0, %v5335
        %v5337 = vpop.f32.mrb[0].mxu0
        %5338 = vmatprep.mubr.bf16.mxu0 0
        %5339 = vmatmul.mubr.bf16.gmra.mrb[0].mxu0 %v2440
        %v5340 = vpop.f32.mrb[0].mxu0
        %v5341 = vadd.f32 0.0, %v5340
        %v5342 = vpop.f32.mrb[0].mxu0
        %v5343 = vpop.f32.mrb[0].mxu0
        %v5344 = vadd.f32 0.0, %v5343
        %v5345 = vpop.f32.mrb[0].mxu0
        %5346 = vmatprep.mubr.bf16.mxu0 0
        %5347 = vmatmul.mubr.bf16.gmra.mrb[0].mxu0 %v2441
        %v5348 = vpop.f32.mrb[0].mxu0
        %v5349 = vadd.f32 0.0, %v5348
        %v5350 = vpop.f32.mrb[0].mxu0
        %v5351 = vpop.f32.mrb[0].mxu0
        %v5352 = vadd.f32 0.0, %v5351
        %v5353 = vpop.f32.mrb[0].mxu0
        %5354 = vmatprep.mubr.bf16.mxu0 0
        %5355 = vmatmul.mubr.bf16.gmra.mrb[0].mxu0 %v2442
        %v5356 = vpop.f32.mrb[0].mxu0
        %v5357 = vadd.f32 0.0, %v5356
        %v5358 = vpop.f32.mrb[0].mxu0
        %v5359 = vpop.f32.mrb[0].mxu0
        %v5360 = vadd.f32 0.0, %v5359
        %v5361 = vpop.f32.mrb[0].mxu0
        %5362 = vmatprep.mubr.bf16.mxu0 0
        %5363 = vmatmul.mubr.bf16.gmra.mrb[0].mxu0 %v2443
        %v5364 = vpop.f32.mrb[0].mxu0
        %v5365 = vadd.f32 0.0, %v5364
        %v5366 = vpop.f32.mrb[0].mxu0
        %v5367 = vpop.f32.mrb[0].mxu0
        %v5368 = vadd.f32 0.0, %v5367
        %v5369 = vpop.f32.mrb[0].mxu0
        %5370 = vmatprep.mubr.bf16.mxu0 0
        %5371 = vmatmul.mubr.bf16.gmra.mrb[0].mxu0 %v2444
        %v5372 = vpop.f32.mrb[0].mxu0
        %v5373 = vadd.f32 0.0, %v5372
        %v5374 = vpop.f32.mrb[0].mxu0
        %v5375 = vpop.f32.mrb[0].mxu0
        %v5376 = vadd.f32 0.0, %v5375
        %v5377 = vpop.f32.mrb[0].mxu0
        %5378 = vmatprep.mubr.bf16.mxu0 0
        %5379 = vmatmul.mubr.bf16.gmra.mrb[0].mxu0 %v2445
        %v5380 = vpop.f32.mrb[0].mxu0
        %v5381 = vadd.f32 0.0, %v5380
        %v5382 = vpop.f32.mrb[0].mxu0
        %v5383 = vpop.f32.mrb[0].mxu0
        %v5384 = vadd.f32 0.0, %v5383
        %v5385 = vpop.f32.mrb[0].mxu0
        %5386 = vmatprep.mubr.bf16.mxu0 0
        %5387 = vmatmul.mubr.bf16.gmra.mrb[0].mxu0 %v3826
        %v5388 = vpop.f32.mrb[0].mxu0
        %v5389 = vadd.f32 0.0, %v5388
        %v5390 = vpop.f32.mrb[0].mxu0
        %v5391 = vpop.f32.mrb[0].mxu0
        %v5392 = vadd.f32 0.0, %v5391
        %v5393 = vpop.f32.mrb[0].mxu0
        %5394 = vmatprep.mubr.bf16.mxu0 0
        %5395 = vmatmul.mubr.bf16.gmra.mrb[0].mxu0 %v5192
        %v5396 = vpop.f32.mrb[0].mxu0
        %v5397 = vadd.f32 0.0, %v5396
        %v5398 = vpop.f32.mrb[0].mxu0
        %v5399 = vpop.f32.mrb[0].mxu0
        %v5400 = vadd.f32 0.0, %v5399
        %v5401 = vpop.f32.mrb[0].mxu0
        %5402 = vdwg.mxu0
        %v5403 = vadd.f32 %v5134, %v5277
        %v5404 = vadd.f32 %v5135, %v5280
        %v5405 = vadd.f32 %v5136, %v5285
        %v5406 = vadd.f32 %v5137, %v5288
        %v5407 = vadd.f32 %v5138, %v5293
        %v5408 = vadd.f32 %v5139, %v5296
        %v5409 = vadd.f32 %v5140, %v5301
        %v5410 = vadd.f32 %v5141, %v5304
        %v5411 = vadd.f32 %v5142, %v5309
        %v5412 = vadd.f32 %v5143, %v5312
        %v5413 = vadd.f32 %v5144, %v5317
        %v5414 = vadd.f32 %v5145, %v5320
        %v5415 = vadd.f32 %v5146, %v5325
        %v5416 = vadd.f32 %v5147, %v5328
        %v5417 = vadd.f32 %v5148, %v5333
        %v5418 = vadd.f32 %v5149, %v5336
        %v5419 = vadd.f32 %v5150, %v5341
        %v5420 = vadd.f32 %v5151, %v5344
        %v5421 = vadd.f32 %v5152, %v5349
        %v5422 = vadd.f32 %v5153, %v5352
        %v5423 = vadd.f32 %v5154, %v5357
        %v5424 = vadd.f32 %v5155, %v5360
        %v5425 = vadd.f32 %v5156, %v5365
        %v5426 = vadd.f32 %v5157, %v5368
        %v5427 = vadd.f32 %v5158, %v5373
        %v5428 = vadd.f32 %v5159, %v5376
        %v5429 = vadd.f32 %v5160, %v5381
        %v5430 = vadd.f32 %v5161, %v5384
        %v5431 = vadd.f32 %v5162, %v5389
        %v5432 = vadd.f32 %v5163, %v5392
        %v5433 = vadd.f32 %v5164, %v5397
        %v5434 = vadd.f32 %v5165, %v5400
        %s5435 = scalar_lea.vmem %s2, 960
        %v5436 = vld [vmem:[%s5435] sm:$0xf]
        %v5437 = vld [vmem:[%s5435 + $0x4] sm:$0xf]
        %v5438 = vld [vmem:[%s5435 + $0x8] sm:$0xf]
        %v5439 = vld [vmem:[%s5435 + $0xc] sm:$0xf]
        %v5440 = vld [vmem:[%s5435 + $0x10] sm:$0xf]
        %v5441 = vld [vmem:[%s5435 + $0x14] sm:$0xf]
        %v5442 = vld [vmem:[%s5435 + $0x18] sm:$0xf]
        %v5443 = vld [vmem:[%s5435 + $0x1c] sm:$0xf]
        %v5444 = vld [vmem:[%s5435 + $0x20] sm:$0xf]
        %v5445 = vld [vmem:[%s5435 + $0x24] sm:$0xf]
        %v5446 = vld [vmem:[%s5435 + $0x28] sm:$0xf]
        %v5447 = vld [vmem:[%s5435 + $0x2c] sm:$0xf]
        %v5448 = vld [vmem:[%s5435 + $0x30] sm:$0xf]
        %v5449 = vld [vmem:[%s5435 + $0x34] sm:$0xf]
        %v5450 = vld [vmem:[%s5435 + $0x38] sm:$0xf]
        %v5451 = vld [vmem:[%s5435 + $0x3c] sm:$0xf]
        %v5454 = vunpack.c.l.b16 %v244
        %v5455 = vunpack.c.l.b16 %v245
        %v5456 = vpack.c.b16 %v5455, %v5454
        %v5474 = vunpack.c.l.b16 %v5436
        %v5475 = vunpack.c.l.b16 %v5437
        %v5476 = vunpack.c.l.b16 %v5438
        %v5477 = vunpack.c.l.b16 %v5439
        %v5478 = vunpack.c.l.b16 %v5440
        %v5479 = vunpack.c.l.b16 %v5441
        %v5480 = vunpack.c.l.b16 %v5442
        %v5481 = vunpack.c.l.b16 %v5443
        %v5482 = vunpack.c.l.b16 %v5444
        %v5483 = vunpack.c.l.b16 %v5445
        %v5484 = vunpack.c.l.b16 %v5446
        %v5485 = vunpack.c.l.b16 %v5447
        %v5486 = vunpack.c.l.b16 %v5448
        %v5487 = vunpack.c.l.b16 %v5449
        %v5488 = vunpack.c.l.b16 %v5450
        %v5489 = vunpack.c.l.b16 %v5451
        %v5490 = vpack.c.b16 %v5475, %v5474
        %v5491 = vpack.c.b16 %v5477, %v5476
        %v5492 = vpack.c.b16 %v5479, %v5478
        %v5493 = vpack.c.b16 %v5481, %v5480
        %v5494 = vpack.c.b16 %v5483, %v5482
        %v5495 = vpack.c.b16 %v5485, %v5484
        %v5496 = vpack.c.b16 %v5487, %v5486
        %v5497 = vpack.c.b16 %v5489, %v5488
        %5506 = vmatprep.subr.bf16.mxu0 0
        %5507 = vmatpush1.bf16.msra.mxu0 %v5490
        %5508 = vmatprep.subr.bf16.mxu0 0
        %5509 = vmatpush1.bf16.msra.mxu0 %v5491
        %5510 = vmatprep.subr.bf16.mxu0 0
        %5511 = vmatpush1.bf16.msra.mxu0 %v5492
        %5512 = vmatprep.subr.bf16.mxu0 0
        %5513 = vmatpush1.bf16.msra.mxu0 %v5493
        %5514 = vmatprep.subr.bf16.mxu0 0
        %5515 = vmatpush1.bf16.msra.mxu0 %v5494
        %5516 = vmatprep.subr.bf16.mxu0 0
        %5517 = vmatpush1.bf16.msra.mxu0 %v5495
        %5518 = vmatprep.subr.bf16.mxu0 0
        %5519 = vmatpush1.bf16.msra.mxu0 %v5496
        %5520 = vmatprep.subr.bf16.mxu0 0
        %5521 = vmatpush1.bf16.msra.mxu0 %v5497
        %5522 = vmatprep.subr.bf16.mxu0 0
        %5523 = vmatpush1.bf16.msra.mxu0 0
        %5524 = vmatprep.subr.bf16.mxu0 0
        %5525 = vmatpush1.bf16.msra.mxu0 0
        %5526 = vmatprep.subr.bf16.mxu0 0
        %5527 = vmatpush1.bf16.msra.mxu0 0
        %5528 = vmatprep.subr.bf16.mxu0 0
        %5529 = vmatpush1.bf16.msra.mxu0 0
        %5530 = vmatprep.subr.bf16.mxu0 0
        %5531 = vmatpush1.bf16.msra.mxu0 0
        %5532 = vmatprep.subr.bf16.mxu0 0
        %5533 = vmatpush1.bf16.msra.mxu0 0
        %5534 = vmatprep.subr.bf16.mxu0 0
        %5535 = vmatpush1.bf16.msra.mxu0 0
        %5536 = vmatprep.subr.bf16.mxu0 0
        %5537 = vmatpush1.bf16.msra.mxu0 0
        %5538 = vmatprep.mubr.bf16.mxu0 0
        %5539 = vmatmul.mubr.bf16.gmra.mrb[0].mxu0 %v1010
        %v5540 = vpop.f32.mrb[0].mxu0
        %v5541 = vadd.f32 0.0, %v5540
        %v5542 = vpop.f32.mrb[0].mxu0
        %v5543 = vpop.f32.mrb[0].mxu0
        %v5544 = vadd.f32 0.0, %v5543
        %v5545 = vpop.f32.mrb[0].mxu0
        %5546 = vmatprep.mubr.bf16.mxu0 0
        %5547 = vmatmul.mubr.bf16.gmra.mrb[0].mxu0 %v1011
        %v5548 = vpop.f32.mrb[0].mxu0
        %v5549 = vadd.f32 0.0, %v5548
        %v5550 = vpop.f32.mrb[0].mxu0
        %v5551 = vpop.f32.mrb[0].mxu0
        %v5552 = vadd.f32 0.0, %v5551
        %v5553 = vpop.f32.mrb[0].mxu0
        %5554 = vmatprep.mubr.bf16.mxu0 0
        %5555 = vmatmul.mubr.bf16.gmra.mrb[0].mxu0 %v1012
        %v5556 = vpop.f32.mrb[0].mxu0
        %v5557 = vadd.f32 0.0, %v5556
        %v5558 = vpop.f32.mrb[0].mxu0
        %v5559 = vpop.f32.mrb[0].mxu0
        %v5560 = vadd.f32 0.0, %v5559
        %v5561 = vpop.f32.mrb[0].mxu0
        %5562 = vmatprep.mubr.bf16.mxu0 0
        %5563 = vmatmul.mubr.bf16.gmra.mrb[0].mxu0 %v1013
        %v5564 = vpop.f32.mrb[0].mxu0
        %v5565 = vadd.f32 0.0, %v5564
        %v5566 = vpop.f32.mrb[0].mxu0
        %v5567 = vpop.f32.mrb[0].mxu0
        %v5568 = vadd.f32 0.0, %v5567
        %v5569 = vpop.f32.mrb[0].mxu0
        %5570 = vmatprep.mubr.bf16.mxu0 0
        %5571 = vmatmul.mubr.bf16.gmra.mrb[0].mxu0 %v1014
        %v5572 = vpop.f32.mrb[0].mxu0
        %v5573 = vadd.f32 0.0, %v5572
        %v5574 = vpop.f32.mrb[0].mxu0
        %v5575 = vpop.f32.mrb[0].mxu0
        %v5576 = vadd.f32 0.0, %v5575
        %v5577 = vpop.f32.mrb[0].mxu0
        %5578 = vmatprep.mubr.bf16.mxu0 0
        %5579 = vmatmul.mubr.bf16.gmra.mrb[0].mxu0 %v1015
        %v5580 = vpop.f32.mrb[0].mxu0
        %v5581 = vadd.f32 0.0, %v5580
        %v5582 = vpop.f32.mrb[0].mxu0
        %v5583 = vpop.f32.mrb[0].mxu0
        %v5584 = vadd.f32 0.0, %v5583
        %v5585 = vpop.f32.mrb[0].mxu0
        %5586 = vmatprep.mubr.bf16.mxu0 0
        %5587 = vmatmul.mubr.bf16.gmra.mrb[0].mxu0 %v1016
        %v5588 = vpop.f32.mrb[0].mxu0
        %v5589 = vadd.f32 0.0, %v5588
        %v5590 = vpop.f32.mrb[0].mxu0
        %v5591 = vpop.f32.mrb[0].mxu0
        %v5592 = vadd.f32 0.0, %v5591
        %v5593 = vpop.f32.mrb[0].mxu0
        %5594 = vmatprep.mubr.bf16.mxu0 0
        %5595 = vmatmul.mubr.bf16.gmra.mrb[0].mxu0 %v1017
        %v5596 = vpop.f32.mrb[0].mxu0
        %v5597 = vadd.f32 0.0, %v5596
        %v5598 = vpop.f32.mrb[0].mxu0
        %v5599 = vpop.f32.mrb[0].mxu0
        %v5600 = vadd.f32 0.0, %v5599
        %v5601 = vpop.f32.mrb[0].mxu0
        %5602 = vmatprep.mubr.bf16.mxu0 0
        %5603 = vmatmul.mubr.bf16.gmra.mrb[0].mxu0 %v1018
        %v5604 = vpop.f32.mrb[0].mxu0
        %v5605 = vadd.f32 0.0, %v5604
        %v5606 = vpop.f32.mrb[0].mxu0
        %v5607 = vpop.f32.mrb[0].mxu0
        %v5608 = vadd.f32 0.0, %v5607
        %v5609 = vpop.f32.mrb[0].mxu0
        %5610 = vmatprep.mubr.bf16.mxu0 0
        %5611 = vmatmul.mubr.bf16.gmra.mrb[0].mxu0 %v1019
        %v5612 = vpop.f32.mrb[0].mxu0
        %v5613 = vadd.f32 0.0, %v5612
        %v5614 = vpop.f32.mrb[0].mxu0
        %v5615 = vpop.f32.mrb[0].mxu0
        %v5616 = vadd.f32 0.0, %v5615
        %v5617 = vpop.f32.mrb[0].mxu0
        %5618 = vmatprep.mubr.bf16.mxu0 0
        %5619 = vmatmul.mubr.bf16.gmra.mrb[0].mxu0 %v1020
        %v5620 = vpop.f32.mrb[0].mxu0
        %v5621 = vadd.f32 0.0, %v5620
        %v5622 = vpop.f32.mrb[0].mxu0
        %v5623 = vpop.f32.mrb[0].mxu0
        %v5624 = vadd.f32 0.0, %v5623
        %v5625 = vpop.f32.mrb[0].mxu0
        %5626 = vmatprep.mubr.bf16.mxu0 0
        %5627 = vmatmul.mubr.bf16.gmra.mrb[0].mxu0 %v1021
        %v5628 = vpop.f32.mrb[0].mxu0
        %v5629 = vadd.f32 0.0, %v5628
        %v5630 = vpop.f32.mrb[0].mxu0
        %v5631 = vpop.f32.mrb[0].mxu0
        %v5632 = vadd.f32 0.0, %v5631
        %v5633 = vpop.f32.mrb[0].mxu0
        %5634 = vmatprep.mubr.bf16.mxu0 0
        %5635 = vmatmul.mubr.bf16.gmra.mrb[0].mxu0 %v1022
        %v5636 = vpop.f32.mrb[0].mxu0
        %v5637 = vadd.f32 0.0, %v5636
        %v5638 = vpop.f32.mrb[0].mxu0
        %v5639 = vpop.f32.mrb[0].mxu0
        %v5640 = vadd.f32 0.0, %v5639
        %v5641 = vpop.f32.mrb[0].mxu0
        %5642 = vmatprep.mubr.bf16.mxu0 0
        %5643 = vmatmul.mubr.bf16.gmra.mrb[0].mxu0 %v2724
        %v5644 = vpop.f32.mrb[0].mxu0
        %v5645 = vadd.f32 0.0, %v5644
        %v5646 = vpop.f32.mrb[0].mxu0
        %v5647 = vpop.f32.mrb[0].mxu0
        %v5648 = vadd.f32 0.0, %v5647
        %v5649 = vpop.f32.mrb[0].mxu0
        %5650 = vmatprep.mubr.bf16.mxu0 0
        %5651 = vmatmul.mubr.bf16.gmra.mrb[0].mxu0 %v4090
        %v5652 = vpop.f32.mrb[0].mxu0
        %v5653 = vadd.f32 0.0, %v5652
        %v5654 = vpop.f32.mrb[0].mxu0
        %v5655 = vpop.f32.mrb[0].mxu0
        %v5656 = vadd.f32 0.0, %v5655
        %v5657 = vpop.f32.mrb[0].mxu0
        %5658 = vmatprep.mubr.bf16.mxu0 0
        %5659 = vmatmul.mubr.bf16.gmra.mrb[0].mxu0 %v5456
        %v5660 = vpop.f32.mrb[0].mxu0
        %v5661 = vadd.f32 0.0, %v5660
        %v5662 = vpop.f32.mrb[0].mxu0
        %v5663 = vpop.f32.mrb[0].mxu0
        %v5664 = vadd.f32 0.0, %v5663
        %v5665 = vpop.f32.mrb[0].mxu0
        %5666 = vdwg.mxu0
        %v5667 = vadd.f32 %v5403, %v5541
        %v5668 = vadd.f32 %v5404, %v5544
        %v5669 = vadd.f32 %v5405, %v5549
        %v5670 = vadd.f32 %v5406, %v5552
        %v5671 = vadd.f32 %v5407, %v5557
        %v5672 = vadd.f32 %v5408, %v5560
        %v5673 = vadd.f32 %v5409, %v5565
        %v5674 = vadd.f32 %v5410, %v5568
        %v5675 = vadd.f32 %v5411, %v5573
        %v5676 = vadd.f32 %v5412, %v5576
        %v5677 = vadd.f32 %v5413, %v5581
        %v5678 = vadd.f32 %v5414, %v5584
        %v5679 = vadd.f32 %v5415, %v5589
        %v5680 = vadd.f32 %v5416, %v5592
        %v5681 = vadd.f32 %v5417, %v5597
        %v5682 = vadd.f32 %v5418, %v5600
        %v5683 = vadd.f32 %v5419, %v5605
        %v5684 = vadd.f32 %v5420, %v5608
        %v5685 = vadd.f32 %v5421, %v5613
        %v5686 = vadd.f32 %v5422, %v5616
        %v5687 = vadd.f32 %v5423, %v5621
        %v5688 = vadd.f32 %v5424, %v5624
        %v5689 = vadd.f32 %v5425, %v5629
        %v5690 = vadd.f32 %v5426, %v5632
        %v5691 = vadd.f32 %v5427, %v5637
        %v5692 = vadd.f32 %v5428, %v5640
        %v5693 = vadd.f32 %v5429, %v5645
        %v5694 = vadd.f32 %v5430, %v5648
        %v5695 = vadd.f32 %v5431, %v5653
        %v5696 = vadd.f32 %v5432, %v5656
        %v5697 = vadd.f32 %v5433, %v5661
        %v5698 = vadd.f32 %v5434, %v5664
        %v5700 = vshrl.u32 %v244, 16
        %v5702 = vrot.slane %v5700, 4
        %v5703 = vshll.u32 %v244, 16
        %v5705 = vrot.slane %v5703, 5
        %v5706 = vor.u32 %v5702, %v5705
        %v5707 = vrot.slane %v5706, 4
        %v5709 = vshll.u32 %v245, 16
        %v5711 = vrot.slane %v5709, 5
        %v5712 = vsel %vm268, %v5707, %v5711
        %v5713 = vshrl.u32 %v245, 16
        %v5715 = vrot.slane %v5713, 4
        %v5716 = vor.u32 %v5715, %v5711
        %v5717 = vrot.slane %v5716, 4
        %v5719 = vshll.u32 %v246, 16
        %v5721 = vrot.slane %v5719, 5
        %v5722 = vsel %vm268, %v5717, %v5721
        %s5723 = scalar_lea.vmem %s2, 1024
        %v5724 = vld [vmem:[%s5723] sm:$0xf]
        %v5725 = vld [vmem:[%s5723 + $0x4] sm:$0xf]
        %v5726 = vld [vmem:[%s5723 + $0x8] sm:$0xf]
        %v5727 = vld [vmem:[%s5723 + $0xc] sm:$0xf]
        %v5728 = vld [vmem:[%s5723 + $0x10] sm:$0xf]
        %v5729 = vld [vmem:[%s5723 + $0x14] sm:$0xf]
        %v5730 = vld [vmem:[%s5723 + $0x18] sm:$0xf]
        %v5731 = vld [vmem:[%s5723 + $0x1c] sm:$0xf]
        %v5732 = vld [vmem:[%s5723 + $0x20] sm:$0xf]
        %v5733 = vld [vmem:[%s5723 + $0x24] sm:$0xf]
        %v5734 = vld [vmem:[%s5723 + $0x28] sm:$0xf]
        %v5735 = vld [vmem:[%s5723 + $0x2c] sm:$0xf]
        %v5736 = vld [vmem:[%s5723 + $0x30] sm:$0xf]
        %v5737 = vld [vmem:[%s5723 + $0x34] sm:$0xf]
        %v5738 = vld [vmem:[%s5723 + $0x38] sm:$0xf]
        %v5739 = vld [vmem:[%s5723 + $0x3c] sm:$0xf]
        %v5740 = vunpack.c.l.b16 %v5712
        %v5741 = vunpack.c.l.b16 %v5722
        %v5742 = vpack.c.b16 %v5741, %v5740
        %v5760 = vunpack.c.l.b16 %v5724
        %v5761 = vunpack.c.l.b16 %v5725
        %v5762 = vunpack.c.l.b16 %v5726
        %v5763 = vunpack.c.l.b16 %v5727
        %v5764 = vunpack.c.l.b16 %v5728
        %v5765 = vunpack.c.l.b16 %v5729
        %v5766 = vunpack.c.l.b16 %v5730
        %v5767 = vunpack.c.l.b16 %v5731
        %v5768 = vunpack.c.l.b16 %v5732
        %v5769 = vunpack.c.l.b16 %v5733
        %v5770 = vunpack.c.l.b16 %v5734
        %v5771 = vunpack.c.l.b16 %v5735
        %v5772 = vunpack.c.l.b16 %v5736
        %v5773 = vunpack.c.l.b16 %v5737
        %v5774 = vunpack.c.l.b16 %v5738
        %v5775 = vunpack.c.l.b16 %v5739
        %v5776 = vpack.c.b16 %v5761, %v5760
        %v5777 = vpack.c.b16 %v5763, %v5762
        %v5778 = vpack.c.b16 %v5765, %v5764
        %v5779 = vpack.c.b16 %v5767, %v5766
        %v5780 = vpack.c.b16 %v5769, %v5768
        %v5781 = vpack.c.b16 %v5771, %v5770
        %v5782 = vpack.c.b16 %v5773, %v5772
        %v5783 = vpack.c.b16 %v5775, %v5774
        %5792 = vmatprep.subr.bf16.mxu0 0
        %5793 = vmatpush1.bf16.msra.mxu0 %v5776
        %5794 = vmatprep.subr.bf16.mxu0 0
        %5795 = vmatpush1.bf16.msra.mxu0 %v5777
        %5796 = vmatprep.subr.bf16.mxu0 0
        %5797 = vmatpush1.bf16.msra.mxu0 %v5778
        %5798 = vmatprep.subr.bf16.mxu0 0
        %5799 = vmatpush1.bf16.msra.mxu0 %v5779
        %5800 = vmatprep.subr.bf16.mxu0 0
        %5801 = vmatpush1.bf16.msra.mxu0 %v5780
        %5802 = vmatprep.subr.bf16.mxu0 0
        %5803 = vmatpush1.bf16.msra.mxu0 %v5781
        %5804 = vmatprep.subr.bf16.mxu0 0
        %5805 = vmatpush1.bf16.msra.mxu0 %v5782
        %5806 = vmatprep.subr.bf16.mxu0 0
        %5807 = vmatpush1.bf16.msra.mxu0 %v5783
        %5808 = vmatprep.subr.bf16.mxu0 0
        %5809 = vmatpush1.bf16.msra.mxu0 0
        %5810 = vmatprep.subr.bf16.mxu0 0
        %5811 = vmatpush1.bf16.msra.mxu0 0
        %5812 = vmatprep.subr.bf16.mxu0 0
        %5813 = vmatpush1.bf16.msra.mxu0 0
        %5814 = vmatprep.subr.bf16.mxu0 0
        %5815 = vmatpush1.bf16.msra.mxu0 0
        %5816 = vmatprep.subr.bf16.mxu0 0
        %5817 = vmatpush1.bf16.msra.mxu0 0
        %5818 = vmatprep.subr.bf16.mxu0 0
        %5819 = vmatpush1.bf16.msra.mxu0 0
        %5820 = vmatprep.subr.bf16.mxu0 0
        %5821 = vmatpush1.bf16.msra.mxu0 0
        %5822 = vmatprep.subr.bf16.mxu0 0
        %5823 = vmatpush1.bf16.msra.mxu0 0
        %5824 = vmatprep.mubr.bf16.mxu0 0
        %5825 = vmatmul.mubr.bf16.gmra.mrb[0].mxu0 %v705
        %v5826 = vpop.f32.mrb[0].mxu0
        %v5827 = vadd.f32 0.0, %v5826
        %v5828 = vpop.f32.mrb[0].mxu0
        %v5829 = vpop.f32.mrb[0].mxu0
        %v5830 = vadd.f32 0.0, %v5829
        %v5831 = vpop.f32.mrb[0].mxu0
        %5832 = vmatprep.mubr.bf16.mxu0 0
        %5833 = vmatmul.mubr.bf16.gmra.mrb[0].mxu0 %v706
        %v5834 = vpop.f32.mrb[0].mxu0
        %v5835 = vadd.f32 0.0, %v5834
        %v5836 = vpop.f32.mrb[0].mxu0
        %v5837 = vpop.f32.mrb[0].mxu0
        %v5838 = vadd.f32 0.0, %v5837
        %v5839 = vpop.f32.mrb[0].mxu0
        %5840 = vmatprep.mubr.bf16.mxu0 0
        %5841 = vmatmul.mubr.bf16.gmra.mrb[0].mxu0 %v707
        %v5842 = vpop.f32.mrb[0].mxu0
        %v5843 = vadd.f32 0.0, %v5842
        %v5844 = vpop.f32.mrb[0].mxu0
        %v5845 = vpop.f32.mrb[0].mxu0
        %v5846 = vadd.f32 0.0, %v5845
        %v5847 = vpop.f32.mrb[0].mxu0
        %5848 = vmatprep.mubr.bf16.mxu0 0
        %5849 = vmatmul.mubr.bf16.gmra.mrb[0].mxu0 %v708
        %v5850 = vpop.f32.mrb[0].mxu0
        %v5851 = vadd.f32 0.0, %v5850
        %v5852 = vpop.f32.mrb[0].mxu0
        %v5853 = vpop.f32.mrb[0].mxu0
        %v5854 = vadd.f32 0.0, %v5853
        %v5855 = vpop.f32.mrb[0].mxu0
        %5856 = vmatprep.mubr.bf16.mxu0 0
        %5857 = vmatmul.mubr.bf16.gmra.mrb[0].mxu0 %v709
        %v5858 = vpop.f32.mrb[0].mxu0
        %v5859 = vadd.f32 0.0, %v5858
        %v5860 = vpop.f32.mrb[0].mxu0
        %v5861 = vpop.f32.mrb[0].mxu0
        %v5862 = vadd.f32 0.0, %v5861
        %v5863 = vpop.f32.mrb[0].mxu0
        %5864 = vmatprep.mubr.bf16.mxu0 0
        %5865 = vmatmul.mubr.bf16.gmra.mrb[0].mxu0 %v710
        %v5866 = vpop.f32.mrb[0].mxu0
        %v5867 = vadd.f32 0.0, %v5866
        %v5868 = vpop.f32.mrb[0].mxu0
        %v5869 = vpop.f32.mrb[0].mxu0
        %v5870 = vadd.f32 0.0, %v5869
        %v5871 = vpop.f32.mrb[0].mxu0
        %5872 = vmatprep.mubr.bf16.mxu0 0
        %5873 = vmatmul.mubr.bf16.gmra.mrb[0].mxu0 %v711
        %v5874 = vpop.f32.mrb[0].mxu0
        %v5875 = vadd.f32 0.0, %v5874
        %v5876 = vpop.f32.mrb[0].mxu0
        %v5877 = vpop.f32.mrb[0].mxu0
        %v5878 = vadd.f32 0.0, %v5877
        %v5879 = vpop.f32.mrb[0].mxu0
        %5880 = vmatprep.mubr.bf16.mxu0 0
        %5881 = vmatmul.mubr.bf16.gmra.mrb[0].mxu0 %v712
        %v5882 = vpop.f32.mrb[0].mxu0
        %v5883 = vadd.f32 0.0, %v5882
        %v5884 = vpop.f32.mrb[0].mxu0
        %v5885 = vpop.f32.mrb[0].mxu0
        %v5886 = vadd.f32 0.0, %v5885
        %v5887 = vpop.f32.mrb[0].mxu0
        %5888 = vmatprep.mubr.bf16.mxu0 0
        %5889 = vmatmul.mubr.bf16.gmra.mrb[0].mxu0 %v713
        %v5890 = vpop.f32.mrb[0].mxu0
        %v5891 = vadd.f32 0.0, %v5890
        %v5892 = vpop.f32.mrb[0].mxu0
        %v5893 = vpop.f32.mrb[0].mxu0
        %v5894 = vadd.f32 0.0, %v5893
        %v5895 = vpop.f32.mrb[0].mxu0
        %5896 = vmatprep.mubr.bf16.mxu0 0
        %5897 = vmatmul.mubr.bf16.gmra.mrb[0].mxu0 %v714
        %v5898 = vpop.f32.mrb[0].mxu0
        %v5899 = vadd.f32 0.0, %v5898
        %v5900 = vpop.f32.mrb[0].mxu0
        %v5901 = vpop.f32.mrb[0].mxu0
        %v5902 = vadd.f32 0.0, %v5901
        %v5903 = vpop.f32.mrb[0].mxu0
        %5904 = vmatprep.mubr.bf16.mxu0 0
        %5905 = vmatmul.mubr.bf16.gmra.mrb[0].mxu0 %v715
        %v5906 = vpop.f32.mrb[0].mxu0
        %v5907 = vadd.f32 0.0, %v5906
        %v5908 = vpop.f32.mrb[0].mxu0
        %v5909 = vpop.f32.mrb[0].mxu0
        %v5910 = vadd.f32 0.0, %v5909
        %v5911 = vpop.f32.mrb[0].mxu0
        %5912 = vmatprep.mubr.bf16.mxu0 0
        %5913 = vmatmul.mubr.bf16.gmra.mrb[0].mxu0 %v716
        %v5914 = vpop.f32.mrb[0].mxu0
        %v5915 = vadd.f32 0.0, %v5914
        %v5916 = vpop.f32.mrb[0].mxu0
        %v5917 = vpop.f32.mrb[0].mxu0
        %v5918 = vadd.f32 0.0, %v5917
        %v5919 = vpop.f32.mrb[0].mxu0
        %5920 = vmatprep.mubr.bf16.mxu0 0
        %5921 = vmatmul.mubr.bf16.gmra.mrb[0].mxu0 %v717
        %v5922 = vpop.f32.mrb[0].mxu0
        %v5923 = vadd.f32 0.0, %v5922
        %v5924 = vpop.f32.mrb[0].mxu0
        %v5925 = vpop.f32.mrb[0].mxu0
        %v5926 = vadd.f32 0.0, %v5925
        %v5927 = vpop.f32.mrb[0].mxu0
        %5928 = vmatprep.mubr.bf16.mxu0 0
        %5929 = vmatmul.mubr.bf16.gmra.mrb[0].mxu0 %v3010
        %v5930 = vpop.f32.mrb[0].mxu0
        %v5931 = vadd.f32 0.0, %v5930
        %v5932 = vpop.f32.mrb[0].mxu0
        %v5933 = vpop.f32.mrb[0].mxu0
        %v5934 = vadd.f32 0.0, %v5933
        %v5935 = vpop.f32.mrb[0].mxu0
        %5936 = vmatprep.mubr.bf16.mxu0 0
        %5937 = vmatmul.mubr.bf16.gmra.mrb[0].mxu0 %v4376
        %v5938 = vpop.f32.mrb[0].mxu0
        %v5939 = vadd.f32 0.0, %v5938
        %v5940 = vpop.f32.mrb[0].mxu0
        %v5941 = vpop.f32.mrb[0].mxu0
        %v5942 = vadd.f32 0.0, %v5941
        %v5943 = vpop.f32.mrb[0].mxu0
        %5944 = vmatprep.mubr.bf16.mxu0 0
        %5945 = vmatmul.mubr.bf16.gmra.mrb[0].mxu0 %v5742
        %v5946 = vpop.f32.mrb[0].mxu0
        %v5947 = vadd.f32 0.0, %v5946
        %v5948 = vpop.f32.mrb[0].mxu0
        %v5949 = vpop.f32.mrb[0].mxu0
        %v5950 = vadd.f32 0.0, %v5949
        %v5951 = vpop.f32.mrb[0].mxu0
        %5952 = vdwg.mxu0
        %v5953 = vadd.f32 %v5667, %v5827
        %v5954 = vadd.f32 %v5668, %v5830
        %v5955 = vadd.f32 %v5669, %v5835
        %v5956 = vadd.f32 %v5670, %v5838
        %v5957 = vadd.f32 %v5671, %v5843
        %v5958 = vadd.f32 %v5672, %v5846
        %v5959 = vadd.f32 %v5673, %v5851
        %v5960 = vadd.f32 %v5674, %v5854
        %v5961 = vadd.f32 %v5675, %v5859
        %v5962 = vadd.f32 %v5676, %v5862
        %v5963 = vadd.f32 %v5677, %v5867
        %v5964 = vadd.f32 %v5678, %v5870
        %v5965 = vadd.f32 %v5679, %v5875
        %v5966 = vadd.f32 %v5680, %v5878
        %v5967 = vadd.f32 %v5681, %v5883
        %v5968 = vadd.f32 %v5682, %v5886
        %v5969 = vadd.f32 %v5683, %v5891
        %v5970 = vadd.f32 %v5684, %v5894
        %v5971 = vadd.f32 %v5685, %v5899
        %v5972 = vadd.f32 %v5686, %v5902
        %v5973 = vadd.f32 %v5687, %v5907
        %v5974 = vadd.f32 %v5688, %v5910
        %v5975 = vadd.f32 %v5689, %v5915
        %v5976 = vadd.f32 %v5690, %v5918
        %v5977 = vadd.f32 %v5691, %v5923
        %v5978 = vadd.f32 %v5692, %v5926
        %v5979 = vadd.f32 %v5693, %v5931
        %v5980 = vadd.f32 %v5694, %v5934
        %v5981 = vadd.f32 %v5695, %v5939
        %v5982 = vadd.f32 %v5696, %v5942
        %v5983 = vadd.f32 %v5697, %v5947
        %v5984 = vadd.f32 %v5698, %v5950
        %v5986 = vrot.slane %v244, 5
        %v5987 = vrot.slane %v5986, 4
        %v5988 = vrot.slane %v245, 5
        %v5989 = vsel %vm1266, %v5987, %v5988
        %v5990 = vrot.slane %v5988, 4
        %v5991 = vrot.slane %v246, 5
        %v5992 = vsel %vm1266, %v5990, %v5991
        %s5993 = scalar_lea.vmem %s2, 1088
        %v5994 = vld [vmem:[%s5993] sm:$0xf]
        %v5995 = vld [vmem:[%s5993 + $0x4] sm:$0xf]
        %v5996 = vld [vmem:[%s5993 + $0x8] sm:$0xf]
        %v5997 = vld [vmem:[%s5993 + $0xc] sm:$0xf]
        %v5998 = vld [vmem:[%s5993 + $0x10] sm:$0xf]
        %v5999 = vld [vmem:[%s5993 + $0x14] sm:$0xf]
        %v6000 = vld [vmem:[%s5993 + $0x18] sm:$0xf]
        %v6001 = vld [vmem:[%s5993 + $0x1c] sm:$0xf]
        %v6002 = vld [vmem:[%s5993 + $0x20] sm:$0xf]
        %v6003 = vld [vmem:[%s5993 + $0x24] sm:$0xf]
        %v6004 = vld [vmem:[%s5993 + $0x28] sm:$0xf]
        %v6005 = vld [vmem:[%s5993 + $0x2c] sm:$0xf]
        %v6006 = vld [vmem:[%s5993 + $0x30] sm:$0xf]
        %v6007 = vld [vmem:[%s5993 + $0x34] sm:$0xf]
        %v6008 = vld [vmem:[%s5993 + $0x38] sm:$0xf]
        %v6009 = vld [vmem:[%s5993 + $0x3c] sm:$0xf]
        %v6010 = vunpack.c.l.b16 %v5989
        %v6011 = vunpack.c.l.b16 %v5992
        %v6012 = vpack.c.b16 %v6011, %v6010
        %v6030 = vunpack.c.l.b16 %v5994
        %v6031 = vunpack.c.l.b16 %v5995
        %v6032 = vunpack.c.l.b16 %v5996
        %v6033 = vunpack.c.l.b16 %v5997
        %v6034 = vunpack.c.l.b16 %v5998
        %v6035 = vunpack.c.l.b16 %v5999
        %v6036 = vunpack.c.l.b16 %v6000
        %v6037 = vunpack.c.l.b16 %v6001
        %v6038 = vunpack.c.l.b16 %v6002
        %v6039 = vunpack.c.l.b16 %v6003
        %v6040 = vunpack.c.l.b16 %v6004
        %v6041 = vunpack.c.l.b16 %v6005
        %v6042 = vunpack.c.l.b16 %v6006
        %v6043 = vunpack.c.l.b16 %v6007
        %v6044 = vunpack.c.l.b16 %v6008
        %v6045 = vunpack.c.l.b16 %v6009
        %v6046 = vpack.c.b16 %v6031, %v6030
        %v6047 = vpack.c.b16 %v6033, %v6032
        %v6048 = vpack.c.b16 %v6035, %v6034
        %v6049 = vpack.c.b16 %v6037, %v6036
        %v6050 = vpack.c.b16 %v6039, %v6038
        %v6051 = vpack.c.b16 %v6041, %v6040
        %v6052 = vpack.c.b16 %v6043, %v6042
        %v6053 = vpack.c.b16 %v6045, %v6044
        %6062 = vmatprep.subr.bf16.mxu0 0
        %6063 = vmatpush1.bf16.msra.mxu0 %v6046
        %6064 = vmatprep.subr.bf16.mxu0 0
        %6065 = vmatpush1.bf16.msra.mxu0 %v6047
        %6066 = vmatprep.subr.bf16.mxu0 0
        %6067 = vmatpush1.bf16.msra.mxu0 %v6048
        %6068 = vmatprep.subr.bf16.mxu0 0
        %6069 = vmatpush1.bf16.msra.mxu0 %v6049
        %6070 = vmatprep.subr.bf16.mxu0 0
        %6071 = vmatpush1.bf16.msra.mxu0 %v6050
        %6072 = vmatprep.subr.bf16.mxu0 0
        %6073 = vmatpush1.bf16.msra.mxu0 %v6051
        %6074 = vmatprep.subr.bf16.mxu0 0
        %6075 = vmatpush1.bf16.msra.mxu0 %v6052
        %6076 = vmatprep.subr.bf16.mxu0 0
        %6077 = vmatpush1.bf16.msra.mxu0 %v6053
        %6078 = vmatprep.subr.bf16.mxu0 0
        %6079 = vmatpush1.bf16.msra.mxu0 0
        %6080 = vmatprep.subr.bf16.mxu0 0
        %6081 = vmatpush1.bf16.msra.mxu0 0
        %6082 = vmatprep.subr.bf16.mxu0 0
        %6083 = vmatpush1.bf16.msra.mxu0 0
        %6084 = vmatprep.subr.bf16.mxu0 0
        %6085 = vmatpush1.bf16.msra.mxu0 0
        %6086 = vmatprep.subr.bf16.mxu0 0
        %6087 = vmatpush1.bf16.msra.mxu0 0
        %6088 = vmatprep.subr.bf16.mxu0 0
        %6089 = vmatpush1.bf16.msra.mxu0 0
        %6090 = vmatprep.subr.bf16.mxu0 0
        %6091 = vmatpush1.bf16.msra.mxu0 0
        %6092 = vmatprep.subr.bf16.mxu0 0
        %6093 = vmatpush1.bf16.msra.mxu0 0
        %6094 = vmatprep.mubr.bf16.mxu0 0
        %6095 = vmatmul.mubr.bf16.gmra.mrb[0].mxu0 %v1431
        %v6096 = vpop.f32.mrb[0].mxu0
        %v6097 = vadd.f32 0.0, %v6096
        %v6098 = vpop.f32.mrb[0].mxu0
        %v6099 = vpop.f32.mrb[0].mxu0
        %v6100 = vadd.f32 0.0, %v6099
        %v6101 = vpop.f32.mrb[0].mxu0
        %6102 = vmatprep.mubr.bf16.mxu0 0
        %6103 = vmatmul.mubr.bf16.gmra.mrb[0].mxu0 %v1432
        %v6104 = vpop.f32.mrb[0].mxu0
        %v6105 = vadd.f32 0.0, %v6104
        %v6106 = vpop.f32.mrb[0].mxu0
        %v6107 = vpop.f32.mrb[0].mxu0
        %v6108 = vadd.f32 0.0, %v6107
        %v6109 = vpop.f32.mrb[0].mxu0
        %6110 = vmatprep.mubr.bf16.mxu0 0
        %6111 = vmatmul.mubr.bf16.gmra.mrb[0].mxu0 %v1433
        %v6112 = vpop.f32.mrb[0].mxu0
        %v6113 = vadd.f32 0.0, %v6112
        %v6114 = vpop.f32.mrb[0].mxu0
        %v6115 = vpop.f32.mrb[0].mxu0
        %v6116 = vadd.f32 0.0, %v6115
        %v6117 = vpop.f32.mrb[0].mxu0
        %6118 = vmatprep.mubr.bf16.mxu0 0
        %6119 = vmatmul.mubr.bf16.gmra.mrb[0].mxu0 %v1434
        %v6120 = vpop.f32.mrb[0].mxu0
        %v6121 = vadd.f32 0.0, %v6120
        %v6122 = vpop.f32.mrb[0].mxu0
        %v6123 = vpop.f32.mrb[0].mxu0
        %v6124 = vadd.f32 0.0, %v6123
        %v6125 = vpop.f32.mrb[0].mxu0
        %6126 = vmatprep.mubr.bf16.mxu0 0
        %6127 = vmatmul.mubr.bf16.gmra.mrb[0].mxu0 %v1435
        %v6128 = vpop.f32.mrb[0].mxu0
        %v6129 = vadd.f32 0.0, %v6128
        %v6130 = vpop.f32.mrb[0].mxu0
        %v6131 = vpop.f32.mrb[0].mxu0
        %v6132 = vadd.f32 0.0, %v6131
        %v6133 = vpop.f32.mrb[0].mxu0
        %6134 = vmatprep.mubr.bf16.mxu0 0
        %6135 = vmatmul.mubr.bf16.gmra.mrb[0].mxu0 %v1436
        %v6136 = vpop.f32.mrb[0].mxu0
        %v6137 = vadd.f32 0.0, %v6136
        %v6138 = vpop.f32.mrb[0].mxu0
        %v6139 = vpop.f32.mrb[0].mxu0
        %v6140 = vadd.f32 0.0, %v6139
        %v6141 = vpop.f32.mrb[0].mxu0
        %6142 = vmatprep.mubr.bf16.mxu0 0
        %6143 = vmatmul.mubr.bf16.gmra.mrb[0].mxu0 %v1437
        %v6144 = vpop.f32.mrb[0].mxu0
        %v6145 = vadd.f32 0.0, %v6144
        %v6146 = vpop.f32.mrb[0].mxu0
        %v6147 = vpop.f32.mrb[0].mxu0
        %v6148 = vadd.f32 0.0, %v6147
        %v6149 = vpop.f32.mrb[0].mxu0
        %6150 = vmatprep.mubr.bf16.mxu0 0
        %6151 = vmatmul.mubr.bf16.gmra.mrb[0].mxu0 %v1438
        %v6152 = vpop.f32.mrb[0].mxu0
        %v6153 = vadd.f32 0.0, %v6152
        %v6154 = vpop.f32.mrb[0].mxu0
        %v6155 = vpop.f32.mrb[0].mxu0
        %v6156 = vadd.f32 0.0, %v6155
        %v6157 = vpop.f32.mrb[0].mxu0
        %6158 = vmatprep.mubr.bf16.mxu0 0
        %6159 = vmatmul.mubr.bf16.gmra.mrb[0].mxu0 %v1439
        %v6160 = vpop.f32.mrb[0].mxu0
        %v6161 = vadd.f32 0.0, %v6160
        %v6162 = vpop.f32.mrb[0].mxu0
        %v6163 = vpop.f32.mrb[0].mxu0
        %v6164 = vadd.f32 0.0, %v6163
        %v6165 = vpop.f32.mrb[0].mxu0
        %6166 = vmatprep.mubr.bf16.mxu0 0
        %6167 = vmatmul.mubr.bf16.gmra.mrb[0].mxu0 %v1440
        %v6168 = vpop.f32.mrb[0].mxu0
        %v6169 = vadd.f32 0.0, %v6168
        %v6170 = vpop.f32.mrb[0].mxu0
        %v6171 = vpop.f32.mrb[0].mxu0
        %v6172 = vadd.f32 0.0, %v6171
        %v6173 = vpop.f32.mrb[0].mxu0
        %6174 = vmatprep.mubr.bf16.mxu0 0
        %6175 = vmatmul.mubr.bf16.gmra.mrb[0].mxu0 %v1441
        %v6176 = vpop.f32.mrb[0].mxu0
        %v6177 = vadd.f32 0.0, %v6176
        %v6178 = vpop.f32.mrb[0].mxu0
        %v6179 = vpop.f32.mrb[0].mxu0
        %v6180 = vadd.f32 0.0, %v6179
        %v6181 = vpop.f32.mrb[0].mxu0
        %6182 = vmatprep.mubr.bf16.mxu0 0
        %6183 = vmatmul.mubr.bf16.gmra.mrb[0].mxu0 %v1442
        %v6184 = vpop.f32.mrb[0].mxu0
        %v6185 = vadd.f32 0.0, %v6184
        %v6186 = vpop.f32.mrb[0].mxu0
        %v6187 = vpop.f32.mrb[0].mxu0
        %v6188 = vadd.f32 0.0, %v6187
        %v6189 = vpop.f32.mrb[0].mxu0
        %6190 = vmatprep.mubr.bf16.mxu0 0
        %6191 = vmatmul.mubr.bf16.gmra.mrb[0].mxu0 %v1443
        %v6192 = vpop.f32.mrb[0].mxu0
        %v6193 = vadd.f32 0.0, %v6192
        %v6194 = vpop.f32.mrb[0].mxu0
        %v6195 = vpop.f32.mrb[0].mxu0
        %v6196 = vadd.f32 0.0, %v6195
        %v6197 = vpop.f32.mrb[0].mxu0
        %6198 = vmatprep.mubr.bf16.mxu0 0
        %6199 = vmatmul.mubr.bf16.gmra.mrb[0].mxu0 %v3280
        %v6200 = vpop.f32.mrb[0].mxu0
        %v6201 = vadd.f32 0.0, %v6200
        %v6202 = vpop.f32.mrb[0].mxu0
        %v6203 = vpop.f32.mrb[0].mxu0
        %v6204 = vadd.f32 0.0, %v6203
        %v6205 = vpop.f32.mrb[0].mxu0
        %6206 = vmatprep.mubr.bf16.mxu0 0
        %6207 = vmatmul.mubr.bf16.gmra.mrb[0].mxu0 %v4646
        %v6208 = vpop.f32.mrb[0].mxu0
        %v6209 = vadd.f32 0.0, %v6208
        %v6210 = vpop.f32.mrb[0].mxu0
        %v6211 = vpop.f32.mrb[0].mxu0
        %v6212 = vadd.f32 0.0, %v6211
        %v6213 = vpop.f32.mrb[0].mxu0
        %6214 = vmatprep.mubr.bf16.mxu0 0
        %6215 = vmatmul.mubr.bf16.gmra.mrb[0].mxu0 %v6012
        %v6216 = vpop.f32.mrb[0].mxu0
        %v6217 = vadd.f32 0.0, %v6216
        %v6218 = vpop.f32.mrb[0].mxu0
        %v6219 = vpop.f32.mrb[0].mxu0
        %v6220 = vadd.f32 0.0, %v6219
        %v6221 = vpop.f32.mrb[0].mxu0
        %6222 = vdwg.mxu0
        %v6223 = vadd.f32 %v5953, %v6097
        %v6224 = vadd.f32 %v5954, %v6100
        %v6225 = vadd.f32 %v5955, %v6105
        %v6226 = vadd.f32 %v5956, %v6108
        %v6227 = vadd.f32 %v5957, %v6113
        %v6228 = vadd.f32 %v5958, %v6116
        %v6229 = vadd.f32 %v5959, %v6121
        %v6230 = vadd.f32 %v5960, %v6124
        %v6231 = vadd.f32 %v5961, %v6129
        %v6232 = vadd.f32 %v5962, %v6132
        %v6233 = vadd.f32 %v5963, %v6137
        %v6234 = vadd.f32 %v5964, %v6140
        %v6235 = vadd.f32 %v5965, %v6145
        %v6236 = vadd.f32 %v5966, %v6148
        %v6237 = vadd.f32 %v5967, %v6153
        %v6238 = vadd.f32 %v5968, %v6156
        %v6239 = vadd.f32 %v5969, %v6161
        %v6240 = vadd.f32 %v5970, %v6164
        %v6241 = vadd.f32 %v5971, %v6169
        %v6242 = vadd.f32 %v5972, %v6172
        %v6243 = vadd.f32 %v5973, %v6177
        %v6244 = vadd.f32 %v5974, %v6180
        %v6245 = vadd.f32 %v5975, %v6185
        %v6246 = vadd.f32 %v5976, %v6188
        %v6247 = vadd.f32 %v5977, %v6193
        %v6248 = vadd.f32 %v5978, %v6196
        %v6249 = vadd.f32 %v5979, %v6201
        %v6250 = vadd.f32 %v5980, %v6204
        %v6251 = vadd.f32 %v5981, %v6209
        %v6252 = vadd.f32 %v5982, %v6212
        %v6253 = vadd.f32 %v5983, %v6217
        %v6254 = vadd.f32 %v5984, %v6220
        %v6255 = vrot.slane %v5700, 5
        %v6256 = vrot.slane %v5703, 6
        %v6257 = vor.u32 %v6255, %v6256
        %v6258 = vrot.slane %v6257, 4
        %v6259 = vrot.slane %v5713, 5
        %v6260 = vrot.slane %v5709, 6
        %v6261 = vor.u32 %v6259, %v6260
        %v6262 = vsel %vm1703, %v6258, %v6261
        %v6263 = vrot.slane %v6261, 4
        %v6264 = vshrl.u32 %v246, 16
        %v6266 = vrot.slane %v6264, 5
        %v6267 = vrot.slane %v5719, 6
        %v6268 = vor.u32 %v6266, %v6267
        %v6269 = vsel %vm1703, %v6263, %v6268
        %s6270 = scalar_lea.vmem %s2, 1152
        %v6271 = vld [vmem:[%s6270] sm:$0xf]
        %v6272 = vld [vmem:[%s6270 + $0x4] sm:$0xf]
        %v6273 = vld [vmem:[%s6270 + $0x8] sm:$0xf]
        %v6274 = vld [vmem:[%s6270 + $0xc] sm:$0xf]
        %v6275 = vld [vmem:[%s6270 + $0x10] sm:$0xf]
        %v6276 = vld [vmem:[%s6270 + $0x14] sm:$0xf]
        %v6277 = vld [vmem:[%s6270 + $0x18] sm:$0xf]
        %v6278 = vld [vmem:[%s6270 + $0x1c] sm:$0xf]
        %v6279 = vld [vmem:[%s6270 + $0x20] sm:$0xf]
        %v6280 = vld [vmem:[%s6270 + $0x24] sm:$0xf]
        %v6281 = vld [vmem:[%s6270 + $0x28] sm:$0xf]
        %v6282 = vld [vmem:[%s6270 + $0x2c] sm:$0xf]
        %v6283 = vld [vmem:[%s6270 + $0x30] sm:$0xf]
        %v6284 = vld [vmem:[%s6270 + $0x34] sm:$0xf]
        %v6285 = vld [vmem:[%s6270 + $0x38] sm:$0xf]
        %v6286 = vld [vmem:[%s6270 + $0x3c] sm:$0xf]
        %v6287 = vunpack.c.l.b16 %v6262
        %v6288 = vunpack.c.l.b16 %v6269
        %v6289 = vpack.c.b16 %v6288, %v6287
        %v6307 = vunpack.c.l.b16 %v6271
        %v6308 = vunpack.c.l.b16 %v6272
        %v6309 = vunpack.c.l.b16 %v6273
        %v6310 = vunpack.c.l.b16 %v6274
        %v6311 = vunpack.c.l.b16 %v6275
        %v6312 = vunpack.c.l.b16 %v6276
        %v6313 = vunpack.c.l.b16 %v6277
        %v6314 = vunpack.c.l.b16 %v6278
        %v6315 = vunpack.c.l.b16 %v6279
        %v6316 = vunpack.c.l.b16 %v6280
        %v6317 = vunpack.c.l.b16 %v6281
        %v6318 = vunpack.c.l.b16 %v6282
        %v6319 = vunpack.c.l.b16 %v6283
        %v6320 = vunpack.c.l.b16 %v6284
        %v6321 = vunpack.c.l.b16 %v6285
        %v6322 = vunpack.c.l.b16 %v6286
        %v6323 = vpack.c.b16 %v6308, %v6307
        %v6324 = vpack.c.b16 %v6310, %v6309
        %v6325 = vpack.c.b16 %v6312, %v6311
        %v6326 = vpack.c.b16 %v6314, %v6313
        %v6327 = vpack.c.b16 %v6316, %v6315
        %v6328 = vpack.c.b16 %v6318, %v6317
        %v6329 = vpack.c.b16 %v6320, %v6319
        %v6330 = vpack.c.b16 %v6322, %v6321
        %6339 = vmatprep.subr.bf16.mxu0 0
        %6340 = vmatpush1.bf16.msra.mxu0 %v6323
        %6341 = vmatprep.subr.bf16.mxu0 0
        %6342 = vmatpush1.bf16.msra.mxu0 %v6324
        %6343 = vmatprep.subr.bf16.mxu0 0
        %6344 = vmatpush1.bf16.msra.mxu0 %v6325
        %6345 = vmatprep.subr.bf16.mxu0 0
        %6346 = vmatpush1.bf16.msra.mxu0 %v6326
        %6347 = vmatprep.subr.bf16.mxu0 0
        %6348 = vmatpush1.bf16.msra.mxu0 %v6327
        %6349 = vmatprep.subr.bf16.mxu0 0
        %6350 = vmatpush1.bf16.msra.mxu0 %v6328
        %6351 = vmatprep.subr.bf16.mxu0 0
        %6352 = vmatpush1.bf16.msra.mxu0 %v6329
        %6353 = vmatprep.subr.bf16.mxu0 0
        %6354 = vmatpush1.bf16.msra.mxu0 %v6330
        %6355 = vmatprep.subr.bf16.mxu0 0
        %6356 = vmatpush1.bf16.msra.mxu0 0
        %6357 = vmatprep.subr.bf16.mxu0 0
        %6358 = vmatpush1.bf16.msra.mxu0 0
        %6359 = vmatprep.subr.bf16.mxu0 0
        %6360 = vmatpush1.bf16.msra.mxu0 0
        %6361 = vmatprep.subr.bf16.mxu0 0
        %6362 = vmatpush1.bf16.msra.mxu0 0
        %6363 = vmatprep.subr.bf16.mxu0 0
        %6364 = vmatpush1.bf16.msra.mxu0 0
        %6365 = vmatprep.subr.bf16.mxu0 0
        %6366 = vmatpush1.bf16.msra.mxu0 0
        %6367 = vmatprep.subr.bf16.mxu0 0
        %6368 = vmatpush1.bf16.msra.mxu0 0
        %6369 = vmatprep.subr.bf16.mxu0 0
        %6370 = vmatpush1.bf16.msra.mxu0 0
        %6371 = vmatprep.mubr.bf16.mxu0 0
        %6372 = vmatmul.mubr.bf16.gmra.mrb[0].mxu0 %v1996
        %v6373 = vpop.f32.mrb[0].mxu0
        %v6374 = vadd.f32 0.0, %v6373
        %v6375 = vpop.f32.mrb[0].mxu0
        %v6376 = vpop.f32.mrb[0].mxu0
        %v6377 = vadd.f32 0.0, %v6376
        %v6378 = vpop.f32.mrb[0].mxu0
        %6379 = vmatprep.mubr.bf16.mxu0 0
        %6380 = vmatmul.mubr.bf16.gmra.mrb[0].mxu0 %v1997
        %v6381 = vpop.f32.mrb[0].mxu0
        %v6382 = vadd.f32 0.0, %v6381
        %v6383 = vpop.f32.mrb[0].mxu0
        %v6384 = vpop.f32.mrb[0].mxu0
        %v6385 = vadd.f32 0.0, %v6384
        %v6386 = vpop.f32.mrb[0].mxu0
        %6387 = vmatprep.mubr.bf16.mxu0 0
        %6388 = vmatmul.mubr.bf16.gmra.mrb[0].mxu0 %v1998
        %v6389 = vpop.f32.mrb[0].mxu0
        %v6390 = vadd.f32 0.0, %v6389
        %v6391 = vpop.f32.mrb[0].mxu0
        %v6392 = vpop.f32.mrb[0].mxu0
        %v6393 = vadd.f32 0.0, %v6392
        %v6394 = vpop.f32.mrb[0].mxu0
        %6395 = vmatprep.mubr.bf16.mxu0 0
        %6396 = vmatmul.mubr.bf16.gmra.mrb[0].mxu0 %v1999
        %v6397 = vpop.f32.mrb[0].mxu0
        %v6398 = vadd.f32 0.0, %v6397
        %v6399 = vpop.f32.mrb[0].mxu0
        %v6400 = vpop.f32.mrb[0].mxu0
        %v6401 = vadd.f32 0.0, %v6400
        %v6402 = vpop.f32.mrb[0].mxu0
        %6403 = vmatprep.mubr.bf16.mxu0 0
        %6404 = vmatmul.mubr.bf16.gmra.mrb[0].mxu0 %v2000
        %v6405 = vpop.f32.mrb[0].mxu0
        %v6406 = vadd.f32 0.0, %v6405
        %v6407 = vpop.f32.mrb[0].mxu0
        %v6408 = vpop.f32.mrb[0].mxu0
        %v6409 = vadd.f32 0.0, %v6408
        %v6410 = vpop.f32.mrb[0].mxu0
        %6411 = vmatprep.mubr.bf16.mxu0 0
        %6412 = vmatmul.mubr.bf16.gmra.mrb[0].mxu0 %v2001
        %v6413 = vpop.f32.mrb[0].mxu0
        %v6414 = vadd.f32 0.0, %v6413
        %v6415 = vpop.f32.mrb[0].mxu0
        %v6416 = vpop.f32.mrb[0].mxu0
        %v6417 = vadd.f32 0.0, %v6416
        %v6418 = vpop.f32.mrb[0].mxu0
        %6419 = vmatprep.mubr.bf16.mxu0 0
        %6420 = vmatmul.mubr.bf16.gmra.mrb[0].mxu0 %v2002
        %v6421 = vpop.f32.mrb[0].mxu0
        %v6422 = vadd.f32 0.0, %v6421
        %v6423 = vpop.f32.mrb[0].mxu0
        %v6424 = vpop.f32.mrb[0].mxu0
        %v6425 = vadd.f32 0.0, %v6424
        %v6426 = vpop.f32.mrb[0].mxu0
        %6427 = vmatprep.mubr.bf16.mxu0 0
        %6428 = vmatmul.mubr.bf16.gmra.mrb[0].mxu0 %v2003
        %v6429 = vpop.f32.mrb[0].mxu0
        %v6430 = vadd.f32 0.0, %v6429
        %v6431 = vpop.f32.mrb[0].mxu0
        %v6432 = vpop.f32.mrb[0].mxu0
        %v6433 = vadd.f32 0.0, %v6432
        %v6434 = vpop.f32.mrb[0].mxu0
        %6435 = vmatprep.mubr.bf16.mxu0 0
        %6436 = vmatmul.mubr.bf16.gmra.mrb[0].mxu0 %v2004
        %v6437 = vpop.f32.mrb[0].mxu0
        %v6438 = vadd.f32 0.0, %v6437
        %v6439 = vpop.f32.mrb[0].mxu0
        %v6440 = vpop.f32.mrb[0].mxu0
        %v6441 = vadd.f32 0.0, %v6440
        %v6442 = vpop.f32.mrb[0].mxu0
        %6443 = vmatprep.mubr.bf16.mxu0 0
        %6444 = vmatmul.mubr.bf16.gmra.mrb[0].mxu0 %v2005
        %v6445 = vpop.f32.mrb[0].mxu0
        %v6446 = vadd.f32 0.0, %v6445
        %v6447 = vpop.f32.mrb[0].mxu0
        %v6448 = vpop.f32.mrb[0].mxu0
        %v6449 = vadd.f32 0.0, %v6448
        %v6450 = vpop.f32.mrb[0].mxu0
        %6451 = vmatprep.mubr.bf16.mxu0 0
        %6452 = vmatmul.mubr.bf16.gmra.mrb[0].mxu0 %v2006
        %v6453 = vpop.f32.mrb[0].mxu0
        %v6454 = vadd.f32 0.0, %v6453
        %v6455 = vpop.f32.mrb[0].mxu0
        %v6456 = vpop.f32.mrb[0].mxu0
        %v6457 = vadd.f32 0.0, %v6456
        %v6458 = vpop.f32.mrb[0].mxu0
        %6459 = vmatprep.mubr.bf16.mxu0 0
        %6460 = vmatmul.mubr.bf16.gmra.mrb[0].mxu0 %v2007
        %v6461 = vpop.f32.mrb[0].mxu0
        %v6462 = vadd.f32 0.0, %v6461
        %v6463 = vpop.f32.mrb[0].mxu0
        %v6464 = vpop.f32.mrb[0].mxu0
        %v6465 = vadd.f32 0.0, %v6464
        %v6466 = vpop.f32.mrb[0].mxu0
        %6467 = vmatprep.mubr.bf16.mxu0 0
        %6468 = vmatmul.mubr.bf16.gmra.mrb[0].mxu0 %v2008
        %v6469 = vpop.f32.mrb[0].mxu0
        %v6470 = vadd.f32 0.0, %v6469
        %v6471 = vpop.f32.mrb[0].mxu0
        %v6472 = vpop.f32.mrb[0].mxu0
        %v6473 = vadd.f32 0.0, %v6472
        %v6474 = vpop.f32.mrb[0].mxu0
        %6475 = vmatprep.mubr.bf16.mxu0 0
        %6476 = vmatmul.mubr.bf16.gmra.mrb[0].mxu0 %v3557
        %v6477 = vpop.f32.mrb[0].mxu0
        %v6478 = vadd.f32 0.0, %v6477
        %v6479 = vpop.f32.mrb[0].mxu0
        %v6480 = vpop.f32.mrb[0].mxu0
        %v6481 = vadd.f32 0.0, %v6480
        %v6482 = vpop.f32.mrb[0].mxu0
        %6483 = vmatprep.mubr.bf16.mxu0 0
        %6484 = vmatmul.mubr.bf16.gmra.mrb[0].mxu0 %v4923
        %v6485 = vpop.f32.mrb[0].mxu0
        %v6486 = vadd.f32 0.0, %v6485
        %v6487 = vpop.f32.mrb[0].mxu0
        %v6488 = vpop.f32.mrb[0].mxu0
        %v6489 = vadd.f32 0.0, %v6488
        %v6490 = vpop.f32.mrb[0].mxu0
        %6491 = vmatprep.mubr.bf16.mxu0 0
        %6492 = vmatmul.mubr.bf16.gmra.mrb[0].mxu0 %v6289
        %v6493 = vpop.f32.mrb[0].mxu0
        %v6494 = vadd.f32 0.0, %v6493
        %v6495 = vpop.f32.mrb[0].mxu0
        %v6496 = vpop.f32.mrb[0].mxu0
        %v6497 = vadd.f32 0.0, %v6496
        %v6498 = vpop.f32.mrb[0].mxu0
        %6499 = vdwg.mxu0
        %v6500 = vadd.f32 %v6223, %v6374
        %v6501 = vadd.f32 %v6224, %v6377
        %v6502 = vadd.f32 %v6225, %v6382
        %v6503 = vadd.f32 %v6226, %v6385
        %v6504 = vadd.f32 %v6227, %v6390
        %v6505 = vadd.f32 %v6228, %v6393
        %v6506 = vadd.f32 %v6229, %v6398
        %v6507 = vadd.f32 %v6230, %v6401
        %v6508 = vadd.f32 %v6231, %v6406
        %v6509 = vadd.f32 %v6232, %v6409
        %v6510 = vadd.f32 %v6233, %v6414
        %v6511 = vadd.f32 %v6234, %v6417
        %v6512 = vadd.f32 %v6235, %v6422
        %v6513 = vadd.f32 %v6236, %v6425
        %v6514 = vadd.f32 %v6237, %v6430
        %v6515 = vadd.f32 %v6238, %v6433
        %v6516 = vadd.f32 %v6239, %v6438
        %v6517 = vadd.f32 %v6240, %v6441
        %v6518 = vadd.f32 %v6241, %v6446
        %v6519 = vadd.f32 %v6242, %v6449
        %v6520 = vadd.f32 %v6243, %v6454
        %v6521 = vadd.f32 %v6244, %v6457
        %v6522 = vadd.f32 %v6245, %v6462
        %v6523 = vadd.f32 %v6246, %v6465
        %v6524 = vadd.f32 %v6247, %v6470
        %v6525 = vadd.f32 %v6248, %v6473
        %v6526 = vadd.f32 %v6249, %v6478
        %v6527 = vadd.f32 %v6250, %v6481
        %v6528 = vadd.f32 %v6251, %v6486
        %v6529 = vadd.f32 %v6252, %v6489
        %v6530 = vadd.f32 %v6253, %v6494
        %v6531 = vadd.f32 %v6254, %v6497
        %v6532 = vrot.slane %v244, 6
        %v6533 = vrot.slane %v6532, 4
        %v6534 = vrot.slane %v245, 6
        %v6535 = vsel %vm2268, %v6533, %v6534
        %v6536 = vrot.slane %v6534, 4
        %v6537 = vrot.slane %v246, 6
        %v6538 = vsel %vm2268, %v6536, %v6537
        %s6539 = scalar_lea.vmem %s2, 1216
        %v6540 = vld [vmem:[%s6539] sm:$0xf]
        %v6541 = vld [vmem:[%s6539 + $0x4] sm:$0xf]
        %v6542 = vld [vmem:[%s6539 + $0x8] sm:$0xf]
        %v6543 = vld [vmem:[%s6539 + $0xc] sm:$0xf]
        %v6544 = vld [vmem:[%s6539 + $0x10] sm:$0xf]
        %v6545 = vld [vmem:[%s6539 + $0x14] sm:$0xf]
        %v6546 = vld [vmem:[%s6539 + $0x18] sm:$0xf]
        %v6547 = vld [vmem:[%s6539 + $0x1c] sm:$0xf]
        %v6548 = vld [vmem:[%s6539 + $0x20] sm:$0xf]
        %v6549 = vld [vmem:[%s6539 + $0x24] sm:$0xf]
        %v6550 = vld [vmem:[%s6539 + $0x28] sm:$0xf]
        %v6551 = vld [vmem:[%s6539 + $0x2c] sm:$0xf]
        %v6552 = vld [vmem:[%s6539 + $0x30] sm:$0xf]
        %v6553 = vld [vmem:[%s6539 + $0x34] sm:$0xf]
        %v6554 = vld [vmem:[%s6539 + $0x38] sm:$0xf]
        %v6555 = vld [vmem:[%s6539 + $0x3c] sm:$0xf]
        %v6556 = vunpack.c.l.b16 %v6535
        %v6557 = vunpack.c.l.b16 %v6538
        %v6558 = vpack.c.b16 %v6557, %v6556
        %v6576 = vunpack.c.l.b16 %v6540
        %v6577 = vunpack.c.l.b16 %v6541
        %v6578 = vunpack.c.l.b16 %v6542
        %v6579 = vunpack.c.l.b16 %v6543
        %v6580 = vunpack.c.l.b16 %v6544
        %v6581 = vunpack.c.l.b16 %v6545
        %v6582 = vunpack.c.l.b16 %v6546
        %v6583 = vunpack.c.l.b16 %v6547
        %v6584 = vunpack.c.l.b16 %v6548
        %v6585 = vunpack.c.l.b16 %v6549
        %v6586 = vunpack.c.l.b16 %v6550
        %v6587 = vunpack.c.l.b16 %v6551
        %v6588 = vunpack.c.l.b16 %v6552
        %v6589 = vunpack.c.l.b16 %v6553
        %v6590 = vunpack.c.l.b16 %v6554
        %v6591 = vunpack.c.l.b16 %v6555
        %v6592 = vpack.c.b16 %v6577, %v6576
        %v6593 = vpack.c.b16 %v6579, %v6578
        %v6594 = vpack.c.b16 %v6581, %v6580
        %v6595 = vpack.c.b16 %v6583, %v6582
        %v6596 = vpack.c.b16 %v6585, %v6584
        %v6597 = vpack.c.b16 %v6587, %v6586
        %v6598 = vpack.c.b16 %v6589, %v6588
        %v6599 = vpack.c.b16 %v6591, %v6590
        %6608 = vmatprep.subr.bf16.mxu0 0
        %6609 = vmatpush1.bf16.msra.mxu0 %v6592
        %6610 = vmatprep.subr.bf16.mxu0 0
        %6611 = vmatpush1.bf16.msra.mxu0 %v6593
        %6612 = vmatprep.subr.bf16.mxu0 0
        %6613 = vmatpush1.bf16.msra.mxu0 %v6594
        %6614 = vmatprep.subr.bf16.mxu0 0
        %6615 = vmatpush1.bf16.msra.mxu0 %v6595
        %6616 = vmatprep.subr.bf16.mxu0 0
        %6617 = vmatpush1.bf16.msra.mxu0 %v6596
        %6618 = vmatprep.subr.bf16.mxu0 0
        %6619 = vmatpush1.bf16.msra.mxu0 %v6597
        %6620 = vmatprep.subr.bf16.mxu0 0
        %6621 = vmatpush1.bf16.msra.mxu0 %v6598
        %6622 = vmatprep.subr.bf16.mxu0 0
        %6623 = vmatpush1.bf16.msra.mxu0 %v6599
        %6624 = vmatprep.subr.bf16.mxu0 0
        %6625 = vmatpush1.bf16.msra.mxu0 0
        %6626 = vmatprep.subr.bf16.mxu0 0
        %6627 = vmatpush1.bf16.msra.mxu0 0
        %6628 = vmatprep.subr.bf16.mxu0 0
        %6629 = vmatpush1.bf16.msra.mxu0 0
        %6630 = vmatprep.subr.bf16.mxu0 0
        %6631 = vmatpush1.bf16.msra.mxu0 0
        %6632 = vmatprep.subr.bf16.mxu0 0
        %6633 = vmatpush1.bf16.msra.mxu0 0
        %6634 = vmatprep.subr.bf16.mxu0 0
        %6635 = vmatpush1.bf16.msra.mxu0 0
        %6636 = vmatprep.subr.bf16.mxu0 0
        %6637 = vmatpush1.bf16.msra.mxu0 0
        %6638 = vmatprep.subr.bf16.mxu0 0
        %6639 = vmatpush1.bf16.msra.mxu0 0
        %6640 = vmatprep.mubr.bf16.mxu0 0
        %6641 = vmatmul.mubr.bf16.gmra.mrb[0].mxu0 %v2433
        %v6642 = vpop.f32.mrb[0].mxu0
        %v6643 = vadd.f32 0.0, %v6642
        %v6644 = vpop.f32.mrb[0].mxu0
        %v6645 = vpop.f32.mrb[0].mxu0
        %v6646 = vadd.f32 0.0, %v6645
        %v6647 = vpop.f32.mrb[0].mxu0
        %6648 = vmatprep.mubr.bf16.mxu0 0
        %6649 = vmatmul.mubr.bf16.gmra.mrb[0].mxu0 %v2434
        %v6650 = vpop.f32.mrb[0].mxu0
        %v6651 = vadd.f32 0.0, %v6650
        %v6652 = vpop.f32.mrb[0].mxu0
        %v6653 = vpop.f32.mrb[0].mxu0
        %v6654 = vadd.f32 0.0, %v6653
        %v6655 = vpop.f32.mrb[0].mxu0
        %6656 = vmatprep.mubr.bf16.mxu0 0
        %6657 = vmatmul.mubr.bf16.gmra.mrb[0].mxu0 %v2435
        %v6658 = vpop.f32.mrb[0].mxu0
        %v6659 = vadd.f32 0.0, %v6658
        %v6660 = vpop.f32.mrb[0].mxu0
        %v6661 = vpop.f32.mrb[0].mxu0
        %v6662 = vadd.f32 0.0, %v6661
        %v6663 = vpop.f32.mrb[0].mxu0
        %6664 = vmatprep.mubr.bf16.mxu0 0
        %6665 = vmatmul.mubr.bf16.gmra.mrb[0].mxu0 %v2436
        %v6666 = vpop.f32.mrb[0].mxu0
        %v6667 = vadd.f32 0.0, %v6666
        %v6668 = vpop.f32.mrb[0].mxu0
        %v6669 = vpop.f32.mrb[0].mxu0
        %v6670 = vadd.f32 0.0, %v6669
        %v6671 = vpop.f32.mrb[0].mxu0
        %6672 = vmatprep.mubr.bf16.mxu0 0
        %6673 = vmatmul.mubr.bf16.gmra.mrb[0].mxu0 %v2437
        %v6674 = vpop.f32.mrb[0].mxu0
        %v6675 = vadd.f32 0.0, %v6674
        %v6676 = vpop.f32.mrb[0].mxu0
        %v6677 = vpop.f32.mrb[0].mxu0
        %v6678 = vadd.f32 0.0, %v6677
        %v6679 = vpop.f32.mrb[0].mxu0
        %6680 = vmatprep.mubr.bf16.mxu0 0
        %6681 = vmatmul.mubr.bf16.gmra.mrb[0].mxu0 %v2438
        %v6682 = vpop.f32.mrb[0].mxu0
        %v6683 = vadd.f32 0.0, %v6682
        %v6684 = vpop.f32.mrb[0].mxu0
        %v6685 = vpop.f32.mrb[0].mxu0
        %v6686 = vadd.f32 0.0, %v6685
        %v6687 = vpop.f32.mrb[0].mxu0
        %6688 = vmatprep.mubr.bf16.mxu0 0
        %6689 = vmatmul.mubr.bf16.gmra.mrb[0].mxu0 %v2439
        %v6690 = vpop.f32.mrb[0].mxu0
        %v6691 = vadd.f32 0.0, %v6690
        %v6692 = vpop.f32.mrb[0].mxu0
        %v6693 = vpop.f32.mrb[0].mxu0
        %v6694 = vadd.f32 0.0, %v6693
        %v6695 = vpop.f32.mrb[0].mxu0
        %6696 = vmatprep.mubr.bf16.mxu0 0
        %6697 = vmatmul.mubr.bf16.gmra.mrb[0].mxu0 %v2440
        %v6698 = vpop.f32.mrb[0].mxu0
        %v6699 = vadd.f32 0.0, %v6698
        %v6700 = vpop.f32.mrb[0].mxu0
        %v6701 = vpop.f32.mrb[0].mxu0
        %v6702 = vadd.f32 0.0, %v6701
        %v6703 = vpop.f32.mrb[0].mxu0
        %6704 = vmatprep.mubr.bf16.mxu0 0
        %6705 = vmatmul.mubr.bf16.gmra.mrb[0].mxu0 %v2441
        %v6706 = vpop.f32.mrb[0].mxu0
        %v6707 = vadd.f32 0.0, %v6706
        %v6708 = vpop.f32.mrb[0].mxu0
        %v6709 = vpop.f32.mrb[0].mxu0
        %v6710 = vadd.f32 0.0, %v6709
        %v6711 = vpop.f32.mrb[0].mxu0
        %6712 = vmatprep.mubr.bf16.mxu0 0
        %6713 = vmatmul.mubr.bf16.gmra.mrb[0].mxu0 %v2442
        %v6714 = vpop.f32.mrb[0].mxu0
        %v6715 = vadd.f32 0.0, %v6714
        %v6716 = vpop.f32.mrb[0].mxu0
        %v6717 = vpop.f32.mrb[0].mxu0
        %v6718 = vadd.f32 0.0, %v6717
        %v6719 = vpop.f32.mrb[0].mxu0
        %6720 = vmatprep.mubr.bf16.mxu0 0
        %6721 = vmatmul.mubr.bf16.gmra.mrb[0].mxu0 %v2443
        %v6722 = vpop.f32.mrb[0].mxu0
        %v6723 = vadd.f32 0.0, %v6722
        %v6724 = vpop.f32.mrb[0].mxu0
        %v6725 = vpop.f32.mrb[0].mxu0
        %v6726 = vadd.f32 0.0, %v6725
        %v6727 = vpop.f32.mrb[0].mxu0
        %6728 = vmatprep.mubr.bf16.mxu0 0
        %6729 = vmatmul.mubr.bf16.gmra.mrb[0].mxu0 %v2444
        %v6730 = vpop.f32.mrb[0].mxu0
        %v6731 = vadd.f32 0.0, %v6730
        %v6732 = vpop.f32.mrb[0].mxu0
        %v6733 = vpop.f32.mrb[0].mxu0
        %v6734 = vadd.f32 0.0, %v6733
        %v6735 = vpop.f32.mrb[0].mxu0
        %6736 = vmatprep.mubr.bf16.mxu0 0
        %6737 = vmatmul.mubr.bf16.gmra.mrb[0].mxu0 %v2445
        %v6738 = vpop.f32.mrb[0].mxu0
        %v6739 = vadd.f32 0.0, %v6738
        %v6740 = vpop.f32.mrb[0].mxu0
        %v6741 = vpop.f32.mrb[0].mxu0
        %v6742 = vadd.f32 0.0, %v6741
        %v6743 = vpop.f32.mrb[0].mxu0
        %6744 = vmatprep.mubr.bf16.mxu0 0
        %6745 = vmatmul.mubr.bf16.gmra.mrb[0].mxu0 %v3826
        %v6746 = vpop.f32.mrb[0].mxu0
        %v6747 = vadd.f32 0.0, %v6746
        %v6748 = vpop.f32.mrb[0].mxu0
        %v6749 = vpop.f32.mrb[0].mxu0
        %v6750 = vadd.f32 0.0, %v6749
        %v6751 = vpop.f32.mrb[0].mxu0
        %6752 = vmatprep.mubr.bf16.mxu0 0
        %6753 = vmatmul.mubr.bf16.gmra.mrb[0].mxu0 %v5192
        %v6754 = vpop.f32.mrb[0].mxu0
        %v6755 = vadd.f32 0.0, %v6754
        %v6756 = vpop.f32.mrb[0].mxu0
        %v6757 = vpop.f32.mrb[0].mxu0
        %v6758 = vadd.f32 0.0, %v6757
        %v6759 = vpop.f32.mrb[0].mxu0
        %6760 = vmatprep.mubr.bf16.mxu0 0
        %6761 = vmatmul.mubr.bf16.gmra.mrb[0].mxu0 %v6558
        %v6762 = vpop.f32.mrb[0].mxu0
        %v6763 = vadd.f32 0.0, %v6762
        %v6764 = vpop.f32.mrb[0].mxu0
        %v6765 = vpop.f32.mrb[0].mxu0
        %v6766 = vadd.f32 0.0, %v6765
        %v6767 = vpop.f32.mrb[0].mxu0
        %6768 = vdwg.mxu0
        %v6769 = vadd.f32 %v6500, %v6643
        %v6770 = vadd.f32 %v6501, %v6646
        %v6771 = vadd.f32 %v6502, %v6651
        %v6772 = vadd.f32 %v6503, %v6654
        %v6773 = vadd.f32 %v6504, %v6659
        %v6774 = vadd.f32 %v6505, %v6662
        %v6775 = vadd.f32 %v6506, %v6667
        %v6776 = vadd.f32 %v6507, %v6670
        %v6777 = vadd.f32 %v6508, %v6675
        %v6778 = vadd.f32 %v6509, %v6678
        %v6779 = vadd.f32 %v6510, %v6683
        %v6780 = vadd.f32 %v6511, %v6686
        %v6781 = vadd.f32 %v6512, %v6691
        %v6782 = vadd.f32 %v6513, %v6694
        %v6783 = vadd.f32 %v6514, %v6699
        %v6784 = vadd.f32 %v6515, %v6702
        %v6785 = vadd.f32 %v6516, %v6707
        %v6786 = vadd.f32 %v6517, %v6710
        %v6787 = vadd.f32 %v6518, %v6715
        %v6788 = vadd.f32 %v6519, %v6718
        %v6789 = vadd.f32 %v6520, %v6723
        %v6790 = vadd.f32 %v6521, %v6726
        %v6791 = vadd.f32 %v6522, %v6731
        %v6792 = vadd.f32 %v6523, %v6734
        %v6793 = vadd.f32 %v6524, %v6739
        %v6794 = vadd.f32 %v6525, %v6742
        %v6795 = vadd.f32 %v6526, %v6747
        %v6796 = vadd.f32 %v6527, %v6750
        %v6797 = vadd.f32 %v6528, %v6755
        %v6798 = vadd.f32 %v6529, %v6758
        %v6799 = vadd.f32 %v6530, %v6763
        %v6800 = vadd.f32 %v6531, %v6766
        %s6801 = scalar_lea.vmem %s2, 1280
        %v6802 = vld [vmem:[%s6801] sm:$0xf]
        %v6803 = vld [vmem:[%s6801 + $0x4] sm:$0xf]
        %v6804 = vld [vmem:[%s6801 + $0x8] sm:$0xf]
        %v6805 = vld [vmem:[%s6801 + $0xc] sm:$0xf]
        %v6806 = vld [vmem:[%s6801 + $0x10] sm:$0xf]
        %v6807 = vld [vmem:[%s6801 + $0x14] sm:$0xf]
        %v6808 = vld [vmem:[%s6801 + $0x18] sm:$0xf]
        %v6809 = vld [vmem:[%s6801 + $0x1c] sm:$0xf]
        %v6810 = vld [vmem:[%s6801 + $0x20] sm:$0xf]
        %v6811 = vld [vmem:[%s6801 + $0x24] sm:$0xf]
        %v6812 = vld [vmem:[%s6801 + $0x28] sm:$0xf]
        %v6813 = vld [vmem:[%s6801 + $0x2c] sm:$0xf]
        %v6814 = vld [vmem:[%s6801 + $0x30] sm:$0xf]
        %v6815 = vld [vmem:[%s6801 + $0x34] sm:$0xf]
        %v6816 = vld [vmem:[%s6801 + $0x38] sm:$0xf]
        %v6817 = vld [vmem:[%s6801 + $0x3c] sm:$0xf]
        %v6820 = vunpack.c.l.b16 %v247
        %v6821 = vunpack.c.l.b16 %v248
        %v6822 = vpack.c.b16 %v6821, %v6820
        %v6840 = vunpack.c.l.b16 %v6802
        %v6841 = vunpack.c.l.b16 %v6803
        %v6842 = vunpack.c.l.b16 %v6804
        %v6843 = vunpack.c.l.b16 %v6805
        %v6844 = vunpack.c.l.b16 %v6806
        %v6845 = vunpack.c.l.b16 %v6807
        %v6846 = vunpack.c.l.b16 %v6808
        %v6847 = vunpack.c.l.b16 %v6809
        %v6848 = vunpack.c.l.b16 %v6810
        %v6849 = vunpack.c.l.b16 %v6811
        %v6850 = vunpack.c.l.b16 %v6812
        %v6851 = vunpack.c.l.b16 %v6813
        %v6852 = vunpack.c.l.b16 %v6814
        %v6853 = vunpack.c.l.b16 %v6815
        %v6854 = vunpack.c.l.b16 %v6816
        %v6855 = vunpack.c.l.b16 %v6817
        %v6856 = vpack.c.b16 %v6841, %v6840
        %v6857 = vpack.c.b16 %v6843, %v6842
        %v6858 = vpack.c.b16 %v6845, %v6844
        %v6859 = vpack.c.b16 %v6847, %v6846
        %v6860 = vpack.c.b16 %v6849, %v6848
        %v6861 = vpack.c.b16 %v6851, %v6850
        %v6862 = vpack.c.b16 %v6853, %v6852
        %v6863 = vpack.c.b16 %v6855, %v6854
        %6872 = vmatprep.subr.bf16.mxu0 0
        %6873 = vmatpush1.bf16.msra.mxu0 %v6856
        %6874 = vmatprep.subr.bf16.mxu0 0
        %6875 = vmatpush1.bf16.msra.mxu0 %v6857
        %6876 = vmatprep.subr.bf16.mxu0 0
        %6877 = vmatpush1.bf16.msra.mxu0 %v6858
        %6878 = vmatprep.subr.bf16.mxu0 0
        %6879 = vmatpush1.bf16.msra.mxu0 %v6859
        %6880 = vmatprep.subr.bf16.mxu0 0
        %6881 = vmatpush1.bf16.msra.mxu0 %v6860
        %6882 = vmatprep.subr.bf16.mxu0 0
        %6883 = vmatpush1.bf16.msra.mxu0 %v6861
        %6884 = vmatprep.subr.bf16.mxu0 0
        %6885 = vmatpush1.bf16.msra.mxu0 %v6862
        %6886 = vmatprep.subr.bf16.mxu0 0
        %6887 = vmatpush1.bf16.msra.mxu0 %v6863
        %6888 = vmatprep.subr.bf16.mxu0 0
        %6889 = vmatpush1.bf16.msra.mxu0 0
        %6890 = vmatprep.subr.bf16.mxu0 0
        %6891 = vmatpush1.bf16.msra.mxu0 0
        %6892 = vmatprep.subr.bf16.mxu0 0
        %6893 = vmatpush1.bf16.msra.mxu0 0
        %6894 = vmatprep.subr.bf16.mxu0 0
        %6895 = vmatpush1.bf16.msra.mxu0 0
        %6896 = vmatprep.subr.bf16.mxu0 0
        %6897 = vmatpush1.bf16.msra.mxu0 0
        %6898 = vmatprep.subr.bf16.mxu0 0
        %6899 = vmatpush1.bf16.msra.mxu0 0
        %6900 = vmatprep.subr.bf16.mxu0 0
        %6901 = vmatpush1.bf16.msra.mxu0 0
        %6902 = vmatprep.subr.bf16.mxu0 0
        %6903 = vmatpush1.bf16.msra.mxu0 0
        %6904 = vmatprep.mubr.bf16.mxu0 0
        %6905 = vmatmul.mubr.bf16.gmra.mrb[0].mxu0 %v1011
        %v6906 = vpop.f32.mrb[0].mxu0
        %v6907 = vadd.f32 0.0, %v6906
        %v6908 = vpop.f32.mrb[0].mxu0
        %v6909 = vpop.f32.mrb[0].mxu0
        %v6910 = vadd.f32 0.0, %v6909
        %v6911 = vpop.f32.mrb[0].mxu0
        %6912 = vmatprep.mubr.bf16.mxu0 0
        %6913 = vmatmul.mubr.bf16.gmra.mrb[0].mxu0 %v1012
        %v6914 = vpop.f32.mrb[0].mxu0
        %v6915 = vadd.f32 0.0, %v6914
        %v6916 = vpop.f32.mrb[0].mxu0
        %v6917 = vpop.f32.mrb[0].mxu0
        %v6918 = vadd.f32 0.0, %v6917
        %v6919 = vpop.f32.mrb[0].mxu0
        %6920 = vmatprep.mubr.bf16.mxu0 0
        %6921 = vmatmul.mubr.bf16.gmra.mrb[0].mxu0 %v1013
        %v6922 = vpop.f32.mrb[0].mxu0
        %v6923 = vadd.f32 0.0, %v6922
        %v6924 = vpop.f32.mrb[0].mxu0
        %v6925 = vpop.f32.mrb[0].mxu0
        %v6926 = vadd.f32 0.0, %v6925
        %v6927 = vpop.f32.mrb[0].mxu0
        %6928 = vmatprep.mubr.bf16.mxu0 0
        %6929 = vmatmul.mubr.bf16.gmra.mrb[0].mxu0 %v1014
        %v6930 = vpop.f32.mrb[0].mxu0
        %v6931 = vadd.f32 0.0, %v6930
        %v6932 = vpop.f32.mrb[0].mxu0
        %v6933 = vpop.f32.mrb[0].mxu0
        %v6934 = vadd.f32 0.0, %v6933
        %v6935 = vpop.f32.mrb[0].mxu0
        %6936 = vmatprep.mubr.bf16.mxu0 0
        %6937 = vmatmul.mubr.bf16.gmra.mrb[0].mxu0 %v1015
        %v6938 = vpop.f32.mrb[0].mxu0
        %v6939 = vadd.f32 0.0, %v6938
        %v6940 = vpop.f32.mrb[0].mxu0
        %v6941 = vpop.f32.mrb[0].mxu0
        %v6942 = vadd.f32 0.0, %v6941
        %v6943 = vpop.f32.mrb[0].mxu0
        %6944 = vmatprep.mubr.bf16.mxu0 0
        %6945 = vmatmul.mubr.bf16.gmra.mrb[0].mxu0 %v1016
        %v6946 = vpop.f32.mrb[0].mxu0
        %v6947 = vadd.f32 0.0, %v6946
        %v6948 = vpop.f32.mrb[0].mxu0
        %v6949 = vpop.f32.mrb[0].mxu0
        %v6950 = vadd.f32 0.0, %v6949
        %v6951 = vpop.f32.mrb[0].mxu0
        %6952 = vmatprep.mubr.bf16.mxu0 0
        %6953 = vmatmul.mubr.bf16.gmra.mrb[0].mxu0 %v1017
        %v6954 = vpop.f32.mrb[0].mxu0
        %v6955 = vadd.f32 0.0, %v6954
        %v6956 = vpop.f32.mrb[0].mxu0
        %v6957 = vpop.f32.mrb[0].mxu0
        %v6958 = vadd.f32 0.0, %v6957
        %v6959 = vpop.f32.mrb[0].mxu0
        %6960 = vmatprep.mubr.bf16.mxu0 0
        %6961 = vmatmul.mubr.bf16.gmra.mrb[0].mxu0 %v1018
        %v6962 = vpop.f32.mrb[0].mxu0
        %v6963 = vadd.f32 0.0, %v6962
        %v6964 = vpop.f32.mrb[0].mxu0
        %v6965 = vpop.f32.mrb[0].mxu0
        %v6966 = vadd.f32 0.0, %v6965
        %v6967 = vpop.f32.mrb[0].mxu0
        %6968 = vmatprep.mubr.bf16.mxu0 0
        %6969 = vmatmul.mubr.bf16.gmra.mrb[0].mxu0 %v1019
        %v6970 = vpop.f32.mrb[0].mxu0
        %v6971 = vadd.f32 0.0, %v6970
        %v6972 = vpop.f32.mrb[0].mxu0
        %v6973 = vpop.f32.mrb[0].mxu0
        %v6974 = vadd.f32 0.0, %v6973
        %v6975 = vpop.f32.mrb[0].mxu0
        %6976 = vmatprep.mubr.bf16.mxu0 0
        %6977 = vmatmul.mubr.bf16.gmra.mrb[0].mxu0 %v1020
        %v6978 = vpop.f32.mrb[0].mxu0
        %v6979 = vadd.f32 0.0, %v6978
        %v6980 = vpop.f32.mrb[0].mxu0
        %v6981 = vpop.f32.mrb[0].mxu0
        %v6982 = vadd.f32 0.0, %v6981
        %v6983 = vpop.f32.mrb[0].mxu0
        %6984 = vmatprep.mubr.bf16.mxu0 0
        %6985 = vmatmul.mubr.bf16.gmra.mrb[0].mxu0 %v1021
        %v6986 = vpop.f32.mrb[0].mxu0
        %v6987 = vadd.f32 0.0, %v6986
        %v6988 = vpop.f32.mrb[0].mxu0
        %v6989 = vpop.f32.mrb[0].mxu0
        %v6990 = vadd.f32 0.0, %v6989
        %v6991 = vpop.f32.mrb[0].mxu0
        %6992 = vmatprep.mubr.bf16.mxu0 0
        %6993 = vmatmul.mubr.bf16.gmra.mrb[0].mxu0 %v1022
        %v6994 = vpop.f32.mrb[0].mxu0
        %v6995 = vadd.f32 0.0, %v6994
        %v6996 = vpop.f32.mrb[0].mxu0
        %v6997 = vpop.f32.mrb[0].mxu0
        %v6998 = vadd.f32 0.0, %v6997
        %v6999 = vpop.f32.mrb[0].mxu0
        %7000 = vmatprep.mubr.bf16.mxu0 0
        %7001 = vmatmul.mubr.bf16.gmra.mrb[0].mxu0 %v2724
        %v7002 = vpop.f32.mrb[0].mxu0
        %v7003 = vadd.f32 0.0, %v7002
        %v7004 = vpop.f32.mrb[0].mxu0
        %v7005 = vpop.f32.mrb[0].mxu0
        %v7006 = vadd.f32 0.0, %v7005
        %v7007 = vpop.f32.mrb[0].mxu0
        %7008 = vmatprep.mubr.bf16.mxu0 0
        %7009 = vmatmul.mubr.bf16.gmra.mrb[0].mxu0 %v4090
        %v7010 = vpop.f32.mrb[0].mxu0
        %v7011 = vadd.f32 0.0, %v7010
        %v7012 = vpop.f32.mrb[0].mxu0
        %v7013 = vpop.f32.mrb[0].mxu0
        %v7014 = vadd.f32 0.0, %v7013
        %v7015 = vpop.f32.mrb[0].mxu0
        %7016 = vmatprep.mubr.bf16.mxu0 0
        %7017 = vmatmul.mubr.bf16.gmra.mrb[0].mxu0 %v5456
        %v7018 = vpop.f32.mrb[0].mxu0
        %v7019 = vadd.f32 0.0, %v7018
        %v7020 = vpop.f32.mrb[0].mxu0
        %v7021 = vpop.f32.mrb[0].mxu0
        %v7022 = vadd.f32 0.0, %v7021
        %v7023 = vpop.f32.mrb[0].mxu0
        %7024 = vmatprep.mubr.bf16.mxu0 0
        %7025 = vmatmul.mubr.bf16.gmra.mrb[0].mxu0 %v6822
        %v7026 = vpop.f32.mrb[0].mxu0
        %v7027 = vadd.f32 0.0, %v7026
        %v7028 = vpop.f32.mrb[0].mxu0
        %v7029 = vpop.f32.mrb[0].mxu0
        %v7030 = vadd.f32 0.0, %v7029
        %v7031 = vpop.f32.mrb[0].mxu0
        %7032 = vdwg.mxu0
        %v7033 = vadd.f32 %v6769, %v6907
        %v7034 = vadd.f32 %v6770, %v6910
        %v7035 = vadd.f32 %v6771, %v6915
        %v7036 = vadd.f32 %v6772, %v6918
        %v7037 = vadd.f32 %v6773, %v6923
        %v7038 = vadd.f32 %v6774, %v6926
        %v7039 = vadd.f32 %v6775, %v6931
        %v7040 = vadd.f32 %v6776, %v6934
        %v7041 = vadd.f32 %v6777, %v6939
        %v7042 = vadd.f32 %v6778, %v6942
        %v7043 = vadd.f32 %v6779, %v6947
        %v7044 = vadd.f32 %v6780, %v6950
        %v7045 = vadd.f32 %v6781, %v6955
        %v7046 = vadd.f32 %v6782, %v6958
        %v7047 = vadd.f32 %v6783, %v6963
        %v7048 = vadd.f32 %v6784, %v6966
        %v7049 = vadd.f32 %v6785, %v6971
        %v7050 = vadd.f32 %v6786, %v6974
        %v7051 = vadd.f32 %v6787, %v6979
        %v7052 = vadd.f32 %v6788, %v6982
        %v7053 = vadd.f32 %v6789, %v6987
        %v7054 = vadd.f32 %v6790, %v6990
        %v7055 = vadd.f32 %v6791, %v6995
        %v7056 = vadd.f32 %v6792, %v6998
        %v7057 = vadd.f32 %v6793, %v7003
        %v7058 = vadd.f32 %v6794, %v7006
        %v7059 = vadd.f32 %v6795, %v7011
        %v7060 = vadd.f32 %v6796, %v7014
        %v7061 = vadd.f32 %v6797, %v7019
        %v7062 = vadd.f32 %v6798, %v7022
        %v7063 = vadd.f32 %v6799, %v7027
        %v7064 = vadd.f32 %v6800, %v7030
        %v7066 = vshrl.u32 %v247, 16
        %v7068 = vrot.slane %v7066, 4
        %v7069 = vshll.u32 %v247, 16
        %v7071 = vrot.slane %v7069, 5
        %v7072 = vor.u32 %v7068, %v7071
        %v7073 = vrot.slane %v7072, 4
        %v7075 = vshll.u32 %v248, 16
        %v7077 = vrot.slane %v7075, 5
        %v7078 = vsel %vm268, %v7073, %v7077
        %v7079 = vshrl.u32 %v248, 16
        %v7081 = vrot.slane %v7079, 4
        %v7082 = vor.u32 %v7081, %v7077
        %v7083 = vrot.slane %v7082, 4
        %v7085 = vshll.u32 %v249, 16
        %v7087 = vrot.slane %v7085, 5
        %v7088 = vsel %vm268, %v7083, %v7087
        %s7089 = scalar_lea.vmem %s2, 1344
        %v7090 = vld [vmem:[%s7089] sm:$0xf]
        %v7091 = vld [vmem:[%s7089 + $0x4] sm:$0xf]
        %v7092 = vld [vmem:[%s7089 + $0x8] sm:$0xf]
        %v7093 = vld [vmem:[%s7089 + $0xc] sm:$0xf]
        %v7094 = vld [vmem:[%s7089 + $0x10] sm:$0xf]
        %v7095 = vld [vmem:[%s7089 + $0x14] sm:$0xf]
        %v7096 = vld [vmem:[%s7089 + $0x18] sm:$0xf]
        %v7097 = vld [vmem:[%s7089 + $0x1c] sm:$0xf]
        %v7098 = vld [vmem:[%s7089 + $0x20] sm:$0xf]
        %v7099 = vld [vmem:[%s7089 + $0x24] sm:$0xf]
        %v7100 = vld [vmem:[%s7089 + $0x28] sm:$0xf]
        %v7101 = vld [vmem:[%s7089 + $0x2c] sm:$0xf]
        %v7102 = vld [vmem:[%s7089 + $0x30] sm:$0xf]
        %v7103 = vld [vmem:[%s7089 + $0x34] sm:$0xf]
        %v7104 = vld [vmem:[%s7089 + $0x38] sm:$0xf]
        %v7105 = vld [vmem:[%s7089 + $0x3c] sm:$0xf]
        %v7106 = vunpack.c.l.b16 %v7078
        %v7107 = vunpack.c.l.b16 %v7088
        %v7108 = vpack.c.b16 %v7107, %v7106
        %v7126 = vunpack.c.l.b16 %v7090
        %v7127 = vunpack.c.l.b16 %v7091
        %v7128 = vunpack.c.l.b16 %v7092
        %v7129 = vunpack.c.l.b16 %v7093
        %v7130 = vunpack.c.l.b16 %v7094
        %v7131 = vunpack.c.l.b16 %v7095
        %v7132 = vunpack.c.l.b16 %v7096
        %v7133 = vunpack.c.l.b16 %v7097
        %v7134 = vunpack.c.l.b16 %v7098
        %v7135 = vunpack.c.l.b16 %v7099
        %v7136 = vunpack.c.l.b16 %v7100
        %v7137 = vunpack.c.l.b16 %v7101
        %v7138 = vunpack.c.l.b16 %v7102
        %v7139 = vunpack.c.l.b16 %v7103
        %v7140 = vunpack.c.l.b16 %v7104
        %v7141 = vunpack.c.l.b16 %v7105
        %v7142 = vpack.c.b16 %v7127, %v7126
        %v7143 = vpack.c.b16 %v7129, %v7128
        %v7144 = vpack.c.b16 %v7131, %v7130
        %v7145 = vpack.c.b16 %v7133, %v7132
        %v7146 = vpack.c.b16 %v7135, %v7134
        %v7147 = vpack.c.b16 %v7137, %v7136
        %v7148 = vpack.c.b16 %v7139, %v7138
        %v7149 = vpack.c.b16 %v7141, %v7140
        %7158 = vmatprep.subr.bf16.mxu0 0
        %7159 = vmatpush1.bf16.msra.mxu0 %v7142
        %7160 = vmatprep.subr.bf16.mxu0 0
        %7161 = vmatpush1.bf16.msra.mxu0 %v7143
        %7162 = vmatprep.subr.bf16.mxu0 0
        %7163 = vmatpush1.bf16.msra.mxu0 %v7144
        %7164 = vmatprep.subr.bf16.mxu0 0
        %7165 = vmatpush1.bf16.msra.mxu0 %v7145
        %7166 = vmatprep.subr.bf16.mxu0 0
        %7167 = vmatpush1.bf16.msra.mxu0 %v7146
        %7168 = vmatprep.subr.bf16.mxu0 0
        %7169 = vmatpush1.bf16.msra.mxu0 %v7147
        %7170 = vmatprep.subr.bf16.mxu0 0
        %7171 = vmatpush1.bf16.msra.mxu0 %v7148
        %7172 = vmatprep.subr.bf16.mxu0 0
        %7173 = vmatpush1.bf16.msra.mxu0 %v7149
        %7174 = vmatprep.subr.bf16.mxu0 0
        %7175 = vmatpush1.bf16.msra.mxu0 0
        %7176 = vmatprep.subr.bf16.mxu0 0
        %7177 = vmatpush1.bf16.msra.mxu0 0
        %7178 = vmatprep.subr.bf16.mxu0 0
        %7179 = vmatpush1.bf16.msra.mxu0 0
        %7180 = vmatprep.subr.bf16.mxu0 0
        %7181 = vmatpush1.bf16.msra.mxu0 0
        %7182 = vmatprep.subr.bf16.mxu0 0
        %7183 = vmatpush1.bf16.msra.mxu0 0
        %7184 = vmatprep.subr.bf16.mxu0 0
        %7185 = vmatpush1.bf16.msra.mxu0 0
        %7186 = vmatprep.subr.bf16.mxu0 0
        %7187 = vmatpush1.bf16.msra.mxu0 0
        %7188 = vmatprep.subr.bf16.mxu0 0
        %7189 = vmatpush1.bf16.msra.mxu0 0
        %7190 = vmatprep.mubr.bf16.mxu0 0
        %7191 = vmatmul.mubr.bf16.gmra.mrb[0].mxu0 %v706
        %v7192 = vpop.f32.mrb[0].mxu0
        %v7193 = vadd.f32 0.0, %v7192
        %v7194 = vpop.f32.mrb[0].mxu0
        %v7195 = vpop.f32.mrb[0].mxu0
        %v7196 = vadd.f32 0.0, %v7195
        %v7197 = vpop.f32.mrb[0].mxu0
        %7198 = vmatprep.mubr.bf16.mxu0 0
        %7199 = vmatmul.mubr.bf16.gmra.mrb[0].mxu0 %v707
        %v7200 = vpop.f32.mrb[0].mxu0
        %v7201 = vadd.f32 0.0, %v7200
        %v7202 = vpop.f32.mrb[0].mxu0
        %v7203 = vpop.f32.mrb[0].mxu0
        %v7204 = vadd.f32 0.0, %v7203
        %v7205 = vpop.f32.mrb[0].mxu0
        %7206 = vmatprep.mubr.bf16.mxu0 0
        %7207 = vmatmul.mubr.bf16.gmra.mrb[0].mxu0 %v708
        %v7208 = vpop.f32.mrb[0].mxu0
        %v7209 = vadd.f32 0.0, %v7208
        %v7210 = vpop.f32.mrb[0].mxu0
        %v7211 = vpop.f32.mrb[0].mxu0
        %v7212 = vadd.f32 0.0, %v7211
        %v7213 = vpop.f32.mrb[0].mxu0
        %7214 = vmatprep.mubr.bf16.mxu0 0
        %7215 = vmatmul.mubr.bf16.gmra.mrb[0].mxu0 %v709
        %v7216 = vpop.f32.mrb[0].mxu0
        %v7217 = vadd.f32 0.0, %v7216
        %v7218 = vpop.f32.mrb[0].mxu0
        %v7219 = vpop.f32.mrb[0].mxu0
        %v7220 = vadd.f32 0.0, %v7219
        %v7221 = vpop.f32.mrb[0].mxu0
        %7222 = vmatprep.mubr.bf16.mxu0 0
        %7223 = vmatmul.mubr.bf16.gmra.mrb[0].mxu0 %v710
        %v7224 = vpop.f32.mrb[0].mxu0
        %v7225 = vadd.f32 0.0, %v7224
        %v7226 = vpop.f32.mrb[0].mxu0
        %v7227 = vpop.f32.mrb[0].mxu0
        %v7228 = vadd.f32 0.0, %v7227
        %v7229 = vpop.f32.mrb[0].mxu0
        %7230 = vmatprep.mubr.bf16.mxu0 0
        %7231 = vmatmul.mubr.bf16.gmra.mrb[0].mxu0 %v711
        %v7232 = vpop.f32.mrb[0].mxu0
        %v7233 = vadd.f32 0.0, %v7232
        %v7234 = vpop.f32.mrb[0].mxu0
        %v7235 = vpop.f32.mrb[0].mxu0
        %v7236 = vadd.f32 0.0, %v7235
        %v7237 = vpop.f32.mrb[0].mxu0
        %7238 = vmatprep.mubr.bf16.mxu0 0
        %7239 = vmatmul.mubr.bf16.gmra.mrb[0].mxu0 %v712
        %v7240 = vpop.f32.mrb[0].mxu0
        %v7241 = vadd.f32 0.0, %v7240
        %v7242 = vpop.f32.mrb[0].mxu0
        %v7243 = vpop.f32.mrb[0].mxu0
        %v7244 = vadd.f32 0.0, %v7243
        %v7245 = vpop.f32.mrb[0].mxu0
        %7246 = vmatprep.mubr.bf16.mxu0 0
        %7247 = vmatmul.mubr.bf16.gmra.mrb[0].mxu0 %v713
        %v7248 = vpop.f32.mrb[0].mxu0
        %v7249 = vadd.f32 0.0, %v7248
        %v7250 = vpop.f32.mrb[0].mxu0
        %v7251 = vpop.f32.mrb[0].mxu0
        %v7252 = vadd.f32 0.0, %v7251
        %v7253 = vpop.f32.mrb[0].mxu0
        %7254 = vmatprep.mubr.bf16.mxu0 0
        %7255 = vmatmul.mubr.bf16.gmra.mrb[0].mxu0 %v714
        %v7256 = vpop.f32.mrb[0].mxu0
        %v7257 = vadd.f32 0.0, %v7256
        %v7258 = vpop.f32.mrb[0].mxu0
        %v7259 = vpop.f32.mrb[0].mxu0
        %v7260 = vadd.f32 0.0, %v7259
        %v7261 = vpop.f32.mrb[0].mxu0
        %7262 = vmatprep.mubr.bf16.mxu0 0
        %7263 = vmatmul.mubr.bf16.gmra.mrb[0].mxu0 %v715
        %v7264 = vpop.f32.mrb[0].mxu0
        %v7265 = vadd.f32 0.0, %v7264
        %v7266 = vpop.f32.mrb[0].mxu0
        %v7267 = vpop.f32.mrb[0].mxu0
        %v7268 = vadd.f32 0.0, %v7267
        %v7269 = vpop.f32.mrb[0].mxu0
        %7270 = vmatprep.mubr.bf16.mxu0 0
        %7271 = vmatmul.mubr.bf16.gmra.mrb[0].mxu0 %v716
        %v7272 = vpop.f32.mrb[0].mxu0
        %v7273 = vadd.f32 0.0, %v7272
        %v7274 = vpop.f32.mrb[0].mxu0
        %v7275 = vpop.f32.mrb[0].mxu0
        %v7276 = vadd.f32 0.0, %v7275
        %v7277 = vpop.f32.mrb[0].mxu0
        %7278 = vmatprep.mubr.bf16.mxu0 0
        %7279 = vmatmul.mubr.bf16.gmra.mrb[0].mxu0 %v717
        %v7280 = vpop.f32.mrb[0].mxu0
        %v7281 = vadd.f32 0.0, %v7280
        %v7282 = vpop.f32.mrb[0].mxu0
        %v7283 = vpop.f32.mrb[0].mxu0
        %v7284 = vadd.f32 0.0, %v7283
        %v7285 = vpop.f32.mrb[0].mxu0
        %7286 = vmatprep.mubr.bf16.mxu0 0
        %7287 = vmatmul.mubr.bf16.gmra.mrb[0].mxu0 %v3010
        %v7288 = vpop.f32.mrb[0].mxu0
        %v7289 = vadd.f32 0.0, %v7288
        %v7290 = vpop.f32.mrb[0].mxu0
        %v7291 = vpop.f32.mrb[0].mxu0
        %v7292 = vadd.f32 0.0, %v7291
        %v7293 = vpop.f32.mrb[0].mxu0
        %7294 = vmatprep.mubr.bf16.mxu0 0
        %7295 = vmatmul.mubr.bf16.gmra.mrb[0].mxu0 %v4376
        %v7296 = vpop.f32.mrb[0].mxu0
        %v7297 = vadd.f32 0.0, %v7296
        %v7298 = vpop.f32.mrb[0].mxu0
        %v7299 = vpop.f32.mrb[0].mxu0
        %v7300 = vadd.f32 0.0, %v7299
        %v7301 = vpop.f32.mrb[0].mxu0
        %7302 = vmatprep.mubr.bf16.mxu0 0
        %7303 = vmatmul.mubr.bf16.gmra.mrb[0].mxu0 %v5742
        %v7304 = vpop.f32.mrb[0].mxu0
        %v7305 = vadd.f32 0.0, %v7304
        %v7306 = vpop.f32.mrb[0].mxu0
        %v7307 = vpop.f32.mrb[0].mxu0
        %v7308 = vadd.f32 0.0, %v7307
        %v7309 = vpop.f32.mrb[0].mxu0
        %7310 = vmatprep.mubr.bf16.mxu0 0
        %7311 = vmatmul.mubr.bf16.gmra.mrb[0].mxu0 %v7108
        %v7312 = vpop.f32.mrb[0].mxu0
        %v7313 = vadd.f32 0.0, %v7312
        %v7314 = vpop.f32.mrb[0].mxu0
        %v7315 = vpop.f32.mrb[0].mxu0
        %v7316 = vadd.f32 0.0, %v7315
        %v7317 = vpop.f32.mrb[0].mxu0
        %7318 = vdwg.mxu0
        %v7319 = vadd.f32 %v7033, %v7193
        %v7320 = vadd.f32 %v7034, %v7196
        %v7321 = vadd.f32 %v7035, %v7201
        %v7322 = vadd.f32 %v7036, %v7204
        %v7323 = vadd.f32 %v7037, %v7209
        %v7324 = vadd.f32 %v7038, %v7212
        %v7325 = vadd.f32 %v7039, %v7217
        %v7326 = vadd.f32 %v7040, %v7220
        %v7327 = vadd.f32 %v7041, %v7225
        %v7328 = vadd.f32 %v7042, %v7228
        %v7329 = vadd.f32 %v7043, %v7233
        %v7330 = vadd.f32 %v7044, %v7236
        %v7331 = vadd.f32 %v7045, %v7241
        %v7332 = vadd.f32 %v7046, %v7244
        %v7333 = vadd.f32 %v7047, %v7249
        %v7334 = vadd.f32 %v7048, %v7252
        %v7335 = vadd.f32 %v7049, %v7257
        %v7336 = vadd.f32 %v7050, %v7260
        %v7337 = vadd.f32 %v7051, %v7265
        %v7338 = vadd.f32 %v7052, %v7268
        %v7339 = vadd.f32 %v7053, %v7273
        %v7340 = vadd.f32 %v7054, %v7276
        %v7341 = vadd.f32 %v7055, %v7281
        %v7342 = vadd.f32 %v7056, %v7284
        %v7343 = vadd.f32 %v7057, %v7289
        %v7344 = vadd.f32 %v7058, %v7292
        %v7345 = vadd.f32 %v7059, %v7297
        %v7346 = vadd.f32 %v7060, %v7300
        %v7347 = vadd.f32 %v7061, %v7305
        %v7348 = vadd.f32 %v7062, %v7308
        %v7349 = vadd.f32 %v7063, %v7313
        %v7350 = vadd.f32 %v7064, %v7316
        %v7352 = vrot.slane %v247, 5
        %v7353 = vrot.slane %v7352, 4
        %v7354 = vrot.slane %v248, 5
        %v7355 = vsel %vm1266, %v7353, %v7354
        %v7356 = vrot.slane %v7354, 4
        %v7357 = vrot.slane %v249, 5
        %v7358 = vsel %vm1266, %v7356, %v7357
        %s7359 = scalar_lea.vmem %s2, 1408
        %v7360 = vld [vmem:[%s7359] sm:$0xf]
        %v7361 = vld [vmem:[%s7359 + $0x4] sm:$0xf]
        %v7362 = vld [vmem:[%s7359 + $0x8] sm:$0xf]
        %v7363 = vld [vmem:[%s7359 + $0xc] sm:$0xf]
        %v7364 = vld [vmem:[%s7359 + $0x10] sm:$0xf]
        %v7365 = vld [vmem:[%s7359 + $0x14] sm:$0xf]
        %v7366 = vld [vmem:[%s7359 + $0x18] sm:$0xf]
        %v7367 = vld [vmem:[%s7359 + $0x1c] sm:$0xf]
        %v7368 = vld [vmem:[%s7359 + $0x20] sm:$0xf]
        %v7369 = vld [vmem:[%s7359 + $0x24] sm:$0xf]
        %v7370 = vld [vmem:[%s7359 + $0x28] sm:$0xf]
        %v7371 = vld [vmem:[%s7359 + $0x2c] sm:$0xf]
        %v7372 = vld [vmem:[%s7359 + $0x30] sm:$0xf]
        %v7373 = vld [vmem:[%s7359 + $0x34] sm:$0xf]
        %v7374 = vld [vmem:[%s7359 + $0x38] sm:$0xf]
        %v7375 = vld [vmem:[%s7359 + $0x3c] sm:$0xf]
        %v7376 = vunpack.c.l.b16 %v7355
        %v7377 = vunpack.c.l.b16 %v7358
        %v7378 = vpack.c.b16 %v7377, %v7376
        %v7396 = vunpack.c.l.b16 %v7360
        %v7397 = vunpack.c.l.b16 %v7361
        %v7398 = vunpack.c.l.b16 %v7362
        %v7399 = vunpack.c.l.b16 %v7363
        %v7400 = vunpack.c.l.b16 %v7364
        %v7401 = vunpack.c.l.b16 %v7365
        %v7402 = vunpack.c.l.b16 %v7366
        %v7403 = vunpack.c.l.b16 %v7367
        %v7404 = vunpack.c.l.b16 %v7368
        %v7405 = vunpack.c.l.b16 %v7369
        %v7406 = vunpack.c.l.b16 %v7370
        %v7407 = vunpack.c.l.b16 %v7371
        %v7408 = vunpack.c.l.b16 %v7372
        %v7409 = vunpack.c.l.b16 %v7373
        %v7410 = vunpack.c.l.b16 %v7374
        %v7411 = vunpack.c.l.b16 %v7375
        %v7412 = vpack.c.b16 %v7397, %v7396
        %v7413 = vpack.c.b16 %v7399, %v7398
        %v7414 = vpack.c.b16 %v7401, %v7400
        %v7415 = vpack.c.b16 %v7403, %v7402
        %v7416 = vpack.c.b16 %v7405, %v7404
        %v7417 = vpack.c.b16 %v7407, %v7406
        %v7418 = vpack.c.b16 %v7409, %v7408
        %v7419 = vpack.c.b16 %v7411, %v7410
        %7428 = vmatprep.subr.bf16.mxu0 0
        %7429 = vmatpush1.bf16.msra.mxu0 %v7412
        %7430 = vmatprep.subr.bf16.mxu0 0
        %7431 = vmatpush1.bf16.msra.mxu0 %v7413
        %7432 = vmatprep.subr.bf16.mxu0 0
        %7433 = vmatpush1.bf16.msra.mxu0 %v7414
        %7434 = vmatprep.subr.bf16.mxu0 0
        %7435 = vmatpush1.bf16.msra.mxu0 %v7415
        %7436 = vmatprep.subr.bf16.mxu0 0
        %7437 = vmatpush1.bf16.msra.mxu0 %v7416
        %7438 = vmatprep.subr.bf16.mxu0 0
        %7439 = vmatpush1.bf16.msra.mxu0 %v7417
        %7440 = vmatprep.subr.bf16.mxu0 0
        %7441 = vmatpush1.bf16.msra.mxu0 %v7418
        %7442 = vmatprep.subr.bf16.mxu0 0
        %7443 = vmatpush1.bf16.msra.mxu0 %v7419
        %7444 = vmatprep.subr.bf16.mxu0 0
        %7445 = vmatpush1.bf16.msra.mxu0 0
        %7446 = vmatprep.subr.bf16.mxu0 0
        %7447 = vmatpush1.bf16.msra.mxu0 0
        %7448 = vmatprep.subr.bf16.mxu0 0
        %7449 = vmatpush1.bf16.msra.mxu0 0
        %7450 = vmatprep.subr.bf16.mxu0 0
        %7451 = vmatpush1.bf16.msra.mxu0 0
        %7452 = vmatprep.subr.bf16.mxu0 0
        %7453 = vmatpush1.bf16.msra.mxu0 0
        %7454 = vmatprep.subr.bf16.mxu0 0
        %7455 = vmatpush1.bf16.msra.mxu0 0
        %7456 = vmatprep.subr.bf16.mxu0 0
        %7457 = vmatpush1.bf16.msra.mxu0 0
        %7458 = vmatprep.subr.bf16.mxu0 0
        %7459 = vmatpush1.bf16.msra.mxu0 0
        %7460 = vmatprep.mubr.bf16.mxu0 0
        %7461 = vmatmul.mubr.bf16.gmra.mrb[0].mxu0 %v1432
        %v7462 = vpop.f32.mrb[0].mxu0
        %v7463 = vadd.f32 0.0, %v7462
        %v7464 = vpop.f32.mrb[0].mxu0
        %v7465 = vpop.f32.mrb[0].mxu0
        %v7466 = vadd.f32 0.0, %v7465
        %v7467 = vpop.f32.mrb[0].mxu0
        %7468 = vmatprep.mubr.bf16.mxu0 0
        %7469 = vmatmul.mubr.bf16.gmra.mrb[0].mxu0 %v1433
        %v7470 = vpop.f32.mrb[0].mxu0
        %v7471 = vadd.f32 0.0, %v7470
        %v7472 = vpop.f32.mrb[0].mxu0
        %v7473 = vpop.f32.mrb[0].mxu0
        %v7474 = vadd.f32 0.0, %v7473
        %v7475 = vpop.f32.mrb[0].mxu0
        %7476 = vmatprep.mubr.bf16.mxu0 0
        %7477 = vmatmul.mubr.bf16.gmra.mrb[0].mxu0 %v1434
        %v7478 = vpop.f32.mrb[0].mxu0
        %v7479 = vadd.f32 0.0, %v7478
        %v7480 = vpop.f32.mrb[0].mxu0
        %v7481 = vpop.f32.mrb[0].mxu0
        %v7482 = vadd.f32 0.0, %v7481
        %v7483 = vpop.f32.mrb[0].mxu0
        %7484 = vmatprep.mubr.bf16.mxu0 0
        %7485 = vmatmul.mubr.bf16.gmra.mrb[0].mxu0 %v1435
        %v7486 = vpop.f32.mrb[0].mxu0
        %v7487 = vadd.f32 0.0, %v7486
        %v7488 = vpop.f32.mrb[0].mxu0
        %v7489 = vpop.f32.mrb[0].mxu0
        %v7490 = vadd.f32 0.0, %v7489
        %v7491 = vpop.f32.mrb[0].mxu0
        %7492 = vmatprep.mubr.bf16.mxu0 0
        %7493 = vmatmul.mubr.bf16.gmra.mrb[0].mxu0 %v1436
        %v7494 = vpop.f32.mrb[0].mxu0
        %v7495 = vadd.f32 0.0, %v7494
        %v7496 = vpop.f32.mrb[0].mxu0
        %v7497 = vpop.f32.mrb[0].mxu0
        %v7498 = vadd.f32 0.0, %v7497
        %v7499 = vpop.f32.mrb[0].mxu0
        %7500 = vmatprep.mubr.bf16.mxu0 0
        %7501 = vmatmul.mubr.bf16.gmra.mrb[0].mxu0 %v1437
        %v7502 = vpop.f32.mrb[0].mxu0
        %v7503 = vadd.f32 0.0, %v7502
        %v7504 = vpop.f32.mrb[0].mxu0
        %v7505 = vpop.f32.mrb[0].mxu0
        %v7506 = vadd.f32 0.0, %v7505
        %v7507 = vpop.f32.mrb[0].mxu0
        %7508 = vmatprep.mubr.bf16.mxu0 0
        %7509 = vmatmul.mubr.bf16.gmra.mrb[0].mxu0 %v1438
        %v7510 = vpop.f32.mrb[0].mxu0
        %v7511 = vadd.f32 0.0, %v7510
        %v7512 = vpop.f32.mrb[0].mxu0
        %v7513 = vpop.f32.mrb[0].mxu0
        %v7514 = vadd.f32 0.0, %v7513
        %v7515 = vpop.f32.mrb[0].mxu0
        %7516 = vmatprep.mubr.bf16.mxu0 0
        %7517 = vmatmul.mubr.bf16.gmra.mrb[0].mxu0 %v1439
        %v7518 = vpop.f32.mrb[0].mxu0
        %v7519 = vadd.f32 0.0, %v7518
        %v7520 = vpop.f32.mrb[0].mxu0
        %v7521 = vpop.f32.mrb[0].mxu0
        %v7522 = vadd.f32 0.0, %v7521
        %v7523 = vpop.f32.mrb[0].mxu0
        %7524 = vmatprep.mubr.bf16.mxu0 0
        %7525 = vmatmul.mubr.bf16.gmra.mrb[0].mxu0 %v1440
        %v7526 = vpop.f32.mrb[0].mxu0
        %v7527 = vadd.f32 0.0, %v7526
        %v7528 = vpop.f32.mrb[0].mxu0
        %v7529 = vpop.f32.mrb[0].mxu0
        %v7530 = vadd.f32 0.0, %v7529
        %v7531 = vpop.f32.mrb[0].mxu0
        %7532 = vmatprep.mubr.bf16.mxu0 0
        %7533 = vmatmul.mubr.bf16.gmra.mrb[0].mxu0 %v1441
        %v7534 = vpop.f32.mrb[0].mxu0
        %v7535 = vadd.f32 0.0, %v7534
        %v7536 = vpop.f32.mrb[0].mxu0
        %v7537 = vpop.f32.mrb[0].mxu0
        %v7538 = vadd.f32 0.0, %v7537
        %v7539 = vpop.f32.mrb[0].mxu0
        %7540 = vmatprep.mubr.bf16.mxu0 0
        %7541 = vmatmul.mubr.bf16.gmra.mrb[0].mxu0 %v1442
        %v7542 = vpop.f32.mrb[0].mxu0
        %v7543 = vadd.f32 0.0, %v7542
        %v7544 = vpop.f32.mrb[0].mxu0
        %v7545 = vpop.f32.mrb[0].mxu0
        %v7546 = vadd.f32 0.0, %v7545
        %v7547 = vpop.f32.mrb[0].mxu0
        %7548 = vmatprep.mubr.bf16.mxu0 0
        %7549 = vmatmul.mubr.bf16.gmra.mrb[0].mxu0 %v1443
        %v7550 = vpop.f32.mrb[0].mxu0
        %v7551 = vadd.f32 0.0, %v7550
        %v7552 = vpop.f32.mrb[0].mxu0
        %v7553 = vpop.f32.mrb[0].mxu0
        %v7554 = vadd.f32 0.0, %v7553
        %v7555 = vpop.f32.mrb[0].mxu0
        %7556 = vmatprep.mubr.bf16.mxu0 0
        %7557 = vmatmul.mubr.bf16.gmra.mrb[0].mxu0 %v3280
        %v7558 = vpop.f32.mrb[0].mxu0
        %v7559 = vadd.f32 0.0, %v7558
        %v7560 = vpop.f32.mrb[0].mxu0
        %v7561 = vpop.f32.mrb[0].mxu0
        %v7562 = vadd.f32 0.0, %v7561
        %v7563 = vpop.f32.mrb[0].mxu0
        %7564 = vmatprep.mubr.bf16.mxu0 0
        %7565 = vmatmul.mubr.bf16.gmra.mrb[0].mxu0 %v4646
        %v7566 = vpop.f32.mrb[0].mxu0
        %v7567 = vadd.f32 0.0, %v7566
        %v7568 = vpop.f32.mrb[0].mxu0
        %v7569 = vpop.f32.mrb[0].mxu0
        %v7570 = vadd.f32 0.0, %v7569
        %v7571 = vpop.f32.mrb[0].mxu0
        %7572 = vmatprep.mubr.bf16.mxu0 0
        %7573 = vmatmul.mubr.bf16.gmra.mrb[0].mxu0 %v6012
        %v7574 = vpop.f32.mrb[0].mxu0
        %v7575 = vadd.f32 0.0, %v7574
        %v7576 = vpop.f32.mrb[0].mxu0
        %v7577 = vpop.f32.mrb[0].mxu0
        %v7578 = vadd.f32 0.0, %v7577
        %v7579 = vpop.f32.mrb[0].mxu0
        %7580 = vmatprep.mubr.bf16.mxu0 0
        %7581 = vmatmul.mubr.bf16.gmra.mrb[0].mxu0 %v7378
        %v7582 = vpop.f32.mrb[0].mxu0
        %v7583 = vadd.f32 0.0, %v7582
        %v7584 = vpop.f32.mrb[0].mxu0
        %v7585 = vpop.f32.mrb[0].mxu0
        %v7586 = vadd.f32 0.0, %v7585
        %v7587 = vpop.f32.mrb[0].mxu0
        %7588 = vdwg.mxu0
        %v7589 = vadd.f32 %v7319, %v7463
        %v7590 = vadd.f32 %v7320, %v7466
        %v7591 = vadd.f32 %v7321, %v7471
        %v7592 = vadd.f32 %v7322, %v7474
        %v7593 = vadd.f32 %v7323, %v7479
        %v7594 = vadd.f32 %v7324, %v7482
        %v7595 = vadd.f32 %v7325, %v7487
        %v7596 = vadd.f32 %v7326, %v7490
        %v7597 = vadd.f32 %v7327, %v7495
        %v7598 = vadd.f32 %v7328, %v7498
        %v7599 = vadd.f32 %v7329, %v7503
        %v7600 = vadd.f32 %v7330, %v7506
        %v7601 = vadd.f32 %v7331, %v7511
        %v7602 = vadd.f32 %v7332, %v7514
        %v7603 = vadd.f32 %v7333, %v7519
        %v7604 = vadd.f32 %v7334, %v7522
        %v7605 = vadd.f32 %v7335, %v7527
        %v7606 = vadd.f32 %v7336, %v7530
        %v7607 = vadd.f32 %v7337, %v7535
        %v7608 = vadd.f32 %v7338, %v7538
        %v7609 = vadd.f32 %v7339, %v7543
        %v7610 = vadd.f32 %v7340, %v7546
        %v7611 = vadd.f32 %v7341, %v7551
        %v7612 = vadd.f32 %v7342, %v7554
        %v7613 = vadd.f32 %v7343, %v7559
        %v7614 = vadd.f32 %v7344, %v7562
        %v7615 = vadd.f32 %v7345, %v7567
        %v7616 = vadd.f32 %v7346, %v7570
        %v7617 = vadd.f32 %v7347, %v7575
        %v7618 = vadd.f32 %v7348, %v7578
        %v7619 = vadd.f32 %v7349, %v7583
        %v7620 = vadd.f32 %v7350, %v7586
        %v7621 = vrot.slane %v7066, 5
        %v7622 = vrot.slane %v7069, 6
        %v7623 = vor.u32 %v7621, %v7622
        %v7624 = vrot.slane %v7623, 4
        %v7625 = vrot.slane %v7079, 5
        %v7626 = vrot.slane %v7075, 6
        %v7627 = vor.u32 %v7625, %v7626
        %v7628 = vsel %vm1703, %v7624, %v7627
        %v7629 = vrot.slane %v7627, 4
        %v7630 = vshrl.u32 %v249, 16
        %v7632 = vrot.slane %v7630, 5
        %v7633 = vrot.slane %v7085, 6
        %v7634 = vor.u32 %v7632, %v7633
        %v7635 = vsel %vm1703, %v7629, %v7634
        %s7636 = scalar_lea.vmem %s2, 1472
        %v7637 = vld [vmem:[%s7636] sm:$0xf]
        %v7638 = vld [vmem:[%s7636 + $0x4] sm:$0xf]
        %v7639 = vld [vmem:[%s7636 + $0x8] sm:$0xf]
        %v7640 = vld [vmem:[%s7636 + $0xc] sm:$0xf]
        %v7641 = vld [vmem:[%s7636 + $0x10] sm:$0xf]
        %v7642 = vld [vmem:[%s7636 + $0x14] sm:$0xf]
        %v7643 = vld [vmem:[%s7636 + $0x18] sm:$0xf]
        %v7644 = vld [vmem:[%s7636 + $0x1c] sm:$0xf]
        %v7645 = vld [vmem:[%s7636 + $0x20] sm:$0xf]
        %v7646 = vld [vmem:[%s7636 + $0x24] sm:$0xf]
        %v7647 = vld [vmem:[%s7636 + $0x28] sm:$0xf]
        %v7648 = vld [vmem:[%s7636 + $0x2c] sm:$0xf]
        %v7649 = vld [vmem:[%s7636 + $0x30] sm:$0xf]
        %v7650 = vld [vmem:[%s7636 + $0x34] sm:$0xf]
        %v7651 = vld [vmem:[%s7636 + $0x38] sm:$0xf]
        %v7652 = vld [vmem:[%s7636 + $0x3c] sm:$0xf]
        %v7653 = vunpack.c.l.b16 %v7628
        %v7654 = vunpack.c.l.b16 %v7635
        %v7655 = vpack.c.b16 %v7654, %v7653
        %v7673 = vunpack.c.l.b16 %v7637
        %v7674 = vunpack.c.l.b16 %v7638
        %v7675 = vunpack.c.l.b16 %v7639
        %v7676 = vunpack.c.l.b16 %v7640
        %v7677 = vunpack.c.l.b16 %v7641
        %v7678 = vunpack.c.l.b16 %v7642
        %v7679 = vunpack.c.l.b16 %v7643
        %v7680 = vunpack.c.l.b16 %v7644
        %v7681 = vunpack.c.l.b16 %v7645
        %v7682 = vunpack.c.l.b16 %v7646
        %v7683 = vunpack.c.l.b16 %v7647
        %v7684 = vunpack.c.l.b16 %v7648
        %v7685 = vunpack.c.l.b16 %v7649
        %v7686 = vunpack.c.l.b16 %v7650
        %v7687 = vunpack.c.l.b16 %v7651
        %v7688 = vunpack.c.l.b16 %v7652
        %v7689 = vpack.c.b16 %v7674, %v7673
        %v7690 = vpack.c.b16 %v7676, %v7675
        %v7691 = vpack.c.b16 %v7678, %v7677
        %v7692 = vpack.c.b16 %v7680, %v7679
        %v7693 = vpack.c.b16 %v7682, %v7681
        %v7694 = vpack.c.b16 %v7684, %v7683
        %v7695 = vpack.c.b16 %v7686, %v7685
        %v7696 = vpack.c.b16 %v7688, %v7687
        %7705 = vmatprep.subr.bf16.mxu0 0
        %7706 = vmatpush1.bf16.msra.mxu0 %v7689
        %7707 = vmatprep.subr.bf16.mxu0 0
        %7708 = vmatpush1.bf16.msra.mxu0 %v7690
        %7709 = vmatprep.subr.bf16.mxu0 0
        %7710 = vmatpush1.bf16.msra.mxu0 %v7691
        %7711 = vmatprep.subr.bf16.mxu0 0
        %7712 = vmatpush1.bf16.msra.mxu0 %v7692
        %7713 = vmatprep.subr.bf16.mxu0 0
        %7714 = vmatpush1.bf16.msra.mxu0 %v7693
        %7715 = vmatprep.subr.bf16.mxu0 0
        %7716 = vmatpush1.bf16.msra.mxu0 %v7694
        %7717 = vmatprep.subr.bf16.mxu0 0
        %7718 = vmatpush1.bf16.msra.mxu0 %v7695
        %7719 = vmatprep.subr.bf16.mxu0 0
        %7720 = vmatpush1.bf16.msra.mxu0 %v7696
        %7721 = vmatprep.subr.bf16.mxu0 0
        %7722 = vmatpush1.bf16.msra.mxu0 0
        %7723 = vmatprep.subr.bf16.mxu0 0
        %7724 = vmatpush1.bf16.msra.mxu0 0
        %7725 = vmatprep.subr.bf16.mxu0 0
        %7726 = vmatpush1.bf16.msra.mxu0 0
        %7727 = vmatprep.subr.bf16.mxu0 0
        %7728 = vmatpush1.bf16.msra.mxu0 0
        %7729 = vmatprep.subr.bf16.mxu0 0
        %7730 = vmatpush1.bf16.msra.mxu0 0
        %7731 = vmatprep.subr.bf16.mxu0 0
        %7732 = vmatpush1.bf16.msra.mxu0 0
        %7733 = vmatprep.subr.bf16.mxu0 0
        %7734 = vmatpush1.bf16.msra.mxu0 0
        %7735 = vmatprep.subr.bf16.mxu0 0
        %7736 = vmatpush1.bf16.msra.mxu0 0
        %7737 = vmatprep.mubr.bf16.mxu0 0
        %7738 = vmatmul.mubr.bf16.gmra.mrb[0].mxu0 %v1997
        %v7739 = vpop.f32.mrb[0].mxu0
        %v7740 = vadd.f32 0.0, %v7739
        %v7741 = vpop.f32.mrb[0].mxu0
        %v7742 = vpop.f32.mrb[0].mxu0
        %v7743 = vadd.f32 0.0, %v7742
        %v7744 = vpop.f32.mrb[0].mxu0
        %7745 = vmatprep.mubr.bf16.mxu0 0
        %7746 = vmatmul.mubr.bf16.gmra.mrb[0].mxu0 %v1998
        %v7747 = vpop.f32.mrb[0].mxu0
        %v7748 = vadd.f32 0.0, %v7747
        %v7749 = vpop.f32.mrb[0].mxu0
        %v7750 = vpop.f32.mrb[0].mxu0
        %v7751 = vadd.f32 0.0, %v7750
        %v7752 = vpop.f32.mrb[0].mxu0
        %7753 = vmatprep.mubr.bf16.mxu0 0
        %7754 = vmatmul.mubr.bf16.gmra.mrb[0].mxu0 %v1999
        %v7755 = vpop.f32.mrb[0].mxu0
        %v7756 = vadd.f32 0.0, %v7755
        %v7757 = vpop.f32.mrb[0].mxu0
        %v7758 = vpop.f32.mrb[0].mxu0
        %v7759 = vadd.f32 0.0, %v7758
        %v7760 = vpop.f32.mrb[0].mxu0
        %7761 = vmatprep.mubr.bf16.mxu0 0
        %7762 = vmatmul.mubr.bf16.gmra.mrb[0].mxu0 %v2000
        %v7763 = vpop.f32.mrb[0].mxu0
        %v7764 = vadd.f32 0.0, %v7763
        %v7765 = vpop.f32.mrb[0].mxu0
        %v7766 = vpop.f32.mrb[0].mxu0
        %v7767 = vadd.f32 0.0, %v7766
        %v7768 = vpop.f32.mrb[0].mxu0
        %7769 = vmatprep.mubr.bf16.mxu0 0
        %7770 = vmatmul.mubr.bf16.gmra.mrb[0].mxu0 %v2001
        %v7771 = vpop.f32.mrb[0].mxu0
        %v7772 = vadd.f32 0.0, %v7771
        %v7773 = vpop.f32.mrb[0].mxu0
        %v7774 = vpop.f32.mrb[0].mxu0
        %v7775 = vadd.f32 0.0, %v7774
        %v7776 = vpop.f32.mrb[0].mxu0
        %7777 = vmatprep.mubr.bf16.mxu0 0
        %7778 = vmatmul.mubr.bf16.gmra.mrb[0].mxu0 %v2002
        %v7779 = vpop.f32.mrb[0].mxu0
        %v7780 = vadd.f32 0.0, %v7779
        %v7781 = vpop.f32.mrb[0].mxu0
        %v7782 = vpop.f32.mrb[0].mxu0
        %v7783 = vadd.f32 0.0, %v7782
        %v7784 = vpop.f32.mrb[0].mxu0
        %7785 = vmatprep.mubr.bf16.mxu0 0
        %7786 = vmatmul.mubr.bf16.gmra.mrb[0].mxu0 %v2003
        %v7787 = vpop.f32.mrb[0].mxu0
        %v7788 = vadd.f32 0.0, %v7787
        %v7789 = vpop.f32.mrb[0].mxu0
        %v7790 = vpop.f32.mrb[0].mxu0
        %v7791 = vadd.f32 0.0, %v7790
        %v7792 = vpop.f32.mrb[0].mxu0
        %7793 = vmatprep.mubr.bf16.mxu0 0
        %7794 = vmatmul.mubr.bf16.gmra.mrb[0].mxu0 %v2004
        %v7795 = vpop.f32.mrb[0].mxu0
        %v7796 = vadd.f32 0.0, %v7795
        %v7797 = vpop.f32.mrb[0].mxu0
        %v7798 = vpop.f32.mrb[0].mxu0
        %v7799 = vadd.f32 0.0, %v7798
        %v7800 = vpop.f32.mrb[0].mxu0
        %7801 = vmatprep.mubr.bf16.mxu0 0
        %7802 = vmatmul.mubr.bf16.gmra.mrb[0].mxu0 %v2005
        %v7803 = vpop.f32.mrb[0].mxu0
        %v7804 = vadd.f32 0.0, %v7803
        %v7805 = vpop.f32.mrb[0].mxu0
        %v7806 = vpop.f32.mrb[0].mxu0
        %v7807 = vadd.f32 0.0, %v7806
        %v7808 = vpop.f32.mrb[0].mxu0
        %7809 = vmatprep.mubr.bf16.mxu0 0
        %7810 = vmatmul.mubr.bf16.gmra.mrb[0].mxu0 %v2006
        %v7811 = vpop.f32.mrb[0].mxu0
        %v7812 = vadd.f32 0.0, %v7811
        %v7813 = vpop.f32.mrb[0].mxu0
        %v7814 = vpop.f32.mrb[0].mxu0
        %v7815 = vadd.f32 0.0, %v7814
        %v7816 = vpop.f32.mrb[0].mxu0
        %7817 = vmatprep.mubr.bf16.mxu0 0
        %7818 = vmatmul.mubr.bf16.gmra.mrb[0].mxu0 %v2007
        %v7819 = vpop.f32.mrb[0].mxu0
        %v7820 = vadd.f32 0.0, %v7819
        %v7821 = vpop.f32.mrb[0].mxu0
        %v7822 = vpop.f32.mrb[0].mxu0
        %v7823 = vadd.f32 0.0, %v7822
        %v7824 = vpop.f32.mrb[0].mxu0
        %7825 = vmatprep.mubr.bf16.mxu0 0
        %7826 = vmatmul.mubr.bf16.gmra.mrb[0].mxu0 %v2008
        %v7827 = vpop.f32.mrb[0].mxu0
        %v7828 = vadd.f32 0.0, %v7827
        %v7829 = vpop.f32.mrb[0].mxu0
        %v7830 = vpop.f32.mrb[0].mxu0
        %v7831 = vadd.f32 0.0, %v7830
        %v7832 = vpop.f32.mrb[0].mxu0
        %7833 = vmatprep.mubr.bf16.mxu0 0
        %7834 = vmatmul.mubr.bf16.gmra.mrb[0].mxu0 %v3557
        %v7835 = vpop.f32.mrb[0].mxu0
        %v7836 = vadd.f32 0.0, %v7835
        %v7837 = vpop.f32.mrb[0].mxu0
        %v7838 = vpop.f32.mrb[0].mxu0
        %v7839 = vadd.f32 0.0, %v7838
        %v7840 = vpop.f32.mrb[0].mxu0
        %7841 = vmatprep.mubr.bf16.mxu0 0
        %7842 = vmatmul.mubr.bf16.gmra.mrb[0].mxu0 %v4923
        %v7843 = vpop.f32.mrb[0].mxu0
        %v7844 = vadd.f32 0.0, %v7843
        %v7845 = vpop.f32.mrb[0].mxu0
        %v7846 = vpop.f32.mrb[0].mxu0
        %v7847 = vadd.f32 0.0, %v7846
        %v7848 = vpop.f32.mrb[0].mxu0
        %7849 = vmatprep.mubr.bf16.mxu0 0
        %7850 = vmatmul.mubr.bf16.gmra.mrb[0].mxu0 %v6289
        %v7851 = vpop.f32.mrb[0].mxu0
        %v7852 = vadd.f32 0.0, %v7851
        %v7853 = vpop.f32.mrb[0].mxu0
        %v7854 = vpop.f32.mrb[0].mxu0
        %v7855 = vadd.f32 0.0, %v7854
        %v7856 = vpop.f32.mrb[0].mxu0
        %7857 = vmatprep.mubr.bf16.mxu0 0
        %7858 = vmatmul.mubr.bf16.gmra.mrb[0].mxu0 %v7655
        %v7859 = vpop.f32.mrb[0].mxu0
        %v7860 = vadd.f32 0.0, %v7859
        %v7861 = vpop.f32.mrb[0].mxu0
        %v7862 = vpop.f32.mrb[0].mxu0
        %v7863 = vadd.f32 0.0, %v7862
        %v7864 = vpop.f32.mrb[0].mxu0
        %7865 = vdwg.mxu0
        %v7866 = vadd.f32 %v7589, %v7740
        %v7867 = vadd.f32 %v7590, %v7743
        %v7868 = vadd.f32 %v7591, %v7748
        %v7869 = vadd.f32 %v7592, %v7751
        %v7870 = vadd.f32 %v7593, %v7756
        %v7871 = vadd.f32 %v7594, %v7759
        %v7872 = vadd.f32 %v7595, %v7764
        %v7873 = vadd.f32 %v7596, %v7767
        %v7874 = vadd.f32 %v7597, %v7772
        %v7875 = vadd.f32 %v7598, %v7775
        %v7876 = vadd.f32 %v7599, %v7780
        %v7877 = vadd.f32 %v7600, %v7783
        %v7878 = vadd.f32 %v7601, %v7788
        %v7879 = vadd.f32 %v7602, %v7791
        %v7880 = vadd.f32 %v7603, %v7796
        %v7881 = vadd.f32 %v7604, %v7799
        %v7882 = vadd.f32 %v7605, %v7804
        %v7883 = vadd.f32 %v7606, %v7807
        %v7884 = vadd.f32 %v7607, %v7812
        %v7885 = vadd.f32 %v7608, %v7815
        %v7886 = vadd.f32 %v7609, %v7820
        %v7887 = vadd.f32 %v7610, %v7823
        %v7888 = vadd.f32 %v7611, %v7828
        %v7889 = vadd.f32 %v7612, %v7831
        %v7890 = vadd.f32 %v7613, %v7836
        %v7891 = vadd.f32 %v7614, %v7839
        %v7892 = vadd.f32 %v7615, %v7844
        %v7893 = vadd.f32 %v7616, %v7847
        %v7894 = vadd.f32 %v7617, %v7852
        %v7895 = vadd.f32 %v7618, %v7855
        %v7896 = vadd.f32 %v7619, %v7860
        %v7897 = vadd.f32 %v7620, %v7863
        %v7898 = vrot.slane %v247, 6
        %v7899 = vrot.slane %v7898, 4
        %v7900 = vrot.slane %v248, 6
        %v7901 = vsel %vm2268, %v7899, %v7900
        %v7902 = vrot.slane %v7900, 4
        %v7903 = vrot.slane %v249, 6
        %v7904 = vsel %vm2268, %v7902, %v7903
        %s7905 = scalar_lea.vmem %s2, 1536
        %v7906 = vld [vmem:[%s7905] sm:$0xf]
        %v7907 = vld [vmem:[%s7905 + $0x4] sm:$0xf]
        %v7908 = vld [vmem:[%s7905 + $0x8] sm:$0xf]
        %v7909 = vld [vmem:[%s7905 + $0xc] sm:$0xf]
        %v7910 = vld [vmem:[%s7905 + $0x10] sm:$0xf]
        %v7911 = vld [vmem:[%s7905 + $0x14] sm:$0xf]
        %v7912 = vld [vmem:[%s7905 + $0x18] sm:$0xf]
        %v7913 = vld [vmem:[%s7905 + $0x1c] sm:$0xf]
        %v7914 = vld [vmem:[%s7905 + $0x20] sm:$0xf]
        %v7915 = vld [vmem:[%s7905 + $0x24] sm:$0xf]
        %v7916 = vld [vmem:[%s7905 + $0x28] sm:$0xf]
        %v7917 = vld [vmem:[%s7905 + $0x2c] sm:$0xf]
        %v7918 = vld [vmem:[%s7905 + $0x30] sm:$0xf]
        %v7919 = vld [vmem:[%s7905 + $0x34] sm:$0xf]
        %v7920 = vld [vmem:[%s7905 + $0x38] sm:$0xf]
        %v7921 = vld [vmem:[%s7905 + $0x3c] sm:$0xf]
        %v7922 = vunpack.c.l.b16 %v7901
        %v7923 = vunpack.c.l.b16 %v7904
        %v7924 = vpack.c.b16 %v7923, %v7922
        %v7942 = vunpack.c.l.b16 %v7906
        %v7943 = vunpack.c.l.b16 %v7907
        %v7944 = vunpack.c.l.b16 %v7908
        %v7945 = vunpack.c.l.b16 %v7909
        %v7946 = vunpack.c.l.b16 %v7910
        %v7947 = vunpack.c.l.b16 %v7911
        %v7948 = vunpack.c.l.b16 %v7912
        %v7949 = vunpack.c.l.b16 %v7913
        %v7950 = vunpack.c.l.b16 %v7914
        %v7951 = vunpack.c.l.b16 %v7915
        %v7952 = vunpack.c.l.b16 %v7916
        %v7953 = vunpack.c.l.b16 %v7917
        %v7954 = vunpack.c.l.b16 %v7918
        %v7955 = vunpack.c.l.b16 %v7919
        %v7956 = vunpack.c.l.b16 %v7920
        %v7957 = vunpack.c.l.b16 %v7921
        %v7958 = vpack.c.b16 %v7943, %v7942
        %v7959 = vpack.c.b16 %v7945, %v7944
        %v7960 = vpack.c.b16 %v7947, %v7946
        %v7961 = vpack.c.b16 %v7949, %v7948
        %v7962 = vpack.c.b16 %v7951, %v7950
        %v7963 = vpack.c.b16 %v7953, %v7952
        %v7964 = vpack.c.b16 %v7955, %v7954
        %v7965 = vpack.c.b16 %v7957, %v7956
        %7974 = vmatprep.subr.bf16.mxu0 0
        %7975 = vmatpush1.bf16.msra.mxu0 %v7958
        %7976 = vmatprep.subr.bf16.mxu0 0
        %7977 = vmatpush1.bf16.msra.mxu0 %v7959
        %7978 = vmatprep.subr.bf16.mxu0 0
        %7979 = vmatpush1.bf16.msra.mxu0 %v7960
        %7980 = vmatprep.subr.bf16.mxu0 0
        %7981 = vmatpush1.bf16.msra.mxu0 %v7961
        %7982 = vmatprep.subr.bf16.mxu0 0
        %7983 = vmatpush1.bf16.msra.mxu0 %v7962
        %7984 = vmatprep.subr.bf16.mxu0 0
        %7985 = vmatpush1.bf16.msra.mxu0 %v7963
        %7986 = vmatprep.subr.bf16.mxu0 0
        %7987 = vmatpush1.bf16.msra.mxu0 %v7964
        %7988 = vmatprep.subr.bf16.mxu0 0
        %7989 = vmatpush1.bf16.msra.mxu0 %v7965
        %7990 = vmatprep.subr.bf16.mxu0 0
        %7991 = vmatpush1.bf16.msra.mxu0 0
        %7992 = vmatprep.subr.bf16.mxu0 0
        %7993 = vmatpush1.bf16.msra.mxu0 0
        %7994 = vmatprep.subr.bf16.mxu0 0
        %7995 = vmatpush1.bf16.msra.mxu0 0
        %7996 = vmatprep.subr.bf16.mxu0 0
        %7997 = vmatpush1.bf16.msra.mxu0 0
        %7998 = vmatprep.subr.bf16.mxu0 0
        %7999 = vmatpush1.bf16.msra.mxu0 0
        %8000 = vmatprep.subr.bf16.mxu0 0
        %8001 = vmatpush1.bf16.msra.mxu0 0
        %8002 = vmatprep.subr.bf16.mxu0 0
        %8003 = vmatpush1.bf16.msra.mxu0 0
        %8004 = vmatprep.subr.bf16.mxu0 0
        %8005 = vmatpush1.bf16.msra.mxu0 0
        %8006 = vmatprep.mubr.bf16.mxu0 0
        %8007 = vmatmul.mubr.bf16.gmra.mrb[0].mxu0 %v2434
        %v8008 = vpop.f32.mrb[0].mxu0
        %v8009 = vadd.f32 0.0, %v8008
        %v8010 = vpop.f32.mrb[0].mxu0
        %v8011 = vpop.f32.mrb[0].mxu0
        %v8012 = vadd.f32 0.0, %v8011
        %v8013 = vpop.f32.mrb[0].mxu0
        %8014 = vmatprep.mubr.bf16.mxu0 0
        %8015 = vmatmul.mubr.bf16.gmra.mrb[0].mxu0 %v2435
        %v8016 = vpop.f32.mrb[0].mxu0
        %v8017 = vadd.f32 0.0, %v8016
        %v8018 = vpop.f32.mrb[0].mxu0
        %v8019 = vpop.f32.mrb[0].mxu0
        %v8020 = vadd.f32 0.0, %v8019
        %v8021 = vpop.f32.mrb[0].mxu0
        %8022 = vmatprep.mubr.bf16.mxu0 0
        %8023 = vmatmul.mubr.bf16.gmra.mrb[0].mxu0 %v2436
        %v8024 = vpop.f32.mrb[0].mxu0
        %v8025 = vadd.f32 0.0, %v8024
        %v8026 = vpop.f32.mrb[0].mxu0
        %v8027 = vpop.f32.mrb[0].mxu0
        %v8028 = vadd.f32 0.0, %v8027
        %v8029 = vpop.f32.mrb[0].mxu0
        %8030 = vmatprep.mubr.bf16.mxu0 0
        %8031 = vmatmul.mubr.bf16.gmra.mrb[0].mxu0 %v2437
        %v8032 = vpop.f32.mrb[0].mxu0
        %v8033 = vadd.f32 0.0, %v8032
        %v8034 = vpop.f32.mrb[0].mxu0
        %v8035 = vpop.f32.mrb[0].mxu0
        %v8036 = vadd.f32 0.0, %v8035
        %v8037 = vpop.f32.mrb[0].mxu0
        %8038 = vmatprep.mubr.bf16.mxu0 0
        %8039 = vmatmul.mubr.bf16.gmra.mrb[0].mxu0 %v2438
        %v8040 = vpop.f32.mrb[0].mxu0
        %v8041 = vadd.f32 0.0, %v8040
        %v8042 = vpop.f32.mrb[0].mxu0
        %v8043 = vpop.f32.mrb[0].mxu0
        %v8044 = vadd.f32 0.0, %v8043
        %v8045 = vpop.f32.mrb[0].mxu0
        %8046 = vmatprep.mubr.bf16.mxu0 0
        %8047 = vmatmul.mubr.bf16.gmra.mrb[0].mxu0 %v2439
        %v8048 = vpop.f32.mrb[0].mxu0
        %v8049 = vadd.f32 0.0, %v8048
        %v8050 = vpop.f32.mrb[0].mxu0
        %v8051 = vpop.f32.mrb[0].mxu0
        %v8052 = vadd.f32 0.0, %v8051
        %v8053 = vpop.f32.mrb[0].mxu0
        %8054 = vmatprep.mubr.bf16.mxu0 0
        %8055 = vmatmul.mubr.bf16.gmra.mrb[0].mxu0 %v2440
        %v8056 = vpop.f32.mrb[0].mxu0
        %v8057 = vadd.f32 0.0, %v8056
        %v8058 = vpop.f32.mrb[0].mxu0
        %v8059 = vpop.f32.mrb[0].mxu0
        %v8060 = vadd.f32 0.0, %v8059
        %v8061 = vpop.f32.mrb[0].mxu0
        %8062 = vmatprep.mubr.bf16.mxu0 0
        %8063 = vmatmul.mubr.bf16.gmra.mrb[0].mxu0 %v2441
        %v8064 = vpop.f32.mrb[0].mxu0
        %v8065 = vadd.f32 0.0, %v8064
        %v8066 = vpop.f32.mrb[0].mxu0
        %v8067 = vpop.f32.mrb[0].mxu0
        %v8068 = vadd.f32 0.0, %v8067
        %v8069 = vpop.f32.mrb[0].mxu0
        %8070 = vmatprep.mubr.bf16.mxu0 0
        %8071 = vmatmul.mubr.bf16.gmra.mrb[0].mxu0 %v2442
        %v8072 = vpop.f32.mrb[0].mxu0
        %v8073 = vadd.f32 0.0, %v8072
        %v8074 = vpop.f32.mrb[0].mxu0
        %v8075 = vpop.f32.mrb[0].mxu0
        %v8076 = vadd.f32 0.0, %v8075
        %v8077 = vpop.f32.mrb[0].mxu0
        %8078 = vmatprep.mubr.bf16.mxu0 0
        %8079 = vmatmul.mubr.bf16.gmra.mrb[0].mxu0 %v2443
        %v8080 = vpop.f32.mrb[0].mxu0
        %v8081 = vadd.f32 0.0, %v8080
        %v8082 = vpop.f32.mrb[0].mxu0
        %v8083 = vpop.f32.mrb[0].mxu0
        %v8084 = vadd.f32 0.0, %v8083
        %v8085 = vpop.f32.mrb[0].mxu0
        %8086 = vmatprep.mubr.bf16.mxu0 0
        %8087 = vmatmul.mubr.bf16.gmra.mrb[0].mxu0 %v2444
        %v8088 = vpop.f32.mrb[0].mxu0
        %v8089 = vadd.f32 0.0, %v8088
        %v8090 = vpop.f32.mrb[0].mxu0
        %v8091 = vpop.f32.mrb[0].mxu0
        %v8092 = vadd.f32 0.0, %v8091
        %v8093 = vpop.f32.mrb[0].mxu0
        %8094 = vmatprep.mubr.bf16.mxu0 0
        %8095 = vmatmul.mubr.bf16.gmra.mrb[0].mxu0 %v2445
        %v8096 = vpop.f32.mrb[0].mxu0
        %v8097 = vadd.f32 0.0, %v8096
        %v8098 = vpop.f32.mrb[0].mxu0
        %v8099 = vpop.f32.mrb[0].mxu0
        %v8100 = vadd.f32 0.0, %v8099
        %v8101 = vpop.f32.mrb[0].mxu0
        %8102 = vmatprep.mubr.bf16.mxu0 0
        %8103 = vmatmul.mubr.bf16.gmra.mrb[0].mxu0 %v3826
        %v8104 = vpop.f32.mrb[0].mxu0
        %v8105 = vadd.f32 0.0, %v8104
        %v8106 = vpop.f32.mrb[0].mxu0
        %v8107 = vpop.f32.mrb[0].mxu0
        %v8108 = vadd.f32 0.0, %v8107
        %v8109 = vpop.f32.mrb[0].mxu0
        %8110 = vmatprep.mubr.bf16.mxu0 0
        %8111 = vmatmul.mubr.bf16.gmra.mrb[0].mxu0 %v5192
        %v8112 = vpop.f32.mrb[0].mxu0
        %v8113 = vadd.f32 0.0, %v8112
        %v8114 = vpop.f32.mrb[0].mxu0
        %v8115 = vpop.f32.mrb[0].mxu0
        %v8116 = vadd.f32 0.0, %v8115
        %v8117 = vpop.f32.mrb[0].mxu0
        %8118 = vmatprep.mubr.bf16.mxu0 0
        %8119 = vmatmul.mubr.bf16.gmra.mrb[0].mxu0 %v6558
        %v8120 = vpop.f32.mrb[0].mxu0
        %v8121 = vadd.f32 0.0, %v8120
        %v8122 = vpop.f32.mrb[0].mxu0
        %v8123 = vpop.f32.mrb[0].mxu0
        %v8124 = vadd.f32 0.0, %v8123
        %v8125 = vpop.f32.mrb[0].mxu0
        %8126 = vmatprep.mubr.bf16.mxu0 0
        %8127 = vmatmul.mubr.bf16.gmra.mrb[0].mxu0 %v7924
        %v8128 = vpop.f32.mrb[0].mxu0
        %v8129 = vadd.f32 0.0, %v8128
        %v8130 = vpop.f32.mrb[0].mxu0
        %v8131 = vpop.f32.mrb[0].mxu0
        %v8132 = vadd.f32 0.0, %v8131
        %v8133 = vpop.f32.mrb[0].mxu0
        %8134 = vdwg.mxu0
        %v8135 = vadd.f32 %v7866, %v8009
        %v8136 = vadd.f32 %v7867, %v8012
        %v8137 = vadd.f32 %v7868, %v8017
        %v8138 = vadd.f32 %v7869, %v8020
        %v8139 = vadd.f32 %v7870, %v8025
        %v8140 = vadd.f32 %v7871, %v8028
        %v8141 = vadd.f32 %v7872, %v8033
        %v8142 = vadd.f32 %v7873, %v8036
        %v8143 = vadd.f32 %v7874, %v8041
        %v8144 = vadd.f32 %v7875, %v8044
        %v8145 = vadd.f32 %v7876, %v8049
        %v8146 = vadd.f32 %v7877, %v8052
        %v8147 = vadd.f32 %v7878, %v8057
        %v8148 = vadd.f32 %v7879, %v8060
        %v8149 = vadd.f32 %v7880, %v8065
        %v8150 = vadd.f32 %v7881, %v8068
        %v8151 = vadd.f32 %v7882, %v8073
        %v8152 = vadd.f32 %v7883, %v8076
        %v8153 = vadd.f32 %v7884, %v8081
        %v8154 = vadd.f32 %v7885, %v8084
        %v8155 = vadd.f32 %v7886, %v8089
        %v8156 = vadd.f32 %v7887, %v8092
        %v8157 = vadd.f32 %v7888, %v8097
        %v8158 = vadd.f32 %v7889, %v8100
        %v8159 = vadd.f32 %v7890, %v8105
        %v8160 = vadd.f32 %v7891, %v8108
        %v8161 = vadd.f32 %v7892, %v8113
        %v8162 = vadd.f32 %v7893, %v8116
        %v8163 = vadd.f32 %v7894, %v8121
        %v8164 = vadd.f32 %v7895, %v8124
        %v8165 = vadd.f32 %v7896, %v8129
        %v8166 = vadd.f32 %v7897, %v8132
        %v8167 = vld [vmem:[%s183] sm:$0xff]
        %v8168 = vld [vmem:[%s183 + $0x8] sm:$0xff]
        %v8169 = vld [vmem:[%s183 + $0x10] sm:$0xff]
        %v8170 = vld [vmem:[%s183 + $0x18] sm:$0xff]
        %v8171 = vld [vmem:[%s183 + $0x20] sm:$0xff]
        %v8172 = vld [vmem:[%s183 + $0x28] sm:$0xff]
        %v8173 = vld [vmem:[%s183 + $0x30] sm:$0xff]
        %v8174 = vld [vmem:[%s183 + $0x38] sm:$0xff]
        %v8175 = vld [vmem:[%s183 + $0x40] sm:$0xff]
        %v8176 = vld [vmem:[%s183 + $0x48] sm:$0xff]
        %v8177 = vld [vmem:[%s183 + $0x50] sm:$0xff]
        %v8178 = vld [vmem:[%s183 + $0x58] sm:$0xff]
        %v8179 = vld [vmem:[%s183 + $0x60] sm:$0xff]
        %v8180 = vld [vmem:[%s183 + $0x68] sm:$0xff]
        %v8181 = vld [vmem:[%s183 + $0x70] sm:$0xff]
        %v8182 = vld [vmem:[%s183 + $0x78] sm:$0xff]
        %v8183 = vld [vmem:[%s183 + $0x80] sm:$0xff]
        %v8184 = vld [vmem:[%s183 + $0x88] sm:$0xff]
        %v8185 = vld [vmem:[%s183 + $0x90] sm:$0xff]
        %v8186 = vld [vmem:[%s183 + $0x98] sm:$0xff]
        %v8187 = vld [vmem:[%s183 + $0xa0] sm:$0xff]
        %v8188 = vld [vmem:[%s183 + $0xa8] sm:$0xff]
        %v8189 = vld [vmem:[%s183 + $0xb0] sm:$0xff]
        %v8190 = vld [vmem:[%s183 + $0xb8] sm:$0xff]
        %v8191 = vld [vmem:[%s183 + $0xc0] sm:$0xff]
        %v8192 = vld [vmem:[%s183 + $0xc8] sm:$0xff]
        %v8193 = vld [vmem:[%s183 + $0xd0] sm:$0xff]
        %v8194 = vld [vmem:[%s183 + $0xd8] sm:$0xff]
        %v8195 = vld [vmem:[%s183 + $0xe0] sm:$0xff]
        %v8196 = vld [vmem:[%s183 + $0xe8] sm:$0xff]
        %v8197 = vld [vmem:[%s183 + $0xf0] sm:$0xff]
        %v8198 = vld [vmem:[%s183 + $0xf8] sm:$0xff]
        %8231 = vrot.lane.b32.xlu0 %v8135, 16
        %v8232 = vpop.permute.xlu0 %8231
        %8233 = vrot.lane.b32.xlu0 %v8136, 16
        %v8234 = vpop.permute.xlu0 %8233
        %8235 = vrot.lane.b32.xlu0 %v8137, 16
        %v8236 = vpop.permute.xlu0 %8235
        %8237 = vrot.lane.b32.xlu0 %v8138, 16
        %v8238 = vpop.permute.xlu0 %8237
        %8239 = vrot.lane.b32.xlu0 %v8139, 16
        %v8240 = vpop.permute.xlu0 %8239
        %8241 = vrot.lane.b32.xlu0 %v8140, 16
        %v8242 = vpop.permute.xlu0 %8241
        %8243 = vrot.lane.b32.xlu0 %v8141, 16
        %v8244 = vpop.permute.xlu0 %8243
        %8245 = vrot.lane.b32.xlu0 %v8142, 16
        %v8246 = vpop.permute.xlu0 %8245
        %8247 = vrot.lane.b32.xlu0 %v8143, 16
        %v8248 = vpop.permute.xlu0 %8247
        %8249 = vrot.lane.b32.xlu0 %v8144, 16
        %v8250 = vpop.permute.xlu0 %8249
        %8251 = vrot.lane.b32.xlu0 %v8145, 16
        %v8252 = vpop.permute.xlu0 %8251
        %8253 = vrot.lane.b32.xlu0 %v8146, 16
        %v8254 = vpop.permute.xlu0 %8253
        %8255 = vrot.lane.b32.xlu0 %v8147, 16
        %v8256 = vpop.permute.xlu0 %8255
        %8257 = vrot.lane.b32.xlu0 %v8148, 16
        %v8258 = vpop.permute.xlu0 %8257
        %8259 = vrot.lane.b32.xlu0 %v8149, 16
        %v8260 = vpop.permute.xlu0 %8259
        %8261 = vrot.lane.b32.xlu0 %v8150, 16
        %v8262 = vpop.permute.xlu0 %8261
        %8263 = vrot.lane.b32.xlu0 %v8151, 16
        %v8264 = vpop.permute.xlu0 %8263
        %8265 = vrot.lane.b32.xlu0 %v8152, 16
        %v8266 = vpop.permute.xlu0 %8265
        %8267 = vrot.lane.b32.xlu0 %v8153, 16
        %v8268 = vpop.permute.xlu0 %8267
        %8269 = vrot.lane.b32.xlu0 %v8154, 16
        %v8270 = vpop.permute.xlu0 %8269
        %8271 = vrot.lane.b32.xlu0 %v8155, 16
        %v8272 = vpop.permute.xlu0 %8271
        %8273 = vrot.lane.b32.xlu0 %v8156, 16
        %v8274 = vpop.permute.xlu0 %8273
        %8275 = vrot.lane.b32.xlu0 %v8157, 16
        %v8276 = vpop.permute.xlu0 %8275
        %8277 = vrot.lane.b32.xlu0 %v8158, 16
        %v8278 = vpop.permute.xlu0 %8277
        %8279 = vrot.lane.b32.xlu0 %v8159, 16
        %v8280 = vpop.permute.xlu0 %8279
        %8281 = vrot.lane.b32.xlu0 %v8160, 16
        %v8282 = vpop.permute.xlu0 %8281
        %8283 = vrot.lane.b32.xlu0 %v8161, 16
        %v8284 = vpop.permute.xlu0 %8283
        %8285 = vrot.lane.b32.xlu0 %v8162, 16
        %v8286 = vpop.permute.xlu0 %8285
        %8287 = vrot.lane.b32.xlu0 %v8163, 16
        %v8288 = vpop.permute.xlu0 %8287
        %8289 = vrot.lane.b32.xlu0 %v8164, 16
        %v8290 = vpop.permute.xlu0 %8289
        %8291 = vrot.lane.b32.xlu0 %v8165, 16
        %v8292 = vpop.permute.xlu0 %8291
        %8293 = vrot.lane.b32.xlu0 %v8166, 16
        %v8294 = vpop.permute.xlu0 %8293
        %vm8327 = vcmask 130048
        %v8328 = vsel %vm8327, %v8167, %v8232
        %v8329 = vsel %vm8327, %v8168, %v8234
        %v8330 = vsel %vm8327, %v8169, %v8236
        %v8331 = vsel %vm8327, %v8170, %v8238
        %v8332 = vsel %vm8327, %v8171, %v8240
        %v8333 = vsel %vm8327, %v8172, %v8242
        %v8334 = vsel %vm8327, %v8173, %v8244
        %v8335 = vsel %vm8327, %v8174, %v8246
        %v8336 = vsel %vm8327, %v8175, %v8248
        %v8337 = vsel %vm8327, %v8176, %v8250
        %v8338 = vsel %vm8327, %v8177, %v8252
        %v8339 = vsel %vm8327, %v8178, %v8254
        %v8340 = vsel %vm8327, %v8179, %v8256
        %v8341 = vsel %vm8327, %v8180, %v8258
        %v8342 = vsel %vm8327, %v8181, %v8260
        %v8343 = vsel %vm8327, %v8182, %v8262
        %v8344 = vsel %vm8327, %v8183, %v8264
        %v8345 = vsel %vm8327, %v8184, %v8266
        %v8346 = vsel %vm8327, %v8185, %v8268
        %v8347 = vsel %vm8327, %v8186, %v8270
        %v8348 = vsel %vm8327, %v8187, %v8272
        %v8349 = vsel %vm8327, %v8188, %v8274
        %v8350 = vsel %vm8327, %v8189, %v8276
        %v8351 = vsel %vm8327, %v8190, %v8278
        %v8352 = vsel %vm8327, %v8191, %v8280
        %v8353 = vsel %vm8327, %v8192, %v8282
        %v8354 = vsel %vm8327, %v8193, %v8284
        %v8355 = vsel %vm8327, %v8194, %v8286
        %v8356 = vsel %vm8327, %v8195, %v8288
        %v8357 = vsel %vm8327, %v8196, %v8290
        %v8358 = vsel %vm8327, %v8197, %v8292
        %v8359 = vsel %vm8327, %v8198, %v8294
        %vm8360 = vcmask 195584
        %8361 = vst.msk [vmem:[%s178] sm:$0xff] %vm8360, %v8328
        %8362 = vst.msk [vmem:[%s178 + $0x8] sm:$0xff] %vm8360, %v8329
        %8363 = vst.msk [vmem:[%s178 + $0x10] sm:$0xff] %vm8360, %v8330
        %8364 = vst.msk [vmem:[%s178 + $0x18] sm:$0xff] %vm8360, %v8331
        %8365 = vst.msk [vmem:[%s178 + $0x20] sm:$0xff] %vm8360, %v8332
        %8366 = vst.msk [vmem:[%s178 + $0x28] sm:$0xff] %vm8360, %v8333
        %8367 = vst.msk [vmem:[%s178 + $0x30] sm:$0xff] %vm8360, %v8334
        %8368 = vst.msk [vmem:[%s178 + $0x38] sm:$0xff] %vm8360, %v8335
        %8369 = vst.msk [vmem:[%s178 + $0x40] sm:$0xff] %vm8360, %v8336
        %8370 = vst.msk [vmem:[%s178 + $0x48] sm:$0xff] %vm8360, %v8337
        %8371 = vst.msk [vmem:[%s178 + $0x50] sm:$0xff] %vm8360, %v8338
        %8372 = vst.msk [vmem:[%s178 + $0x58] sm:$0xff] %vm8360, %v8339
        %8373 = vst.msk [vmem:[%s178 + $0x60] sm:$0xff] %vm8360, %v8340
        %8374 = vst.msk [vmem:[%s178 + $0x68] sm:$0xff] %vm8360, %v8341
        %8375 = vst.msk [vmem:[%s178 + $0x70] sm:$0xff] %vm8360, %v8342
        %8376 = vst.msk [vmem:[%s178 + $0x78] sm:$0xff] %vm8360, %v8343
        %8377 = vst.msk [vmem:[%s178 + $0x80] sm:$0xff] %vm8360, %v8344
        %8378 = vst.msk [vmem:[%s178 + $0x88] sm:$0xff] %vm8360, %v8345
        %8379 = vst.msk [vmem:[%s178 + $0x90] sm:$0xff] %vm8360, %v8346
        %8380 = vst.msk [vmem:[%s178 + $0x98] sm:$0xff] %vm8360, %v8347
        %8381 = vst.msk [vmem:[%s178 + $0xa0] sm:$0xff] %vm8360, %v8348
        %8382 = vst.msk [vmem:[%s178 + $0xa8] sm:$0xff] %vm8360, %v8349
        %8383 = vst.msk [vmem:[%s178 + $0xb0] sm:$0xff] %vm8360, %v8350
        %8384 = vst.msk [vmem:[%s178 + $0xb8] sm:$0xff] %vm8360, %v8351
        %8385 = vst.msk [vmem:[%s178 + $0xc0] sm:$0xff] %vm8360, %v8352
        %8386 = vst.msk [vmem:[%s178 + $0xc8] sm:$0xff] %vm8360, %v8353
        %8387 = vst.msk [vmem:[%s178 + $0xd0] sm:$0xff] %vm8360, %v8354
        %8388 = vst.msk [vmem:[%s178 + $0xd8] sm:$0xff] %vm8360, %v8355
        %8389 = vst.msk [vmem:[%s178 + $0xe0] sm:$0xff] %vm8360, %v8356
        %8390 = vst.msk [vmem:[%s178 + $0xe8] sm:$0xff] %vm8360, %v8357
        %8391 = vst.msk [vmem:[%s178 + $0xf0] sm:$0xff] %vm8360, %v8358
        %8392 = vst.msk [vmem:[%s178 + $0xf8] sm:$0xff] %vm8360, %v8359
        %s8393 = sand.u32 %s98, 1
        %s8394 = scalar_lea.sflag [#allocation3], %s8393
        %s8395 = sand.u32 %s98, 1
        %s8396 = smul.addr %s8395, 256
        %s8397 = scalar_lea.vmem [#allocation2], %s8396
        // Predicated region
        $region33: #{bottleneck_block1_forward.3} parent=31 // pred_check
          %p8398 = pneg %p108
        $region34: #{bottleneck_block1_forward.3} parent=31 // pred_check_branch
          %8400 = sbr.rel (%p8398) target = $region36
        $region35: #{bottleneck_block1_forward.3} parent=31 // pred_region
          %s8402 = ssub.s32 4096, 4096
          %8403 = vsyncadd %s8394, %s8402
          %s8404 = smul.addr %s17, 32
          %s8405 = smul.addr %s8404, 128
          %s8406 = scalar_lea.hbm %s3, %s8405
          %s8407 = sshll.u32 %s8397, 4
          %s8408 = int_to_ptr.vmem [resolvable:$true] %s8407
          %8413 = dma.vmem_to_hbm [thread:$0]  %s8408, 4096, %s8406, %s8394, 128, 128, 8
        $region36: #{bottleneck_block1_forward.3} parent=31 // pred_fallthru
          _
      $region32: #{bottleneck_block1_forward.3} parent=5 // pred_fallthru
        _
      %p8414 = scmp.le.s32.totalorder 2, %s12
      // Predicated region
      $region37: #{bottleneck_block1_forward.3} parent=5 // pred_check
        %p8415 = pneg %p8414
      $region38: #{bottleneck_block1_forward.3} parent=5 // pred_check_branch
        %8417 = sbr.rel (%p8415) target = $region40
      $region39: #{bottleneck_block1_forward.3} parent=5 // pred_region
        %s8418 = ssub.s32 %s12, 2
        // Predicated region
        $region41: #{bottleneck_block1_forward.3} parent=39 // pred_check
          %p8419 = pneg %p114
        $region42: #{bottleneck_block1_forward.3} parent=39 // pred_check_branch
          %8421 = sbr.rel (%p8419) target = $region44
        $region43: #{bottleneck_block1_forward.3} parent=39 // pred_region
          %s8422 = sand.u32 %s99, 1
          %s8423 = scalar_lea.sflag [#allocation3], %s8422
          %s8424 = sand.u32 %s99, 1
          %s8425 = smul.addr %s8424, 256
          %s8426 = scalar_lea.vmem [#allocation2], %s8425
          %8427 = dma.done %s8423, 4096
        $region44: #{bottleneck_block1_forward.3} parent=39 // pred_fallthru
          _
      $region40: #{bottleneck_block1_forward.3} parent=5 // pred_fallthru
        _
    $region6: #{bottleneck_block1_forward.3} parent=1 // loop_footer
      %s16 = sadd.s32 1, %s12
    $region7: #{bottleneck_block1_forward.3} parent=1 // loop_footer_branch
      %11 = sbr.rel target = $region3
    $region8: #{bottleneck_block1_forward.3} parent=1 // loop_exit
      _
    %8428 = vsyncpa [#allocation3], 1
    %s8429 = scalar_lea.sflag [#allocation3], 1
    %8430 = vsyncpa %s8429, 1

</llo_original>
